<compile_context>
chip_gen: v7x
topology: tpu7x:2x2x1
jax: 0.10.0
libtpu: 0.0.40
codegen_flags: <defaults>
</compile_context>

<pallas_src>
import jax
import jax.numpy as jnp
import numpy as np
from jax.experimental import pallas as pl
from jax.experimental.pallas import tpu as pltpu

BN_EPS = 1e-5
LANE = 128
VMEM_LIMIT = 32 * 1024 * 1024  # fits v7x (64 MiB phys / 32 MiB scoped default)


def _round_up(x, m):
    return (x + m - 1) // m * m


# --------------------------- conv (+ fused bn/relu) kernel ---------------------------
def _make_conv_kernel(h, w, cp, apply_bn_relu):
    """3x3 conv as a single K=9*cp MXU matmul + per-image BN partial moments.

    If apply_bn_relu, the folded BatchNorm scale/bias + ReLU of the *previous*
    layer is applied to the input tile first (bn1+relu+conv2 fusion).
    """
    hw = h * w

    def compute(x_ref, scale, bias, w_ref, y_ref, stats_ref, pad_ref, patch_ref):
        a = x_ref[0]                                       # (hw, cp) f32
        if apply_bn_relu:
            a = jnp.maximum(a * scale + bias, 0.0)
        # Halo-padded activation in VMEM; zero borders give 'zeros' conv padding.
        pad_ref[...] = jnp.zeros(pad_ref.shape, pad_ref.dtype)
        pad_ref[1:h + 1, 1:w + 1, :] = a.astype(jnp.bfloat16).reshape(h, w, cp)
        # Gather the 9 shifted taps into one (hw, 9*cp) patch matrix so the conv
        # is one matmul; the K accumulation happens inside the MXU.
        for k in range(9):
            kh, kw = divmod(k, 3)
            patch_ref[:, k * cp:(k + 1) * cp] = (
                pad_ref[kh:kh + h, kw:kw + w, :].reshape(hw, cp))
        acc = jnp.dot(patch_ref[...], w_ref[...],
                      preferred_element_type=jnp.float32)   # (hw, cp) f32
        y_ref[0] = acc
        # Single-pass BN moments: per-channel sum and sum of squares.
        s = jnp.sum(acc, axis=0, keepdims=True)
        ss = jnp.sum(acc * acc, axis=0, keepdims=True)
        stats_ref[0] = jnp.concatenate([s, ss], axis=0)     # (2, cp)

    if apply_bn_relu:
        def kernel(x_ref, scale_ref, bias_ref, w_ref, y_ref, stats_ref,
                   pad_ref, patch_ref):
            compute(x_ref, scale_ref[...], bias_ref[...], w_ref,
                    y_ref, stats_ref, pad_ref, patch_ref)
    else:
        def kernel(x_ref, w_ref, y_ref, stats_ref, pad_ref, patch_ref):
            compute(x_ref, None, None, w_ref, y_ref, stats_ref,
                    pad_ref, patch_ref)
    return kernel


def _conv_pass(x_rows, w9, h, w, scale=None, bias=None):
    """Per-image grid: (optional fused bn+relu) -> conv3x3 -> (y, BN partials)."""
    n, hw, cp = x_rows.shape
    apply_bn_relu = scale is not None
    kernel = _make_conv_kernel(h, w, cp, apply_bn_relu)

    in_specs = [pl.BlockSpec((1, hw, cp), lambda i: (i, 0, 0))]
    args = [x_rows]
    if apply_bn_relu:
        in_specs += [pl.BlockSpec((1, cp), lambda i: (0, 0)),
                     pl.BlockSpec((1, cp), lambda i: (0, 0))]
        args += [scale, bias]
    in_specs.append(pl.BlockSpec((9 * cp, cp), lambda i: (0, 0)))
    args.append(w9)

    y, stats = pl.pallas_call(
        kernel,
        grid=(n,),
        in_specs=in_specs,
        out_specs=(pl.BlockSpec((1, hw, cp), lambda i: (i, 0, 0)),
                   pl.BlockSpec((1, 2, cp), lambda i: (i, 0, 0))),
        out_shape=(jax.ShapeDtypeStruct((n, hw, cp), jnp.float32),
                   jax.ShapeDtypeStruct((n, 2, cp), jnp.float32)),
        scratch_shapes=[pltpu.VMEM((h + 2, w + 2, cp), jnp.bfloat16),
                        pltpu.VMEM((hw, 9 * cp), jnp.bfloat16)],
        compiler_params=pltpu.CompilerParams(
            dimension_semantics=("parallel",),
            vmem_limit_bytes=VMEM_LIMIT),
    )(*args)
    return y, stats


# --------------------------- bn2 + residual + relu kernel ---------------------------
def _bn_add_relu_kernel(y_ref, scale_ref, bias_ref, res_ref, out_ref):
    out_ref[0] = jnp.maximum(
        y_ref[0] * scale_ref[...] + bias_ref[...] + res_ref[0], 0.0)


def _bn_add_relu(y, scale, bias, resid):
    n, hw, cp = y.shape
    return pl.pallas_call(
        _bn_add_relu_kernel,
        grid=(n,),
        in_specs=[pl.BlockSpec((1, hw, cp), lambda i: (i, 0, 0)),
                  pl.BlockSpec((1, cp), lambda i: (0, 0)),
                  pl.BlockSpec((1, cp), lambda i: (0, 0)),
                  pl.BlockSpec((1, hw, cp), lambda i: (i, 0, 0))],
        out_specs=pl.BlockSpec((1, hw, cp), lambda i: (i, 0, 0)),
        out_shape=jax.ShapeDtypeStruct((n, hw, cp), jnp.float32),
        compiler_params=pltpu.CompilerParams(
            dimension_semantics=("parallel",),
            vmem_limit_bytes=VMEM_LIMIT),
    )(y, scale, bias, resid)


# --------------------------- wrapper glue (plain JAX, tiny) ---------------------------
def _fold_bn(stats, gamma, beta, count):
    """(N, 2, Cp) partial sums -> folded per-channel (scale, bias), train-mode BN."""
    cp = stats.shape[-1]
    s = jnp.sum(stats[:, 0, :], axis=0)
    ss = jnp.sum(stats[:, 1, :], axis=0)
    mean = s / count
    var = jnp.maximum(ss / count - mean * mean, 0.0)   # biased variance, clamped
    inv = jax.lax.rsqrt(var + BN_EPS)
    g = jnp.pad(gamma, (0, cp - gamma.shape[0]))
    b = jnp.pad(beta, (0, cp - beta.shape[0]))
    scale = g * inv
    bias = b - mean * scale
    return scale.reshape(1, cp), bias.reshape(1, cp)


def _pack_weights(w_oihw, cp):
    """(Cout, Cin, 3, 3) -> (9*cp, cp) bf16, rows ordered (kh, kw, cin)."""
    cin, cout = w_oihw.shape[1], w_oihw.shape[0]
    wt = jnp.transpose(w_oihw, (2, 3, 1, 0))                       # (3,3,Cin,Cout)
    wt = jnp.pad(wt, ((0, 0), (0, 0), (0, cp - cin), (0, cp - cout)))
    return wt.reshape(9 * cp, cp).astype(jnp.bfloat16)


@jax.jit
def basic_block_forward(x, params):
    """x: (N, C, H, W) f32 -> (N, C, H, W) f32 (stride=1, zeros pad, no downsample)."""
    n, c, h, w = x.shape
    cp = _round_up(c, LANE)
    hw = h * w

    # NCHW -> channel-padded NHWC rows, once (also reused as the residual).
    x_rows = jnp.transpose(x, (0, 2, 3, 1))
    x_rows = jnp.pad(x_rows, ((0, 0), (0, 0), (0, 0), (0, cp - c)))
    x_rows = x_rows.reshape(n, hw, cp).astype(jnp.float32)

    w1 = _pack_weights(params["w1"], cp)
    w2 = _pack_weights(params["w2"], cp)

    # conv1 (+ BN1 batch partials)
    y1, st1 = _conv_pass(x_rows, w1, h, w)
    scale1, bias1 = _fold_bn(st1, params["gamma1"], params["beta1"], n * hw)
    # bn1 + relu fused into conv2 (+ BN2 batch partials)
    y2, st2 = _conv_pass(y1, w2, h, w, scale=scale1, bias=bias1)
    scale2, bias2 = _fold_bn(st2, params["gamma2"], params["beta2"], n * hw)
    # bn2 + residual add + relu
    out = _bn_add_relu(y2, scale2, bias2, x_rows)

    out = out[:, :, :c].reshape(n, h, w, c)
    return jnp.transpose(out, (0, 3, 1, 2))


# ---------------- pure-JAX reference (for correctness check) ----------------
def _ref_conv3x3(x_nchw, w_oihw):
    return jax.lax.conv_general_dilated(
        x_nchw, w_oihw, window_strides=(1, 1), padding=((1, 1), (1, 1)),
        dimension_numbers=("NCHW", "OIHW", "NCHW"))


def _ref_bn_train(x_nchw, gamma, beta):
    mean = jnp.mean(x_nchw, axis=(0, 2, 3), keepdims=True)
    var = jnp.var(x_nchw, axis=(0, 2, 3), keepdims=True)  # biased, as in PyTorch
    y = (x_nchw - mean) * jax.lax.rsqrt(var + BN_EPS)
    return y * gamma.reshape(1, -1, 1, 1) + beta.reshape(1, -1, 1, 1)


def basic_block_reference(x, params):
    out = _ref_conv3x3(x, params["w1"])
    out = jnp.maximum(_ref_bn_train(out, params["gamma1"], params["beta1"]), 0.0)
    out = _ref_conv3x3(out, params["w2"])
    out = _ref_bn_train(out, params["gamma2"], params["beta2"])
    out = out + x
    return jnp.maximum(out, 0.0)


if __name__ == "__main__":
    # inplanes == planes (residual add without downsample), stride=1.
    N, C, H, W = 2, 8, 16, 16
    key = jax.random.PRNGKey(0)
    kx, kw1, kw2, kg1, kb1, kg2, kb2 = jax.random.split(key, 7)

    fan_in = C * 9
    params = {
        "w1": jax.random.normal(kw1, (C, C, 3, 3), jnp.float32) / np.sqrt(fan_in),
        "w2": jax.random.normal(kw2, (C, C, 3, 3), jnp.float32) / np.sqrt(fan_in),
        "gamma1": 1.0 + 0.1 * jax.random.normal(kg1, (C,), jnp.float32),
        "beta1": 0.1 * jax.random.normal(kb1, (C,), jnp.float32),
        "gamma2": 1.0 + 0.1 * jax.random.normal(kg2, (C,), jnp.float32),
        "beta2": 0.1 * jax.random.normal(kb2, (C,), jnp.float32),
    }
    x = jax.random.normal(kx, (N, C, H, W), jnp.float32)

    out = jax.block_until_ready(basic_block_forward(x, params))
    ref = jax.block_until_ready(basic_block_reference(x, params))

    assert out.shape == (N, C, H, W), out.shape
    # bf16 MXU operands (f32 accumulate) -> tolerance slightly above f32.
    if not np.allclose(np.asarray(out), np.asarray(ref), atol=3e-2, rtol=3e-2):
        raise AssertionError(
            f"mismatch: max abs diff "
            f"{np.max(np.abs(np.asarray(out) - np.asarray(ref)))}")
    # TODO(synk): 'reflect'/'replicate'/'circular' conv paddings, the BlurPool
    # (stride>1) conv2 path, the downsample branch, and eval-mode BN (running
    # stats / momentum update) are not implemented; only the default
    # stride=1 / zeros-padding / no-downsample train-mode configuration.
    print("KERNEL_OK")
</pallas_src>

<mosaic_0001>
module attributes {stable_mosaic.version = 11 : i64} {
  func.func @kernel(%arg0: i32, %arg1: memref<1x256x128xf32, #tpu.memory_space<vmem>>, %arg2: memref<1152x128xbf16, #tpu.memory_space<vmem>>, %arg3: memref<1x256x128xf32, #tpu.memory_space<vmem>>, %arg4: memref<1x2x128xf32, #tpu.memory_space<vmem>>, %arg5: memref<18x18x128xbf16, #tpu.memory_space<vmem>>, %arg6: memref<256x1152xbf16, #tpu.memory_space<vmem>>) attributes {dimension_semantics = [#tpu.dimension_semantics<parallel>], iteration_bounds = array<i64: 2>, scalar_prefetch = 0 : i64, scratch_operands = 2 : i64, tpu.core_type = #tpu.core_type<tc>, window_params = [{transform_indices = @transform_0, window_bounds = array<i64: 1, 256, 128>}, {pipeline_mode = #tpu.pipeline_mode<synchronous>, transform_indices = @transform_1, window_bounds = array<i64: 1152, 128>}, {transform_indices = @transform_2, window_bounds = array<i64: 1, 256, 128>}, {transform_indices = @transform_3, window_bounds = array<i64: 1, 2, 128>}]} {
    %c0 = arith.constant 0 : index
    %c0_0 = arith.constant 0 : index
    %c0_1 = arith.constant 0 : index
    %0 = vector.load %arg1[%c0, %c0_0, %c0_1] : memref<1x256x128xf32, #tpu.memory_space<vmem>>, vector<1x256x128xf32>
    %1 = vector.shape_cast %0 : vector<1x256x128xf32> to vector<256x128xf32>
    %cst = arith.constant 0.000000e+00 : bf16
    %2 = vector.broadcast %cst : bf16 to vector<18x18x128xbf16>
    %c0_2 = arith.constant 0 : index
    %c0_3 = arith.constant 0 : index
    %c0_4 = arith.constant 0 : index
    %3 = vector.load %arg5[%c0_2, %c0_3, %c0_4] : memref<18x18x128xbf16, #tpu.memory_space<vmem>>, vector<18x18x128xbf16>
    tpu.vector_store %arg5[%c0_2, %c0_3, %c0_4], %2 {strides = array<i32>} : memref<18x18x128xbf16, #tpu.memory_space<vmem>>, vector<18x18x128xbf16>,
    %4 = arith.truncf %1 : vector<256x128xf32> to vector<256x128xbf16>
    %5 = vector.shape_cast %4 : vector<256x128xbf16> to vector<16x16x128xbf16>
    %c1 = arith.constant 1 : index
    %c1_5 = arith.constant 1 : index
    %c0_6 = arith.constant 0 : index
    %6 = vector.load %arg5[%c1, %c1_5, %c0_6] : memref<18x18x128xbf16, #tpu.memory_space<vmem>>, vector<16x16x128xbf16>
    tpu.vector_store %arg5[%c1, %c1_5, %c0_6], %5 {strides = array<i32>} : memref<18x18x128xbf16, #tpu.memory_space<vmem>>, vector<16x16x128xbf16>,
    %c0_7 = arith.constant 0 : index
    %c0_8 = arith.constant 0 : index
    %c0_9 = arith.constant 0 : index
    %7 = vector.load %arg5[%c0_7, %c0_8, %c0_9] : memref<18x18x128xbf16, #tpu.memory_space<vmem>>, vector<16x16x128xbf16>
    %8 = vector.shape_cast %7 : vector<16x16x128xbf16> to vector<256x128xbf16>
    %c0_10 = arith.constant 0 : index
    %c0_11 = arith.constant 0 : index
    %9 = vector.load %arg6[%c0_10, %c0_11] : memref<256x1152xbf16, #tpu.memory_space<vmem>>, vector<256x128xbf16>
    tpu.vector_store %arg6[%c0_10, %c0_11], %8 {strides = array<i32>} : memref<256x1152xbf16, #tpu.memory_space<vmem>>, vector<256x128xbf16>,
    %c0_12 = arith.constant 0 : index
    %c1_13 = arith.constant 1 : index
    %c0_14 = arith.constant 0 : index
    %10 = vector.load %arg5[%c0_12, %c1_13, %c0_14] : memref<18x18x128xbf16, #tpu.memory_space<vmem>>, vector<16x16x128xbf16>
    %11 = vector.shape_cast %10 : vector<16x16x128xbf16> to vector<256x128xbf16>
    %c0_15 = arith.constant 0 : index
    %c128 = arith.constant 128 : index
    %12 = vector.load %arg6[%c0_15, %c128] : memref<256x1152xbf16, #tpu.memory_space<vmem>>, vector<256x128xbf16>
    tpu.vector_store %arg6[%c0_15, %c128], %11 {strides = array<i32>} : memref<256x1152xbf16, #tpu.memory_space<vmem>>, vector<256x128xbf16>,
    %c0_16 = arith.constant 0 : index
    %c2 = arith.constant 2 : index
    %c0_17 = arith.constant 0 : index
    %13 = vector.load %arg5[%c0_16, %c2, %c0_17] : memref<18x18x128xbf16, #tpu.memory_space<vmem>>, vector<16x16x128xbf16>
    %14 = vector.shape_cast %13 : vector<16x16x128xbf16> to vector<256x128xbf16>
    %c0_18 = arith.constant 0 : index
    %c256 = arith.constant 256 : index
    %15 = vector.load %arg6[%c0_18, %c256] : memref<256x1152xbf16, #tpu.memory_space<vmem>>, vector<256x128xbf16>
    tpu.vector_store %arg6[%c0_18, %c256], %14 {strides = array<i32>} : memref<256x1152xbf16, #tpu.memory_space<vmem>>, vector<256x128xbf16>,
    %c1_19 = arith.constant 1 : index
    %c0_20 = arith.constant 0 : index
    %c0_21 = arith.constant 0 : index
    %16 = vector.load %arg5[%c1_19, %c0_20, %c0_21] : memref<18x18x128xbf16, #tpu.memory_space<vmem>>, vector<16x16x128xbf16>
    %17 = vector.shape_cast %16 : vector<16x16x128xbf16> to vector<256x128xbf16>
    %c0_22 = arith.constant 0 : index
    %c384 = arith.constant 384 : index
    %18 = vector.load %arg6[%c0_22, %c384] : memref<256x1152xbf16, #tpu.memory_space<vmem>>, vector<256x128xbf16>
    tpu.vector_store %arg6[%c0_22, %c384], %17 {strides = array<i32>} : memref<256x1152xbf16, #tpu.memory_space<vmem>>, vector<256x128xbf16>,
    %c1_23 = arith.constant 1 : index
    %c1_24 = arith.constant 1 : index
    %c0_25 = arith.constant 0 : index
    %19 = vector.load %arg5[%c1_23, %c1_24, %c0_25] : memref<18x18x128xbf16, #tpu.memory_space<vmem>>, vector<16x16x128xbf16>
    %20 = vector.shape_cast %19 : vector<16x16x128xbf16> to vector<256x128xbf16>
    %c0_26 = arith.constant 0 : index
    %c512 = arith.constant 512 : index
    %21 = vector.load %arg6[%c0_26, %c512] : memref<256x1152xbf16, #tpu.memory_space<vmem>>, vector<256x128xbf16>
    tpu.vector_store %arg6[%c0_26, %c512], %20 {strides = array<i32>} : memref<256x1152xbf16, #tpu.memory_space<vmem>>, vector<256x128xbf16>,
    %c1_27 = arith.constant 1 : index
    %c2_28 = arith.constant 2 : index
    %c0_29 = arith.constant 0 : index
    %22 = vector.load %arg5[%c1_27, %c2_28, %c0_29] : memref<18x18x128xbf16, #tpu.memory_space<vmem>>, vector<16x16x128xbf16>
    %23 = vector.shape_cast %22 : vector<16x16x128xbf16> to vector<256x128xbf16>
    %c0_30 = arith.constant 0 : index
    %c640 = arith.constant 640 : index
    %24 = vector.load %arg6[%c0_30, %c640] : memref<256x1152xbf16, #tpu.memory_space<vmem>>, vector<256x128xbf16>
    tpu.vector_store %arg6[%c0_30, %c640], %23 {strides = array<i32>} : memref<256x1152xbf16, #tpu.memory_space<vmem>>, vector<256x128xbf16>,
    %c2_31 = arith.constant 2 : index
    %c0_32 = arith.constant 0 : index
    %c0_33 = arith.constant 0 : index
    %25 = vector.load %arg5[%c2_31, %c0_32, %c0_33] : memref<18x18x128xbf16, #tpu.memory_space<vmem>>, vector<16x16x128xbf16>
    %26 = vector.shape_cast %25 : vector<16x16x128xbf16> to vector<256x128xbf16>
    %c0_34 = arith.constant 0 : index
    %c768 = arith.constant 768 : index
    %27 = vector.load %arg6[%c0_34, %c768] : memref<256x1152xbf16, #tpu.memory_space<vmem>>, vector<256x128xbf16>
    tpu.vector_store %arg6[%c0_34, %c768], %26 {strides = array<i32>} : memref<256x1152xbf16, #tpu.memory_space<vmem>>, vector<256x128xbf16>,
    %c2_35 = arith.constant 2 : index
    %c1_36 = arith.constant 1 : index
    %c0_37 = arith.constant 0 : index
    %28 = vector.load %arg5[%c2_35, %c1_36, %c0_37] : memref<18x18x128xbf16, #tpu.memory_space<vmem>>, vector<16x16x128xbf16>
    %29 = vector.shape_cast %28 : vector<16x16x128xbf16> to vector<256x128xbf16>
    %c0_38 = arith.constant 0 : index
    %c896 = arith.constant 896 : index
    %30 = vector.load %arg6[%c0_38, %c896] : memref<256x1152xbf16, #tpu.memory_space<vmem>>, vector<256x128xbf16>
    tpu.vector_store %arg6[%c0_38, %c896], %29 {strides = array<i32>} : memref<256x1152xbf16, #tpu.memory_space<vmem>>, vector<256x128xbf16>,
    %c2_39 = arith.constant 2 : index
    %c2_40 = arith.constant 2 : index
    %c0_41 = arith.constant 0 : index
    %31 = vector.load %arg5[%c2_39, %c2_40, %c0_41] : memref<18x18x128xbf16, #tpu.memory_space<vmem>>, vector<16x16x128xbf16>
    %32 = vector.shape_cast %31 : vector<16x16x128xbf16> to vector<256x128xbf16>
    %c0_42 = arith.constant 0 : index
    %c1024 = arith.constant 1024 : index
    %33 = vector.load %arg6[%c0_42, %c1024] : memref<256x1152xbf16, #tpu.memory_space<vmem>>, vector<256x128xbf16>
    tpu.vector_store %arg6[%c0_42, %c1024], %32 {strides = array<i32>} : memref<256x1152xbf16, #tpu.memory_space<vmem>>, vector<256x128xbf16>,
    %c0_43 = arith.constant 0 : index
    %c0_44 = arith.constant 0 : index
    %34 = vector.load %arg6[%c0_43, %c0_44] : memref<256x1152xbf16, #tpu.memory_space<vmem>>, vector<256x1152xbf16>
    %c0_45 = arith.constant 0 : index
    %c0_46 = arith.constant 0 : index
    %35 = vector.load %arg2[%c0_45, %c0_46] : memref<1152x128xbf16, #tpu.memory_space<vmem>>, vector<1152x128xbf16>
    %cst_47 = arith.constant dense<0.000000e+00> : vector<256x128xf32>
    %36 = tpu.matmul %34, %35, %cst_47 {dimension_numbers = #tpu.dot_dimension_numbers<[1], [0], [0], [1], [0, 0, 1, 1], [], []>} : vector<256x1152xbf16>, vector<1152x128xbf16>, vector<256x128xf32> -> vector<256x128xf32>
    %c0_48 = arith.constant 0 : index
    %c0_49 = arith.constant 0 : index
    %c0_50 = arith.constant 0 : index
    %37 = vector.load %arg3[%c0_48, %c0_49, %c0_50] : memref<1x256x128xf32, #tpu.memory_space<vmem>>, vector<1x256x128xf32>
    %38 = vector.shape_cast %37 : vector<1x256x128xf32> to vector<256x128xf32>
    %39 = vector.shape_cast %36 : vector<256x128xf32> to vector<1x256x128xf32>
    tpu.vector_store %arg3[%c0_48, %c0_49, %c0_50], %39 {strides = array<i32>} : memref<1x256x128xf32, #tpu.memory_space<vmem>>, vector<1x256x128xf32>,
    %cst_51 = arith.constant dense<0.000000e+00> : vector<128xf32>
    %40 = vector.multi_reduction <add>, %36, %cst_51 [0] : vector<256x128xf32> to vector<128xf32>
    %41 = vector.shape_cast %40 : vector<128xf32> to vector<1x128xf32>
    %42 = arith.mulf %36, %36 : vector<256x128xf32>
    %cst_52 = arith.constant dense<0.000000e+00> : vector<128xf32>
    %43 = vector.multi_reduction <add>, %42, %cst_52 [0] : vector<256x128xf32> to vector<128xf32>
    %44 = vector.shape_cast %43 : vector<128xf32> to vector<1x128xf32>
    %45 = tpu.concatenate %41, %44 in 0 : vector<1x128xf32>, vector<1x128xf32> -> vector<2x128xf32>
    %c0_53 = arith.constant 0 : index
    %c0_54 = arith.constant 0 : index
    %c0_55 = arith.constant 0 : index
    %46 = vector.load %arg4[%c0_53, %c0_54, %c0_55] : memref<1x2x128xf32, #tpu.memory_space<vmem>>, vector<1x2x128xf32>
    %47 = vector.shape_cast %46 : vector<1x2x128xf32> to vector<2x128xf32>
    %48 = vector.shape_cast %45 : vector<2x128xf32> to vector<1x2x128xf32>
    tpu.vector_store %arg4[%c0_53, %c0_54, %c0_55], %48 {strides = array<i32>} : memref<1x2x128xf32, #tpu.memory_space<vmem>>, vector<1x2x128xf32>,
    return
  }
  func.func @transform_0(%arg0: i32) -> (i32, i32, i32) {
    %c0_i32 = arith.constant 0 : i32
    %c0_i32_0 = arith.constant 0 : i32
    %c0_i32_1 = arith.constant 0 : i32
    return %arg0, %c0_i32, %c0_i32_0 : i32, i32, i32
  }
  func.func @transform_1(%arg0: i32) -> (i32, i32) {
    %c0_i32 = arith.constant 0 : i32
    %c0_i32_0 = arith.constant 0 : i32
    %c0_i32_1 = arith.constant 0 : i32
    return %c0_i32, %c0_i32_0 : i32, i32
  }
  func.func @transform_2(%arg0: i32) -> (i32, i32, i32) {
    %c0_i32 = arith.constant 0 : i32
    %c0_i32_0 = arith.constant 0 : i32
    %c0_i32_1 = arith.constant 0 : i32
    return %arg0, %c0_i32, %c0_i32_0 : i32, i32, i32
  }
  func.func @transform_3(%arg0: i32) -> (i32, i32, i32) {
    %c0_i32 = arith.constant 0 : i32
    %c0_i32_0 = arith.constant 0 : i32
    %c0_i32_1 = arith.constant 0 : i32
    return %arg0, %c0_i32, %c0_i32_0 : i32, i32, i32
  }
}

module attributes {stable_mosaic.version = 11 : i64} {
  func.func @kernel(%arg0: i32, %arg1: memref<1x256x128xf32, #tpu.memory_space<vmem>>, %arg2: memref<1x128xf32, #tpu.memory_space<vmem>>, %arg3: memref<1x128xf32, #tpu.memory_space<vmem>>, %arg4: memref<1152x128xbf16, #tpu.memory_space<vmem>>, %arg5: memref<1x256x128xf32, #tpu.memory_space<vmem>>, %arg6: memref<1x2x128xf32, #tpu.memory_space<vmem>>, %arg7: memref<18x18x128xbf16, #tpu.memory_space<vmem>>, %arg8: memref<256x1152xbf16, #tpu.memory_space<vmem>>) attributes {dimension_semantics = [#tpu.dimension_semantics<parallel>], iteration_bounds = array<i64: 2>, scalar_prefetch = 0 : i64, scratch_operands = 2 : i64, tpu.core_type = #tpu.core_type<tc>, window_params = [{transform_indices = @transform_0, window_bounds = array<i64: 1, 256, 128>}, {pipeline_mode = #tpu.pipeline_mode<synchronous>, transform_indices = @transform_1, window_bounds = array<i64: 1, 128>}, {pipeline_mode = #tpu.pipeline_mode<synchronous>, transform_indices = @transform_2, window_bounds = array<i64: 1, 128>}, {pipeline_mode = #tpu.pipeline_mode<synchronous>, transform_indices = @transform_3, window_bounds = array<i64: 1152, 128>}, {transform_indices = @transform_4, window_bounds = array<i64: 1, 256, 128>}, {transform_indices = @transform_5, window_bounds = array<i64: 1, 2, 128>}]} {
    %c0 = arith.constant 0 : index
    %c0_0 = arith.constant 0 : index
    %0 = vector.load %arg2[%c0, %c0_0] : memref<1x128xf32, #tpu.memory_space<vmem>>, vector<1x128xf32>
    %c0_1 = arith.constant 0 : index
    %c0_2 = arith.constant 0 : index
    %1 = vector.load %arg3[%c0_1, %c0_2] : memref<1x128xf32, #tpu.memory_space<vmem>>, vector<1x128xf32>
    %c0_3 = arith.constant 0 : index
    %c0_4 = arith.constant 0 : index
    %c0_5 = arith.constant 0 : index
    %2 = vector.load %arg1[%c0_3, %c0_4, %c0_5] : memref<1x256x128xf32, #tpu.memory_space<vmem>>, vector<1x256x128xf32>
    %3 = vector.shape_cast %2 : vector<1x256x128xf32> to vector<256x128xf32>
    %4 = vector.broadcast %0 : vector<1x128xf32> to vector<256x128xf32>
    %5 = arith.mulf %3, %4 : vector<256x128xf32>
    %6 = vector.broadcast %1 : vector<1x128xf32> to vector<256x128xf32>
    %7 = arith.addf %5, %6 : vector<256x128xf32>
    %cst = arith.constant 0.000000e+00 : f32
    %8 = vector.broadcast %cst : f32 to vector<256x128xf32>
    %9 = arith.maximumf %7, %8 : vector<256x128xf32>
    %cst_6 = arith.constant 0.000000e+00 : bf16
    %10 = vector.broadcast %cst_6 : bf16 to vector<18x18x128xbf16>
    %c0_7 = arith.constant 0 : index
    %c0_8 = arith.constant 0 : index
    %c0_9 = arith.constant 0 : index
    %11 = vector.load %arg7[%c0_7, %c0_8, %c0_9] : memref<18x18x128xbf16, #tpu.memory_space<vmem>>, vector<18x18x128xbf16>
    tpu.vector_store %arg7[%c0_7, %c0_8, %c0_9], %10 {strides = array<i32>} : memref<18x18x128xbf16, #tpu.memory_space<vmem>>, vector<18x18x128xbf16>,
    %12 = arith.truncf %9 : vector<256x128xf32> to vector<256x128xbf16>
    %13 = vector.shape_cast %12 : vector<256x128xbf16> to vector<16x16x128xbf16>
    %c1 = arith.constant 1 : index
    %c1_10 = arith.constant 1 : index
    %c0_11 = arith.constant 0 : index
    %14 = vector.load %arg7[%c1, %c1_10, %c0_11] : memref<18x18x128xbf16, #tpu.memory_space<vmem>>, vector<16x16x128xbf16>
    tpu.vector_store %arg7[%c1, %c1_10, %c0_11], %13 {strides = array<i32>} : memref<18x18x128xbf16, #tpu.memory_space<vmem>>, vector<16x16x128xbf16>,
    %c0_12 = arith.constant 0 : index
    %c0_13 = arith.constant 0 : index
    %c0_14 = arith.constant 0 : index
    %15 = vector.load %arg7[%c0_12, %c0_13, %c0_14] : memref<18x18x128xbf16, #tpu.memory_space<vmem>>, vector<16x16x128xbf16>
    %16 = vector.shape_cast %15 : vector<16x16x128xbf16> to vector<256x128xbf16>
    %c0_15 = arith.constant 0 : index
    %c0_16 = arith.constant 0 : index
    %17 = vector.load %arg8[%c0_15, %c0_16] : memref<256x1152xbf16, #tpu.memory_space<vmem>>, vector<256x128xbf16>
    tpu.vector_store %arg8[%c0_15, %c0_16], %16 {strides = array<i32>} : memref<256x1152xbf16, #tpu.memory_space<vmem>>, vector<256x128xbf16>,
    %c0_17 = arith.constant 0 : index
    %c1_18 = arith.constant 1 : index
    %c0_19 = arith.constant 0 : index
    %18 = vector.load %arg7[%c0_17, %c1_18, %c0_19] : memref<18x18x128xbf16, #tpu.memory_space<vmem>>, vector<16x16x128xbf16>
    %19 = vector.shape_cast %18 : vector<16x16x128xbf16> to vector<256x128xbf16>
    %c0_20 = arith.constant 0 : index
    %c128 = arith.constant 128 : index
    %20 = vector.load %arg8[%c0_20, %c128] : memref<256x1152xbf16, #tpu.memory_space<vmem>>, vector<256x128xbf16>
    tpu.vector_store %arg8[%c0_20, %c128], %19 {strides = array<i32>} : memref<256x1152xbf16, #tpu.memory_space<vmem>>, vector<256x128xbf16>,
    %c0_21 = arith.constant 0 : index
    %c2 = arith.constant 2 : index
    %c0_22 = arith.constant 0 : index
    %21 = vector.load %arg7[%c0_21, %c2, %c0_22] : memref<18x18x128xbf16, #tpu.memory_space<vmem>>, vector<16x16x128xbf16>
    %22 = vector.shape_cast %21 : vector<16x16x128xbf16> to vector<256x128xbf16>
    %c0_23 = arith.constant 0 : index
    %c256 = arith.constant 256 : index
    %23 = vector.load %arg8[%c0_23, %c256] : memref<256x1152xbf16, #tpu.memory_space<vmem>>, vector<256x128xbf16>
    tpu.vector_store %arg8[%c0_23, %c256], %22 {strides = array<i32>} : memref<256x1152xbf16, #tpu.memory_space<vmem>>, vector<256x128xbf16>,
    %c1_24 = arith.constant 1 : index
    %c0_25 = arith.constant 0 : index
    %c0_26 = arith.constant 0 : index
    %24 = vector.load %arg7[%c1_24, %c0_25, %c0_26] : memref<18x18x128xbf16, #tpu.memory_space<vmem>>, vector<16x16x128xbf16>
    %25 = vector.shape_cast %24 : vector<16x16x128xbf16> to vector<256x128xbf16>
    %c0_27 = arith.constant 0 : index
    %c384 = arith.constant 384 : index
    %26 = vector.load %arg8[%c0_27, %c384] : memref<256x1152xbf16, #tpu.memory_space<vmem>>, vector<256x128xbf16>
    tpu.vector_store %arg8[%c0_27, %c384], %25 {strides = array<i32>} : memref<256x1152xbf16, #tpu.memory_space<vmem>>, vector<256x128xbf16>,
    %c1_28 = arith.constant 1 : index
    %c1_29 = arith.constant 1 : index
    %c0_30 = arith.constant 0 : index
    %27 = vector.load %arg7[%c1_28, %c1_29, %c0_30] : memref<18x18x128xbf16, #tpu.memory_space<vmem>>, vector<16x16x128xbf16>
    %28 = vector.shape_cast %27 : vector<16x16x128xbf16> to vector<256x128xbf16>
    %c0_31 = arith.constant 0 : index
    %c512 = arith.constant 512 : index
    %29 = vector.load %arg8[%c0_31, %c512] : memref<256x1152xbf16, #tpu.memory_space<vmem>>, vector<256x128xbf16>
    tpu.vector_store %arg8[%c0_31, %c512], %28 {strides = array<i32>} : memref<256x1152xbf16, #tpu.memory_space<vmem>>, vector<256x128xbf16>,
    %c1_32 = arith.constant 1 : index
    %c2_33 = arith.constant 2 : index
    %c0_34 = arith.constant 0 : index
    %30 = vector.load %arg7[%c1_32, %c2_33, %c0_34] : memref<18x18x128xbf16, #tpu.memory_space<vmem>>, vector<16x16x128xbf16>
    %31 = vector.shape_cast %30 : vector<16x16x128xbf16> to vector<256x128xbf16>
    %c0_35 = arith.constant 0 : index
    %c640 = arith.constant 640 : index
    %32 = vector.load %arg8[%c0_35, %c640] : memref<256x1152xbf16, #tpu.memory_space<vmem>>, vector<256x128xbf16>
    tpu.vector_store %arg8[%c0_35, %c640], %31 {strides = array<i32>} : memref<256x1152xbf16, #tpu.memory_space<vmem>>, vector<256x128xbf16>,
    %c2_36 = arith.constant 2 : index
    %c0_37 = arith.constant 0 : index
    %c0_38 = arith.constant 0 : index
    %33 = vector.load %arg7[%c2_36, %c0_37, %c0_38] : memref<18x18x128xbf16, #tpu.memory_space<vmem>>, vector<16x16x128xbf16>
    %34 = vector.shape_cast %33 : vector<16x16x128xbf16> to vector<256x128xbf16>
    %c0_39 = arith.constant 0 : index
    %c768 = arith.constant 768 : index
    %35 = vector.load %arg8[%c0_39, %c768] : memref<256x1152xbf16, #tpu.memory_space<vmem>>, vector<256x128xbf16>
    tpu.vector_store %arg8[%c0_39, %c768], %34 {strides = array<i32>} : memref<256x1152xbf16, #tpu.memory_space<vmem>>, vector<256x128xbf16>,
    %c2_40 = arith.constant 2 : index
    %c1_41 = arith.constant 1 : index
    %c0_42 = arith.constant 0 : index
    %36 = vector.load %arg7[%c2_40, %c1_41, %c0_42] : memref<18x18x128xbf16, #tpu.memory_space<vmem>>, vector<16x16x128xbf16>
    %37 = vector.shape_cast %36 : vector<16x16x128xbf16> to vector<256x128xbf16>
    %c0_43 = arith.constant 0 : index
    %c896 = arith.constant 896 : index
    %38 = vector.load %arg8[%c0_43, %c896] : memref<256x1152xbf16, #tpu.memory_space<vmem>>, vector<256x128xbf16>
    tpu.vector_store %arg8[%c0_43, %c896], %37 {strides = array<i32>} : memref<256x1152xbf16, #tpu.memory_space<vmem>>, vector<256x128xbf16>,
    %c2_44 = arith.constant 2 : index
    %c2_45 = arith.constant 2 : index
    %c0_46 = arith.constant 0 : index
    %39 = vector.load %arg7[%c2_44, %c2_45, %c0_46] : memref<18x18x128xbf16, #tpu.memory_space<vmem>>, vector<16x16x128xbf16>
    %40 = vector.shape_cast %39 : vector<16x16x128xbf16> to vector<256x128xbf16>
    %c0_47 = arith.constant 0 : index
    %c1024 = arith.constant 1024 : index
    %41 = vector.load %arg8[%c0_47, %c1024] : memref<256x1152xbf16, #tpu.memory_space<vmem>>, vector<256x128xbf16>
    tpu.vector_store %arg8[%c0_47, %c1024], %40 {strides = array<i32>} : memref<256x1152xbf16, #tpu.memory_space<vmem>>, vector<256x128xbf16>,
    %c0_48 = arith.constant 0 : index
    %c0_49 = arith.constant 0 : index
    %42 = vector.load %arg8[%c0_48, %c0_49] : memref<256x1152xbf16, #tpu.memory_space<vmem>>, vector<256x1152xbf16>
    %c0_50 = arith.constant 0 : index
    %c0_51 = arith.constant 0 : index
    %43 = vector.load %arg4[%c0_50, %c0_51] : memref<1152x128xbf16, #tpu.memory_space<vmem>>, vector<1152x128xbf16>
    %cst_52 = arith.constant dense<0.000000e+00> : vector<256x128xf32>
    %44 = tpu.matmul %42, %43, %cst_52 {dimension_numbers = #tpu.dot_dimension_numbers<[1], [0], [0], [1], [0, 0, 1, 1], [], []>} : vector<256x1152xbf16>, vector<1152x128xbf16>, vector<256x128xf32> -> vector<256x128xf32>
    %c0_53 = arith.constant 0 : index
    %c0_54 = arith.constant 0 : index
    %c0_55 = arith.constant 0 : index
    %45 = vector.load %arg5[%c0_53, %c0_54, %c0_55] : memref<1x256x128xf32, #tpu.memory_space<vmem>>, vector<1x256x128xf32>
    %46 = vector.shape_cast %45 : vector<1x256x128xf32> to vector<256x128xf32>
    %47 = vector.shape_cast %44 : vector<256x128xf32> to vector<1x256x128xf32>
    tpu.vector_store %arg5[%c0_53, %c0_54, %c0_55], %47 {strides = array<i32>} : memref<1x256x128xf32, #tpu.memory_space<vmem>>, vector<1x256x128xf32>,
    %cst_56 = arith.constant dense<0.000000e+00> : vector<128xf32>
    %48 = vector.multi_reduction <add>, %44, %cst_56 [0] : vector<256x128xf32> to vector<128xf32>
    %49 = vector.shape_cast %48 : vector<128xf32> to vector<1x128xf32>
    %50 = arith.mulf %44, %44 : vector<256x128xf32>
    %cst_57 = arith.constant dense<0.000000e+00> : vector<128xf32>
    %51 = vector.multi_reduction <add>, %50, %cst_57 [0] : vector<256x128xf32> to vector<128xf32>
    %52 = vector.shape_cast %51 : vector<128xf32> to vector<1x128xf32>
    %53 = tpu.concatenate %49, %52 in 0 : vector<1x128xf32>, vector<1x128xf32> -> vector<2x128xf32>
    %c0_58 = arith.constant 0 : index
    %c0_59 = arith.constant 0 : index
    %c0_60 = arith.constant 0 : index
    %54 = vector.load %arg6[%c0_58, %c0_59, %c0_60] : memref<1x2x128xf32, #tpu.memory_space<vmem>>, vector<1x2x128xf32>
    %55 = vector.shape_cast %54 : vector<1x2x128xf32> to vector<2x128xf32>
    %56 = vector.shape_cast %53 : vector<2x128xf32> to vector<1x2x128xf32>
    tpu.vector_store %arg6[%c0_58, %c0_59, %c0_60], %56 {strides = array<i32>} : memref<1x2x128xf32, #tpu.memory_space<vmem>>, vector<1x2x128xf32>,
    return
  }
  func.func @transform_0(%arg0: i32) -> (i32, i32, i32) {
    %c0_i32 = arith.constant 0 : i32
    %c0_i32_0 = arith.constant 0 : i32
    %c0_i32_1 = arith.constant 0 : i32
    return %arg0, %c0_i32, %c0_i32_0 : i32, i32, i32
  }
  func.func @transform_1(%arg0: i32) -> (i32, i32) {
    %c0_i32 = arith.constant 0 : i32
    %c0_i32_0 = arith.constant 0 : i32
    %c0_i32_1 = arith.constant 0 : i32
    return %c0_i32, %c0_i32_0 : i32, i32
  }
  func.func @transform_2(%arg0: i32) -> (i32, i32) {
    %c0_i32 = arith.constant 0 : i32
    %c0_i32_0 = arith.constant 0 : i32
    %c0_i32_1 = arith.constant 0 : i32
    return %c0_i32, %c0_i32_0 : i32, i32
  }
  func.func @transform_3(%arg0: i32) -> (i32, i32) {
    %c0_i32 = arith.constant 0 : i32
    %c0_i32_0 = arith.constant 0 : i32
    %c0_i32_1 = arith.constant 0 : i32
    return %c0_i32, %c0_i32_0 : i32, i32
  }
  func.func @transform_4(%arg0: i32) -> (i32, i32, i32) {
    %c0_i32 = arith.constant 0 : i32
    %c0_i32_0 = arith.constant 0 : i32
    %c0_i32_1 = arith.constant 0 : i32
    return %arg0, %c0_i32, %c0_i32_0 : i32, i32, i32
  }
  func.func @transform_5(%arg0: i32) -> (i32, i32, i32) {
    %c0_i32 = arith.constant 0 : i32
    %c0_i32_0 = arith.constant 0 : i32
    %c0_i32_1 = arith.constant 0 : i32
    return %arg0, %c0_i32, %c0_i32_0 : i32, i32, i32
  }
}

module attributes {stable_mosaic.version = 11 : i64} {
  func.func @_bn_add_relu_kernel(%arg0: i32, %arg1: memref<1x256x128xf32, #tpu.memory_space<vmem>>, %arg2: memref<1x128xf32, #tpu.memory_space<vmem>>, %arg3: memref<1x128xf32, #tpu.memory_space<vmem>>, %arg4: memref<1x256x128xf32, #tpu.memory_space<vmem>>, %arg5: memref<1x256x128xf32, #tpu.memory_space<vmem>>) attributes {dimension_semantics = [#tpu.dimension_semantics<parallel>], iteration_bounds = array<i64: 2>, scalar_prefetch = 0 : i64, scratch_operands = 0 : i64, tpu.core_type = #tpu.core_type<tc>, window_params = [{transform_indices = @transform_0, window_bounds = array<i64: 1, 256, 128>}, {pipeline_mode = #tpu.pipeline_mode<synchronous>, transform_indices = @transform_1, window_bounds = array<i64: 1, 128>}, {pipeline_mode = #tpu.pipeline_mode<synchronous>, transform_indices = @transform_2, window_bounds = array<i64: 1, 128>}, {transform_indices = @transform_3, window_bounds = array<i64: 1, 256, 128>}, {transform_indices = @transform_4, window_bounds = array<i64: 1, 256, 128>}]} {
    %c0 = arith.constant 0 : index
    %c0_0 = arith.constant 0 : index
    %c0_1 = arith.constant 0 : index
    %0 = vector.load %arg1[%c0, %c0_0, %c0_1] : memref<1x256x128xf32, #tpu.memory_space<vmem>>, vector<1x256x128xf32>
    %1 = vector.shape_cast %0 : vector<1x256x128xf32> to vector<256x128xf32>
    %c0_2 = arith.constant 0 : index
    %c0_3 = arith.constant 0 : index
    %2 = vector.load %arg2[%c0_2, %c0_3] : memref<1x128xf32, #tpu.memory_space<vmem>>, vector<1x128xf32>
    %3 = vector.broadcast %2 : vector<1x128xf32> to vector<256x128xf32>
    %4 = arith.mulf %1, %3 : vector<256x128xf32>
    %c0_4 = arith.constant 0 : index
    %c0_5 = arith.constant 0 : index
    %5 = vector.load %arg3[%c0_4, %c0_5] : memref<1x128xf32, #tpu.memory_space<vmem>>, vector<1x128xf32>
    %6 = vector.broadcast %5 : vector<1x128xf32> to vector<256x128xf32>
    %7 = arith.addf %4, %6 : vector<256x128xf32>
    %c0_6 = arith.constant 0 : index
    %c0_7 = arith.constant 0 : index
    %c0_8 = arith.constant 0 : index
    %8 = vector.load %arg4[%c0_6, %c0_7, %c0_8] : memref<1x256x128xf32, #tpu.memory_space<vmem>>, vector<1x256x128xf32>
    %9 = vector.shape_cast %8 : vector<1x256x128xf32> to vector<256x128xf32>
    %10 = arith.addf %7, %9 : vector<256x128xf32>
    %cst = arith.constant 0.000000e+00 : f32
    %11 = vector.broadcast %cst : f32 to vector<256x128xf32>
    %12 = arith.maximumf %10, %11 : vector<256x128xf32>
    %c0_9 = arith.constant 0 : index
    %c0_10 = arith.constant 0 : index
    %c0_11 = arith.constant 0 : index
    %13 = vector.load %arg5[%c0_9, %c0_10, %c0_11] : memref<1x256x128xf32, #tpu.memory_space<vmem>>, vector<1x256x128xf32>
    %14 = vector.shape_cast %13 : vector<1x256x128xf32> to vector<256x128xf32>
    %15 = vector.shape_cast %12 : vector<256x128xf32> to vector<1x256x128xf32>
    tpu.vector_store %arg5[%c0_9, %c0_10, %c0_11], %15 {strides = array<i32>} : memref<1x256x128xf32, #tpu.memory_space<vmem>>, vector<1x256x128xf32>,
    return
  }
  func.func @transform_0(%arg0: i32) -> (i32, i32, i32) {
    %c0_i32 = arith.constant 0 : i32
    %c0_i32_0 = arith.constant 0 : i32
    %c0_i32_1 = arith.constant 0 : i32
    return %arg0, %c0_i32, %c0_i32_0 : i32, i32, i32
  }
  func.func @transform_1(%arg0: i32) -> (i32, i32) {
    %c0_i32 = arith.constant 0 : i32
    %c0_i32_0 = arith.constant 0 : i32
    %c0_i32_1 = arith.constant 0 : i32
    return %c0_i32, %c0_i32_0 : i32, i32
  }
  func.func @transform_2(%arg0: i32) -> (i32, i32) {
    %c0_i32 = arith.constant 0 : i32
    %c0_i32_0 = arith.constant 0 : i32
    %c0_i32_1 = arith.constant 0 : i32
    return %c0_i32, %c0_i32_0 : i32, i32
  }
  func.func @transform_3(%arg0: i32) -> (i32, i32, i32) {
    %c0_i32 = arith.constant 0 : i32
    %c0_i32_0 = arith.constant 0 : i32
    %c0_i32_1 = arith.constant 0 : i32
    return %arg0, %c0_i32, %c0_i32_0 : i32, i32, i32
  }
  func.func @transform_4(%arg0: i32) -> (i32, i32, i32) {
    %c0_i32 = arith.constant 0 : i32
    %c0_i32_0 = arith.constant 0 : i32
    %c0_i32_1 = arith.constant 0 : i32
    return %arg0, %c0_i32, %c0_i32_0 : i32, i32, i32
  }
}

</mosaic_0001>

<llo_original>
// kernel: basic_block_forward.5
$region0: #{basic_block_forward.5}
  #allocation0 [shape = 'u32[]', space=smem, size = 0x4, offset = 0x4, fixed_abs, tag = 'smem constant byte address 0x4 - core index']
  #allocation1 [shape = 'u32[144,128]{1,0:T(1,128)}', space=vmem, size = 0x12000, scoped, tag = 'internal scratch']
  %s0 = inlined_call_operand.vmem [shape: f32[2,256,128], index: 0, kind: input, shape index: {}]
  %s1 = inlined_call_operand.vmem [shape: f32[1,128], index: 1, kind: input, shape index: {}]
  %s2 = inlined_call_operand.vmem [shape: f32[1,128], index: 2, kind: input, shape index: {}]
  %s3 = inlined_call_operand.vmem [shape: f32[2,256,128], index: 3, kind: input, shape index: {}]
  %s4 = inlined_call_operand.vmem [shape: f32[2,256,128], index: 4, kind: output, shape index: {}]
  %s5 = sld [smem:[#allocation0]]
  $region49: #{basic_block_forward.5} parent=0
    _
  %s7 = ssub.s32 1, %s5
  %s8 = scalar_select 0, %s7, %s5
  loop: start=0, step=1, limit=4
  $region2: #{basic_block_forward.5} parent=0 // loop_pre_header
    _
  $region3: #{basic_block_forward.5} parent=0 // loop_header
    %s10 = sphi 0, %s14
    %p11 = scmp.ge.s32.totalorder %s10, 4
    %s20 = sphi 0, %s22
    %s23 = sphi 0, %s20
    %s24 = sphi 0, %s23
    %s40 = sphi 0, %s24
    %s44 = sphi 0, %s44
    %s46 = sphi 0, %s44
    %s47 = sphi 0, %s46
    %s61 = sphi 0, %s47
    %s65 = sphi 0, %s65
    %s67 = sphi 0, %s65
    %s68 = sphi 0, %s67
    %s82 = sphi 0, %s68
    %s88 = sphi 0, %s90
    %s91 = sphi 0, %s88
    %s92 = sphi 0, %s91
    %s108 = sphi 0, %s92
    %s114 = sphi 0, %s116
    %s117 = sphi 0, %s114
    %s118 = sphi 0, %s117
    %s134 = sphi 0, %s118
  $region4: #{basic_block_forward.5} parent=0 // loop_header_branch
    %13 = sbr.rel (%p11) target = $region8
  $region5: #{basic_block_forward.5} parent=0 // loop_body
    %s15 = ssub.s32 %s10, 1
    %s16 = ssub.s32 %s10, 2
    %s17 = sadd.s32 %s10, 1
    %s18 = ssub.s32 %s10, %s17
    %p19 = scmp.eq.s32.totalorder %s18, 0
    %s21 = sadd.s32 %s20, 1
    %s22 = scalar_select %p19, %s20, %s21
    %p25 = pneg %p19
    %p26 = scmp.eq.s32.totalorder %s10, 1
    %p27 = por %p25, %p26
    %p28 = scmp.ne.s32.totalorder %s20, %s23
    %p29 = scmp.eq.s32.totalorder %s10, 0
    %p30 = por %p28, %p29
    %p31 = scmp.ne.s32.totalorder %s20, %s23
    %p32 = scmp.eq.s32.totalorder %s15, 1
    %p33 = por %p31, %p32
    %p34 = scmp.ne.s32.totalorder %s23, %s24
    %p35 = scmp.eq.s32.totalorder %s15, 0
    %p36 = por %p34, %p35
    %p37 = scmp.ne.s32.totalorder %s23, %s24
    %p38 = scmp.eq.s32.totalorder %s16, 1
    %p39 = por %p37, %p38
    %p41 = scmp.ne.s32.totalorder %s24, %s40
    %p42 = scmp.eq.s32.totalorder %s16, 0
    %p43 = por %p41, %p42
    %s45 = sadd.s32 %s44, 1
    %p48 = scmp.eq.s32.totalorder %s10, 1
    %p49 = scmp.ne.s32.totalorder %s44, %s46
    %p50 = scmp.eq.s32.totalorder %s10, 0
    %p51 = por %p49, %p50
    %p52 = scmp.ne.s32.totalorder %s44, %s46
    %p53 = scmp.eq.s32.totalorder %s15, 1
    %p54 = por %p52, %p53
    %p55 = scmp.ne.s32.totalorder %s46, %s47
    %p56 = scmp.eq.s32.totalorder %s15, 0
    %p57 = por %p55, %p56
    %p58 = scmp.ne.s32.totalorder %s46, %s47
    %p59 = scmp.eq.s32.totalorder %s16, 1
    %p60 = por %p58, %p59
    %p62 = scmp.ne.s32.totalorder %s47, %s61
    %p63 = scmp.eq.s32.totalorder %s16, 0
    %p64 = por %p62, %p63
    %s66 = sadd.s32 %s65, 1
    %p69 = scmp.eq.s32.totalorder %s10, 1
    %p70 = scmp.ne.s32.totalorder %s65, %s67
    %p71 = scmp.eq.s32.totalorder %s10, 0
    %p72 = por %p70, %p71
    %p73 = scmp.ne.s32.totalorder %s65, %s67
    %p74 = scmp.eq.s32.totalorder %s15, 1
    %p75 = por %p73, %p74
    %p76 = scmp.ne.s32.totalorder %s67, %s68
    %p77 = scmp.eq.s32.totalorder %s15, 0
    %p78 = por %p76, %p77
    %p79 = scmp.ne.s32.totalorder %s67, %s68
    %p80 = scmp.eq.s32.totalorder %s16, 1
    %p81 = por %p79, %p80
    %p83 = scmp.ne.s32.totalorder %s68, %s82
    %p84 = scmp.eq.s32.totalorder %s16, 0
    %p85 = por %p83, %p84
    %s86 = ssub.s32 %s10, %s17
    %p87 = scmp.eq.s32.totalorder %s86, 0
    %s89 = sadd.s32 %s88, 1
    %s90 = scalar_select %p87, %s88, %s89
    %p93 = pneg %p87
    %p94 = scmp.eq.s32.totalorder %s10, 1
    %p95 = por %p93, %p94
    %p96 = scmp.ne.s32.totalorder %s88, %s91
    %p97 = scmp.eq.s32.totalorder %s10, 0
    %p98 = por %p96, %p97
    %p99 = scmp.ne.s32.totalorder %s88, %s91
    %p100 = scmp.eq.s32.totalorder %s15, 1
    %p101 = por %p99, %p100
    %p102 = scmp.ne.s32.totalorder %s91, %s92
    %p103 = scmp.eq.s32.totalorder %s15, 0
    %p104 = por %p102, %p103
    %p105 = scmp.ne.s32.totalorder %s91, %s92
    %p106 = scmp.eq.s32.totalorder %s16, 1
    %p107 = por %p105, %p106
    %p109 = scmp.ne.s32.totalorder %s92, %s108
    %p110 = scmp.eq.s32.totalorder %s16, 0
    %p111 = por %p109, %p110
    %s112 = ssub.s32 %s10, %s17
    %p113 = scmp.eq.s32.totalorder %s112, 0
    %s115 = sadd.s32 %s114, 1
    %s116 = scalar_select %p113, %s114, %s115
    %p119 = pneg %p113
    %p120 = scmp.eq.s32.totalorder %s10, 1
    %p121 = por %p119, %p120
    %p122 = scmp.ne.s32.totalorder %s114, %s117
    %p123 = scmp.eq.s32.totalorder %s10, 0
    %p124 = por %p122, %p123
    %p125 = scmp.ne.s32.totalorder %s114, %s117
    %p126 = scmp.eq.s32.totalorder %s15, 1
    %p127 = por %p125, %p126
    %p128 = scmp.ne.s32.totalorder %s117, %s118
    %p129 = scmp.eq.s32.totalorder %s15, 0
    %p130 = por %p128, %p129
    %p131 = scmp.ne.s32.totalorder %s117, %s118
    %p132 = scmp.eq.s32.totalorder %s16, 1
    %p133 = por %p131, %p132
    %p135 = scmp.ne.s32.totalorder %s118, %s134
    %p136 = scmp.eq.s32.totalorder %s16, 0
    %p137 = por %p135, %p136
    %p138 = scmp.le.s32.totalorder 1, %s10
    %p139 = scmp.lt.s32.totalorder %s10, 3
    %p140 = pnand %p138, %p139
    %p141 = pneg %p140
    // Predicated region
    $region9: #{basic_block_forward.5} parent=5 // pred_check
      _
    $region10: #{basic_block_forward.5} parent=5 // pred_check_branch
      %143 = sbr.rel (%p140) target = $region12
    $region11: #{basic_block_forward.5} parent=5 // pred_region
      %s144 = ssub.s32 %s10, 1
      // Predicated region
      $region13: #{basic_block_forward.5} parent=11 // pred_check
        %p145 = pneg %p57
      $region14: #{basic_block_forward.5} parent=11 // pred_check_branch
        %147 = sbr.rel (%p145) target = $region16
      $region15: #{basic_block_forward.5} parent=11 // pred_region
        _
      $region16: #{basic_block_forward.5} parent=11 // pred_fallthru
        _
      // Predicated region
      $region17: #{basic_block_forward.5} parent=11 // pred_check
        %p148 = pneg %p78
      $region18: #{basic_block_forward.5} parent=11 // pred_check_branch
        %150 = sbr.rel (%p148) target = $region20
      $region19: #{basic_block_forward.5} parent=11 // pred_region
        _
      $region20: #{basic_block_forward.5} parent=11 // pred_fallthru
        _
    $region12: #{basic_block_forward.5} parent=5 // pred_fallthru
      _
    %p151 = scmp.lt.s32.totalorder %s10, 2
    // Predicated region
    $region21: #{basic_block_forward.5} parent=5 // pred_check
      %p152 = pneg %p151
    $region22: #{basic_block_forward.5} parent=5 // pred_check_branch
      %154 = sbr.rel (%p152) target = $region24
    $region23: #{basic_block_forward.5} parent=5 // pred_region
      // Predicated region
      $region25: #{basic_block_forward.5} parent=23 // pred_check
        %p155 = pneg %p30
      $region26: #{basic_block_forward.5} parent=23 // pred_check_branch
        %157 = sbr.rel (%p155) target = $region28
      $region27: #{basic_block_forward.5} parent=23 // pred_region
        %p158 = scmp.lt.s32.totalorder %s10, 1
        %s159 = scalar_select %p158, %s10, 1
        %s160 = smul.addr %s159, 32
        %s161 = smul.addr %s160, 8
        %s162 = scalar_lea.vmem %s0, %s161
      $region28: #{basic_block_forward.5} parent=23 // pred_fallthru
        _
      // Predicated region
      $region29: #{basic_block_forward.5} parent=23 // pred_check
        %p163 = pneg %p98
      $region30: #{basic_block_forward.5} parent=23 // pred_check_branch
        %165 = sbr.rel (%p163) target = $region32
      $region31: #{basic_block_forward.5} parent=23 // pred_region
        %p166 = scmp.lt.s32.totalorder %s10, 1
        %s167 = scalar_select %p166, %s10, 1
        %s168 = smul.addr %s167, 32
        %s169 = smul.addr %s168, 8
        %s170 = scalar_lea.vmem %s3, %s169
      $region32: #{basic_block_forward.5} parent=23 // pred_fallthru
        _
    $region24: #{basic_block_forward.5} parent=5 // pred_fallthru
      _
    %p171 = scmp.le.s32.totalorder 1, %s10
    %p172 = scmp.lt.s32.totalorder %s10, 3
    %p173 = pnand %p171, %p172
    %p174 = pneg %p173
    // Predicated region
    $region33: #{basic_block_forward.5} parent=5 // pred_check
      _
    $region34: #{basic_block_forward.5} parent=5 // pred_check_branch
      %176 = sbr.rel (%p173) target = $region36
    $region35: #{basic_block_forward.5} parent=5 // pred_region
      %s177 = ssub.s32 %s10, 1
      %p178 = scmp.lt.s32.totalorder %s15, 1
      %s179 = scalar_select %p178, %s15, 1
      %s180 = smul.addr %s179, 32
      %s181 = smul.addr %s180, 8
      %s182 = scalar_lea.vmem %s0, %s181
      %p183 = pneg %p36
      %p184 = pneg %p33
      %p185 = pneg %p57
      %p186 = pneg %p54
      %p187 = pneg %p78
      %p188 = pneg %p75
      %p189 = scmp.lt.s32.totalorder %s15, 1
      %s190 = scalar_select %p189, %s15, 1
      %s191 = smul.addr %s190, 32
      %s192 = smul.addr %s191, 8
      %s193 = scalar_lea.vmem %s3, %s192
      %p194 = pneg %p104
      %p195 = pneg %p101
      %p196 = pneg %p130
      %p197 = pneg %p127
      %p198 = scmp.lt.s32.totalorder %s15, 1
      %s199 = scalar_select %p198, %s15, 1
      %s200 = smul.addr %s199, 32
      %s201 = smul.addr %s200, 8
      %s202 = scalar_lea.vmem %s4, %s201
      %p203 = scmp.lt.s32.totalorder %s15, 1
      %s204 = scalar_select %p203, %s15, 1
      %s205 = smul.addr %s204, 32
      %s206 = smul.addr %s205, 8
      %s207 = scalar_lea.vmem %s0, %s206
      %p208 = scmp.lt.s32.totalorder %s15, 1
      %s209 = scalar_select %p208, %s15, 1
      %s210 = smul.addr %s209, 32
      %s211 = smul.addr %s210, 8
      %s212 = scalar_lea.vmem %s3, %s211
      %p213 = scmp.lt.s32.totalorder %s15, 1
      %s214 = scalar_select %p213, %s15, 1
      %s215 = smul.addr %s214, 32
      %s216 = smul.addr %s215, 8
      %s217 = scalar_lea.vmem %s4, %s216
      %v218 = vld [vmem:[%s207] sm:$0xff]
      %v219 = vld [vmem:[%s207 + $0x8] sm:$0xff]
      %v220 = vld [vmem:[%s207 + $0x10] sm:$0xff]
      %v221 = vld [vmem:[%s207 + $0x18] sm:$0xff]
      %v222 = vld [vmem:[%s207 + $0x20] sm:$0xff]
      %v223 = vld [vmem:[%s207 + $0x28] sm:$0xff]
      %v224 = vld [vmem:[%s207 + $0x30] sm:$0xff]
      %v225 = vld [vmem:[%s207 + $0x38] sm:$0xff]
      %v226 = vld [vmem:[%s207 + $0x40] sm:$0xff]
      %v227 = vld [vmem:[%s207 + $0x48] sm:$0xff]
      %v228 = vld [vmem:[%s207 + $0x50] sm:$0xff]
      %v229 = vld [vmem:[%s207 + $0x58] sm:$0xff]
      %v230 = vld [vmem:[%s207 + $0x60] sm:$0xff]
      %v231 = vld [vmem:[%s207 + $0x68] sm:$0xff]
      %v232 = vld [vmem:[%s207 + $0x70] sm:$0xff]
      %v233 = vld [vmem:[%s207 + $0x78] sm:$0xff]
      %v234 = vld [vmem:[%s207 + $0x80] sm:$0xff]
      %v235 = vld [vmem:[%s207 + $0x88] sm:$0xff]
      %v236 = vld [vmem:[%s207 + $0x90] sm:$0xff]
      %v237 = vld [vmem:[%s207 + $0x98] sm:$0xff]
      %v238 = vld [vmem:[%s207 + $0xa0] sm:$0xff]
      %v239 = vld [vmem:[%s207 + $0xa8] sm:$0xff]
      %v240 = vld [vmem:[%s207 + $0xb0] sm:$0xff]
      %v241 = vld [vmem:[%s207 + $0xb8] sm:$0xff]
      %v242 = vld [vmem:[%s207 + $0xc0] sm:$0xff]
      %v243 = vld [vmem:[%s207 + $0xc8] sm:$0xff]
      %v244 = vld [vmem:[%s207 + $0xd0] sm:$0xff]
      %v245 = vld [vmem:[%s207 + $0xd8] sm:$0xff]
      %v246 = vld [vmem:[%s207 + $0xe0] sm:$0xff]
      %v247 = vld [vmem:[%s207 + $0xe8] sm:$0xff]
      %v248 = vld [vmem:[%s207 + $0xf0] sm:$0xff]
      %v249 = vld [vmem:[%s207 + $0xf8] sm:$0xff]
      %v250 = vld [vmem:[%s1] sm:$0x1]
      %v252 = vlaneseq
      %v253 = vshrl.u32 %v252, 7
      %v254 = vsub.s32 0, %v253
      %v255 = vrot.slane %v250, %v254
      %v257 = vmul.f32 %v218, %v255
      %v258 = vmul.f32 %v219, %v255
      %v259 = vmul.f32 %v220, %v255
      %v260 = vmul.f32 %v221, %v255
      %v261 = vmul.f32 %v222, %v255
      %v262 = vmul.f32 %v223, %v255
      %v263 = vmul.f32 %v224, %v255
      %v264 = vmul.f32 %v225, %v255
      %v265 = vmul.f32 %v226, %v255
      %v266 = vmul.f32 %v227, %v255
      %v267 = vmul.f32 %v228, %v255
      %v268 = vmul.f32 %v229, %v255
      %v269 = vmul.f32 %v230, %v255
      %v270 = vmul.f32 %v231, %v255
      %v271 = vmul.f32 %v232, %v255
      %v272 = vmul.f32 %v233, %v255
      %v273 = vmul.f32 %v234, %v255
      %v274 = vmul.f32 %v235, %v255
      %v275 = vmul.f32 %v236, %v255
      %v276 = vmul.f32 %v237, %v255
      %v277 = vmul.f32 %v238, %v255
      %v278 = vmul.f32 %v239, %v255
      %v279 = vmul.f32 %v240, %v255
      %v280 = vmul.f32 %v241, %v255
      %v281 = vmul.f32 %v242, %v255
      %v282 = vmul.f32 %v243, %v255
      %v283 = vmul.f32 %v244, %v255
      %v284 = vmul.f32 %v245, %v255
      %v285 = vmul.f32 %v246, %v255
      %v286 = vmul.f32 %v247, %v255
      %v287 = vmul.f32 %v248, %v255
      %v288 = vmul.f32 %v249, %v255
      %v289 = vld [vmem:[%s2] sm:$0x1]
      %v291 = vlaneseq
      %v292 = vshrl.u32 %v291, 7
      %v293 = vsub.s32 0, %v292
      %v294 = vrot.slane %v289, %v293
      %v296 = vadd.f32 %v257, %v294
      %v297 = vadd.f32 %v258, %v294
      %v298 = vadd.f32 %v259, %v294
      %v299 = vadd.f32 %v260, %v294
      %v300 = vadd.f32 %v261, %v294
      %v301 = vadd.f32 %v262, %v294
      %v302 = vadd.f32 %v263, %v294
      %v303 = vadd.f32 %v264, %v294
      %v304 = vadd.f32 %v265, %v294
      %v305 = vadd.f32 %v266, %v294
      %v306 = vadd.f32 %v267, %v294
      %v307 = vadd.f32 %v268, %v294
      %v308 = vadd.f32 %v269, %v294
      %v309 = vadd.f32 %v270, %v294
      %v310 = vadd.f32 %v271, %v294
      %v311 = vadd.f32 %v272, %v294
      %v312 = vadd.f32 %v273, %v294
      %v313 = vadd.f32 %v274, %v294
      %v314 = vadd.f32 %v275, %v294
      %v315 = vadd.f32 %v276, %v294
      %v316 = vadd.f32 %v277, %v294
      %v317 = vadd.f32 %v278, %v294
      %v318 = vadd.f32 %v279, %v294
      %v319 = vadd.f32 %v280, %v294
      %v320 = vadd.f32 %v281, %v294
      %v321 = vadd.f32 %v282, %v294
      %v322 = vadd.f32 %v283, %v294
      %v323 = vadd.f32 %v284, %v294
      %v324 = vadd.f32 %v285, %v294
      %v325 = vadd.f32 %v286, %v294
      %v326 = vadd.f32 %v287, %v294
      %v327 = vadd.f32 %v288, %v294
      %v328 = vld [vmem:[%s212] sm:$0xff]
      %v329 = vld [vmem:[%s212 + $0x8] sm:$0xff]
      %v330 = vld [vmem:[%s212 + $0x10] sm:$0xff]
      %v331 = vld [vmem:[%s212 + $0x18] sm:$0xff]
      %v332 = vld [vmem:[%s212 + $0x20] sm:$0xff]
      %v333 = vld [vmem:[%s212 + $0x28] sm:$0xff]
      %v334 = vld [vmem:[%s212 + $0x30] sm:$0xff]
      %v335 = vld [vmem:[%s212 + $0x38] sm:$0xff]
      %v336 = vld [vmem:[%s212 + $0x40] sm:$0xff]
      %v337 = vld [vmem:[%s212 + $0x48] sm:$0xff]
      %v338 = vld [vmem:[%s212 + $0x50] sm:$0xff]
      %v339 = vld [vmem:[%s212 + $0x58] sm:$0xff]
      %v340 = vld [vmem:[%s212 + $0x60] sm:$0xff]
      %v341 = vld [vmem:[%s212 + $0x68] sm:$0xff]
      %v342 = vld [vmem:[%s212 + $0x70] sm:$0xff]
      %v343 = vld [vmem:[%s212 + $0x78] sm:$0xff]
      %v344 = vld [vmem:[%s212 + $0x80] sm:$0xff]
      %v345 = vld [vmem:[%s212 + $0x88] sm:$0xff]
      %v346 = vld [vmem:[%s212 + $0x90] sm:$0xff]
      %v347 = vld [vmem:[%s212 + $0x98] sm:$0xff]
      %v348 = vld [vmem:[%s212 + $0xa0] sm:$0xff]
      %v349 = vld [vmem:[%s212 + $0xa8] sm:$0xff]
      %v350 = vld [vmem:[%s212 + $0xb0] sm:$0xff]
      %v351 = vld [vmem:[%s212 + $0xb8] sm:$0xff]
      %v352 = vld [vmem:[%s212 + $0xc0] sm:$0xff]
      %v353 = vld [vmem:[%s212 + $0xc8] sm:$0xff]
      %v354 = vld [vmem:[%s212 + $0xd0] sm:$0xff]
      %v355 = vld [vmem:[%s212 + $0xd8] sm:$0xff]
      %v356 = vld [vmem:[%s212 + $0xe0] sm:$0xff]
      %v357 = vld [vmem:[%s212 + $0xe8] sm:$0xff]
      %v358 = vld [vmem:[%s212 + $0xf0] sm:$0xff]
      %v359 = vld [vmem:[%s212 + $0xf8] sm:$0xff]
      %v360 = vadd.f32 %v296, %v328
      %v361 = vadd.f32 %v297, %v329
      %v362 = vadd.f32 %v298, %v330
      %v363 = vadd.f32 %v299, %v331
      %v364 = vadd.f32 %v300, %v332
      %v365 = vadd.f32 %v301, %v333
      %v366 = vadd.f32 %v302, %v334
      %v367 = vadd.f32 %v303, %v335
      %v368 = vadd.f32 %v304, %v336
      %v369 = vadd.f32 %v305, %v337
      %v370 = vadd.f32 %v306, %v338
      %v371 = vadd.f32 %v307, %v339
      %v372 = vadd.f32 %v308, %v340
      %v373 = vadd.f32 %v309, %v341
      %v374 = vadd.f32 %v310, %v342
      %v375 = vadd.f32 %v311, %v343
      %v376 = vadd.f32 %v312, %v344
      %v377 = vadd.f32 %v313, %v345
      %v378 = vadd.f32 %v314, %v346
      %v379 = vadd.f32 %v315, %v347
      %v380 = vadd.f32 %v316, %v348
      %v381 = vadd.f32 %v317, %v349
      %v382 = vadd.f32 %v318, %v350
      %v383 = vadd.f32 %v319, %v351
      %v384 = vadd.f32 %v320, %v352
      %v385 = vadd.f32 %v321, %v353
      %v386 = vadd.f32 %v322, %v354
      %v387 = vadd.f32 %v323, %v355
      %v388 = vadd.f32 %v324, %v356
      %v389 = vadd.f32 %v325, %v357
      %v390 = vadd.f32 %v326, %v358
      %v391 = vadd.f32 %v327, %v359
      %v392 = vmax.f32 %v360, 0.0
      %v393 = vmax.f32 %v361, 0.0
      %v394 = vmax.f32 %v362, 0.0
      %v395 = vmax.f32 %v363, 0.0
      %v396 = vmax.f32 %v364, 0.0
      %v397 = vmax.f32 %v365, 0.0
      %v398 = vmax.f32 %v366, 0.0
      %v399 = vmax.f32 %v367, 0.0
      %v400 = vmax.f32 %v368, 0.0
      %v401 = vmax.f32 %v369, 0.0
      %v402 = vmax.f32 %v370, 0.0
      %v403 = vmax.f32 %v371, 0.0
      %v404 = vmax.f32 %v372, 0.0
      %v405 = vmax.f32 %v373, 0.0
      %v406 = vmax.f32 %v374, 0.0
      %v407 = vmax.f32 %v375, 0.0
      %v408 = vmax.f32 %v376, 0.0
      %v409 = vmax.f32 %v377, 0.0
      %v410 = vmax.f32 %v378, 0.0
      %v411 = vmax.f32 %v379, 0.0
      %v412 = vmax.f32 %v380, 0.0
      %v413 = vmax.f32 %v381, 0.0
      %v414 = vmax.f32 %v382, 0.0
      %v415 = vmax.f32 %v383, 0.0
      %v416 = vmax.f32 %v384, 0.0
      %v417 = vmax.f32 %v385, 0.0
      %v418 = vmax.f32 %v386, 0.0
      %v419 = vmax.f32 %v387, 0.0
      %v420 = vmax.f32 %v388, 0.0
      %v421 = vmax.f32 %v389, 0.0
      %v422 = vmax.f32 %v390, 0.0
      %v423 = vmax.f32 %v391, 0.0
      %424 = vst [vmem:[%s217] sm:$0xff] %v392
      %425 = vst [vmem:[%s217 + $0x8] sm:$0xff] %v393
      %426 = vst [vmem:[%s217 + $0x10] sm:$0xff] %v394
      %427 = vst [vmem:[%s217 + $0x18] sm:$0xff] %v395
      %428 = vst [vmem:[%s217 + $0x20] sm:$0xff] %v396
      %429 = vst [vmem:[%s217 + $0x28] sm:$0xff] %v397
      %430 = vst [vmem:[%s217 + $0x30] sm:$0xff] %v398
      %431 = vst [vmem:[%s217 + $0x38] sm:$0xff] %v399
      %432 = vst [vmem:[%s217 + $0x40] sm:$0xff] %v400
      %433 = vst [vmem:[%s217 + $0x48] sm:$0xff] %v401
      %434 = vst [vmem:[%s217 + $0x50] sm:$0xff] %v402
      %435 = vst [vmem:[%s217 + $0x58] sm:$0xff] %v403
      %436 = vst [vmem:[%s217 + $0x60] sm:$0xff] %v404
      %437 = vst [vmem:[%s217 + $0x68] sm:$0xff] %v405
      %438 = vst [vmem:[%s217 + $0x70] sm:$0xff] %v406
      %439 = vst [vmem:[%s217 + $0x78] sm:$0xff] %v407
      %440 = vst [vmem:[%s217 + $0x80] sm:$0xff] %v408
      %441 = vst [vmem:[%s217 + $0x88] sm:$0xff] %v409
      %442 = vst [vmem:[%s217 + $0x90] sm:$0xff] %v410
      %443 = vst [vmem:[%s217 + $0x98] sm:$0xff] %v411
      %444 = vst [vmem:[%s217 + $0xa0] sm:$0xff] %v412
      %445 = vst [vmem:[%s217 + $0xa8] sm:$0xff] %v413
      %446 = vst [vmem:[%s217 + $0xb0] sm:$0xff] %v414
      %447 = vst [vmem:[%s217 + $0xb8] sm:$0xff] %v415
      %448 = vst [vmem:[%s217 + $0xc0] sm:$0xff] %v416
      %449 = vst [vmem:[%s217 + $0xc8] sm:$0xff] %v417
      %450 = vst [vmem:[%s217 + $0xd0] sm:$0xff] %v418
      %451 = vst [vmem:[%s217 + $0xd8] sm:$0xff] %v419
      %452 = vst [vmem:[%s217 + $0xe0] sm:$0xff] %v420
      %453 = vst [vmem:[%s217 + $0xe8] sm:$0xff] %v421
      %454 = vst [vmem:[%s217 + $0xf0] sm:$0xff] %v422
      %455 = vst [vmem:[%s217 + $0xf8] sm:$0xff] %v423
      %p456 = scmp.lt.s32.totalorder %s15, 1
      %s457 = scalar_select %p456, %s15, 1
      %s458 = smul.addr %s457, 32
      %s459 = smul.addr %s458, 8
      %s460 = scalar_lea.vmem %s4, %s459
      // Predicated region
      $region37: #{basic_block_forward.5} parent=35 // pred_check
        %p461 = pneg %p127
      $region38: #{basic_block_forward.5} parent=35 // pred_check_branch
        %463 = sbr.rel (%p461) target = $region40
      $region39: #{basic_block_forward.5} parent=35 // pred_region
        _
      $region40: #{basic_block_forward.5} parent=35 // pred_fallthru
        _
    $region36: #{basic_block_forward.5} parent=5 // pred_fallthru
      _
    %p464 = scmp.le.s32.totalorder 2, %s10
    // Predicated region
    $region41: #{basic_block_forward.5} parent=5 // pred_check
      %p465 = pneg %p464
    $region42: #{basic_block_forward.5} parent=5 // pred_check_branch
      %467 = sbr.rel (%p465) target = $region44
    $region43: #{basic_block_forward.5} parent=5 // pred_region
      %s468 = ssub.s32 %s10, 2
      // Predicated region
      $region45: #{basic_block_forward.5} parent=43 // pred_check
        %p469 = pneg %p133
      $region46: #{basic_block_forward.5} parent=43 // pred_check_branch
        %471 = sbr.rel (%p469) target = $region48
      $region47: #{basic_block_forward.5} parent=43 // pred_region
        %p472 = scmp.lt.s32.totalorder %s16, 1
        %s473 = scalar_select %p472, %s16, 1
        %s474 = smul.addr %s473, 32
        %s475 = smul.addr %s474, 8
        %s476 = scalar_lea.vmem %s4, %s475
      $region48: #{basic_block_forward.5} parent=43 // pred_fallthru
        _
    $region44: #{basic_block_forward.5} parent=5 // pred_fallthru
      _
  $region6: #{basic_block_forward.5} parent=0 // loop_footer
    %s14 = sadd.s32 1, %s10
  $region7: #{basic_block_forward.5} parent=0 // loop_footer_branch
    %9 = sbr.rel target = $region3
  $region8: #{basic_block_forward.5} parent=0 // loop_exit
    _

// kernel: basic_block_forward.3
$region0: #{basic_block_forward.3}
  #allocation0 [shape = 'u32[]', space=smem, size = 0x4, offset = 0x4, fixed_abs, tag = 'smem constant byte address 0x4 - core index']
  #allocation1 [shape = 'u32[144,128]{1,0:T(1,128)}', space=vmem, size = 0x12000, scoped, tag = 'internal scratch']
  #allocation2 [shape = 'bf16[18,18,128]{2,1,0:T(8,128)(2,1)}', space=vmem, size = 0x1b000, scoped, tag = 'scratch operand']
  #allocation3 [shape = 'bf16[256,1152]{1,0:T(16,128)(2,1)}', space=vmem, size = 0x90000, scoped, tag = 'scratch operand']
  %s0 = inlined_call_operand.vmem [shape: f32[2,256,128], index: 0, kind: input, shape index: {}]
  %s1 = inlined_call_operand.vmem [shape: bf16[1152,128], index: 1, kind: input, shape index: {}]
  %s2 = inlined_call_operand.vmem [shape: f32[2,256,128], index: 2, kind: output, shape index: {0}]
  %s3 = inlined_call_operand.vmem [shape: f32[2,2,128], index: 3, kind: output, shape index: {1}]
  %4 = xla_tuple %s2, %s3
  %s5 = sld [smem:[#allocation0]]
  $region49: #{basic_block_forward.3} parent=0
    _
  %s7 = ssub.s32 1, %s5
  %s8 = scalar_select 0, %s7, %s5
  loop: start=0, step=1, limit=4
  $region2: #{basic_block_forward.3} parent=0 // loop_pre_header
    _
  $region3: #{basic_block_forward.3} parent=0 // loop_header
    %s10 = sphi 0, %s14
    %p11 = scmp.ge.s32.totalorder %s10, 4
    %s20 = sphi 0, %s22
    %s23 = sphi 0, %s20
    %s24 = sphi 0, %s23
    %s40 = sphi 0, %s24
    %s44 = sphi 0, %s44
    %s46 = sphi 0, %s44
    %s47 = sphi 0, %s46
    %s61 = sphi 0, %s47
    %s67 = sphi 0, %s69
    %s70 = sphi 0, %s67
    %s71 = sphi 0, %s70
    %s87 = sphi 0, %s71
    %s93 = sphi 0, %s95
    %s96 = sphi 0, %s93
    %s97 = sphi 0, %s96
    %s113 = sphi 0, %s97
  $region4: #{basic_block_forward.3} parent=0 // loop_header_branch
    %13 = sbr.rel (%p11) target = $region8
  $region5: #{basic_block_forward.3} parent=0 // loop_body
    %s15 = ssub.s32 %s10, 1
    %s16 = ssub.s32 %s10, 2
    %s17 = sadd.s32 %s10, 1
    %s18 = ssub.s32 %s10, %s17
    %p19 = scmp.eq.s32.totalorder %s18, 0
    %s21 = sadd.s32 %s20, 1
    %s22 = scalar_select %p19, %s20, %s21
    %p25 = pneg %p19
    %p26 = scmp.eq.s32.totalorder %s10, 1
    %p27 = por %p25, %p26
    %p28 = scmp.ne.s32.totalorder %s20, %s23
    %p29 = scmp.eq.s32.totalorder %s10, 0
    %p30 = por %p28, %p29
    %p31 = scmp.ne.s32.totalorder %s20, %s23
    %p32 = scmp.eq.s32.totalorder %s15, 1
    %p33 = por %p31, %p32
    %p34 = scmp.ne.s32.totalorder %s23, %s24
    %p35 = scmp.eq.s32.totalorder %s15, 0
    %p36 = por %p34, %p35
    %p37 = scmp.ne.s32.totalorder %s23, %s24
    %p38 = scmp.eq.s32.totalorder %s16, 1
    %p39 = por %p37, %p38
    %p41 = scmp.ne.s32.totalorder %s24, %s40
    %p42 = scmp.eq.s32.totalorder %s16, 0
    %p43 = por %p41, %p42
    %s45 = sadd.s32 %s44, 1
    %p48 = scmp.eq.s32.totalorder %s10, 1
    %p49 = scmp.ne.s32.totalorder %s44, %s46
    %p50 = scmp.eq.s32.totalorder %s10, 0
    %p51 = por %p49, %p50
    %p52 = scmp.ne.s32.totalorder %s44, %s46
    %p53 = scmp.eq.s32.totalorder %s15, 1
    %p54 = por %p52, %p53
    %p55 = scmp.ne.s32.totalorder %s46, %s47
    %p56 = scmp.eq.s32.totalorder %s15, 0
    %p57 = por %p55, %p56
    %p58 = scmp.ne.s32.totalorder %s46, %s47
    %p59 = scmp.eq.s32.totalorder %s16, 1
    %p60 = por %p58, %p59
    %p62 = scmp.ne.s32.totalorder %s47, %s61
    %p63 = scmp.eq.s32.totalorder %s16, 0
    %p64 = por %p62, %p63
    %s65 = ssub.s32 %s10, %s17
    %p66 = scmp.eq.s32.totalorder %s65, 0
    %s68 = sadd.s32 %s67, 1
    %s69 = scalar_select %p66, %s67, %s68
    %p72 = pneg %p66
    %p73 = scmp.eq.s32.totalorder %s10, 1
    %p74 = por %p72, %p73
    %p75 = scmp.ne.s32.totalorder %s67, %s70
    %p76 = scmp.eq.s32.totalorder %s10, 0
    %p77 = por %p75, %p76
    %p78 = scmp.ne.s32.totalorder %s67, %s70
    %p79 = scmp.eq.s32.totalorder %s15, 1
    %p80 = por %p78, %p79
    %p81 = scmp.ne.s32.totalorder %s70, %s71
    %p82 = scmp.eq.s32.totalorder %s15, 0
    %p83 = por %p81, %p82
    %p84 = scmp.ne.s32.totalorder %s70, %s71
    %p85 = scmp.eq.s32.totalorder %s16, 1
    %p86 = por %p84, %p85
    %p88 = scmp.ne.s32.totalorder %s71, %s87
    %p89 = scmp.eq.s32.totalorder %s16, 0
    %p90 = por %p88, %p89
    %s91 = ssub.s32 %s10, %s17
    %p92 = scmp.eq.s32.totalorder %s91, 0
    %s94 = sadd.s32 %s93, 1
    %s95 = scalar_select %p92, %s93, %s94
    %p98 = pneg %p92
    %p99 = scmp.eq.s32.totalorder %s10, 1
    %p100 = por %p98, %p99
    %p101 = scmp.ne.s32.totalorder %s93, %s96
    %p102 = scmp.eq.s32.totalorder %s10, 0
    %p103 = por %p101, %p102
    %p104 = scmp.ne.s32.totalorder %s93, %s96
    %p105 = scmp.eq.s32.totalorder %s15, 1
    %p106 = por %p104, %p105
    %p107 = scmp.ne.s32.totalorder %s96, %s97
    %p108 = scmp.eq.s32.totalorder %s15, 0
    %p109 = por %p107, %p108
    %p110 = scmp.ne.s32.totalorder %s96, %s97
    %p111 = scmp.eq.s32.totalorder %s16, 1
    %p112 = por %p110, %p111
    %p114 = scmp.ne.s32.totalorder %s97, %s113
    %p115 = scmp.eq.s32.totalorder %s16, 0
    %p116 = por %p114, %p115
    %p117 = scmp.le.s32.totalorder 1, %s10
    %p118 = scmp.lt.s32.totalorder %s10, 3
    %p119 = pnand %p117, %p118
    %p120 = pneg %p119
    // Predicated region
    $region9: #{basic_block_forward.3} parent=5 // pred_check
      _
    $region10: #{basic_block_forward.3} parent=5 // pred_check_branch
      %122 = sbr.rel (%p119) target = $region12
    $region11: #{basic_block_forward.3} parent=5 // pred_region
      %s123 = ssub.s32 %s10, 1
      // Predicated region
      $region13: #{basic_block_forward.3} parent=11 // pred_check
        %p124 = pneg %p57
      $region14: #{basic_block_forward.3} parent=11 // pred_check_branch
        %126 = sbr.rel (%p124) target = $region16
      $region15: #{basic_block_forward.3} parent=11 // pred_region
        _
      $region16: #{basic_block_forward.3} parent=11 // pred_fallthru
        _
    $region12: #{basic_block_forward.3} parent=5 // pred_fallthru
      _
    %p127 = scmp.lt.s32.totalorder %s10, 2
    // Predicated region
    $region17: #{basic_block_forward.3} parent=5 // pred_check
      %p128 = pneg %p127
    $region18: #{basic_block_forward.3} parent=5 // pred_check_branch
      %130 = sbr.rel (%p128) target = $region20
    $region19: #{basic_block_forward.3} parent=5 // pred_region
      // Predicated region
      $region21: #{basic_block_forward.3} parent=19 // pred_check
        %p131 = pneg %p30
      $region22: #{basic_block_forward.3} parent=19 // pred_check_branch
        %133 = sbr.rel (%p131) target = $region24
      $region23: #{basic_block_forward.3} parent=19 // pred_region
        %p134 = scmp.lt.s32.totalorder %s10, 1
        %s135 = scalar_select %p134, %s10, 1
        %s136 = smul.addr %s135, 32
        %s137 = smul.addr %s136, 8
        %s138 = scalar_lea.vmem %s0, %s137
      $region24: #{basic_block_forward.3} parent=19 // pred_fallthru
        _
    $region20: #{basic_block_forward.3} parent=5 // pred_fallthru
      _
    %p139 = scmp.le.s32.totalorder 1, %s10
    %p140 = scmp.lt.s32.totalorder %s10, 3
    %p141 = pnand %p139, %p140
    %p142 = pneg %p141
    // Predicated region
    $region25: #{basic_block_forward.3} parent=5 // pred_check
      _
    $region26: #{basic_block_forward.3} parent=5 // pred_check_branch
      %144 = sbr.rel (%p141) target = $region28
    $region27: #{basic_block_forward.3} parent=5 // pred_region
      %s145 = ssub.s32 %s10, 1
      %p146 = scmp.lt.s32.totalorder %s15, 1
      %s147 = scalar_select %p146, %s15, 1
      %s148 = smul.addr %s147, 32
      %s149 = smul.addr %s148, 8
      %s150 = scalar_lea.vmem %s0, %s149
      %p151 = pneg %p36
      %p152 = pneg %p33
      %p153 = pneg %p57
      %p154 = pneg %p54
      %p155 = pneg %p83
      %p156 = pneg %p80
      %p157 = scmp.lt.s32.totalorder %s15, 1
      %s158 = scalar_select %p157, %s15, 1
      %s159 = smul.addr %s158, 32
      %s160 = smul.addr %s159, 8
      %s161 = scalar_lea.vmem %s2, %s160
      %p162 = pneg %p109
      %p163 = pneg %p106
      %p164 = scmp.lt.s32.totalorder %s15, 1
      %s165 = scalar_select %p164, %s15, 1
      %s166 = smul.addr %s165, 2
      %s167 = scalar_lea.vmem %s3, %s166
      %p168 = scmp.lt.s32.totalorder %s15, 1
      %s169 = scalar_select %p168, %s15, 1
      %s170 = smul.addr %s169, 32
      %s171 = smul.addr %s170, 8
      %s172 = scalar_lea.vmem %s0, %s171
      %p173 = scmp.lt.s32.totalorder %s15, 1
      %s174 = scalar_select %p173, %s15, 1
      %s175 = smul.addr %s174, 32
      %s176 = smul.addr %s175, 8
      %s177 = scalar_lea.vmem %s2, %s176
      %p178 = scmp.lt.s32.totalorder %s15, 1
      %s179 = scalar_select %p178, %s15, 1
      %s180 = smul.addr %s179, 2
      %s181 = scalar_lea.vmem %s3, %s180
      %v183 = vld [vmem:[%s172] sm:$0xff]
      %v184 = vld [vmem:[%s172 + $0x8] sm:$0xff]
      %v185 = vld [vmem:[%s172 + $0x10] sm:$0xff]
      %v186 = vld [vmem:[%s172 + $0x18] sm:$0xff]
      %v187 = vld [vmem:[%s172 + $0x20] sm:$0xff]
      %v188 = vld [vmem:[%s172 + $0x28] sm:$0xff]
      %v189 = vld [vmem:[%s172 + $0x30] sm:$0xff]
      %v190 = vld [vmem:[%s172 + $0x38] sm:$0xff]
      %v191 = vld [vmem:[%s172 + $0x40] sm:$0xff]
      %v192 = vld [vmem:[%s172 + $0x48] sm:$0xff]
      %v193 = vld [vmem:[%s172 + $0x50] sm:$0xff]
      %v194 = vld [vmem:[%s172 + $0x58] sm:$0xff]
      %v195 = vld [vmem:[%s172 + $0x60] sm:$0xff]
      %v196 = vld [vmem:[%s172 + $0x68] sm:$0xff]
      %v197 = vld [vmem:[%s172 + $0x70] sm:$0xff]
      %v198 = vld [vmem:[%s172 + $0x78] sm:$0xff]
      %v199 = vld [vmem:[%s172 + $0x80] sm:$0xff]
      %v200 = vld [vmem:[%s172 + $0x88] sm:$0xff]
      %v201 = vld [vmem:[%s172 + $0x90] sm:$0xff]
      %v202 = vld [vmem:[%s172 + $0x98] sm:$0xff]
      %v203 = vld [vmem:[%s172 + $0xa0] sm:$0xff]
      %v204 = vld [vmem:[%s172 + $0xa8] sm:$0xff]
      %v205 = vld [vmem:[%s172 + $0xb0] sm:$0xff]
      %v206 = vld [vmem:[%s172 + $0xb8] sm:$0xff]
      %v207 = vld [vmem:[%s172 + $0xc0] sm:$0xff]
      %v208 = vld [vmem:[%s172 + $0xc8] sm:$0xff]
      %v209 = vld [vmem:[%s172 + $0xd0] sm:$0xff]
      %v210 = vld [vmem:[%s172 + $0xd8] sm:$0xff]
      %v211 = vld [vmem:[%s172 + $0xe0] sm:$0xff]
      %v212 = vld [vmem:[%s172 + $0xe8] sm:$0xff]
      %v213 = vld [vmem:[%s172 + $0xf0] sm:$0xff]
      %v214 = vld [vmem:[%s172 + $0xf8] sm:$0xff]
      %215 = vst [vmem:[#allocation2] sm:$0xf] 0
      %216 = vst [vmem:[#allocation2 + $0x4] sm:$0xf] 0
      %217 = vst [vmem:[#allocation2 + $0x8] sm:$0x1] 0
      %218 = vst [vmem:[#allocation2 + $0xc] sm:$0xf] 0
      %219 = vst [vmem:[#allocation2 + $0x10] sm:$0xf] 0
      %220 = vst [vmem:[#allocation2 + $0x14] sm:$0x1] 0
      %221 = vst [vmem:[#allocation2 + $0x18] sm:$0xf] 0
      %222 = vst [vmem:[#allocation2 + $0x1c] sm:$0xf] 0
      %223 = vst [vmem:[#allocation2 + $0x20] sm:$0x1] 0
      %224 = vst [vmem:[#allocation2 + $0x24] sm:$0xf] 0
      %225 = vst [vmem:[#allocation2 + $0x28] sm:$0xf] 0
      %226 = vst [vmem:[#allocation2 + $0x2c] sm:$0x1] 0
      %227 = vst [vmem:[#allocation2 + $0x30] sm:$0xf] 0
      %228 = vst [vmem:[#allocation2 + $0x34] sm:$0xf] 0
      %229 = vst [vmem:[#allocation2 + $0x38] sm:$0x1] 0
      %230 = vst [vmem:[#allocation2 + $0x3c] sm:$0xf] 0
      %231 = vst [vmem:[#allocation2 + $0x40] sm:$0xf] 0
      %232 = vst [vmem:[#allocation2 + $0x44] sm:$0x1] 0
      %233 = vst [vmem:[#allocation2 + $0x48] sm:$0xf] 0
      %234 = vst [vmem:[#allocation2 + $0x4c] sm:$0xf] 0
      %235 = vst [vmem:[#allocation2 + $0x50] sm:$0x1] 0
      %236 = vst [vmem:[#allocation2 + $0x54] sm:$0xf] 0
      %237 = vst [vmem:[#allocation2 + $0x58] sm:$0xf] 0
      %238 = vst [vmem:[#allocation2 + $0x5c] sm:$0x1] 0
      %239 = vst [vmem:[#allocation2 + $0x60] sm:$0xf] 0
      %240 = vst [vmem:[#allocation2 + $0x64] sm:$0xf] 0
      %241 = vst [vmem:[#allocation2 + $0x68] sm:$0x1] 0
      %242 = vst [vmem:[#allocation2 + $0x6c] sm:$0xf] 0
      %243 = vst [vmem:[#allocation2 + $0x70] sm:$0xf] 0
      %244 = vst [vmem:[#allocation2 + $0x74] sm:$0x1] 0
      %245 = vst [vmem:[#allocation2 + $0x78] sm:$0xf] 0
      %246 = vst [vmem:[#allocation2 + $0x7c] sm:$0xf] 0
      %247 = vst [vmem:[#allocation2 + $0x80] sm:$0x1] 0
      %248 = vst [vmem:[#allocation2 + $0x84] sm:$0xf] 0
      %249 = vst [vmem:[#allocation2 + $0x88] sm:$0xf] 0
      %250 = vst [vmem:[#allocation2 + $0x8c] sm:$0x1] 0
      %251 = vst [vmem:[#allocation2 + $0x90] sm:$0xf] 0
      %252 = vst [vmem:[#allocation2 + $0x94] sm:$0xf] 0
      %253 = vst [vmem:[#allocation2 + $0x98] sm:$0x1] 0
      %254 = vst [vmem:[#allocation2 + $0x9c] sm:$0xf] 0
      %255 = vst [vmem:[#allocation2 + $0xa0] sm:$0xf] 0
      %256 = vst [vmem:[#allocation2 + $0xa4] sm:$0x1] 0
      %257 = vst [vmem:[#allocation2 + $0xa8] sm:$0xf] 0
      %258 = vst [vmem:[#allocation2 + $0xac] sm:$0xf] 0
      %259 = vst [vmem:[#allocation2 + $0xb0] sm:$0x1] 0
      %260 = vst [vmem:[#allocation2 + $0xb4] sm:$0xf] 0
      %261 = vst [vmem:[#allocation2 + $0xb8] sm:$0xf] 0
      %262 = vst [vmem:[#allocation2 + $0xbc] sm:$0x1] 0
      %263 = vst [vmem:[#allocation2 + $0xc0] sm:$0xf] 0
      %264 = vst [vmem:[#allocation2 + $0xc4] sm:$0xf] 0
      %265 = vst [vmem:[#allocation2 + $0xc8] sm:$0x1] 0
      %266 = vst [vmem:[#allocation2 + $0xcc] sm:$0xf] 0
      %267 = vst [vmem:[#allocation2 + $0xd0] sm:$0xf] 0
      %268 = vst [vmem:[#allocation2 + $0xd4] sm:$0x1] 0
      %v269 = vpack.c.bf16 %v184, %v183
      %v270 = vpack.c.bf16 %v186, %v185
      %v271 = vpack.c.bf16 %v188, %v187
      %v272 = vpack.c.bf16 %v190, %v189
      %v273 = vpack.c.bf16 %v192, %v191
      %v274 = vpack.c.bf16 %v194, %v193
      %v275 = vpack.c.bf16 %v196, %v195
      %v276 = vpack.c.bf16 %v198, %v197
      %v277 = vpack.c.bf16 %v200, %v199
      %v278 = vpack.c.bf16 %v202, %v201
      %v279 = vpack.c.bf16 %v204, %v203
      %v280 = vpack.c.bf16 %v206, %v205
      %v281 = vpack.c.bf16 %v208, %v207
      %v282 = vpack.c.bf16 %v210, %v209
      %v283 = vpack.c.bf16 %v212, %v211
      %v284 = vpack.c.bf16 %v214, %v213
      %v301 = vunpack.c.l.b16 %v269
      %v302 = vunpack.c.h.b16 %v269
      %v303 = vunpack.c.l.b16 %v270
      %v304 = vunpack.c.h.b16 %v270
      %v305 = vunpack.c.l.b16 %v271
      %v306 = vunpack.c.h.b16 %v271
      %v307 = vunpack.c.l.b16 %v272
      %v308 = vunpack.c.h.b16 %v272
      %v309 = vunpack.c.l.b16 %v273
      %v310 = vunpack.c.h.b16 %v273
      %v311 = vunpack.c.l.b16 %v274
      %v312 = vunpack.c.h.b16 %v274
      %v313 = vunpack.c.l.b16 %v275
      %v314 = vunpack.c.h.b16 %v275
      %v315 = vunpack.c.l.b16 %v276
      %v316 = vunpack.c.h.b16 %v276
      %v317 = vunpack.c.l.b16 %v277
      %v318 = vunpack.c.h.b16 %v277
      %v319 = vunpack.c.l.b16 %v278
      %v320 = vunpack.c.h.b16 %v278
      %v321 = vunpack.c.l.b16 %v279
      %v322 = vunpack.c.h.b16 %v279
      %v323 = vunpack.c.l.b16 %v280
      %v324 = vunpack.c.h.b16 %v280
      %v325 = vunpack.c.l.b16 %v281
      %v326 = vunpack.c.h.b16 %v281
      %v327 = vunpack.c.l.b16 %v282
      %v328 = vunpack.c.h.b16 %v282
      %v329 = vunpack.c.l.b16 %v283
      %v330 = vunpack.c.h.b16 %v283
      %v331 = vunpack.c.l.b16 %v284
      %v332 = vunpack.c.h.b16 %v284
      %v333 = vpack.c.b16 %v301, %v301
      %v334 = vpack.c.b16 %v302, %v302
      %v335 = vpack.c.b16 %v303, %v303
      %v336 = vpack.c.b16 %v304, %v304
      %v337 = vpack.c.b16 %v305, %v305
      %v338 = vpack.c.b16 %v306, %v306
      %v339 = vpack.c.b16 %v307, %v307
      %v340 = vpack.c.b16 %v308, %v308
      %v341 = vpack.c.b16 %v309, %v309
      %v342 = vpack.c.b16 %v310, %v310
      %v343 = vpack.c.b16 %v311, %v311
      %v344 = vpack.c.b16 %v312, %v312
      %v345 = vpack.c.b16 %v313, %v313
      %v346 = vpack.c.b16 %v314, %v314
      %v347 = vpack.c.b16 %v315, %v315
      %v348 = vpack.c.b16 %v316, %v316
      %v349 = vpack.c.b16 %v317, %v317
      %v350 = vpack.c.b16 %v318, %v318
      %v351 = vpack.c.b16 %v319, %v319
      %v352 = vpack.c.b16 %v320, %v320
      %v353 = vpack.c.b16 %v321, %v321
      %v354 = vpack.c.b16 %v322, %v322
      %v355 = vpack.c.b16 %v323, %v323
      %v356 = vpack.c.b16 %v324, %v324
      %v357 = vpack.c.b16 %v325, %v325
      %v358 = vpack.c.b16 %v326, %v326
      %v359 = vpack.c.b16 %v327, %v327
      %v360 = vpack.c.b16 %v328, %v328
      %v361 = vpack.c.b16 %v329, %v329
      %v362 = vpack.c.b16 %v330, %v330
      %v363 = vpack.c.b16 %v331, %v331
      %v364 = vpack.c.b16 %v332, %v332
      %vm365 = vsmask.f32 256
      %vm366 = vsmask.f32 4368
      %vm367 = vmor %vm365, %vm366
      %v369 = vshrl.u32 %v333, 16
      %v371 = vrot.slane %v369, 7
      %v372 = vshll.u32 %v333, 16
      %v374 = vor.u32 %v371, %v372
      %v375 = vrot.slane %v371, 4
      %v377 = vshrl.u32 %v334, 16
      %v379 = vrot.slane %v377, 7
      %v380 = vshll.u32 %v334, 16
      %v382 = vor.u32 %v379, %v380
      %v383 = vsel %vm367, %v375, %v382
      %v384 = vrot.slane %v379, 4
      %v386 = vshrl.u32 %v335, 16
      %v388 = vrot.slane %v386, 7
      %v389 = vshll.u32 %v335, 16
      %v391 = vor.u32 %v388, %v389
      %v392 = vrot.slane %v388, 4
      %v394 = vshrl.u32 %v336, 16
      %v396 = vrot.slane %v394, 7
      %v397 = vshll.u32 %v336, 16
      %v399 = vor.u32 %v396, %v397
      %v400 = vsel %vm367, %v392, %v399
      %v401 = vrot.slane %v396, 4
      %v403 = vshrl.u32 %v337, 16
      %v405 = vrot.slane %v403, 7
      %v406 = vshll.u32 %v337, 16
      %v408 = vor.u32 %v405, %v406
      %v409 = vrot.slane %v405, 4
      %v411 = vshrl.u32 %v338, 16
      %v413 = vrot.slane %v411, 7
      %v414 = vshll.u32 %v338, 16
      %v416 = vor.u32 %v413, %v414
      %v417 = vsel %vm367, %v409, %v416
      %v418 = vrot.slane %v413, 4
      %v420 = vshrl.u32 %v339, 16
      %v422 = vrot.slane %v420, 7
      %v423 = vshll.u32 %v339, 16
      %v425 = vor.u32 %v422, %v423
      %v426 = vrot.slane %v422, 4
      %v428 = vshrl.u32 %v340, 16
      %v430 = vrot.slane %v428, 7
      %v431 = vshll.u32 %v340, 16
      %v433 = vor.u32 %v430, %v431
      %v434 = vsel %vm367, %v426, %v433
      %v435 = vrot.slane %v430, 4
      %v437 = vshrl.u32 %v341, 16
      %v439 = vrot.slane %v437, 7
      %v440 = vshll.u32 %v341, 16
      %v442 = vor.u32 %v439, %v440
      %v443 = vrot.slane %v439, 4
      %v445 = vshrl.u32 %v342, 16
      %v447 = vrot.slane %v445, 7
      %v448 = vshll.u32 %v342, 16
      %v450 = vor.u32 %v447, %v448
      %v451 = vsel %vm367, %v443, %v450
      %v452 = vrot.slane %v447, 4
      %v454 = vshrl.u32 %v343, 16
      %v456 = vrot.slane %v454, 7
      %v457 = vshll.u32 %v343, 16
      %v459 = vor.u32 %v456, %v457
      %v460 = vrot.slane %v456, 4
      %v462 = vshrl.u32 %v344, 16
      %v464 = vrot.slane %v462, 7
      %v465 = vshll.u32 %v344, 16
      %v467 = vor.u32 %v464, %v465
      %v468 = vsel %vm367, %v460, %v467
      %v469 = vrot.slane %v464, 4
      %v471 = vshrl.u32 %v345, 16
      %v473 = vrot.slane %v471, 7
      %v474 = vshll.u32 %v345, 16
      %v476 = vor.u32 %v473, %v474
      %v477 = vrot.slane %v473, 4
      %v479 = vshrl.u32 %v346, 16
      %v481 = vrot.slane %v479, 7
      %v482 = vshll.u32 %v346, 16
      %v484 = vor.u32 %v481, %v482
      %v485 = vsel %vm367, %v477, %v484
      %v486 = vrot.slane %v481, 4
      %v488 = vshrl.u32 %v347, 16
      %v490 = vrot.slane %v488, 7
      %v491 = vshll.u32 %v347, 16
      %v493 = vor.u32 %v490, %v491
      %v494 = vrot.slane %v490, 4
      %v496 = vshrl.u32 %v348, 16
      %v498 = vrot.slane %v496, 7
      %v499 = vshll.u32 %v348, 16
      %v501 = vor.u32 %v498, %v499
      %v502 = vsel %vm367, %v494, %v501
      %v503 = vrot.slane %v498, 4
      %v505 = vshrl.u32 %v349, 16
      %v507 = vrot.slane %v505, 7
      %v508 = vshll.u32 %v349, 16
      %v510 = vor.u32 %v507, %v508
      %v511 = vrot.slane %v507, 4
      %v513 = vshrl.u32 %v350, 16
      %v515 = vrot.slane %v513, 7
      %v516 = vshll.u32 %v350, 16
      %v518 = vor.u32 %v515, %v516
      %v519 = vsel %vm367, %v511, %v518
      %v520 = vrot.slane %v515, 4
      %v522 = vshrl.u32 %v351, 16
      %v524 = vrot.slane %v522, 7
      %v525 = vshll.u32 %v351, 16
      %v527 = vor.u32 %v524, %v525
      %v528 = vrot.slane %v524, 4
      %v530 = vshrl.u32 %v352, 16
      %v532 = vrot.slane %v530, 7
      %v533 = vshll.u32 %v352, 16
      %v535 = vor.u32 %v532, %v533
      %v536 = vsel %vm367, %v528, %v535
      %v537 = vrot.slane %v532, 4
      %v539 = vshrl.u32 %v353, 16
      %v541 = vrot.slane %v539, 7
      %v542 = vshll.u32 %v353, 16
      %v544 = vor.u32 %v541, %v542
      %v545 = vrot.slane %v541, 4
      %v547 = vshrl.u32 %v354, 16
      %v549 = vrot.slane %v547, 7
      %v550 = vshll.u32 %v354, 16
      %v552 = vor.u32 %v549, %v550
      %v553 = vsel %vm367, %v545, %v552
      %v554 = vrot.slane %v549, 4
      %v556 = vshrl.u32 %v355, 16
      %v558 = vrot.slane %v556, 7
      %v559 = vshll.u32 %v355, 16
      %v561 = vor.u32 %v558, %v559
      %v562 = vrot.slane %v558, 4
      %v564 = vshrl.u32 %v356, 16
      %v566 = vrot.slane %v564, 7
      %v567 = vshll.u32 %v356, 16
      %v569 = vor.u32 %v566, %v567
      %v570 = vsel %vm367, %v562, %v569
      %v571 = vrot.slane %v566, 4
      %v573 = vshrl.u32 %v357, 16
      %v575 = vrot.slane %v573, 7
      %v576 = vshll.u32 %v357, 16
      %v578 = vor.u32 %v575, %v576
      %v579 = vrot.slane %v575, 4
      %v581 = vshrl.u32 %v358, 16
      %v583 = vrot.slane %v581, 7
      %v584 = vshll.u32 %v358, 16
      %v586 = vor.u32 %v583, %v584
      %v587 = vsel %vm367, %v579, %v586
      %v588 = vrot.slane %v583, 4
      %v590 = vshrl.u32 %v359, 16
      %v592 = vrot.slane %v590, 7
      %v593 = vshll.u32 %v359, 16
      %v595 = vor.u32 %v592, %v593
      %v596 = vrot.slane %v592, 4
      %v598 = vshrl.u32 %v360, 16
      %v600 = vrot.slane %v598, 7
      %v601 = vshll.u32 %v360, 16
      %v603 = vor.u32 %v600, %v601
      %v604 = vsel %vm367, %v596, %v603
      %v605 = vrot.slane %v600, 4
      %v607 = vshrl.u32 %v361, 16
      %v609 = vrot.slane %v607, 7
      %v610 = vshll.u32 %v361, 16
      %v612 = vor.u32 %v609, %v610
      %v613 = vrot.slane %v609, 4
      %v615 = vshrl.u32 %v362, 16
      %v617 = vrot.slane %v615, 7
      %v618 = vshll.u32 %v362, 16
      %v620 = vor.u32 %v617, %v618
      %v621 = vsel %vm367, %v613, %v620
      %v622 = vrot.slane %v617, 4
      %v624 = vshrl.u32 %v363, 16
      %v626 = vrot.slane %v624, 7
      %v627 = vshll.u32 %v363, 16
      %v629 = vor.u32 %v626, %v627
      %v630 = vrot.slane %v626, 4
      %v632 = vshrl.u32 %v364, 16
      %v634 = vrot.slane %v632, 7
      %v635 = vshll.u32 %v364, 16
      %v637 = vor.u32 %v634, %v635
      %v638 = vsel %vm367, %v630, %v637
      %v639 = vrot.slane %v634, 4
      %s688 = scalar_lea.vmem [#allocation2], 12
      %vm689 = vcmask 1043456
      %vm690 = vsmask.f32 7938
      %vm691 = vmand %vm689, %vm690
      %v692 = vld [vmem:[%s688] sm:$0xf]
      %v693 = vsel %vm691, %v374, %v692
      %694 = vst [vmem:[%s688] sm:$0xf] %v693
      %695 = vst [vmem:[%s688 + $0x4] sm:$0xf] %v383
      %vm696 = vcmask 1040384
      %vm697 = vmand %vm696, %vm365
      %v698 = vld [vmem:[%s688 + $0x8] sm:$0x1]
      %v699 = vsel %vm697, %v384, %v698
      %700 = vst [vmem:[%s688 + $0x8] sm:$0x1] %v699
      %v701 = vld [vmem:[%s688 + $0xc] sm:$0xf]
      %v702 = vsel %vm691, %v391, %v701
      %703 = vst [vmem:[%s688 + $0xc] sm:$0xf] %v702
      %704 = vst [vmem:[%s688 + $0x10] sm:$0xf] %v400
      %v705 = vld [vmem:[%s688 + $0x14] sm:$0x1]
      %v706 = vsel %vm697, %v401, %v705
      %707 = vst [vmem:[%s688 + $0x14] sm:$0x1] %v706
      %v708 = vld [vmem:[%s688 + $0x18] sm:$0xf]
      %v709 = vsel %vm691, %v408, %v708
      %710 = vst [vmem:[%s688 + $0x18] sm:$0xf] %v709
      %711 = vst [vmem:[%s688 + $0x1c] sm:$0xf] %v417
      %v712 = vld [vmem:[%s688 + $0x20] sm:$0x1]
      %v713 = vsel %vm697, %v418, %v712
      %714 = vst [vmem:[%s688 + $0x20] sm:$0x1] %v713
      %v715 = vld [vmem:[%s688 + $0x24] sm:$0xf]
      %v716 = vsel %vm691, %v425, %v715
      %717 = vst [vmem:[%s688 + $0x24] sm:$0xf] %v716
      %718 = vst [vmem:[%s688 + $0x28] sm:$0xf] %v434
      %v719 = vld [vmem:[%s688 + $0x2c] sm:$0x1]
      %v720 = vsel %vm697, %v435, %v719
      %721 = vst [vmem:[%s688 + $0x2c] sm:$0x1] %v720
      %v722 = vld [vmem:[%s688 + $0x30] sm:$0xf]
      %v723 = vsel %vm691, %v442, %v722
      %724 = vst [vmem:[%s688 + $0x30] sm:$0xf] %v723
      %725 = vst [vmem:[%s688 + $0x34] sm:$0xf] %v451
      %v726 = vld [vmem:[%s688 + $0x38] sm:$0x1]
      %v727 = vsel %vm697, %v452, %v726
      %728 = vst [vmem:[%s688 + $0x38] sm:$0x1] %v727
      %v729 = vld [vmem:[%s688 + $0x3c] sm:$0xf]
      %v730 = vsel %vm691, %v459, %v729
      %731 = vst [vmem:[%s688 + $0x3c] sm:$0xf] %v730
      %732 = vst [vmem:[%s688 + $0x40] sm:$0xf] %v468
      %v733 = vld [vmem:[%s688 + $0x44] sm:$0x1]
      %v734 = vsel %vm697, %v469, %v733
      %735 = vst [vmem:[%s688 + $0x44] sm:$0x1] %v734
      %v736 = vld [vmem:[%s688 + $0x48] sm:$0xf]
      %v737 = vsel %vm691, %v476, %v736
      %738 = vst [vmem:[%s688 + $0x48] sm:$0xf] %v737
      %739 = vst [vmem:[%s688 + $0x4c] sm:$0xf] %v485
      %v740 = vld [vmem:[%s688 + $0x50] sm:$0x1]
      %v741 = vsel %vm697, %v486, %v740
      %742 = vst [vmem:[%s688 + $0x50] sm:$0x1] %v741
      %v743 = vld [vmem:[%s688 + $0x54] sm:$0xf]
      %v744 = vsel %vm691, %v493, %v743
      %745 = vst [vmem:[%s688 + $0x54] sm:$0xf] %v744
      %746 = vst [vmem:[%s688 + $0x58] sm:$0xf] %v502
      %v747 = vld [vmem:[%s688 + $0x5c] sm:$0x1]
      %v748 = vsel %vm697, %v503, %v747
      %749 = vst [vmem:[%s688 + $0x5c] sm:$0x1] %v748
      %v750 = vld [vmem:[%s688 + $0x60] sm:$0xf]
      %v751 = vsel %vm691, %v510, %v750
      %752 = vst [vmem:[%s688 + $0x60] sm:$0xf] %v751
      %753 = vst [vmem:[%s688 + $0x64] sm:$0xf] %v519
      %v754 = vld [vmem:[%s688 + $0x68] sm:$0x1]
      %v755 = vsel %vm697, %v520, %v754
      %756 = vst [vmem:[%s688 + $0x68] sm:$0x1] %v755
      %v757 = vld [vmem:[%s688 + $0x6c] sm:$0xf]
      %v758 = vsel %vm691, %v527, %v757
      %759 = vst [vmem:[%s688 + $0x6c] sm:$0xf] %v758
      %760 = vst [vmem:[%s688 + $0x70] sm:$0xf] %v536
      %v761 = vld [vmem:[%s688 + $0x74] sm:$0x1]
      %v762 = vsel %vm697, %v537, %v761
      %763 = vst [vmem:[%s688 + $0x74] sm:$0x1] %v762
      %v764 = vld [vmem:[%s688 + $0x78] sm:$0xf]
      %v765 = vsel %vm691, %v544, %v764
      %766 = vst [vmem:[%s688 + $0x78] sm:$0xf] %v765
      %767 = vst [vmem:[%s688 + $0x7c] sm:$0xf] %v553
      %v768 = vld [vmem:[%s688 + $0x80] sm:$0x1]
      %v769 = vsel %vm697, %v554, %v768
      %770 = vst [vmem:[%s688 + $0x80] sm:$0x1] %v769
      %v771 = vld [vmem:[%s688 + $0x84] sm:$0xf]
      %v772 = vsel %vm691, %v561, %v771
      %773 = vst [vmem:[%s688 + $0x84] sm:$0xf] %v772
      %774 = vst [vmem:[%s688 + $0x88] sm:$0xf] %v570
      %v775 = vld [vmem:[%s688 + $0x8c] sm:$0x1]
      %v776 = vsel %vm697, %v571, %v775
      %777 = vst [vmem:[%s688 + $0x8c] sm:$0x1] %v776
      %v778 = vld [vmem:[%s688 + $0x90] sm:$0xf]
      %v779 = vsel %vm691, %v578, %v778
      %780 = vst [vmem:[%s688 + $0x90] sm:$0xf] %v779
      %781 = vst [vmem:[%s688 + $0x94] sm:$0xf] %v587
      %v782 = vld [vmem:[%s688 + $0x98] sm:$0x1]
      %v783 = vsel %vm697, %v588, %v782
      %784 = vst [vmem:[%s688 + $0x98] sm:$0x1] %v783
      %v785 = vld [vmem:[%s688 + $0x9c] sm:$0xf]
      %v786 = vsel %vm691, %v595, %v785
      %787 = vst [vmem:[%s688 + $0x9c] sm:$0xf] %v786
      %788 = vst [vmem:[%s688 + $0xa0] sm:$0xf] %v604
      %v789 = vld [vmem:[%s688 + $0xa4] sm:$0x1]
      %v790 = vsel %vm697, %v605, %v789
      %791 = vst [vmem:[%s688 + $0xa4] sm:$0x1] %v790
      %v792 = vld [vmem:[%s688 + $0xa8] sm:$0xf]
      %v793 = vsel %vm691, %v612, %v792
      %794 = vst [vmem:[%s688 + $0xa8] sm:$0xf] %v793
      %795 = vst [vmem:[%s688 + $0xac] sm:$0xf] %v621
      %v796 = vld [vmem:[%s688 + $0xb0] sm:$0x1]
      %v797 = vsel %vm697, %v622, %v796
      %798 = vst [vmem:[%s688 + $0xb0] sm:$0x1] %v797
      %v799 = vld [vmem:[%s688 + $0xb4] sm:$0xf]
      %v800 = vsel %vm691, %v629, %v799
      %801 = vst [vmem:[%s688 + $0xb4] sm:$0xf] %v800
      %802 = vst [vmem:[%s688 + $0xb8] sm:$0xf] %v638
      %v803 = vld [vmem:[%s688 + $0xbc] sm:$0x1]
      %v804 = vsel %vm697, %v639, %v803
      %805 = vst [vmem:[%s688 + $0xbc] sm:$0x1] %v804
      %v806 = vld [vmem:[#allocation2] sm:$0xf]
      %v807 = vld [vmem:[#allocation2 + $0x4] sm:$0xf]
      %v808 = vld [vmem:[#allocation2 + $0xc] sm:$0xf]
      %v809 = vld [vmem:[#allocation2 + $0x10] sm:$0xf]
      %v810 = vld [vmem:[#allocation2 + $0x18] sm:$0xf]
      %v811 = vld [vmem:[#allocation2 + $0x1c] sm:$0xf]
      %v812 = vld [vmem:[#allocation2 + $0x24] sm:$0xf]
      %v813 = vld [vmem:[#allocation2 + $0x28] sm:$0xf]
      %v814 = vld [vmem:[#allocation2 + $0x30] sm:$0xf]
      %v815 = vld [vmem:[#allocation2 + $0x34] sm:$0xf]
      %v816 = vld [vmem:[#allocation2 + $0x3c] sm:$0xf]
      %v817 = vld [vmem:[#allocation2 + $0x40] sm:$0xf]
      %v818 = vld [vmem:[#allocation2 + $0x48] sm:$0xf]
      %v819 = vld [vmem:[#allocation2 + $0x4c] sm:$0xf]
      %v820 = vld [vmem:[#allocation2 + $0x54] sm:$0xf]
      %v821 = vld [vmem:[#allocation2 + $0x58] sm:$0xf]
      %v822 = vld [vmem:[#allocation2 + $0x60] sm:$0xf]
      %v823 = vld [vmem:[#allocation2 + $0x64] sm:$0xf]
      %v824 = vld [vmem:[#allocation2 + $0x6c] sm:$0xf]
      %v825 = vld [vmem:[#allocation2 + $0x70] sm:$0xf]
      %v826 = vld [vmem:[#allocation2 + $0x78] sm:$0xf]
      %v827 = vld [vmem:[#allocation2 + $0x7c] sm:$0xf]
      %v828 = vld [vmem:[#allocation2 + $0x84] sm:$0xf]
      %v829 = vld [vmem:[#allocation2 + $0x88] sm:$0xf]
      %v830 = vld [vmem:[#allocation2 + $0x90] sm:$0xf]
      %v831 = vld [vmem:[#allocation2 + $0x94] sm:$0xf]
      %v832 = vld [vmem:[#allocation2 + $0x9c] sm:$0xf]
      %v833 = vld [vmem:[#allocation2 + $0xa0] sm:$0xf]
      %v834 = vld [vmem:[#allocation2 + $0xa8] sm:$0xf]
      %v835 = vld [vmem:[#allocation2 + $0xac] sm:$0xf]
      %v836 = vld [vmem:[#allocation2 + $0xb4] sm:$0xf]
      %v837 = vld [vmem:[#allocation2 + $0xb8] sm:$0xf]
      %v870 = vunpack.c.l.b16 %v806
      %v871 = vunpack.c.l.b16 %v807
      %v872 = vunpack.c.l.b16 %v808
      %v873 = vunpack.c.l.b16 %v809
      %v874 = vunpack.c.l.b16 %v810
      %v875 = vunpack.c.l.b16 %v811
      %v876 = vunpack.c.l.b16 %v812
      %v877 = vunpack.c.l.b16 %v813
      %v878 = vunpack.c.l.b16 %v814
      %v879 = vunpack.c.l.b16 %v815
      %v880 = vunpack.c.l.b16 %v816
      %v881 = vunpack.c.l.b16 %v817
      %v882 = vunpack.c.l.b16 %v818
      %v883 = vunpack.c.l.b16 %v819
      %v884 = vunpack.c.l.b16 %v820
      %v885 = vunpack.c.l.b16 %v821
      %v886 = vunpack.c.l.b16 %v822
      %v887 = vunpack.c.l.b16 %v823
      %v888 = vunpack.c.l.b16 %v824
      %v889 = vunpack.c.l.b16 %v825
      %v890 = vunpack.c.l.b16 %v826
      %v891 = vunpack.c.l.b16 %v827
      %v892 = vunpack.c.l.b16 %v828
      %v893 = vunpack.c.l.b16 %v829
      %v894 = vunpack.c.l.b16 %v830
      %v895 = vunpack.c.l.b16 %v831
      %v896 = vunpack.c.l.b16 %v832
      %v897 = vunpack.c.l.b16 %v833
      %v898 = vunpack.c.l.b16 %v834
      %v899 = vunpack.c.l.b16 %v835
      %v900 = vunpack.c.l.b16 %v836
      %v901 = vunpack.c.l.b16 %v837
      %v902 = vpack.c.b16 %v871, %v870
      %v903 = vpack.c.b16 %v873, %v872
      %v904 = vpack.c.b16 %v875, %v874
      %v905 = vpack.c.b16 %v877, %v876
      %v906 = vpack.c.b16 %v879, %v878
      %v907 = vpack.c.b16 %v881, %v880
      %v908 = vpack.c.b16 %v883, %v882
      %v909 = vpack.c.b16 %v885, %v884
      %v910 = vpack.c.b16 %v887, %v886
      %v911 = vpack.c.b16 %v889, %v888
      %v912 = vpack.c.b16 %v891, %v890
      %v913 = vpack.c.b16 %v893, %v892
      %v914 = vpack.c.b16 %v895, %v894
      %v915 = vpack.c.b16 %v897, %v896
      %v916 = vpack.c.b16 %v899, %v898
      %v917 = vpack.c.b16 %v901, %v900
      %934 = vst [vmem:[#allocation3] sm:$0xff] %v902
      %935 = vst [vmem:[#allocation3 + $0x48] sm:$0xff] %v903
      %936 = vst [vmem:[#allocation3 + $0x90] sm:$0xff] %v904
      %937 = vst [vmem:[#allocation3 + $0xd8] sm:$0xff] %v905
      %938 = vst [vmem:[#allocation3 + $0x120] sm:$0xff] %v906
      %939 = vst [vmem:[#allocation3 + $0x168] sm:$0xff] %v907
      %940 = vst [vmem:[#allocation3 + $0x1b0] sm:$0xff] %v908
      %941 = vst [vmem:[#allocation3 + $0x1f8] sm:$0xff] %v909
      %942 = vst [vmem:[#allocation3 + $0x240] sm:$0xff] %v910
      %943 = vst [vmem:[#allocation3 + $0x288] sm:$0xff] %v911
      %944 = vst [vmem:[#allocation3 + $0x2d0] sm:$0xff] %v912
      %945 = vst [vmem:[#allocation3 + $0x318] sm:$0xff] %v913
      %946 = vst [vmem:[#allocation3 + $0x360] sm:$0xff] %v914
      %947 = vst [vmem:[#allocation3 + $0x3a8] sm:$0xff] %v915
      %948 = vst [vmem:[#allocation3 + $0x3f0] sm:$0xff] %v916
      %949 = vst [vmem:[#allocation3 + $0x438] sm:$0xff] %v917
      %v950 = vld [vmem:[#allocation2] sm:$0xf]
      %v951 = vld [vmem:[#allocation2 + $0x4] sm:$0xf]
      %v952 = vld [vmem:[#allocation2 + $0x8] sm:$0x1]
      %v953 = vld [vmem:[#allocation2 + $0xc] sm:$0xf]
      %v954 = vld [vmem:[#allocation2 + $0x10] sm:$0xf]
      %v955 = vld [vmem:[#allocation2 + $0x14] sm:$0x1]
      %v956 = vld [vmem:[#allocation2 + $0x18] sm:$0xf]
      %v957 = vld [vmem:[#allocation2 + $0x1c] sm:$0xf]
      %v958 = vld [vmem:[#allocation2 + $0x20] sm:$0x1]
      %v959 = vld [vmem:[#allocation2 + $0x24] sm:$0xf]
      %v960 = vld [vmem:[#allocation2 + $0x28] sm:$0xf]
      %v961 = vld [vmem:[#allocation2 + $0x2c] sm:$0x1]
      %v962 = vld [vmem:[#allocation2 + $0x30] sm:$0xf]
      %v963 = vld [vmem:[#allocation2 + $0x34] sm:$0xf]
      %v964 = vld [vmem:[#allocation2 + $0x38] sm:$0x1]
      %v965 = vld [vmem:[#allocation2 + $0x3c] sm:$0xf]
      %v966 = vld [vmem:[#allocation2 + $0x40] sm:$0xf]
      %v967 = vld [vmem:[#allocation2 + $0x44] sm:$0x1]
      %v968 = vld [vmem:[#allocation2 + $0x48] sm:$0xf]
      %v969 = vld [vmem:[#allocation2 + $0x4c] sm:$0xf]
      %v970 = vld [vmem:[#allocation2 + $0x50] sm:$0x1]
      %v971 = vld [vmem:[#allocation2 + $0x54] sm:$0xf]
      %v972 = vld [vmem:[#allocation2 + $0x58] sm:$0xf]
      %v973 = vld [vmem:[#allocation2 + $0x5c] sm:$0x1]
      %v974 = vld [vmem:[#allocation2 + $0x60] sm:$0xf]
      %v975 = vld [vmem:[#allocation2 + $0x64] sm:$0xf]
      %v976 = vld [vmem:[#allocation2 + $0x68] sm:$0x1]
      %v977 = vld [vmem:[#allocation2 + $0x6c] sm:$0xf]
      %v978 = vld [vmem:[#allocation2 + $0x70] sm:$0xf]
      %v979 = vld [vmem:[#allocation2 + $0x74] sm:$0x1]
      %v980 = vld [vmem:[#allocation2 + $0x78] sm:$0xf]
      %v981 = vld [vmem:[#allocation2 + $0x7c] sm:$0xf]
      %v982 = vld [vmem:[#allocation2 + $0x80] sm:$0x1]
      %v983 = vld [vmem:[#allocation2 + $0x84] sm:$0xf]
      %v984 = vld [vmem:[#allocation2 + $0x88] sm:$0xf]
      %v985 = vld [vmem:[#allocation2 + $0x8c] sm:$0x1]
      %v986 = vld [vmem:[#allocation2 + $0x90] sm:$0xf]
      %v987 = vld [vmem:[#allocation2 + $0x94] sm:$0xf]
      %v988 = vld [vmem:[#allocation2 + $0x98] sm:$0x1]
      %v989 = vld [vmem:[#allocation2 + $0x9c] sm:$0xf]
      %v990 = vld [vmem:[#allocation2 + $0xa0] sm:$0xf]
      %v991 = vld [vmem:[#allocation2 + $0xa4] sm:$0x1]
      %v992 = vld [vmem:[#allocation2 + $0xa8] sm:$0xf]
      %v993 = vld [vmem:[#allocation2 + $0xac] sm:$0xf]
      %v994 = vld [vmem:[#allocation2 + $0xb0] sm:$0x1]
      %v995 = vld [vmem:[#allocation2 + $0xb4] sm:$0xf]
      %v996 = vld [vmem:[#allocation2 + $0xb8] sm:$0xf]
      %v997 = vld [vmem:[#allocation2 + $0xbc] sm:$0x1]
      %vm998 = vsmask.f32 3328
      %vm999 = vsmask.f32 7440
      %vm1000 = vmor %vm998, %vm999
      %v1002 = vshrl.u32 %v950, 16
      %v1004 = vrot.slane %v1002, 4
      %v1005 = vshll.u32 %v950, 16
      %v1007 = vrot.slane %v1005, 5
      %v1008 = vor.u32 %v1004, %v1007
      %v1009 = vrot.slane %v1008, 4
      %v1011 = vshll.u32 %v951, 16
      %v1013 = vrot.slane %v1011, 5
      %v1014 = vsel %vm1000, %v1009, %v1013
      %v1015 = vshrl.u32 %v951, 16
      %v1017 = vrot.slane %v1015, 4
      %v1018 = vor.u32 %v1017, %v1013
      %v1019 = vrot.slane %v1018, 4
      %v1021 = vshll.u32 %v952, 16
      %v1023 = vrot.slane %v1021, 5
      %v1024 = vsel %vm1000, %v1019, %v1023
      %v1026 = vshrl.u32 %v953, 16
      %v1028 = vrot.slane %v1026, 4
      %v1029 = vshll.u32 %v953, 16
      %v1031 = vrot.slane %v1029, 5
      %v1032 = vor.u32 %v1028, %v1031
      %v1033 = vrot.slane %v1032, 4
      %v1035 = vshll.u32 %v954, 16
      %v1037 = vrot.slane %v1035, 5
      %v1038 = vsel %vm1000, %v1033, %v1037
      %v1039 = vshrl.u32 %v954, 16
      %v1041 = vrot.slane %v1039, 4
      %v1042 = vor.u32 %v1041, %v1037
      %v1043 = vrot.slane %v1042, 4
      %v1045 = vshll.u32 %v955, 16
      %v1047 = vrot.slane %v1045, 5
      %v1048 = vsel %vm1000, %v1043, %v1047
      %v1050 = vshrl.u32 %v956, 16
      %v1052 = vrot.slane %v1050, 4
      %v1053 = vshll.u32 %v956, 16
      %v1055 = vrot.slane %v1053, 5
      %v1056 = vor.u32 %v1052, %v1055
      %v1057 = vrot.slane %v1056, 4
      %v1059 = vshll.u32 %v957, 16
      %v1061 = vrot.slane %v1059, 5
      %v1062 = vsel %vm1000, %v1057, %v1061
      %v1063 = vshrl.u32 %v957, 16
      %v1065 = vrot.slane %v1063, 4
      %v1066 = vor.u32 %v1065, %v1061
      %v1067 = vrot.slane %v1066, 4
      %v1069 = vshll.u32 %v958, 16
      %v1071 = vrot.slane %v1069, 5
      %v1072 = vsel %vm1000, %v1067, %v1071
      %v1074 = vshrl.u32 %v959, 16
      %v1076 = vrot.slane %v1074, 4
      %v1077 = vshll.u32 %v959, 16
      %v1079 = vrot.slane %v1077, 5
      %v1080 = vor.u32 %v1076, %v1079
      %v1081 = vrot.slane %v1080, 4
      %v1083 = vshll.u32 %v960, 16
      %v1085 = vrot.slane %v1083, 5
      %v1086 = vsel %vm1000, %v1081, %v1085
      %v1087 = vshrl.u32 %v960, 16
      %v1089 = vrot.slane %v1087, 4
      %v1090 = vor.u32 %v1089, %v1085
      %v1091 = vrot.slane %v1090, 4
      %v1093 = vshll.u32 %v961, 16
      %v1095 = vrot.slane %v1093, 5
      %v1096 = vsel %vm1000, %v1091, %v1095
      %v1098 = vshrl.u32 %v962, 16
      %v1100 = vrot.slane %v1098, 4
      %v1101 = vshll.u32 %v962, 16
      %v1103 = vrot.slane %v1101, 5
      %v1104 = vor.u32 %v1100, %v1103
      %v1105 = vrot.slane %v1104, 4
      %v1107 = vshll.u32 %v963, 16
      %v1109 = vrot.slane %v1107, 5
      %v1110 = vsel %vm1000, %v1105, %v1109
      %v1111 = vshrl.u32 %v963, 16
      %v1113 = vrot.slane %v1111, 4
      %v1114 = vor.u32 %v1113, %v1109
      %v1115 = vrot.slane %v1114, 4
      %v1117 = vshll.u32 %v964, 16
      %v1119 = vrot.slane %v1117, 5
      %v1120 = vsel %vm1000, %v1115, %v1119
      %v1122 = vshrl.u32 %v965, 16
      %v1124 = vrot.slane %v1122, 4
      %v1125 = vshll.u32 %v965, 16
      %v1127 = vrot.slane %v1125, 5
      %v1128 = vor.u32 %v1124, %v1127
      %v1129 = vrot.slane %v1128, 4
      %v1131 = vshll.u32 %v966, 16
      %v1133 = vrot.slane %v1131, 5
      %v1134 = vsel %vm1000, %v1129, %v1133
      %v1135 = vshrl.u32 %v966, 16
      %v1137 = vrot.slane %v1135, 4
      %v1138 = vor.u32 %v1137, %v1133
      %v1139 = vrot.slane %v1138, 4
      %v1141 = vshll.u32 %v967, 16
      %v1143 = vrot.slane %v1141, 5
      %v1144 = vsel %vm1000, %v1139, %v1143
      %v1146 = vshrl.u32 %v968, 16
      %v1148 = vrot.slane %v1146, 4
      %v1149 = vshll.u32 %v968, 16
      %v1151 = vrot.slane %v1149, 5
      %v1152 = vor.u32 %v1148, %v1151
      %v1153 = vrot.slane %v1152, 4
      %v1155 = vshll.u32 %v969, 16
      %v1157 = vrot.slane %v1155, 5
      %v1158 = vsel %vm1000, %v1153, %v1157
      %v1159 = vshrl.u32 %v969, 16
      %v1161 = vrot.slane %v1159, 4
      %v1162 = vor.u32 %v1161, %v1157
      %v1163 = vrot.slane %v1162, 4
      %v1165 = vshll.u32 %v970, 16
      %v1167 = vrot.slane %v1165, 5
      %v1168 = vsel %vm1000, %v1163, %v1167
      %v1170 = vshrl.u32 %v971, 16
      %v1172 = vrot.slane %v1170, 4
      %v1173 = vshll.u32 %v971, 16
      %v1175 = vrot.slane %v1173, 5
      %v1176 = vor.u32 %v1172, %v1175
      %v1177 = vrot.slane %v1176, 4
      %v1179 = vshll.u32 %v972, 16
      %v1181 = vrot.slane %v1179, 5
      %v1182 = vsel %vm1000, %v1177, %v1181
      %v1183 = vshrl.u32 %v972, 16
      %v1185 = vrot.slane %v1183, 4
      %v1186 = vor.u32 %v1185, %v1181
      %v1187 = vrot.slane %v1186, 4
      %v1189 = vshll.u32 %v973, 16
      %v1191 = vrot.slane %v1189, 5
      %v1192 = vsel %vm1000, %v1187, %v1191
      %v1194 = vshrl.u32 %v974, 16
      %v1196 = vrot.slane %v1194, 4
      %v1197 = vshll.u32 %v974, 16
      %v1199 = vrot.slane %v1197, 5
      %v1200 = vor.u32 %v1196, %v1199
      %v1201 = vrot.slane %v1200, 4
      %v1203 = vshll.u32 %v975, 16
      %v1205 = vrot.slane %v1203, 5
      %v1206 = vsel %vm1000, %v1201, %v1205
      %v1207 = vshrl.u32 %v975, 16
      %v1209 = vrot.slane %v1207, 4
      %v1210 = vor.u32 %v1209, %v1205
      %v1211 = vrot.slane %v1210, 4
      %v1213 = vshll.u32 %v976, 16
      %v1215 = vrot.slane %v1213, 5
      %v1216 = vsel %vm1000, %v1211, %v1215
      %v1218 = vshrl.u32 %v977, 16
      %v1220 = vrot.slane %v1218, 4
      %v1221 = vshll.u32 %v977, 16
      %v1223 = vrot.slane %v1221, 5
      %v1224 = vor.u32 %v1220, %v1223
      %v1225 = vrot.slane %v1224, 4
      %v1227 = vshll.u32 %v978, 16
      %v1229 = vrot.slane %v1227, 5
      %v1230 = vsel %vm1000, %v1225, %v1229
      %v1231 = vshrl.u32 %v978, 16
      %v1233 = vrot.slane %v1231, 4
      %v1234 = vor.u32 %v1233, %v1229
      %v1235 = vrot.slane %v1234, 4
      %v1237 = vshll.u32 %v979, 16
      %v1239 = vrot.slane %v1237, 5
      %v1240 = vsel %vm1000, %v1235, %v1239
      %v1242 = vshrl.u32 %v980, 16
      %v1244 = vrot.slane %v1242, 4
      %v1245 = vshll.u32 %v980, 16
      %v1247 = vrot.slane %v1245, 5
      %v1248 = vor.u32 %v1244, %v1247
      %v1249 = vrot.slane %v1248, 4
      %v1251 = vshll.u32 %v981, 16
      %v1253 = vrot.slane %v1251, 5
      %v1254 = vsel %vm1000, %v1249, %v1253
      %v1255 = vshrl.u32 %v981, 16
      %v1257 = vrot.slane %v1255, 4
      %v1258 = vor.u32 %v1257, %v1253
      %v1259 = vrot.slane %v1258, 4
      %v1261 = vshll.u32 %v982, 16
      %v1263 = vrot.slane %v1261, 5
      %v1264 = vsel %vm1000, %v1259, %v1263
      %v1266 = vshrl.u32 %v983, 16
      %v1268 = vrot.slane %v1266, 4
      %v1269 = vshll.u32 %v983, 16
      %v1271 = vrot.slane %v1269, 5
      %v1272 = vor.u32 %v1268, %v1271
      %v1273 = vrot.slane %v1272, 4
      %v1275 = vshll.u32 %v984, 16
      %v1277 = vrot.slane %v1275, 5
      %v1278 = vsel %vm1000, %v1273, %v1277
      %v1279 = vshrl.u32 %v984, 16
      %v1281 = vrot.slane %v1279, 4
      %v1282 = vor.u32 %v1281, %v1277
      %v1283 = vrot.slane %v1282, 4
      %v1285 = vshll.u32 %v985, 16
      %v1287 = vrot.slane %v1285, 5
      %v1288 = vsel %vm1000, %v1283, %v1287
      %v1290 = vshrl.u32 %v986, 16
      %v1292 = vrot.slane %v1290, 4
      %v1293 = vshll.u32 %v986, 16
      %v1295 = vrot.slane %v1293, 5
      %v1296 = vor.u32 %v1292, %v1295
      %v1297 = vrot.slane %v1296, 4
      %v1299 = vshll.u32 %v987, 16
      %v1301 = vrot.slane %v1299, 5
      %v1302 = vsel %vm1000, %v1297, %v1301
      %v1303 = vshrl.u32 %v987, 16
      %v1305 = vrot.slane %v1303, 4
      %v1306 = vor.u32 %v1305, %v1301
      %v1307 = vrot.slane %v1306, 4
      %v1309 = vshll.u32 %v988, 16
      %v1311 = vrot.slane %v1309, 5
      %v1312 = vsel %vm1000, %v1307, %v1311
      %v1314 = vshrl.u32 %v989, 16
      %v1316 = vrot.slane %v1314, 4
      %v1317 = vshll.u32 %v989, 16
      %v1319 = vrot.slane %v1317, 5
      %v1320 = vor.u32 %v1316, %v1319
      %v1321 = vrot.slane %v1320, 4
      %v1323 = vshll.u32 %v990, 16
      %v1325 = vrot.slane %v1323, 5
      %v1326 = vsel %vm1000, %v1321, %v1325
      %v1327 = vshrl.u32 %v990, 16
      %v1329 = vrot.slane %v1327, 4
      %v1330 = vor.u32 %v1329, %v1325
      %v1331 = vrot.slane %v1330, 4
      %v1333 = vshll.u32 %v991, 16
      %v1335 = vrot.slane %v1333, 5
      %v1336 = vsel %vm1000, %v1331, %v1335
      %v1338 = vshrl.u32 %v992, 16
      %v1340 = vrot.slane %v1338, 4
      %v1341 = vshll.u32 %v992, 16
      %v1343 = vrot.slane %v1341, 5
      %v1344 = vor.u32 %v1340, %v1343
      %v1345 = vrot.slane %v1344, 4
      %v1347 = vshll.u32 %v993, 16
      %v1349 = vrot.slane %v1347, 5
      %v1350 = vsel %vm1000, %v1345, %v1349
      %v1351 = vshrl.u32 %v993, 16
      %v1353 = vrot.slane %v1351, 4
      %v1354 = vor.u32 %v1353, %v1349
      %v1355 = vrot.slane %v1354, 4
      %v1357 = vshll.u32 %v994, 16
      %v1359 = vrot.slane %v1357, 5
      %v1360 = vsel %vm1000, %v1355, %v1359
      %v1362 = vshrl.u32 %v995, 16
      %v1364 = vrot.slane %v1362, 4
      %v1365 = vshll.u32 %v995, 16
      %v1367 = vrot.slane %v1365, 5
      %v1368 = vor.u32 %v1364, %v1367
      %v1369 = vrot.slane %v1368, 4
      %v1371 = vshll.u32 %v996, 16
      %v1373 = vrot.slane %v1371, 5
      %v1374 = vsel %vm1000, %v1369, %v1373
      %v1375 = vshrl.u32 %v996, 16
      %v1377 = vrot.slane %v1375, 4
      %v1378 = vor.u32 %v1377, %v1373
      %v1379 = vrot.slane %v1378, 4
      %v1381 = vshll.u32 %v997, 16
      %v1383 = vrot.slane %v1381, 5
      %v1384 = vsel %vm1000, %v1379, %v1383
      %v1385 = vunpack.c.l.b16 %v1014
      %v1386 = vunpack.c.l.b16 %v1024
      %v1387 = vunpack.c.l.b16 %v1038
      %v1388 = vunpack.c.l.b16 %v1048
      %v1389 = vunpack.c.l.b16 %v1062
      %v1390 = vunpack.c.l.b16 %v1072
      %v1391 = vunpack.c.l.b16 %v1086
      %v1392 = vunpack.c.l.b16 %v1096
      %v1393 = vunpack.c.l.b16 %v1110
      %v1394 = vunpack.c.l.b16 %v1120
      %v1395 = vunpack.c.l.b16 %v1134
      %v1396 = vunpack.c.l.b16 %v1144
      %v1397 = vunpack.c.l.b16 %v1158
      %v1398 = vunpack.c.l.b16 %v1168
      %v1399 = vunpack.c.l.b16 %v1182
      %v1400 = vunpack.c.l.b16 %v1192
      %v1401 = vunpack.c.l.b16 %v1206
      %v1402 = vunpack.c.l.b16 %v1216
      %v1403 = vunpack.c.l.b16 %v1230
      %v1404 = vunpack.c.l.b16 %v1240
      %v1405 = vunpack.c.l.b16 %v1254
      %v1406 = vunpack.c.l.b16 %v1264
      %v1407 = vunpack.c.l.b16 %v1278
      %v1408 = vunpack.c.l.b16 %v1288
      %v1409 = vunpack.c.l.b16 %v1302
      %v1410 = vunpack.c.l.b16 %v1312
      %v1411 = vunpack.c.l.b16 %v1326
      %v1412 = vunpack.c.l.b16 %v1336
      %v1413 = vunpack.c.l.b16 %v1350
      %v1414 = vunpack.c.l.b16 %v1360
      %v1415 = vunpack.c.l.b16 %v1374
      %v1416 = vunpack.c.l.b16 %v1384
      %v1417 = vpack.c.b16 %v1386, %v1385
      %v1418 = vpack.c.b16 %v1388, %v1387
      %v1419 = vpack.c.b16 %v1390, %v1389
      %v1420 = vpack.c.b16 %v1392, %v1391
      %v1421 = vpack.c.b16 %v1394, %v1393
      %v1422 = vpack.c.b16 %v1396, %v1395
      %v1423 = vpack.c.b16 %v1398, %v1397
      %v1424 = vpack.c.b16 %v1400, %v1399
      %v1425 = vpack.c.b16 %v1402, %v1401
      %v1426 = vpack.c.b16 %v1404, %v1403
      %v1427 = vpack.c.b16 %v1406, %v1405
      %v1428 = vpack.c.b16 %v1408, %v1407
      %v1429 = vpack.c.b16 %v1410, %v1409
      %v1430 = vpack.c.b16 %v1412, %v1411
      %v1431 = vpack.c.b16 %v1414, %v1413
      %v1432 = vpack.c.b16 %v1416, %v1415
      %1449 = vst [vmem:[#allocation3 + $0x8] sm:$0xff] %v1417
      %1450 = vst [vmem:[#allocation3 + $0x50] sm:$0xff] %v1418
      %1451 = vst [vmem:[#allocation3 + $0x98] sm:$0xff] %v1419
      %1452 = vst [vmem:[#allocation3 + $0xe0] sm:$0xff] %v1420
      %1453 = vst [vmem:[#allocation3 + $0x128] sm:$0xff] %v1421
      %1454 = vst [vmem:[#allocation3 + $0x170] sm:$0xff] %v1422
      %1455 = vst [vmem:[#allocation3 + $0x1b8] sm:$0xff] %v1423
      %1456 = vst [vmem:[#allocation3 + $0x200] sm:$0xff] %v1424
      %1457 = vst [vmem:[#allocation3 + $0x248] sm:$0xff] %v1425
      %1458 = vst [vmem:[#allocation3 + $0x290] sm:$0xff] %v1426
      %1459 = vst [vmem:[#allocation3 + $0x2d8] sm:$0xff] %v1427
      %1460 = vst [vmem:[#allocation3 + $0x320] sm:$0xff] %v1428
      %1461 = vst [vmem:[#allocation3 + $0x368] sm:$0xff] %v1429
      %1462 = vst [vmem:[#allocation3 + $0x3b0] sm:$0xff] %v1430
      %1463 = vst [vmem:[#allocation3 + $0x3f8] sm:$0xff] %v1431
      %1464 = vst [vmem:[#allocation3 + $0x440] sm:$0xff] %v1432
      %v1465 = vld [vmem:[#allocation2] sm:$0xe]
      %v1466 = vld [vmem:[#allocation2 + $0x4] sm:$0xf]
      %v1467 = vld [vmem:[#allocation2 + $0x8] sm:$0x1]
      %v1468 = vld [vmem:[#allocation2 + $0xc] sm:$0xe]
      %v1469 = vld [vmem:[#allocation2 + $0x10] sm:$0xf]
      %v1470 = vld [vmem:[#allocation2 + $0x14] sm:$0x1]
      %v1471 = vld [vmem:[#allocation2 + $0x18] sm:$0xe]
      %v1472 = vld [vmem:[#allocation2 + $0x1c] sm:$0xf]
      %v1473 = vld [vmem:[#allocation2 + $0x20] sm:$0x1]
      %v1474 = vld [vmem:[#allocation2 + $0x24] sm:$0xe]
      %v1475 = vld [vmem:[#allocation2 + $0x28] sm:$0xf]
      %v1476 = vld [vmem:[#allocation2 + $0x2c] sm:$0x1]
      %v1477 = vld [vmem:[#allocation2 + $0x30] sm:$0xe]
      %v1478 = vld [vmem:[#allocation2 + $0x34] sm:$0xf]
      %v1479 = vld [vmem:[#allocation2 + $0x38] sm:$0x1]
      %v1480 = vld [vmem:[#allocation2 + $0x3c] sm:$0xe]
      %v1481 = vld [vmem:[#allocation2 + $0x40] sm:$0xf]
      %v1482 = vld [vmem:[#allocation2 + $0x44] sm:$0x1]
      %v1483 = vld [vmem:[#allocation2 + $0x48] sm:$0xe]
      %v1484 = vld [vmem:[#allocation2 + $0x4c] sm:$0xf]
      %v1485 = vld [vmem:[#allocation2 + $0x50] sm:$0x1]
      %v1486 = vld [vmem:[#allocation2 + $0x54] sm:$0xe]
      %v1487 = vld [vmem:[#allocation2 + $0x58] sm:$0xf]
      %v1488 = vld [vmem:[#allocation2 + $0x5c] sm:$0x1]
      %v1489 = vld [vmem:[#allocation2 + $0x60] sm:$0xe]
      %v1490 = vld [vmem:[#allocation2 + $0x64] sm:$0xf]
      %v1491 = vld [vmem:[#allocation2 + $0x68] sm:$0x1]
      %v1492 = vld [vmem:[#allocation2 + $0x6c] sm:$0xe]
      %v1493 = vld [vmem:[#allocation2 + $0x70] sm:$0xf]
      %v1494 = vld [vmem:[#allocation2 + $0x74] sm:$0x1]
      %v1495 = vld [vmem:[#allocation2 + $0x78] sm:$0xe]
      %v1496 = vld [vmem:[#allocation2 + $0x7c] sm:$0xf]
      %v1497 = vld [vmem:[#allocation2 + $0x80] sm:$0x1]
      %v1498 = vld [vmem:[#allocation2 + $0x84] sm:$0xe]
      %v1499 = vld [vmem:[#allocation2 + $0x88] sm:$0xf]
      %v1500 = vld [vmem:[#allocation2 + $0x8c] sm:$0x1]
      %v1501 = vld [vmem:[#allocation2 + $0x90] sm:$0xe]
      %v1502 = vld [vmem:[#allocation2 + $0x94] sm:$0xf]
      %v1503 = vld [vmem:[#allocation2 + $0x98] sm:$0x1]
      %v1504 = vld [vmem:[#allocation2 + $0x9c] sm:$0xe]
      %v1505 = vld [vmem:[#allocation2 + $0xa0] sm:$0xf]
      %v1506 = vld [vmem:[#allocation2 + $0xa4] sm:$0x1]
      %v1507 = vld [vmem:[#allocation2 + $0xa8] sm:$0xe]
      %v1508 = vld [vmem:[#allocation2 + $0xac] sm:$0xf]
      %v1509 = vld [vmem:[#allocation2 + $0xb0] sm:$0x1]
      %v1510 = vld [vmem:[#allocation2 + $0xb4] sm:$0xe]
      %v1511 = vld [vmem:[#allocation2 + $0xb8] sm:$0xf]
      %v1512 = vld [vmem:[#allocation2 + $0xbc] sm:$0x1]
      %vm1561 = vcmask 1042432
      %vm1562 = vcmask 1046532
      %vm1563 = vmor %vm1561, %vm1562
      %v1564 = vrot.slane %v1465, 5
      %v1565 = vrot.slane %v1564, 4
      %v1566 = vrot.slane %v1466, 5
      %v1567 = vsel %vm1563, %v1565, %v1566
      %v1568 = vrot.slane %v1566, 4
      %v1569 = vrot.slane %v1467, 5
      %v1570 = vsel %vm1563, %v1568, %v1569
      %v1571 = vrot.slane %v1468, 5
      %v1572 = vrot.slane %v1571, 4
      %v1573 = vrot.slane %v1469, 5
      %v1574 = vsel %vm1563, %v1572, %v1573
      %v1575 = vrot.slane %v1573, 4
      %v1576 = vrot.slane %v1470, 5
      %v1577 = vsel %vm1563, %v1575, %v1576
      %v1578 = vrot.slane %v1471, 5
      %v1579 = vrot.slane %v1578, 4
      %v1580 = vrot.slane %v1472, 5
      %v1581 = vsel %vm1563, %v1579, %v1580
      %v1582 = vrot.slane %v1580, 4
      %v1583 = vrot.slane %v1473, 5
      %v1584 = vsel %vm1563, %v1582, %v1583
      %v1585 = vrot.slane %v1474, 5
      %v1586 = vrot.slane %v1585, 4
      %v1587 = vrot.slane %v1475, 5
      %v1588 = vsel %vm1563, %v1586, %v1587
      %v1589 = vrot.slane %v1587, 4
      %v1590 = vrot.slane %v1476, 5
      %v1591 = vsel %vm1563, %v1589, %v1590
      %v1592 = vrot.slane %v1477, 5
      %v1593 = vrot.slane %v1592, 4
      %v1594 = vrot.slane %v1478, 5
      %v1595 = vsel %vm1563, %v1593, %v1594
      %v1596 = vrot.slane %v1594, 4
      %v1597 = vrot.slane %v1479, 5
      %v1598 = vsel %vm1563, %v1596, %v1597
      %v1599 = vrot.slane %v1480, 5
      %v1600 = vrot.slane %v1599, 4
      %v1601 = vrot.slane %v1481, 5
      %v1602 = vsel %vm1563, %v1600, %v1601
      %v1603 = vrot.slane %v1601, 4
      %v1604 = vrot.slane %v1482, 5
      %v1605 = vsel %vm1563, %v1603, %v1604
      %v1606 = vrot.slane %v1483, 5
      %v1607 = vrot.slane %v1606, 4
      %v1608 = vrot.slane %v1484, 5
      %v1609 = vsel %vm1563, %v1607, %v1608
      %v1610 = vrot.slane %v1608, 4
      %v1611 = vrot.slane %v1485, 5
      %v1612 = vsel %vm1563, %v1610, %v1611
      %v1613 = vrot.slane %v1486, 5
      %v1614 = vrot.slane %v1613, 4
      %v1615 = vrot.slane %v1487, 5
      %v1616 = vsel %vm1563, %v1614, %v1615
      %v1617 = vrot.slane %v1615, 4
      %v1618 = vrot.slane %v1488, 5
      %v1619 = vsel %vm1563, %v1617, %v1618
      %v1620 = vrot.slane %v1489, 5
      %v1621 = vrot.slane %v1620, 4
      %v1622 = vrot.slane %v1490, 5
      %v1623 = vsel %vm1563, %v1621, %v1622
      %v1624 = vrot.slane %v1622, 4
      %v1625 = vrot.slane %v1491, 5
      %v1626 = vsel %vm1563, %v1624, %v1625
      %v1627 = vrot.slane %v1492, 5
      %v1628 = vrot.slane %v1627, 4
      %v1629 = vrot.slane %v1493, 5
      %v1630 = vsel %vm1563, %v1628, %v1629
      %v1631 = vrot.slane %v1629, 4
      %v1632 = vrot.slane %v1494, 5
      %v1633 = vsel %vm1563, %v1631, %v1632
      %v1634 = vrot.slane %v1495, 5
      %v1635 = vrot.slane %v1634, 4
      %v1636 = vrot.slane %v1496, 5
      %v1637 = vsel %vm1563, %v1635, %v1636
      %v1638 = vrot.slane %v1636, 4
      %v1639 = vrot.slane %v1497, 5
      %v1640 = vsel %vm1563, %v1638, %v1639
      %v1641 = vrot.slane %v1498, 5
      %v1642 = vrot.slane %v1641, 4
      %v1643 = vrot.slane %v1499, 5
      %v1644 = vsel %vm1563, %v1642, %v1643
      %v1645 = vrot.slane %v1643, 4
      %v1646 = vrot.slane %v1500, 5
      %v1647 = vsel %vm1563, %v1645, %v1646
      %v1648 = vrot.slane %v1501, 5
      %v1649 = vrot.slane %v1648, 4
      %v1650 = vrot.slane %v1502, 5
      %v1651 = vsel %vm1563, %v1649, %v1650
      %v1652 = vrot.slane %v1650, 4
      %v1653 = vrot.slane %v1503, 5
      %v1654 = vsel %vm1563, %v1652, %v1653
      %v1655 = vrot.slane %v1504, 5
      %v1656 = vrot.slane %v1655, 4
      %v1657 = vrot.slane %v1505, 5
      %v1658 = vsel %vm1563, %v1656, %v1657
      %v1659 = vrot.slane %v1657, 4
      %v1660 = vrot.slane %v1506, 5
      %v1661 = vsel %vm1563, %v1659, %v1660
      %v1662 = vrot.slane %v1507, 5
      %v1663 = vrot.slane %v1662, 4
      %v1664 = vrot.slane %v1508, 5
      %v1665 = vsel %vm1563, %v1663, %v1664
      %v1666 = vrot.slane %v1664, 4
      %v1667 = vrot.slane %v1509, 5
      %v1668 = vsel %vm1563, %v1666, %v1667
      %v1669 = vrot.slane %v1510, 5
      %v1670 = vrot.slane %v1669, 4
      %v1671 = vrot.slane %v1511, 5
      %v1672 = vsel %vm1563, %v1670, %v1671
      %v1673 = vrot.slane %v1671, 4
      %v1674 = vrot.slane %v1512, 5
      %v1675 = vsel %vm1563, %v1673, %v1674
      %v1676 = vunpack.c.l.b16 %v1567
      %v1677 = vunpack.c.l.b16 %v1570
      %v1678 = vunpack.c.l.b16 %v1574
      %v1679 = vunpack.c.l.b16 %v1577
      %v1680 = vunpack.c.l.b16 %v1581
      %v1681 = vunpack.c.l.b16 %v1584
      %v1682 = vunpack.c.l.b16 %v1588
      %v1683 = vunpack.c.l.b16 %v1591
      %v1684 = vunpack.c.l.b16 %v1595
      %v1685 = vunpack.c.l.b16 %v1598
      %v1686 = vunpack.c.l.b16 %v1602
      %v1687 = vunpack.c.l.b16 %v1605
      %v1688 = vunpack.c.l.b16 %v1609
      %v1689 = vunpack.c.l.b16 %v1612
      %v1690 = vunpack.c.l.b16 %v1616
      %v1691 = vunpack.c.l.b16 %v1619
      %v1692 = vunpack.c.l.b16 %v1623
      %v1693 = vunpack.c.l.b16 %v1626
      %v1694 = vunpack.c.l.b16 %v1630
      %v1695 = vunpack.c.l.b16 %v1633
      %v1696 = vunpack.c.l.b16 %v1637
      %v1697 = vunpack.c.l.b16 %v1640
      %v1698 = vunpack.c.l.b16 %v1644
      %v1699 = vunpack.c.l.b16 %v1647
      %v1700 = vunpack.c.l.b16 %v1651
      %v1701 = vunpack.c.l.b16 %v1654
      %v1702 = vunpack.c.l.b16 %v1658
      %v1703 = vunpack.c.l.b16 %v1661
      %v1704 = vunpack.c.l.b16 %v1665
      %v1705 = vunpack.c.l.b16 %v1668
      %v1706 = vunpack.c.l.b16 %v1672
      %v1707 = vunpack.c.l.b16 %v1675
      %v1708 = vpack.c.b16 %v1677, %v1676
      %v1709 = vpack.c.b16 %v1679, %v1678
      %v1710 = vpack.c.b16 %v1681, %v1680
      %v1711 = vpack.c.b16 %v1683, %v1682
      %v1712 = vpack.c.b16 %v1685, %v1684
      %v1713 = vpack.c.b16 %v1687, %v1686
      %v1714 = vpack.c.b16 %v1689, %v1688
      %v1715 = vpack.c.b16 %v1691, %v1690
      %v1716 = vpack.c.b16 %v1693, %v1692
      %v1717 = vpack.c.b16 %v1695, %v1694
      %v1718 = vpack.c.b16 %v1697, %v1696
      %v1719 = vpack.c.b16 %v1699, %v1698
      %v1720 = vpack.c.b16 %v1701, %v1700
      %v1721 = vpack.c.b16 %v1703, %v1702
      %v1722 = vpack.c.b16 %v1705, %v1704
      %v1723 = vpack.c.b16 %v1707, %v1706
      %1740 = vst [vmem:[#allocation3 + $0x10] sm:$0xff] %v1708
      %1741 = vst [vmem:[#allocation3 + $0x58] sm:$0xff] %v1709
      %1742 = vst [vmem:[#allocation3 + $0xa0] sm:$0xff] %v1710
      %1743 = vst [vmem:[#allocation3 + $0xe8] sm:$0xff] %v1711
      %1744 = vst [vmem:[#allocation3 + $0x130] sm:$0xff] %v1712
      %1745 = vst [vmem:[#allocation3 + $0x178] sm:$0xff] %v1713
      %1746 = vst [vmem:[#allocation3 + $0x1c0] sm:$0xff] %v1714
      %1747 = vst [vmem:[#allocation3 + $0x208] sm:$0xff] %v1715
      %1748 = vst [vmem:[#allocation3 + $0x250] sm:$0xff] %v1716
      %1749 = vst [vmem:[#allocation3 + $0x298] sm:$0xff] %v1717
      %1750 = vst [vmem:[#allocation3 + $0x2e0] sm:$0xff] %v1718
      %1751 = vst [vmem:[#allocation3 + $0x328] sm:$0xff] %v1719
      %1752 = vst [vmem:[#allocation3 + $0x370] sm:$0xff] %v1720
      %1753 = vst [vmem:[#allocation3 + $0x3b8] sm:$0xff] %v1721
      %1754 = vst [vmem:[#allocation3 + $0x400] sm:$0xff] %v1722
      %1755 = vst [vmem:[#allocation3 + $0x448] sm:$0xff] %v1723
      %v1756 = vld [vmem:[%s688] sm:$0xf]
      %v1757 = vld [vmem:[%s688 + $0x4] sm:$0xf]
      %v1758 = vld [vmem:[%s688 + $0xc] sm:$0xf]
      %v1759 = vld [vmem:[%s688 + $0x10] sm:$0xf]
      %v1760 = vld [vmem:[%s688 + $0x18] sm:$0xf]
      %v1761 = vld [vmem:[%s688 + $0x1c] sm:$0xf]
      %v1762 = vld [vmem:[%s688 + $0x24] sm:$0xf]
      %v1763 = vld [vmem:[%s688 + $0x28] sm:$0xf]
      %v1764 = vld [vmem:[%s688 + $0x30] sm:$0xf]
      %v1765 = vld [vmem:[%s688 + $0x34] sm:$0xf]
      %v1766 = vld [vmem:[%s688 + $0x3c] sm:$0xf]
      %v1767 = vld [vmem:[%s688 + $0x40] sm:$0xf]
      %v1768 = vld [vmem:[%s688 + $0x48] sm:$0xf]
      %v1769 = vld [vmem:[%s688 + $0x4c] sm:$0xf]
      %v1770 = vld [vmem:[%s688 + $0x54] sm:$0xf]
      %v1771 = vld [vmem:[%s688 + $0x58] sm:$0xf]
      %v1772 = vld [vmem:[%s688 + $0x60] sm:$0xf]
      %v1773 = vld [vmem:[%s688 + $0x64] sm:$0xf]
      %v1774 = vld [vmem:[%s688 + $0x6c] sm:$0xf]
      %v1775 = vld [vmem:[%s688 + $0x70] sm:$0xf]
      %v1776 = vld [vmem:[%s688 + $0x78] sm:$0xf]
      %v1777 = vld [vmem:[%s688 + $0x7c] sm:$0xf]
      %v1778 = vld [vmem:[%s688 + $0x84] sm:$0xf]
      %v1779 = vld [vmem:[%s688 + $0x88] sm:$0xf]
      %v1780 = vld [vmem:[%s688 + $0x90] sm:$0xf]
      %v1781 = vld [vmem:[%s688 + $0x94] sm:$0xf]
      %v1782 = vld [vmem:[%s688 + $0x9c] sm:$0xf]
      %v1783 = vld [vmem:[%s688 + $0xa0] sm:$0xf]
      %v1784 = vld [vmem:[%s688 + $0xa8] sm:$0xf]
      %v1785 = vld [vmem:[%s688 + $0xac] sm:$0xf]
      %v1786 = vld [vmem:[%s688 + $0xb4] sm:$0xf]
      %v1787 = vld [vmem:[%s688 + $0xb8] sm:$0xf]
      %v1820 = vunpack.c.l.b16 %v1756
      %v1821 = vunpack.c.l.b16 %v1757
      %v1822 = vunpack.c.l.b16 %v1758
      %v1823 = vunpack.c.l.b16 %v1759
      %v1824 = vunpack.c.l.b16 %v1760
      %v1825 = vunpack.c.l.b16 %v1761
      %v1826 = vunpack.c.l.b16 %v1762
      %v1827 = vunpack.c.l.b16 %v1763
      %v1828 = vunpack.c.l.b16 %v1764
      %v1829 = vunpack.c.l.b16 %v1765
      %v1830 = vunpack.c.l.b16 %v1766
      %v1831 = vunpack.c.l.b16 %v1767
      %v1832 = vunpack.c.l.b16 %v1768
      %v1833 = vunpack.c.l.b16 %v1769
      %v1834 = vunpack.c.l.b16 %v1770
      %v1835 = vunpack.c.l.b16 %v1771
      %v1836 = vunpack.c.l.b16 %v1772
      %v1837 = vunpack.c.l.b16 %v1773
      %v1838 = vunpack.c.l.b16 %v1774
      %v1839 = vunpack.c.l.b16 %v1775
      %v1840 = vunpack.c.l.b16 %v1776
      %v1841 = vunpack.c.l.b16 %v1777
      %v1842 = vunpack.c.l.b16 %v1778
      %v1843 = vunpack.c.l.b16 %v1779
      %v1844 = vunpack.c.l.b16 %v1780
      %v1845 = vunpack.c.l.b16 %v1781
      %v1846 = vunpack.c.l.b16 %v1782
      %v1847 = vunpack.c.l.b16 %v1783
      %v1848 = vunpack.c.l.b16 %v1784
      %v1849 = vunpack.c.l.b16 %v1785
      %v1850 = vunpack.c.l.b16 %v1786
      %v1851 = vunpack.c.l.b16 %v1787
      %v1852 = vpack.c.b16 %v1821, %v1820
      %v1853 = vpack.c.b16 %v1823, %v1822
      %v1854 = vpack.c.b16 %v1825, %v1824
      %v1855 = vpack.c.b16 %v1827, %v1826
      %v1856 = vpack.c.b16 %v1829, %v1828
      %v1857 = vpack.c.b16 %v1831, %v1830
      %v1858 = vpack.c.b16 %v1833, %v1832
      %v1859 = vpack.c.b16 %v1835, %v1834
      %v1860 = vpack.c.b16 %v1837, %v1836
      %v1861 = vpack.c.b16 %v1839, %v1838
      %v1862 = vpack.c.b16 %v1841, %v1840
      %v1863 = vpack.c.b16 %v1843, %v1842
      %v1864 = vpack.c.b16 %v1845, %v1844
      %v1865 = vpack.c.b16 %v1847, %v1846
      %v1866 = vpack.c.b16 %v1849, %v1848
      %v1867 = vpack.c.b16 %v1851, %v1850
      %1884 = vst [vmem:[#allocation3 + $0x18] sm:$0xff] %v1852
      %1885 = vst [vmem:[#allocation3 + $0x60] sm:$0xff] %v1853
      %1886 = vst [vmem:[#allocation3 + $0xa8] sm:$0xff] %v1854
      %1887 = vst [vmem:[#allocation3 + $0xf0] sm:$0xff] %v1855
      %1888 = vst [vmem:[#allocation3 + $0x138] sm:$0xff] %v1856
      %1889 = vst [vmem:[#allocation3 + $0x180] sm:$0xff] %v1857
      %1890 = vst [vmem:[#allocation3 + $0x1c8] sm:$0xff] %v1858
      %1891 = vst [vmem:[#allocation3 + $0x210] sm:$0xff] %v1859
      %1892 = vst [vmem:[#allocation3 + $0x258] sm:$0xff] %v1860
      %1893 = vst [vmem:[#allocation3 + $0x2a0] sm:$0xff] %v1861
      %1894 = vst [vmem:[#allocation3 + $0x2e8] sm:$0xff] %v1862
      %1895 = vst [vmem:[#allocation3 + $0x330] sm:$0xff] %v1863
      %1896 = vst [vmem:[#allocation3 + $0x378] sm:$0xff] %v1864
      %1897 = vst [vmem:[#allocation3 + $0x3c0] sm:$0xff] %v1865
      %1898 = vst [vmem:[#allocation3 + $0x408] sm:$0xff] %v1866
      %1899 = vst [vmem:[#allocation3 + $0x450] sm:$0xff] %v1867
      %v1900 = vld [vmem:[%s688] sm:$0xf]
      %v1901 = vld [vmem:[%s688 + $0x4] sm:$0xf]
      %v1902 = vld [vmem:[%s688 + $0x8] sm:$0x1]
      %v1903 = vld [vmem:[%s688 + $0xc] sm:$0xf]
      %v1904 = vld [vmem:[%s688 + $0x10] sm:$0xf]
      %v1905 = vld [vmem:[%s688 + $0x14] sm:$0x1]
      %v1906 = vld [vmem:[%s688 + $0x18] sm:$0xf]
      %v1907 = vld [vmem:[%s688 + $0x1c] sm:$0xf]
      %v1908 = vld [vmem:[%s688 + $0x20] sm:$0x1]
      %v1909 = vld [vmem:[%s688 + $0x24] sm:$0xf]
      %v1910 = vld [vmem:[%s688 + $0x28] sm:$0xf]
      %v1911 = vld [vmem:[%s688 + $0x2c] sm:$0x1]
      %v1912 = vld [vmem:[%s688 + $0x30] sm:$0xf]
      %v1913 = vld [vmem:[%s688 + $0x34] sm:$0xf]
      %v1914 = vld [vmem:[%s688 + $0x38] sm:$0x1]
      %v1915 = vld [vmem:[%s688 + $0x3c] sm:$0xf]
      %v1916 = vld [vmem:[%s688 + $0x40] sm:$0xf]
      %v1917 = vld [vmem:[%s688 + $0x44] sm:$0x1]
      %v1918 = vld [vmem:[%s688 + $0x48] sm:$0xf]
      %v1919 = vld [vmem:[%s688 + $0x4c] sm:$0xf]
      %v1920 = vld [vmem:[%s688 + $0x50] sm:$0x1]
      %v1921 = vld [vmem:[%s688 + $0x54] sm:$0xf]
      %v1922 = vld [vmem:[%s688 + $0x58] sm:$0xf]
      %v1923 = vld [vmem:[%s688 + $0x5c] sm:$0x1]
      %v1924 = vld [vmem:[%s688 + $0x60] sm:$0xf]
      %v1925 = vld [vmem:[%s688 + $0x64] sm:$0xf]
      %v1926 = vld [vmem:[%s688 + $0x68] sm:$0x1]
      %v1927 = vld [vmem:[%s688 + $0x6c] sm:$0xf]
      %v1928 = vld [vmem:[%s688 + $0x70] sm:$0xf]
      %v1929 = vld [vmem:[%s688 + $0x74] sm:$0x1]
      %v1930 = vld [vmem:[%s688 + $0x78] sm:$0xf]
      %v1931 = vld [vmem:[%s688 + $0x7c] sm:$0xf]
      %v1932 = vld [vmem:[%s688 + $0x80] sm:$0x1]
      %v1933 = vld [vmem:[%s688 + $0x84] sm:$0xf]
      %v1934 = vld [vmem:[%s688 + $0x88] sm:$0xf]
      %v1935 = vld [vmem:[%s688 + $0x8c] sm:$0x1]
      %v1936 = vld [vmem:[%s688 + $0x90] sm:$0xf]
      %v1937 = vld [vmem:[%s688 + $0x94] sm:$0xf]
      %v1938 = vld [vmem:[%s688 + $0x98] sm:$0x1]
      %v1939 = vld [vmem:[%s688 + $0x9c] sm:$0xf]
      %v1940 = vld [vmem:[%s688 + $0xa0] sm:$0xf]
      %v1941 = vld [vmem:[%s688 + $0xa4] sm:$0x1]
      %v1942 = vld [vmem:[%s688 + $0xa8] sm:$0xf]
      %v1943 = vld [vmem:[%s688 + $0xac] sm:$0xf]
      %v1944 = vld [vmem:[%s688 + $0xb0] sm:$0x1]
      %v1945 = vld [vmem:[%s688 + $0xb4] sm:$0xf]
      %v1946 = vld [vmem:[%s688 + $0xb8] sm:$0xf]
      %v1947 = vld [vmem:[%s688 + $0xbc] sm:$0x1]
      %v1949 = vshrl.u32 %v1900, 16
      %v1951 = vrot.slane %v1949, 4
      %v1952 = vshll.u32 %v1900, 16
      %v1954 = vrot.slane %v1952, 5
      %v1955 = vor.u32 %v1951, %v1954
      %v1956 = vrot.slane %v1955, 4
      %v1958 = vshll.u32 %v1901, 16
      %v1960 = vrot.slane %v1958, 5
      %v1961 = vsel %vm1000, %v1956, %v1960
      %v1962 = vshrl.u32 %v1901, 16
      %v1964 = vrot.slane %v1962, 4
      %v1965 = vor.u32 %v1964, %v1960
      %v1966 = vrot.slane %v1965, 4
      %v1968 = vshll.u32 %v1902, 16
      %v1970 = vrot.slane %v1968, 5
      %v1971 = vsel %vm1000, %v1966, %v1970
      %v1973 = vshrl.u32 %v1903, 16
      %v1975 = vrot.slane %v1973, 4
      %v1976 = vshll.u32 %v1903, 16
      %v1978 = vrot.slane %v1976, 5
      %v1979 = vor.u32 %v1975, %v1978
      %v1980 = vrot.slane %v1979, 4
      %v1982 = vshll.u32 %v1904, 16
      %v1984 = vrot.slane %v1982, 5
      %v1985 = vsel %vm1000, %v1980, %v1984
      %v1986 = vshrl.u32 %v1904, 16
      %v1988 = vrot.slane %v1986, 4
      %v1989 = vor.u32 %v1988, %v1984
      %v1990 = vrot.slane %v1989, 4
      %v1992 = vshll.u32 %v1905, 16
      %v1994 = vrot.slane %v1992, 5
      %v1995 = vsel %vm1000, %v1990, %v1994
      %v1997 = vshrl.u32 %v1906, 16
      %v1999 = vrot.slane %v1997, 4
      %v2000 = vshll.u32 %v1906, 16
      %v2002 = vrot.slane %v2000, 5
      %v2003 = vor.u32 %v1999, %v2002
      %v2004 = vrot.slane %v2003, 4
      %v2006 = vshll.u32 %v1907, 16
      %v2008 = vrot.slane %v2006, 5
      %v2009 = vsel %vm1000, %v2004, %v2008
      %v2010 = vshrl.u32 %v1907, 16
      %v2012 = vrot.slane %v2010, 4
      %v2013 = vor.u32 %v2012, %v2008
      %v2014 = vrot.slane %v2013, 4
      %v2016 = vshll.u32 %v1908, 16
      %v2018 = vrot.slane %v2016, 5
      %v2019 = vsel %vm1000, %v2014, %v2018
      %v2021 = vshrl.u32 %v1909, 16
      %v2023 = vrot.slane %v2021, 4
      %v2024 = vshll.u32 %v1909, 16
      %v2026 = vrot.slane %v2024, 5
      %v2027 = vor.u32 %v2023, %v2026
      %v2028 = vrot.slane %v2027, 4
      %v2030 = vshll.u32 %v1910, 16
      %v2032 = vrot.slane %v2030, 5
      %v2033 = vsel %vm1000, %v2028, %v2032
      %v2034 = vshrl.u32 %v1910, 16
      %v2036 = vrot.slane %v2034, 4
      %v2037 = vor.u32 %v2036, %v2032
      %v2038 = vrot.slane %v2037, 4
      %v2040 = vshll.u32 %v1911, 16
      %v2042 = vrot.slane %v2040, 5
      %v2043 = vsel %vm1000, %v2038, %v2042
      %v2045 = vshrl.u32 %v1912, 16
      %v2047 = vrot.slane %v2045, 4
      %v2048 = vshll.u32 %v1912, 16
      %v2050 = vrot.slane %v2048, 5
      %v2051 = vor.u32 %v2047, %v2050
      %v2052 = vrot.slane %v2051, 4
      %v2054 = vshll.u32 %v1913, 16
      %v2056 = vrot.slane %v2054, 5
      %v2057 = vsel %vm1000, %v2052, %v2056
      %v2058 = vshrl.u32 %v1913, 16
      %v2060 = vrot.slane %v2058, 4
      %v2061 = vor.u32 %v2060, %v2056
      %v2062 = vrot.slane %v2061, 4
      %v2064 = vshll.u32 %v1914, 16
      %v2066 = vrot.slane %v2064, 5
      %v2067 = vsel %vm1000, %v2062, %v2066
      %v2069 = vshrl.u32 %v1915, 16
      %v2071 = vrot.slane %v2069, 4
      %v2072 = vshll.u32 %v1915, 16
      %v2074 = vrot.slane %v2072, 5
      %v2075 = vor.u32 %v2071, %v2074
      %v2076 = vrot.slane %v2075, 4
      %v2078 = vshll.u32 %v1916, 16
      %v2080 = vrot.slane %v2078, 5
      %v2081 = vsel %vm1000, %v2076, %v2080
      %v2082 = vshrl.u32 %v1916, 16
      %v2084 = vrot.slane %v2082, 4
      %v2085 = vor.u32 %v2084, %v2080
      %v2086 = vrot.slane %v2085, 4
      %v2088 = vshll.u32 %v1917, 16
      %v2090 = vrot.slane %v2088, 5
      %v2091 = vsel %vm1000, %v2086, %v2090
      %v2093 = vshrl.u32 %v1918, 16
      %v2095 = vrot.slane %v2093, 4
      %v2096 = vshll.u32 %v1918, 16
      %v2098 = vrot.slane %v2096, 5
      %v2099 = vor.u32 %v2095, %v2098
      %v2100 = vrot.slane %v2099, 4
      %v2102 = vshll.u32 %v1919, 16
      %v2104 = vrot.slane %v2102, 5
      %v2105 = vsel %vm1000, %v2100, %v2104
      %v2106 = vshrl.u32 %v1919, 16
      %v2108 = vrot.slane %v2106, 4
      %v2109 = vor.u32 %v2108, %v2104
      %v2110 = vrot.slane %v2109, 4
      %v2112 = vshll.u32 %v1920, 16
      %v2114 = vrot.slane %v2112, 5
      %v2115 = vsel %vm1000, %v2110, %v2114
      %v2117 = vshrl.u32 %v1921, 16
      %v2119 = vrot.slane %v2117, 4
      %v2120 = vshll.u32 %v1921, 16
      %v2122 = vrot.slane %v2120, 5
      %v2123 = vor.u32 %v2119, %v2122
      %v2124 = vrot.slane %v2123, 4
      %v2126 = vshll.u32 %v1922, 16
      %v2128 = vrot.slane %v2126, 5
      %v2129 = vsel %vm1000, %v2124, %v2128
      %v2130 = vshrl.u32 %v1922, 16
      %v2132 = vrot.slane %v2130, 4
      %v2133 = vor.u32 %v2132, %v2128
      %v2134 = vrot.slane %v2133, 4
      %v2136 = vshll.u32 %v1923, 16
      %v2138 = vrot.slane %v2136, 5
      %v2139 = vsel %vm1000, %v2134, %v2138
      %v2141 = vshrl.u32 %v1924, 16
      %v2143 = vrot.slane %v2141, 4
      %v2144 = vshll.u32 %v1924, 16
      %v2146 = vrot.slane %v2144, 5
      %v2147 = vor.u32 %v2143, %v2146
      %v2148 = vrot.slane %v2147, 4
      %v2150 = vshll.u32 %v1925, 16
      %v2152 = vrot.slane %v2150, 5
      %v2153 = vsel %vm1000, %v2148, %v2152
      %v2154 = vshrl.u32 %v1925, 16
      %v2156 = vrot.slane %v2154, 4
      %v2157 = vor.u32 %v2156, %v2152
      %v2158 = vrot.slane %v2157, 4
      %v2160 = vshll.u32 %v1926, 16
      %v2162 = vrot.slane %v2160, 5
      %v2163 = vsel %vm1000, %v2158, %v2162
      %v2165 = vshrl.u32 %v1927, 16
      %v2167 = vrot.slane %v2165, 4
      %v2168 = vshll.u32 %v1927, 16
      %v2170 = vrot.slane %v2168, 5
      %v2171 = vor.u32 %v2167, %v2170
      %v2172 = vrot.slane %v2171, 4
      %v2174 = vshll.u32 %v1928, 16
      %v2176 = vrot.slane %v2174, 5
      %v2177 = vsel %vm1000, %v2172, %v2176
      %v2178 = vshrl.u32 %v1928, 16
      %v2180 = vrot.slane %v2178, 4
      %v2181 = vor.u32 %v2180, %v2176
      %v2182 = vrot.slane %v2181, 4
      %v2184 = vshll.u32 %v1929, 16
      %v2186 = vrot.slane %v2184, 5
      %v2187 = vsel %vm1000, %v2182, %v2186
      %v2189 = vshrl.u32 %v1930, 16
      %v2191 = vrot.slane %v2189, 4
      %v2192 = vshll.u32 %v1930, 16
      %v2194 = vrot.slane %v2192, 5
      %v2195 = vor.u32 %v2191, %v2194
      %v2196 = vrot.slane %v2195, 4
      %v2198 = vshll.u32 %v1931, 16
      %v2200 = vrot.slane %v2198, 5
      %v2201 = vsel %vm1000, %v2196, %v2200
      %v2202 = vshrl.u32 %v1931, 16
      %v2204 = vrot.slane %v2202, 4
      %v2205 = vor.u32 %v2204, %v2200
      %v2206 = vrot.slane %v2205, 4
      %v2208 = vshll.u32 %v1932, 16
      %v2210 = vrot.slane %v2208, 5
      %v2211 = vsel %vm1000, %v2206, %v2210
      %v2213 = vshrl.u32 %v1933, 16
      %v2215 = vrot.slane %v2213, 4
      %v2216 = vshll.u32 %v1933, 16
      %v2218 = vrot.slane %v2216, 5
      %v2219 = vor.u32 %v2215, %v2218
      %v2220 = vrot.slane %v2219, 4
      %v2222 = vshll.u32 %v1934, 16
      %v2224 = vrot.slane %v2222, 5
      %v2225 = vsel %vm1000, %v2220, %v2224
      %v2226 = vshrl.u32 %v1934, 16
      %v2228 = vrot.slane %v2226, 4
      %v2229 = vor.u32 %v2228, %v2224
      %v2230 = vrot.slane %v2229, 4
      %v2232 = vshll.u32 %v1935, 16
      %v2234 = vrot.slane %v2232, 5
      %v2235 = vsel %vm1000, %v2230, %v2234
      %v2237 = vshrl.u32 %v1936, 16
      %v2239 = vrot.slane %v2237, 4
      %v2240 = vshll.u32 %v1936, 16
      %v2242 = vrot.slane %v2240, 5
      %v2243 = vor.u32 %v2239, %v2242
      %v2244 = vrot.slane %v2243, 4
      %v2246 = vshll.u32 %v1937, 16
      %v2248 = vrot.slane %v2246, 5
      %v2249 = vsel %vm1000, %v2244, %v2248
      %v2250 = vshrl.u32 %v1937, 16
      %v2252 = vrot.slane %v2250, 4
      %v2253 = vor.u32 %v2252, %v2248
      %v2254 = vrot.slane %v2253, 4
      %v2256 = vshll.u32 %v1938, 16
      %v2258 = vrot.slane %v2256, 5
      %v2259 = vsel %vm1000, %v2254, %v2258
      %v2261 = vshrl.u32 %v1939, 16
      %v2263 = vrot.slane %v2261, 4
      %v2264 = vshll.u32 %v1939, 16
      %v2266 = vrot.slane %v2264, 5
      %v2267 = vor.u32 %v2263, %v2266
      %v2268 = vrot.slane %v2267, 4
      %v2270 = vshll.u32 %v1940, 16
      %v2272 = vrot.slane %v2270, 5
      %v2273 = vsel %vm1000, %v2268, %v2272
      %v2274 = vshrl.u32 %v1940, 16
      %v2276 = vrot.slane %v2274, 4
      %v2277 = vor.u32 %v2276, %v2272
      %v2278 = vrot.slane %v2277, 4
      %v2280 = vshll.u32 %v1941, 16
      %v2282 = vrot.slane %v2280, 5
      %v2283 = vsel %vm1000, %v2278, %v2282
      %v2285 = vshrl.u32 %v1942, 16
      %v2287 = vrot.slane %v2285, 4
      %v2288 = vshll.u32 %v1942, 16
      %v2290 = vrot.slane %v2288, 5
      %v2291 = vor.u32 %v2287, %v2290
      %v2292 = vrot.slane %v2291, 4
      %v2294 = vshll.u32 %v1943, 16
      %v2296 = vrot.slane %v2294, 5
      %v2297 = vsel %vm1000, %v2292, %v2296
      %v2298 = vshrl.u32 %v1943, 16
      %v2300 = vrot.slane %v2298, 4
      %v2301 = vor.u32 %v2300, %v2296
      %v2302 = vrot.slane %v2301, 4
      %v2304 = vshll.u32 %v1944, 16
      %v2306 = vrot.slane %v2304, 5
      %v2307 = vsel %vm1000, %v2302, %v2306
      %v2309 = vshrl.u32 %v1945, 16
      %v2311 = vrot.slane %v2309, 4
      %v2312 = vshll.u32 %v1945, 16
      %v2314 = vrot.slane %v2312, 5
      %v2315 = vor.u32 %v2311, %v2314
      %v2316 = vrot.slane %v2315, 4
      %v2318 = vshll.u32 %v1946, 16
      %v2320 = vrot.slane %v2318, 5
      %v2321 = vsel %vm1000, %v2316, %v2320
      %v2322 = vshrl.u32 %v1946, 16
      %v2324 = vrot.slane %v2322, 4
      %v2325 = vor.u32 %v2324, %v2320
      %v2326 = vrot.slane %v2325, 4
      %v2328 = vshll.u32 %v1947, 16
      %v2330 = vrot.slane %v2328, 5
      %v2331 = vsel %vm1000, %v2326, %v2330
      %v2332 = vunpack.c.l.b16 %v1961
      %v2333 = vunpack.c.l.b16 %v1971
      %v2334 = vunpack.c.l.b16 %v1985
      %v2335 = vunpack.c.l.b16 %v1995
      %v2336 = vunpack.c.l.b16 %v2009
      %v2337 = vunpack.c.l.b16 %v2019
      %v2338 = vunpack.c.l.b16 %v2033
      %v2339 = vunpack.c.l.b16 %v2043
      %v2340 = vunpack.c.l.b16 %v2057
      %v2341 = vunpack.c.l.b16 %v2067
      %v2342 = vunpack.c.l.b16 %v2081
      %v2343 = vunpack.c.l.b16 %v2091
      %v2344 = vunpack.c.l.b16 %v2105
      %v2345 = vunpack.c.l.b16 %v2115
      %v2346 = vunpack.c.l.b16 %v2129
      %v2347 = vunpack.c.l.b16 %v2139
      %v2348 = vunpack.c.l.b16 %v2153
      %v2349 = vunpack.c.l.b16 %v2163
      %v2350 = vunpack.c.l.b16 %v2177
      %v2351 = vunpack.c.l.b16 %v2187
      %v2352 = vunpack.c.l.b16 %v2201
      %v2353 = vunpack.c.l.b16 %v2211
      %v2354 = vunpack.c.l.b16 %v2225
      %v2355 = vunpack.c.l.b16 %v2235
      %v2356 = vunpack.c.l.b16 %v2249
      %v2357 = vunpack.c.l.b16 %v2259
      %v2358 = vunpack.c.l.b16 %v2273
      %v2359 = vunpack.c.l.b16 %v2283
      %v2360 = vunpack.c.l.b16 %v2297
      %v2361 = vunpack.c.l.b16 %v2307
      %v2362 = vunpack.c.l.b16 %v2321
      %v2363 = vunpack.c.l.b16 %v2331
      %v2364 = vpack.c.b16 %v2333, %v2332
      %v2365 = vpack.c.b16 %v2335, %v2334
      %v2366 = vpack.c.b16 %v2337, %v2336
      %v2367 = vpack.c.b16 %v2339, %v2338
      %v2368 = vpack.c.b16 %v2341, %v2340
      %v2369 = vpack.c.b16 %v2343, %v2342
      %v2370 = vpack.c.b16 %v2345, %v2344
      %v2371 = vpack.c.b16 %v2347, %v2346
      %v2372 = vpack.c.b16 %v2349, %v2348
      %v2373 = vpack.c.b16 %v2351, %v2350
      %v2374 = vpack.c.b16 %v2353, %v2352
      %v2375 = vpack.c.b16 %v2355, %v2354
      %v2376 = vpack.c.b16 %v2357, %v2356
      %v2377 = vpack.c.b16 %v2359, %v2358
      %v2378 = vpack.c.b16 %v2361, %v2360
      %v2379 = vpack.c.b16 %v2363, %v2362
      %2396 = vst [vmem:[#allocation3 + $0x20] sm:$0xff] %v2364
      %2397 = vst [vmem:[#allocation3 + $0x68] sm:$0xff] %v2365
      %2398 = vst [vmem:[#allocation3 + $0xb0] sm:$0xff] %v2366
      %2399 = vst [vmem:[#allocation3 + $0xf8] sm:$0xff] %v2367
      %2400 = vst [vmem:[#allocation3 + $0x140] sm:$0xff] %v2368
      %2401 = vst [vmem:[#allocation3 + $0x188] sm:$0xff] %v2369
      %2402 = vst [vmem:[#allocation3 + $0x1d0] sm:$0xff] %v2370
      %2403 = vst [vmem:[#allocation3 + $0x218] sm:$0xff] %v2371
      %2404 = vst [vmem:[#allocation3 + $0x260] sm:$0xff] %v2372
      %2405 = vst [vmem:[#allocation3 + $0x2a8] sm:$0xff] %v2373
      %2406 = vst [vmem:[#allocation3 + $0x2f0] sm:$0xff] %v2374
      %2407 = vst [vmem:[#allocation3 + $0x338] sm:$0xff] %v2375
      %2408 = vst [vmem:[#allocation3 + $0x380] sm:$0xff] %v2376
      %2409 = vst [vmem:[#allocation3 + $0x3c8] sm:$0xff] %v2377
      %2410 = vst [vmem:[#allocation3 + $0x410] sm:$0xff] %v2378
      %2411 = vst [vmem:[#allocation3 + $0x458] sm:$0xff] %v2379
      %v2412 = vld [vmem:[%s688] sm:$0xe]
      %v2413 = vld [vmem:[%s688 + $0x4] sm:$0xf]
      %v2414 = vld [vmem:[%s688 + $0x8] sm:$0x1]
      %v2415 = vld [vmem:[%s688 + $0xc] sm:$0xe]
      %v2416 = vld [vmem:[%s688 + $0x10] sm:$0xf]
      %v2417 = vld [vmem:[%s688 + $0x14] sm:$0x1]
      %v2418 = vld [vmem:[%s688 + $0x18] sm:$0xe]
      %v2419 = vld [vmem:[%s688 + $0x1c] sm:$0xf]
      %v2420 = vld [vmem:[%s688 + $0x20] sm:$0x1]
      %v2421 = vld [vmem:[%s688 + $0x24] sm:$0xe]
      %v2422 = vld [vmem:[%s688 + $0x28] sm:$0xf]
      %v2423 = vld [vmem:[%s688 + $0x2c] sm:$0x1]
      %v2424 = vld [vmem:[%s688 + $0x30] sm:$0xe]
      %v2425 = vld [vmem:[%s688 + $0x34] sm:$0xf]
      %v2426 = vld [vmem:[%s688 + $0x38] sm:$0x1]
      %v2427 = vld [vmem:[%s688 + $0x3c] sm:$0xe]
      %v2428 = vld [vmem:[%s688 + $0x40] sm:$0xf]
      %v2429 = vld [vmem:[%s688 + $0x44] sm:$0x1]
      %v2430 = vld [vmem:[%s688 + $0x48] sm:$0xe]
      %v2431 = vld [vmem:[%s688 + $0x4c] sm:$0xf]
      %v2432 = vld [vmem:[%s688 + $0x50] sm:$0x1]
      %v2433 = vld [vmem:[%s688 + $0x54] sm:$0xe]
      %v2434 = vld [vmem:[%s688 + $0x58] sm:$0xf]
      %v2435 = vld [vmem:[%s688 + $0x5c] sm:$0x1]
      %v2436 = vld [vmem:[%s688 + $0x60] sm:$0xe]
      %v2437 = vld [vmem:[%s688 + $0x64] sm:$0xf]
      %v2438 = vld [vmem:[%s688 + $0x68] sm:$0x1]
      %v2439 = vld [vmem:[%s688 + $0x6c] sm:$0xe]
      %v2440 = vld [vmem:[%s688 + $0x70] sm:$0xf]
      %v2441 = vld [vmem:[%s688 + $0x74] sm:$0x1]
      %v2442 = vld [vmem:[%s688 + $0x78] sm:$0xe]
      %v2443 = vld [vmem:[%s688 + $0x7c] sm:$0xf]
      %v2444 = vld [vmem:[%s688 + $0x80] sm:$0x1]
      %v2445 = vld [vmem:[%s688 + $0x84] sm:$0xe]
      %v2446 = vld [vmem:[%s688 + $0x88] sm:$0xf]
      %v2447 = vld [vmem:[%s688 + $0x8c] sm:$0x1]
      %v2448 = vld [vmem:[%s688 + $0x90] sm:$0xe]
      %v2449 = vld [vmem:[%s688 + $0x94] sm:$0xf]
      %v2450 = vld [vmem:[%s688 + $0x98] sm:$0x1]
      %v2451 = vld [vmem:[%s688 + $0x9c] sm:$0xe]
      %v2452 = vld [vmem:[%s688 + $0xa0] sm:$0xf]
      %v2453 = vld [vmem:[%s688 + $0xa4] sm:$0x1]
      %v2454 = vld [vmem:[%s688 + $0xa8] sm:$0xe]
      %v2455 = vld [vmem:[%s688 + $0xac] sm:$0xf]
      %v2456 = vld [vmem:[%s688 + $0xb0] sm:$0x1]
      %v2457 = vld [vmem:[%s688 + $0xb4] sm:$0xe]
      %v2458 = vld [vmem:[%s688 + $0xb8] sm:$0xf]
      %v2459 = vld [vmem:[%s688 + $0xbc] sm:$0x1]
      %v2508 = vrot.slane %v2412, 5
      %v2509 = vrot.slane %v2508, 4
      %v2510 = vrot.slane %v2413, 5
      %v2511 = vsel %vm1563, %v2509, %v2510
      %v2512 = vrot.slane %v2510, 4
      %v2513 = vrot.slane %v2414, 5
      %v2514 = vsel %vm1563, %v2512, %v2513
      %v2515 = vrot.slane %v2415, 5
      %v2516 = vrot.slane %v2515, 4
      %v2517 = vrot.slane %v2416, 5
      %v2518 = vsel %vm1563, %v2516, %v2517
      %v2519 = vrot.slane %v2517, 4
      %v2520 = vrot.slane %v2417, 5
      %v2521 = vsel %vm1563, %v2519, %v2520
      %v2522 = vrot.slane %v2418, 5
      %v2523 = vrot.slane %v2522, 4
      %v2524 = vrot.slane %v2419, 5
      %v2525 = vsel %vm1563, %v2523, %v2524
      %v2526 = vrot.slane %v2524, 4
      %v2527 = vrot.slane %v2420, 5
      %v2528 = vsel %vm1563, %v2526, %v2527
      %v2529 = vrot.slane %v2421, 5
      %v2530 = vrot.slane %v2529, 4
      %v2531 = vrot.slane %v2422, 5
      %v2532 = vsel %vm1563, %v2530, %v2531
      %v2533 = vrot.slane %v2531, 4
      %v2534 = vrot.slane %v2423, 5
      %v2535 = vsel %vm1563, %v2533, %v2534
      %v2536 = vrot.slane %v2424, 5
      %v2537 = vrot.slane %v2536, 4
      %v2538 = vrot.slane %v2425, 5
      %v2539 = vsel %vm1563, %v2537, %v2538
      %v2540 = vrot.slane %v2538, 4
      %v2541 = vrot.slane %v2426, 5
      %v2542 = vsel %vm1563, %v2540, %v2541
      %v2543 = vrot.slane %v2427, 5
      %v2544 = vrot.slane %v2543, 4
      %v2545 = vrot.slane %v2428, 5
      %v2546 = vsel %vm1563, %v2544, %v2545
      %v2547 = vrot.slane %v2545, 4
      %v2548 = vrot.slane %v2429, 5
      %v2549 = vsel %vm1563, %v2547, %v2548
      %v2550 = vrot.slane %v2430, 5
      %v2551 = vrot.slane %v2550, 4
      %v2552 = vrot.slane %v2431, 5
      %v2553 = vsel %vm1563, %v2551, %v2552
      %v2554 = vrot.slane %v2552, 4
      %v2555 = vrot.slane %v2432, 5
      %v2556 = vsel %vm1563, %v2554, %v2555
      %v2557 = vrot.slane %v2433, 5
      %v2558 = vrot.slane %v2557, 4
      %v2559 = vrot.slane %v2434, 5
      %v2560 = vsel %vm1563, %v2558, %v2559
      %v2561 = vrot.slane %v2559, 4
      %v2562 = vrot.slane %v2435, 5
      %v2563 = vsel %vm1563, %v2561, %v2562
      %v2564 = vrot.slane %v2436, 5
      %v2565 = vrot.slane %v2564, 4
      %v2566 = vrot.slane %v2437, 5
      %v2567 = vsel %vm1563, %v2565, %v2566
      %v2568 = vrot.slane %v2566, 4
      %v2569 = vrot.slane %v2438, 5
      %v2570 = vsel %vm1563, %v2568, %v2569
      %v2571 = vrot.slane %v2439, 5
      %v2572 = vrot.slane %v2571, 4
      %v2573 = vrot.slane %v2440, 5
      %v2574 = vsel %vm1563, %v2572, %v2573
      %v2575 = vrot.slane %v2573, 4
      %v2576 = vrot.slane %v2441, 5
      %v2577 = vsel %vm1563, %v2575, %v2576
      %v2578 = vrot.slane %v2442, 5
      %v2579 = vrot.slane %v2578, 4
      %v2580 = vrot.slane %v2443, 5
      %v2581 = vsel %vm1563, %v2579, %v2580
      %v2582 = vrot.slane %v2580, 4
      %v2583 = vrot.slane %v2444, 5
      %v2584 = vsel %vm1563, %v2582, %v2583
      %v2585 = vrot.slane %v2445, 5
      %v2586 = vrot.slane %v2585, 4
      %v2587 = vrot.slane %v2446, 5
      %v2588 = vsel %vm1563, %v2586, %v2587
      %v2589 = vrot.slane %v2587, 4
      %v2590 = vrot.slane %v2447, 5
      %v2591 = vsel %vm1563, %v2589, %v2590
      %v2592 = vrot.slane %v2448, 5
      %v2593 = vrot.slane %v2592, 4
      %v2594 = vrot.slane %v2449, 5
      %v2595 = vsel %vm1563, %v2593, %v2594
      %v2596 = vrot.slane %v2594, 4
      %v2597 = vrot.slane %v2450, 5
      %v2598 = vsel %vm1563, %v2596, %v2597
      %v2599 = vrot.slane %v2451, 5
      %v2600 = vrot.slane %v2599, 4
      %v2601 = vrot.slane %v2452, 5
      %v2602 = vsel %vm1563, %v2600, %v2601
      %v2603 = vrot.slane %v2601, 4
      %v2604 = vrot.slane %v2453, 5
      %v2605 = vsel %vm1563, %v2603, %v2604
      %v2606 = vrot.slane %v2454, 5
      %v2607 = vrot.slane %v2606, 4
      %v2608 = vrot.slane %v2455, 5
      %v2609 = vsel %vm1563, %v2607, %v2608
      %v2610 = vrot.slane %v2608, 4
      %v2611 = vrot.slane %v2456, 5
      %v2612 = vsel %vm1563, %v2610, %v2611
      %v2613 = vrot.slane %v2457, 5
      %v2614 = vrot.slane %v2613, 4
      %v2615 = vrot.slane %v2458, 5
      %v2616 = vsel %vm1563, %v2614, %v2615
      %v2617 = vrot.slane %v2615, 4
      %v2618 = vrot.slane %v2459, 5
      %v2619 = vsel %vm1563, %v2617, %v2618
      %v2620 = vunpack.c.l.b16 %v2511
      %v2621 = vunpack.c.l.b16 %v2514
      %v2622 = vunpack.c.l.b16 %v2518
      %v2623 = vunpack.c.l.b16 %v2521
      %v2624 = vunpack.c.l.b16 %v2525
      %v2625 = vunpack.c.l.b16 %v2528
      %v2626 = vunpack.c.l.b16 %v2532
      %v2627 = vunpack.c.l.b16 %v2535
      %v2628 = vunpack.c.l.b16 %v2539
      %v2629 = vunpack.c.l.b16 %v2542
      %v2630 = vunpack.c.l.b16 %v2546
      %v2631 = vunpack.c.l.b16 %v2549
      %v2632 = vunpack.c.l.b16 %v2553
      %v2633 = vunpack.c.l.b16 %v2556
      %v2634 = vunpack.c.l.b16 %v2560
      %v2635 = vunpack.c.l.b16 %v2563
      %v2636 = vunpack.c.l.b16 %v2567
      %v2637 = vunpack.c.l.b16 %v2570
      %v2638 = vunpack.c.l.b16 %v2574
      %v2639 = vunpack.c.l.b16 %v2577
      %v2640 = vunpack.c.l.b16 %v2581
      %v2641 = vunpack.c.l.b16 %v2584
      %v2642 = vunpack.c.l.b16 %v2588
      %v2643 = vunpack.c.l.b16 %v2591
      %v2644 = vunpack.c.l.b16 %v2595
      %v2645 = vunpack.c.l.b16 %v2598
      %v2646 = vunpack.c.l.b16 %v2602
      %v2647 = vunpack.c.l.b16 %v2605
      %v2648 = vunpack.c.l.b16 %v2609
      %v2649 = vunpack.c.l.b16 %v2612
      %v2650 = vunpack.c.l.b16 %v2616
      %v2651 = vunpack.c.l.b16 %v2619
      %v2652 = vpack.c.b16 %v2621, %v2620
      %v2653 = vpack.c.b16 %v2623, %v2622
      %v2654 = vpack.c.b16 %v2625, %v2624
      %v2655 = vpack.c.b16 %v2627, %v2626
      %v2656 = vpack.c.b16 %v2629, %v2628
      %v2657 = vpack.c.b16 %v2631, %v2630
      %v2658 = vpack.c.b16 %v2633, %v2632
      %v2659 = vpack.c.b16 %v2635, %v2634
      %v2660 = vpack.c.b16 %v2637, %v2636
      %v2661 = vpack.c.b16 %v2639, %v2638
      %v2662 = vpack.c.b16 %v2641, %v2640
      %v2663 = vpack.c.b16 %v2643, %v2642
      %v2664 = vpack.c.b16 %v2645, %v2644
      %v2665 = vpack.c.b16 %v2647, %v2646
      %v2666 = vpack.c.b16 %v2649, %v2648
      %v2667 = vpack.c.b16 %v2651, %v2650
      %2684 = vst [vmem:[#allocation3 + $0x28] sm:$0xff] %v2652
      %2685 = vst [vmem:[#allocation3 + $0x70] sm:$0xff] %v2653
      %2686 = vst [vmem:[#allocation3 + $0xb8] sm:$0xff] %v2654
      %2687 = vst [vmem:[#allocation3 + $0x100] sm:$0xff] %v2655
      %2688 = vst [vmem:[#allocation3 + $0x148] sm:$0xff] %v2656
      %2689 = vst [vmem:[#allocation3 + $0x190] sm:$0xff] %v2657
      %2690 = vst [vmem:[#allocation3 + $0x1d8] sm:$0xff] %v2658
      %2691 = vst [vmem:[#allocation3 + $0x220] sm:$0xff] %v2659
      %2692 = vst [vmem:[#allocation3 + $0x268] sm:$0xff] %v2660
      %2693 = vst [vmem:[#allocation3 + $0x2b0] sm:$0xff] %v2661
      %2694 = vst [vmem:[#allocation3 + $0x2f8] sm:$0xff] %v2662
      %2695 = vst [vmem:[#allocation3 + $0x340] sm:$0xff] %v2663
      %2696 = vst [vmem:[#allocation3 + $0x388] sm:$0xff] %v2664
      %2697 = vst [vmem:[#allocation3 + $0x3d0] sm:$0xff] %v2665
      %2698 = vst [vmem:[#allocation3 + $0x418] sm:$0xff] %v2666
      %2699 = vst [vmem:[#allocation3 + $0x460] sm:$0xff] %v2667
      %s2700 = scalar_lea.vmem [#allocation2], 24
      %v2701 = vld [vmem:[%s2700] sm:$0xf]
      %v2702 = vld [vmem:[%s2700 + $0x4] sm:$0xf]
      %v2703 = vld [vmem:[%s2700 + $0xc] sm:$0xf]
      %v2704 = vld [vmem:[%s2700 + $0x10] sm:$0xf]
      %v2705 = vld [vmem:[%s2700 + $0x18] sm:$0xf]
      %v2706 = vld [vmem:[%s2700 + $0x1c] sm:$0xf]
      %v2707 = vld [vmem:[%s2700 + $0x24] sm:$0xf]
      %v2708 = vld [vmem:[%s2700 + $0x28] sm:$0xf]
      %v2709 = vld [vmem:[%s2700 + $0x30] sm:$0xf]
      %v2710 = vld [vmem:[%s2700 + $0x34] sm:$0xf]
      %v2711 = vld [vmem:[%s2700 + $0x3c] sm:$0xf]
      %v2712 = vld [vmem:[%s2700 + $0x40] sm:$0xf]
      %v2713 = vld [vmem:[%s2700 + $0x48] sm:$0xf]
      %v2714 = vld [vmem:[%s2700 + $0x4c] sm:$0xf]
      %v2715 = vld [vmem:[%s2700 + $0x54] sm:$0xf]
      %v2716 = vld [vmem:[%s2700 + $0x58] sm:$0xf]
      %v2717 = vld [vmem:[%s2700 + $0x60] sm:$0xf]
      %v2718 = vld [vmem:[%s2700 + $0x64] sm:$0xf]
      %v2719 = vld [vmem:[%s2700 + $0x6c] sm:$0xf]
      %v2720 = vld [vmem:[%s2700 + $0x70] sm:$0xf]
      %v2721 = vld [vmem:[%s2700 + $0x78] sm:$0xf]
      %v2722 = vld [vmem:[%s2700 + $0x7c] sm:$0xf]
      %v2723 = vld [vmem:[%s2700 + $0x84] sm:$0xf]
      %v2724 = vld [vmem:[%s2700 + $0x88] sm:$0xf]
      %v2725 = vld [vmem:[%s2700 + $0x90] sm:$0xf]
      %v2726 = vld [vmem:[%s2700 + $0x94] sm:$0xf]
      %v2727 = vld [vmem:[%s2700 + $0x9c] sm:$0xf]
      %v2728 = vld [vmem:[%s2700 + $0xa0] sm:$0xf]
      %v2729 = vld [vmem:[%s2700 + $0xa8] sm:$0xf]
      %v2730 = vld [vmem:[%s2700 + $0xac] sm:$0xf]
      %v2731 = vld [vmem:[%s2700 + $0xb4] sm:$0xf]
      %v2732 = vld [vmem:[%s2700 + $0xb8] sm:$0xf]
      %v2765 = vunpack.c.l.b16 %v2701
      %v2766 = vunpack.c.l.b16 %v2702
      %v2767 = vunpack.c.l.b16 %v2703
      %v2768 = vunpack.c.l.b16 %v2704
      %v2769 = vunpack.c.l.b16 %v2705
      %v2770 = vunpack.c.l.b16 %v2706
      %v2771 = vunpack.c.l.b16 %v2707
      %v2772 = vunpack.c.l.b16 %v2708
      %v2773 = vunpack.c.l.b16 %v2709
      %v2774 = vunpack.c.l.b16 %v2710
      %v2775 = vunpack.c.l.b16 %v2711
      %v2776 = vunpack.c.l.b16 %v2712
      %v2777 = vunpack.c.l.b16 %v2713
      %v2778 = vunpack.c.l.b16 %v2714
      %v2779 = vunpack.c.l.b16 %v2715
      %v2780 = vunpack.c.l.b16 %v2716
      %v2781 = vunpack.c.l.b16 %v2717
      %v2782 = vunpack.c.l.b16 %v2718
      %v2783 = vunpack.c.l.b16 %v2719
      %v2784 = vunpack.c.l.b16 %v2720
      %v2785 = vunpack.c.l.b16 %v2721
      %v2786 = vunpack.c.l.b16 %v2722
      %v2787 = vunpack.c.l.b16 %v2723
      %v2788 = vunpack.c.l.b16 %v2724
      %v2789 = vunpack.c.l.b16 %v2725
      %v2790 = vunpack.c.l.b16 %v2726
      %v2791 = vunpack.c.l.b16 %v2727
      %v2792 = vunpack.c.l.b16 %v2728
      %v2793 = vunpack.c.l.b16 %v2729
      %v2794 = vunpack.c.l.b16 %v2730
      %v2795 = vunpack.c.l.b16 %v2731
      %v2796 = vunpack.c.l.b16 %v2732
      %v2797 = vpack.c.b16 %v2766, %v2765
      %v2798 = vpack.c.b16 %v2768, %v2767
      %v2799 = vpack.c.b16 %v2770, %v2769
      %v2800 = vpack.c.b16 %v2772, %v2771
      %v2801 = vpack.c.b16 %v2774, %v2773
      %v2802 = vpack.c.b16 %v2776, %v2775
      %v2803 = vpack.c.b16 %v2778, %v2777
      %v2804 = vpack.c.b16 %v2780, %v2779
      %v2805 = vpack.c.b16 %v2782, %v2781
      %v2806 = vpack.c.b16 %v2784, %v2783
      %v2807 = vpack.c.b16 %v2786, %v2785
      %v2808 = vpack.c.b16 %v2788, %v2787
      %v2809 = vpack.c.b16 %v2790, %v2789
      %v2810 = vpack.c.b16 %v2792, %v2791
      %v2811 = vpack.c.b16 %v2794, %v2793
      %v2812 = vpack.c.b16 %v2796, %v2795
      %2829 = vst [vmem:[#allocation3 + $0x30] sm:$0xff] %v2797
      %2830 = vst [vmem:[#allocation3 + $0x78] sm:$0xff] %v2798
      %2831 = vst [vmem:[#allocation3 + $0xc0] sm:$0xff] %v2799
      %2832 = vst [vmem:[#allocation3 + $0x108] sm:$0xff] %v2800
      %2833 = vst [vmem:[#allocation3 + $0x150] sm:$0xff] %v2801
      %2834 = vst [vmem:[#allocation3 + $0x198] sm:$0xff] %v2802
      %2835 = vst [vmem:[#allocation3 + $0x1e0] sm:$0xff] %v2803
      %2836 = vst [vmem:[#allocation3 + $0x228] sm:$0xff] %v2804
      %2837 = vst [vmem:[#allocation3 + $0x270] sm:$0xff] %v2805
      %2838 = vst [vmem:[#allocation3 + $0x2b8] sm:$0xff] %v2806
      %2839 = vst [vmem:[#allocation3 + $0x300] sm:$0xff] %v2807
      %2840 = vst [vmem:[#allocation3 + $0x348] sm:$0xff] %v2808
      %2841 = vst [vmem:[#allocation3 + $0x390] sm:$0xff] %v2809
      %2842 = vst [vmem:[#allocation3 + $0x3d8] sm:$0xff] %v2810
      %2843 = vst [vmem:[#allocation3 + $0x420] sm:$0xff] %v2811
      %2844 = vst [vmem:[#allocation3 + $0x468] sm:$0xff] %v2812
      %v2845 = vld [vmem:[%s2700] sm:$0xf]
      %v2846 = vld [vmem:[%s2700 + $0x4] sm:$0xf]
      %v2847 = vld [vmem:[%s2700 + $0x8] sm:$0x1]
      %v2848 = vld [vmem:[%s2700 + $0xc] sm:$0xf]
      %v2849 = vld [vmem:[%s2700 + $0x10] sm:$0xf]
      %v2850 = vld [vmem:[%s2700 + $0x14] sm:$0x1]
      %v2851 = vld [vmem:[%s2700 + $0x18] sm:$0xf]
      %v2852 = vld [vmem:[%s2700 + $0x1c] sm:$0xf]
      %v2853 = vld [vmem:[%s2700 + $0x20] sm:$0x1]
      %v2854 = vld [vmem:[%s2700 + $0x24] sm:$0xf]
      %v2855 = vld [vmem:[%s2700 + $0x28] sm:$0xf]
      %v2856 = vld [vmem:[%s2700 + $0x2c] sm:$0x1]
      %v2857 = vld [vmem:[%s2700 + $0x30] sm:$0xf]
      %v2858 = vld [vmem:[%s2700 + $0x34] sm:$0xf]
      %v2859 = vld [vmem:[%s2700 + $0x38] sm:$0x1]
      %v2860 = vld [vmem:[%s2700 + $0x3c] sm:$0xf]
      %v2861 = vld [vmem:[%s2700 + $0x40] sm:$0xf]
      %v2862 = vld [vmem:[%s2700 + $0x44] sm:$0x1]
      %v2863 = vld [vmem:[%s2700 + $0x48] sm:$0xf]
      %v2864 = vld [vmem:[%s2700 + $0x4c] sm:$0xf]
      %v2865 = vld [vmem:[%s2700 + $0x50] sm:$0x1]
      %v2866 = vld [vmem:[%s2700 + $0x54] sm:$0xf]
      %v2867 = vld [vmem:[%s2700 + $0x58] sm:$0xf]
      %v2868 = vld [vmem:[%s2700 + $0x5c] sm:$0x1]
      %v2869 = vld [vmem:[%s2700 + $0x60] sm:$0xf]
      %v2870 = vld [vmem:[%s2700 + $0x64] sm:$0xf]
      %v2871 = vld [vmem:[%s2700 + $0x68] sm:$0x1]
      %v2872 = vld [vmem:[%s2700 + $0x6c] sm:$0xf]
      %v2873 = vld [vmem:[%s2700 + $0x70] sm:$0xf]
      %v2874 = vld [vmem:[%s2700 + $0x74] sm:$0x1]
      %v2875 = vld [vmem:[%s2700 + $0x78] sm:$0xf]
      %v2876 = vld [vmem:[%s2700 + $0x7c] sm:$0xf]
      %v2877 = vld [vmem:[%s2700 + $0x80] sm:$0x1]
      %v2878 = vld [vmem:[%s2700 + $0x84] sm:$0xf]
      %v2879 = vld [vmem:[%s2700 + $0x88] sm:$0xf]
      %v2880 = vld [vmem:[%s2700 + $0x8c] sm:$0x1]
      %v2881 = vld [vmem:[%s2700 + $0x90] sm:$0xf]
      %v2882 = vld [vmem:[%s2700 + $0x94] sm:$0xf]
      %v2883 = vld [vmem:[%s2700 + $0x98] sm:$0x1]
      %v2884 = vld [vmem:[%s2700 + $0x9c] sm:$0xf]
      %v2885 = vld [vmem:[%s2700 + $0xa0] sm:$0xf]
      %v2886 = vld [vmem:[%s2700 + $0xa4] sm:$0x1]
      %v2887 = vld [vmem:[%s2700 + $0xa8] sm:$0xf]
      %v2888 = vld [vmem:[%s2700 + $0xac] sm:$0xf]
      %v2889 = vld [vmem:[%s2700 + $0xb0] sm:$0x1]
      %v2890 = vld [vmem:[%s2700 + $0xb4] sm:$0xf]
      %v2891 = vld [vmem:[%s2700 + $0xb8] sm:$0xf]
      %v2892 = vld [vmem:[%s2700 + $0xbc] sm:$0x1]
      %v2894 = vshrl.u32 %v2845, 16
      %v2896 = vrot.slane %v2894, 4
      %v2897 = vshll.u32 %v2845, 16
      %v2899 = vrot.slane %v2897, 5
      %v2900 = vor.u32 %v2896, %v2899
      %v2901 = vrot.slane %v2900, 4
      %v2903 = vshll.u32 %v2846, 16
      %v2905 = vrot.slane %v2903, 5
      %v2906 = vsel %vm1000, %v2901, %v2905
      %v2907 = vshrl.u32 %v2846, 16
      %v2909 = vrot.slane %v2907, 4
      %v2910 = vor.u32 %v2909, %v2905
      %v2911 = vrot.slane %v2910, 4
      %v2913 = vshll.u32 %v2847, 16
      %v2915 = vrot.slane %v2913, 5
      %v2916 = vsel %vm1000, %v2911, %v2915
      %v2918 = vshrl.u32 %v2848, 16
      %v2920 = vrot.slane %v2918, 4
      %v2921 = vshll.u32 %v2848, 16
      %v2923 = vrot.slane %v2921, 5
      %v2924 = vor.u32 %v2920, %v2923
      %v2925 = vrot.slane %v2924, 4
      %v2927 = vshll.u32 %v2849, 16
      %v2929 = vrot.slane %v2927, 5
      %v2930 = vsel %vm1000, %v2925, %v2929
      %v2931 = vshrl.u32 %v2849, 16
      %v2933 = vrot.slane %v2931, 4
      %v2934 = vor.u32 %v2933, %v2929
      %v2935 = vrot.slane %v2934, 4
      %v2937 = vshll.u32 %v2850, 16
      %v2939 = vrot.slane %v2937, 5
      %v2940 = vsel %vm1000, %v2935, %v2939
      %v2942 = vshrl.u32 %v2851, 16
      %v2944 = vrot.slane %v2942, 4
      %v2945 = vshll.u32 %v2851, 16
      %v2947 = vrot.slane %v2945, 5
      %v2948 = vor.u32 %v2944, %v2947
      %v2949 = vrot.slane %v2948, 4
      %v2951 = vshll.u32 %v2852, 16
      %v2953 = vrot.slane %v2951, 5
      %v2954 = vsel %vm1000, %v2949, %v2953
      %v2955 = vshrl.u32 %v2852, 16
      %v2957 = vrot.slane %v2955, 4
      %v2958 = vor.u32 %v2957, %v2953
      %v2959 = vrot.slane %v2958, 4
      %v2961 = vshll.u32 %v2853, 16
      %v2963 = vrot.slane %v2961, 5
      %v2964 = vsel %vm1000, %v2959, %v2963
      %v2966 = vshrl.u32 %v2854, 16
      %v2968 = vrot.slane %v2966, 4
      %v2969 = vshll.u32 %v2854, 16
      %v2971 = vrot.slane %v2969, 5
      %v2972 = vor.u32 %v2968, %v2971
      %v2973 = vrot.slane %v2972, 4
      %v2975 = vshll.u32 %v2855, 16
      %v2977 = vrot.slane %v2975, 5
      %v2978 = vsel %vm1000, %v2973, %v2977
      %v2979 = vshrl.u32 %v2855, 16
      %v2981 = vrot.slane %v2979, 4
      %v2982 = vor.u32 %v2981, %v2977
      %v2983 = vrot.slane %v2982, 4
      %v2985 = vshll.u32 %v2856, 16
      %v2987 = vrot.slane %v2985, 5
      %v2988 = vsel %vm1000, %v2983, %v2987
      %v2990 = vshrl.u32 %v2857, 16
      %v2992 = vrot.slane %v2990, 4
      %v2993 = vshll.u32 %v2857, 16
      %v2995 = vrot.slane %v2993, 5
      %v2996 = vor.u32 %v2992, %v2995
      %v2997 = vrot.slane %v2996, 4
      %v2999 = vshll.u32 %v2858, 16
      %v3001 = vrot.slane %v2999, 5
      %v3002 = vsel %vm1000, %v2997, %v3001
      %v3003 = vshrl.u32 %v2858, 16
      %v3005 = vrot.slane %v3003, 4
      %v3006 = vor.u32 %v3005, %v3001
      %v3007 = vrot.slane %v3006, 4
      %v3009 = vshll.u32 %v2859, 16
      %v3011 = vrot.slane %v3009, 5
      %v3012 = vsel %vm1000, %v3007, %v3011
      %v3014 = vshrl.u32 %v2860, 16
      %v3016 = vrot.slane %v3014, 4
      %v3017 = vshll.u32 %v2860, 16
      %v3019 = vrot.slane %v3017, 5
      %v3020 = vor.u32 %v3016, %v3019
      %v3021 = vrot.slane %v3020, 4
      %v3023 = vshll.u32 %v2861, 16
      %v3025 = vrot.slane %v3023, 5
      %v3026 = vsel %vm1000, %v3021, %v3025
      %v3027 = vshrl.u32 %v2861, 16
      %v3029 = vrot.slane %v3027, 4
      %v3030 = vor.u32 %v3029, %v3025
      %v3031 = vrot.slane %v3030, 4
      %v3033 = vshll.u32 %v2862, 16
      %v3035 = vrot.slane %v3033, 5
      %v3036 = vsel %vm1000, %v3031, %v3035
      %v3038 = vshrl.u32 %v2863, 16
      %v3040 = vrot.slane %v3038, 4
      %v3041 = vshll.u32 %v2863, 16
      %v3043 = vrot.slane %v3041, 5
      %v3044 = vor.u32 %v3040, %v3043
      %v3045 = vrot.slane %v3044, 4
      %v3047 = vshll.u32 %v2864, 16
      %v3049 = vrot.slane %v3047, 5
      %v3050 = vsel %vm1000, %v3045, %v3049
      %v3051 = vshrl.u32 %v2864, 16
      %v3053 = vrot.slane %v3051, 4
      %v3054 = vor.u32 %v3053, %v3049
      %v3055 = vrot.slane %v3054, 4
      %v3057 = vshll.u32 %v2865, 16
      %v3059 = vrot.slane %v3057, 5
      %v3060 = vsel %vm1000, %v3055, %v3059
      %v3062 = vshrl.u32 %v2866, 16
      %v3064 = vrot.slane %v3062, 4
      %v3065 = vshll.u32 %v2866, 16
      %v3067 = vrot.slane %v3065, 5
      %v3068 = vor.u32 %v3064, %v3067
      %v3069 = vrot.slane %v3068, 4
      %v3071 = vshll.u32 %v2867, 16
      %v3073 = vrot.slane %v3071, 5
      %v3074 = vsel %vm1000, %v3069, %v3073
      %v3075 = vshrl.u32 %v2867, 16
      %v3077 = vrot.slane %v3075, 4
      %v3078 = vor.u32 %v3077, %v3073
      %v3079 = vrot.slane %v3078, 4
      %v3081 = vshll.u32 %v2868, 16
      %v3083 = vrot.slane %v3081, 5
      %v3084 = vsel %vm1000, %v3079, %v3083
      %v3086 = vshrl.u32 %v2869, 16
      %v3088 = vrot.slane %v3086, 4
      %v3089 = vshll.u32 %v2869, 16
      %v3091 = vrot.slane %v3089, 5
      %v3092 = vor.u32 %v3088, %v3091
      %v3093 = vrot.slane %v3092, 4
      %v3095 = vshll.u32 %v2870, 16
      %v3097 = vrot.slane %v3095, 5
      %v3098 = vsel %vm1000, %v3093, %v3097
      %v3099 = vshrl.u32 %v2870, 16
      %v3101 = vrot.slane %v3099, 4
      %v3102 = vor.u32 %v3101, %v3097
      %v3103 = vrot.slane %v3102, 4
      %v3105 = vshll.u32 %v2871, 16
      %v3107 = vrot.slane %v3105, 5
      %v3108 = vsel %vm1000, %v3103, %v3107
      %v3110 = vshrl.u32 %v2872, 16
      %v3112 = vrot.slane %v3110, 4
      %v3113 = vshll.u32 %v2872, 16
      %v3115 = vrot.slane %v3113, 5
      %v3116 = vor.u32 %v3112, %v3115
      %v3117 = vrot.slane %v3116, 4
      %v3119 = vshll.u32 %v2873, 16
      %v3121 = vrot.slane %v3119, 5
      %v3122 = vsel %vm1000, %v3117, %v3121
      %v3123 = vshrl.u32 %v2873, 16
      %v3125 = vrot.slane %v3123, 4
      %v3126 = vor.u32 %v3125, %v3121
      %v3127 = vrot.slane %v3126, 4
      %v3129 = vshll.u32 %v2874, 16
      %v3131 = vrot.slane %v3129, 5
      %v3132 = vsel %vm1000, %v3127, %v3131
      %v3134 = vshrl.u32 %v2875, 16
      %v3136 = vrot.slane %v3134, 4
      %v3137 = vshll.u32 %v2875, 16
      %v3139 = vrot.slane %v3137, 5
      %v3140 = vor.u32 %v3136, %v3139
      %v3141 = vrot.slane %v3140, 4
      %v3143 = vshll.u32 %v2876, 16
      %v3145 = vrot.slane %v3143, 5
      %v3146 = vsel %vm1000, %v3141, %v3145
      %v3147 = vshrl.u32 %v2876, 16
      %v3149 = vrot.slane %v3147, 4
      %v3150 = vor.u32 %v3149, %v3145
      %v3151 = vrot.slane %v3150, 4
      %v3153 = vshll.u32 %v2877, 16
      %v3155 = vrot.slane %v3153, 5
      %v3156 = vsel %vm1000, %v3151, %v3155
      %v3158 = vshrl.u32 %v2878, 16
      %v3160 = vrot.slane %v3158, 4
      %v3161 = vshll.u32 %v2878, 16
      %v3163 = vrot.slane %v3161, 5
      %v3164 = vor.u32 %v3160, %v3163
      %v3165 = vrot.slane %v3164, 4
      %v3167 = vshll.u32 %v2879, 16
      %v3169 = vrot.slane %v3167, 5
      %v3170 = vsel %vm1000, %v3165, %v3169
      %v3171 = vshrl.u32 %v2879, 16
      %v3173 = vrot.slane %v3171, 4
      %v3174 = vor.u32 %v3173, %v3169
      %v3175 = vrot.slane %v3174, 4
      %v3177 = vshll.u32 %v2880, 16
      %v3179 = vrot.slane %v3177, 5
      %v3180 = vsel %vm1000, %v3175, %v3179
      %v3182 = vshrl.u32 %v2881, 16
      %v3184 = vrot.slane %v3182, 4
      %v3185 = vshll.u32 %v2881, 16
      %v3187 = vrot.slane %v3185, 5
      %v3188 = vor.u32 %v3184, %v3187
      %v3189 = vrot.slane %v3188, 4
      %v3191 = vshll.u32 %v2882, 16
      %v3193 = vrot.slane %v3191, 5
      %v3194 = vsel %vm1000, %v3189, %v3193
      %v3195 = vshrl.u32 %v2882, 16
      %v3197 = vrot.slane %v3195, 4
      %v3198 = vor.u32 %v3197, %v3193
      %v3199 = vrot.slane %v3198, 4
      %v3201 = vshll.u32 %v2883, 16
      %v3203 = vrot.slane %v3201, 5
      %v3204 = vsel %vm1000, %v3199, %v3203
      %v3206 = vshrl.u32 %v2884, 16
      %v3208 = vrot.slane %v3206, 4
      %v3209 = vshll.u32 %v2884, 16
      %v3211 = vrot.slane %v3209, 5
      %v3212 = vor.u32 %v3208, %v3211
      %v3213 = vrot.slane %v3212, 4
      %v3215 = vshll.u32 %v2885, 16
      %v3217 = vrot.slane %v3215, 5
      %v3218 = vsel %vm1000, %v3213, %v3217
      %v3219 = vshrl.u32 %v2885, 16
      %v3221 = vrot.slane %v3219, 4
      %v3222 = vor.u32 %v3221, %v3217
      %v3223 = vrot.slane %v3222, 4
      %v3225 = vshll.u32 %v2886, 16
      %v3227 = vrot.slane %v3225, 5
      %v3228 = vsel %vm1000, %v3223, %v3227
      %v3230 = vshrl.u32 %v2887, 16
      %v3232 = vrot.slane %v3230, 4
      %v3233 = vshll.u32 %v2887, 16
      %v3235 = vrot.slane %v3233, 5
      %v3236 = vor.u32 %v3232, %v3235
      %v3237 = vrot.slane %v3236, 4
      %v3239 = vshll.u32 %v2888, 16
      %v3241 = vrot.slane %v3239, 5
      %v3242 = vsel %vm1000, %v3237, %v3241
      %v3243 = vshrl.u32 %v2888, 16
      %v3245 = vrot.slane %v3243, 4
      %v3246 = vor.u32 %v3245, %v3241
      %v3247 = vrot.slane %v3246, 4
      %v3249 = vshll.u32 %v2889, 16
      %v3251 = vrot.slane %v3249, 5
      %v3252 = vsel %vm1000, %v3247, %v3251
      %v3254 = vshrl.u32 %v2890, 16
      %v3256 = vrot.slane %v3254, 4
      %v3257 = vshll.u32 %v2890, 16
      %v3259 = vrot.slane %v3257, 5
      %v3260 = vor.u32 %v3256, %v3259
      %v3261 = vrot.slane %v3260, 4
      %v3263 = vshll.u32 %v2891, 16
      %v3265 = vrot.slane %v3263, 5
      %v3266 = vsel %vm1000, %v3261, %v3265
      %v3267 = vshrl.u32 %v2891, 16
      %v3269 = vrot.slane %v3267, 4
      %v3270 = vor.u32 %v3269, %v3265
      %v3271 = vrot.slane %v3270, 4
      %v3273 = vshll.u32 %v2892, 16
      %v3275 = vrot.slane %v3273, 5
      %v3276 = vsel %vm1000, %v3271, %v3275
      %v3277 = vunpack.c.l.b16 %v2906
      %v3278 = vunpack.c.l.b16 %v2916
      %v3279 = vunpack.c.l.b16 %v2930
      %v3280 = vunpack.c.l.b16 %v2940
      %v3281 = vunpack.c.l.b16 %v2954
      %v3282 = vunpack.c.l.b16 %v2964
      %v3283 = vunpack.c.l.b16 %v2978
      %v3284 = vunpack.c.l.b16 %v2988
      %v3285 = vunpack.c.l.b16 %v3002
      %v3286 = vunpack.c.l.b16 %v3012
      %v3287 = vunpack.c.l.b16 %v3026
      %v3288 = vunpack.c.l.b16 %v3036
      %v3289 = vunpack.c.l.b16 %v3050
      %v3290 = vunpack.c.l.b16 %v3060
      %v3291 = vunpack.c.l.b16 %v3074
      %v3292 = vunpack.c.l.b16 %v3084
      %v3293 = vunpack.c.l.b16 %v3098
      %v3294 = vunpack.c.l.b16 %v3108
      %v3295 = vunpack.c.l.b16 %v3122
      %v3296 = vunpack.c.l.b16 %v3132
      %v3297 = vunpack.c.l.b16 %v3146
      %v3298 = vunpack.c.l.b16 %v3156
      %v3299 = vunpack.c.l.b16 %v3170
      %v3300 = vunpack.c.l.b16 %v3180
      %v3301 = vunpack.c.l.b16 %v3194
      %v3302 = vunpack.c.l.b16 %v3204
      %v3303 = vunpack.c.l.b16 %v3218
      %v3304 = vunpack.c.l.b16 %v3228
      %v3305 = vunpack.c.l.b16 %v3242
      %v3306 = vunpack.c.l.b16 %v3252
      %v3307 = vunpack.c.l.b16 %v3266
      %v3308 = vunpack.c.l.b16 %v3276
      %v3309 = vpack.c.b16 %v3278, %v3277
      %v3310 = vpack.c.b16 %v3280, %v3279
      %v3311 = vpack.c.b16 %v3282, %v3281
      %v3312 = vpack.c.b16 %v3284, %v3283
      %v3313 = vpack.c.b16 %v3286, %v3285
      %v3314 = vpack.c.b16 %v3288, %v3287
      %v3315 = vpack.c.b16 %v3290, %v3289
      %v3316 = vpack.c.b16 %v3292, %v3291
      %v3317 = vpack.c.b16 %v3294, %v3293
      %v3318 = vpack.c.b16 %v3296, %v3295
      %v3319 = vpack.c.b16 %v3298, %v3297
      %v3320 = vpack.c.b16 %v3300, %v3299
      %v3321 = vpack.c.b16 %v3302, %v3301
      %v3322 = vpack.c.b16 %v3304, %v3303
      %v3323 = vpack.c.b16 %v3306, %v3305
      %v3324 = vpack.c.b16 %v3308, %v3307
      %3341 = vst [vmem:[#allocation3 + $0x38] sm:$0xff] %v3309
      %3342 = vst [vmem:[#allocation3 + $0x80] sm:$0xff] %v3310
      %3343 = vst [vmem:[#allocation3 + $0xc8] sm:$0xff] %v3311
      %3344 = vst [vmem:[#allocation3 + $0x110] sm:$0xff] %v3312
      %3345 = vst [vmem:[#allocation3 + $0x158] sm:$0xff] %v3313
      %3346 = vst [vmem:[#allocation3 + $0x1a0] sm:$0xff] %v3314
      %3347 = vst [vmem:[#allocation3 + $0x1e8] sm:$0xff] %v3315
      %3348 = vst [vmem:[#allocation3 + $0x230] sm:$0xff] %v3316
      %3349 = vst [vmem:[#allocation3 + $0x278] sm:$0xff] %v3317
      %3350 = vst [vmem:[#allocation3 + $0x2c0] sm:$0xff] %v3318
      %3351 = vst [vmem:[#allocation3 + $0x308] sm:$0xff] %v3319
      %3352 = vst [vmem:[#allocation3 + $0x350] sm:$0xff] %v3320
      %3353 = vst [vmem:[#allocation3 + $0x398] sm:$0xff] %v3321
      %3354 = vst [vmem:[#allocation3 + $0x3e0] sm:$0xff] %v3322
      %3355 = vst [vmem:[#allocation3 + $0x428] sm:$0xff] %v3323
      %3356 = vst [vmem:[#allocation3 + $0x470] sm:$0xff] %v3324
      %v3357 = vld [vmem:[%s2700] sm:$0xe]
      %v3358 = vld [vmem:[%s2700 + $0x4] sm:$0xf]
      %v3359 = vld [vmem:[%s2700 + $0x8] sm:$0x1]
      %v3360 = vld [vmem:[%s2700 + $0xc] sm:$0xe]
      %v3361 = vld [vmem:[%s2700 + $0x10] sm:$0xf]
      %v3362 = vld [vmem:[%s2700 + $0x14] sm:$0x1]
      %v3363 = vld [vmem:[%s2700 + $0x18] sm:$0xe]
      %v3364 = vld [vmem:[%s2700 + $0x1c] sm:$0xf]
      %v3365 = vld [vmem:[%s2700 + $0x20] sm:$0x1]
      %v3366 = vld [vmem:[%s2700 + $0x24] sm:$0xe]
      %v3367 = vld [vmem:[%s2700 + $0x28] sm:$0xf]
      %v3368 = vld [vmem:[%s2700 + $0x2c] sm:$0x1]
      %v3369 = vld [vmem:[%s2700 + $0x30] sm:$0xe]
      %v3370 = vld [vmem:[%s2700 + $0x34] sm:$0xf]
      %v3371 = vld [vmem:[%s2700 + $0x38] sm:$0x1]
      %v3372 = vld [vmem:[%s2700 + $0x3c] sm:$0xe]
      %v3373 = vld [vmem:[%s2700 + $0x40] sm:$0xf]
      %v3374 = vld [vmem:[%s2700 + $0x44] sm:$0x1]
      %v3375 = vld [vmem:[%s2700 + $0x48] sm:$0xe]
      %v3376 = vld [vmem:[%s2700 + $0x4c] sm:$0xf]
      %v3377 = vld [vmem:[%s2700 + $0x50] sm:$0x1]
      %v3378 = vld [vmem:[%s2700 + $0x54] sm:$0xe]
      %v3379 = vld [vmem:[%s2700 + $0x58] sm:$0xf]
      %v3380 = vld [vmem:[%s2700 + $0x5c] sm:$0x1]
      %v3381 = vld [vmem:[%s2700 + $0x60] sm:$0xe]
      %v3382 = vld [vmem:[%s2700 + $0x64] sm:$0xf]
      %v3383 = vld [vmem:[%s2700 + $0x68] sm:$0x1]
      %v3384 = vld [vmem:[%s2700 + $0x6c] sm:$0xe]
      %v3385 = vld [vmem:[%s2700 + $0x70] sm:$0xf]
      %v3386 = vld [vmem:[%s2700 + $0x74] sm:$0x1]
      %v3387 = vld [vmem:[%s2700 + $0x78] sm:$0xe]
      %v3388 = vld [vmem:[%s2700 + $0x7c] sm:$0xf]
      %v3389 = vld [vmem:[%s2700 + $0x80] sm:$0x1]
      %v3390 = vld [vmem:[%s2700 + $0x84] sm:$0xe]
      %v3391 = vld [vmem:[%s2700 + $0x88] sm:$0xf]
      %v3392 = vld [vmem:[%s2700 + $0x8c] sm:$0x1]
      %v3393 = vld [vmem:[%s2700 + $0x90] sm:$0xe]
      %v3394 = vld [vmem:[%s2700 + $0x94] sm:$0xf]
      %v3395 = vld [vmem:[%s2700 + $0x98] sm:$0x1]
      %v3396 = vld [vmem:[%s2700 + $0x9c] sm:$0xe]
      %v3397 = vld [vmem:[%s2700 + $0xa0] sm:$0xf]
      %v3398 = vld [vmem:[%s2700 + $0xa4] sm:$0x1]
      %v3399 = vld [vmem:[%s2700 + $0xa8] sm:$0xe]
      %v3400 = vld [vmem:[%s2700 + $0xac] sm:$0xf]
      %v3401 = vld [vmem:[%s2700 + $0xb0] sm:$0x1]
      %v3402 = vld [vmem:[%s2700 + $0xb4] sm:$0xe]
      %v3403 = vld [vmem:[%s2700 + $0xb8] sm:$0xf]
      %v3404 = vld [vmem:[%s2700 + $0xbc] sm:$0x1]
      %v3453 = vrot.slane %v3357, 5
      %v3454 = vrot.slane %v3453, 4
      %v3455 = vrot.slane %v3358, 5
      %v3456 = vsel %vm1563, %v3454, %v3455
      %v3457 = vrot.slane %v3455, 4
      %v3458 = vrot.slane %v3359, 5
      %v3459 = vsel %vm1563, %v3457, %v3458
      %v3460 = vrot.slane %v3360, 5
      %v3461 = vrot.slane %v3460, 4
      %v3462 = vrot.slane %v3361, 5
      %v3463 = vsel %vm1563, %v3461, %v3462
      %v3464 = vrot.slane %v3462, 4
      %v3465 = vrot.slane %v3362, 5
      %v3466 = vsel %vm1563, %v3464, %v3465
      %v3467 = vrot.slane %v3363, 5
      %v3468 = vrot.slane %v3467, 4
      %v3469 = vrot.slane %v3364, 5
      %v3470 = vsel %vm1563, %v3468, %v3469
      %v3471 = vrot.slane %v3469, 4
      %v3472 = vrot.slane %v3365, 5
      %v3473 = vsel %vm1563, %v3471, %v3472
      %v3474 = vrot.slane %v3366, 5
      %v3475 = vrot.slane %v3474, 4
      %v3476 = vrot.slane %v3367, 5
      %v3477 = vsel %vm1563, %v3475, %v3476
      %v3478 = vrot.slane %v3476, 4
      %v3479 = vrot.slane %v3368, 5
      %v3480 = vsel %vm1563, %v3478, %v3479
      %v3481 = vrot.slane %v3369, 5
      %v3482 = vrot.slane %v3481, 4
      %v3483 = vrot.slane %v3370, 5
      %v3484 = vsel %vm1563, %v3482, %v3483
      %v3485 = vrot.slane %v3483, 4
      %v3486 = vrot.slane %v3371, 5
      %v3487 = vsel %vm1563, %v3485, %v3486
      %v3488 = vrot.slane %v3372, 5
      %v3489 = vrot.slane %v3488, 4
      %v3490 = vrot.slane %v3373, 5
      %v3491 = vsel %vm1563, %v3489, %v3490
      %v3492 = vrot.slane %v3490, 4
      %v3493 = vrot.slane %v3374, 5
      %v3494 = vsel %vm1563, %v3492, %v3493
      %v3495 = vrot.slane %v3375, 5
      %v3496 = vrot.slane %v3495, 4
      %v3497 = vrot.slane %v3376, 5
      %v3498 = vsel %vm1563, %v3496, %v3497
      %v3499 = vrot.slane %v3497, 4
      %v3500 = vrot.slane %v3377, 5
      %v3501 = vsel %vm1563, %v3499, %v3500
      %v3502 = vrot.slane %v3378, 5
      %v3503 = vrot.slane %v3502, 4
      %v3504 = vrot.slane %v3379, 5
      %v3505 = vsel %vm1563, %v3503, %v3504
      %v3506 = vrot.slane %v3504, 4
      %v3507 = vrot.slane %v3380, 5
      %v3508 = vsel %vm1563, %v3506, %v3507
      %v3509 = vrot.slane %v3381, 5
      %v3510 = vrot.slane %v3509, 4
      %v3511 = vrot.slane %v3382, 5
      %v3512 = vsel %vm1563, %v3510, %v3511
      %v3513 = vrot.slane %v3511, 4
      %v3514 = vrot.slane %v3383, 5
      %v3515 = vsel %vm1563, %v3513, %v3514
      %v3516 = vrot.slane %v3384, 5
      %v3517 = vrot.slane %v3516, 4
      %v3518 = vrot.slane %v3385, 5
      %v3519 = vsel %vm1563, %v3517, %v3518
      %v3520 = vrot.slane %v3518, 4
      %v3521 = vrot.slane %v3386, 5
      %v3522 = vsel %vm1563, %v3520, %v3521
      %v3523 = vrot.slane %v3387, 5
      %v3524 = vrot.slane %v3523, 4
      %v3525 = vrot.slane %v3388, 5
      %v3526 = vsel %vm1563, %v3524, %v3525
      %v3527 = vrot.slane %v3525, 4
      %v3528 = vrot.slane %v3389, 5
      %v3529 = vsel %vm1563, %v3527, %v3528
      %v3530 = vrot.slane %v3390, 5
      %v3531 = vrot.slane %v3530, 4
      %v3532 = vrot.slane %v3391, 5
      %v3533 = vsel %vm1563, %v3531, %v3532
      %v3534 = vrot.slane %v3532, 4
      %v3535 = vrot.slane %v3392, 5
      %v3536 = vsel %vm1563, %v3534, %v3535
      %v3537 = vrot.slane %v3393, 5
      %v3538 = vrot.slane %v3537, 4
      %v3539 = vrot.slane %v3394, 5
      %v3540 = vsel %vm1563, %v3538, %v3539
      %v3541 = vrot.slane %v3539, 4
      %v3542 = vrot.slane %v3395, 5
      %v3543 = vsel %vm1563, %v3541, %v3542
      %v3544 = vrot.slane %v3396, 5
      %v3545 = vrot.slane %v3544, 4
      %v3546 = vrot.slane %v3397, 5
      %v3547 = vsel %vm1563, %v3545, %v3546
      %v3548 = vrot.slane %v3546, 4
      %v3549 = vrot.slane %v3398, 5
      %v3550 = vsel %vm1563, %v3548, %v3549
      %v3551 = vrot.slane %v3399, 5
      %v3552 = vrot.slane %v3551, 4
      %v3553 = vrot.slane %v3400, 5
      %v3554 = vsel %vm1563, %v3552, %v3553
      %v3555 = vrot.slane %v3553, 4
      %v3556 = vrot.slane %v3401, 5
      %v3557 = vsel %vm1563, %v3555, %v3556
      %v3558 = vrot.slane %v3402, 5
      %v3559 = vrot.slane %v3558, 4
      %v3560 = vrot.slane %v3403, 5
      %v3561 = vsel %vm1563, %v3559, %v3560
      %v3562 = vrot.slane %v3560, 4
      %v3563 = vrot.slane %v3404, 5
      %v3564 = vsel %vm1563, %v3562, %v3563
      %v3565 = vunpack.c.l.b16 %v3456
      %v3566 = vunpack.c.l.b16 %v3459
      %v3567 = vunpack.c.l.b16 %v3463
      %v3568 = vunpack.c.l.b16 %v3466
      %v3569 = vunpack.c.l.b16 %v3470
      %v3570 = vunpack.c.l.b16 %v3473
      %v3571 = vunpack.c.l.b16 %v3477
      %v3572 = vunpack.c.l.b16 %v3480
      %v3573 = vunpack.c.l.b16 %v3484
      %v3574 = vunpack.c.l.b16 %v3487
      %v3575 = vunpack.c.l.b16 %v3491
      %v3576 = vunpack.c.l.b16 %v3494
      %v3577 = vunpack.c.l.b16 %v3498
      %v3578 = vunpack.c.l.b16 %v3501
      %v3579 = vunpack.c.l.b16 %v3505
      %v3580 = vunpack.c.l.b16 %v3508
      %v3581 = vunpack.c.l.b16 %v3512
      %v3582 = vunpack.c.l.b16 %v3515
      %v3583 = vunpack.c.l.b16 %v3519
      %v3584 = vunpack.c.l.b16 %v3522
      %v3585 = vunpack.c.l.b16 %v3526
      %v3586 = vunpack.c.l.b16 %v3529
      %v3587 = vunpack.c.l.b16 %v3533
      %v3588 = vunpack.c.l.b16 %v3536
      %v3589 = vunpack.c.l.b16 %v3540
      %v3590 = vunpack.c.l.b16 %v3543
      %v3591 = vunpack.c.l.b16 %v3547
      %v3592 = vunpack.c.l.b16 %v3550
      %v3593 = vunpack.c.l.b16 %v3554
      %v3594 = vunpack.c.l.b16 %v3557
      %v3595 = vunpack.c.l.b16 %v3561
      %v3596 = vunpack.c.l.b16 %v3564
      %v3597 = vpack.c.b16 %v3566, %v3565
      %v3598 = vpack.c.b16 %v3568, %v3567
      %v3599 = vpack.c.b16 %v3570, %v3569
      %v3600 = vpack.c.b16 %v3572, %v3571
      %v3601 = vpack.c.b16 %v3574, %v3573
      %v3602 = vpack.c.b16 %v3576, %v3575
      %v3603 = vpack.c.b16 %v3578, %v3577
      %v3604 = vpack.c.b16 %v3580, %v3579
      %v3605 = vpack.c.b16 %v3582, %v3581
      %v3606 = vpack.c.b16 %v3584, %v3583
      %v3607 = vpack.c.b16 %v3586, %v3585
      %v3608 = vpack.c.b16 %v3588, %v3587
      %v3609 = vpack.c.b16 %v3590, %v3589
      %v3610 = vpack.c.b16 %v3592, %v3591
      %v3611 = vpack.c.b16 %v3594, %v3593
      %v3612 = vpack.c.b16 %v3596, %v3595
      %3629 = vst [vmem:[#allocation3 + $0x40] sm:$0xff] %v3597
      %3630 = vst [vmem:[#allocation3 + $0x88] sm:$0xff] %v3598
      %3631 = vst [vmem:[#allocation3 + $0xd0] sm:$0xff] %v3599
      %3632 = vst [vmem:[#allocation3 + $0x118] sm:$0xff] %v3600
      %3633 = vst [vmem:[#allocation3 + $0x160] sm:$0xff] %v3601
      %3634 = vst [vmem:[#allocation3 + $0x1a8] sm:$0xff] %v3602
      %3635 = vst [vmem:[#allocation3 + $0x1f0] sm:$0xff] %v3603
      %3636 = vst [vmem:[#allocation3 + $0x238] sm:$0xff] %v3604
      %3637 = vst [vmem:[#allocation3 + $0x280] sm:$0xff] %v3605
      %3638 = vst [vmem:[#allocation3 + $0x2c8] sm:$0xff] %v3606
      %3639 = vst [vmem:[#allocation3 + $0x310] sm:$0xff] %v3607
      %3640 = vst [vmem:[#allocation3 + $0x358] sm:$0xff] %v3608
      %3641 = vst [vmem:[#allocation3 + $0x3a0] sm:$0xff] %v3609
      %3642 = vst [vmem:[#allocation3 + $0x3e8] sm:$0xff] %v3610
      %3643 = vst [vmem:[#allocation3 + $0x430] sm:$0xff] %v3611
      %3644 = vst [vmem:[#allocation3 + $0x478] sm:$0xff] %v3612
      %v3645 = vld [vmem:[#allocation3] sm:$0xff]
      %v3646 = vld [vmem:[#allocation3 + $0x8] sm:$0xff]
      %v3647 = vld [vmem:[#allocation3 + $0x10] sm:$0xff]
      %v3648 = vld [vmem:[#allocation3 + $0x18] sm:$0xff]
      %v3649 = vld [vmem:[#allocation3 + $0x20] sm:$0xff]
      %v3650 = vld [vmem:[#allocation3 + $0x28] sm:$0xff]
      %v3651 = vld [vmem:[#allocation3 + $0x30] sm:$0xff]
      %v3652 = vld [vmem:[#allocation3 + $0x38] sm:$0xff]
      %v3653 = vld [vmem:[#allocation3 + $0x40] sm:$0xff]
      %v3654 = vld [vmem:[#allocation3 + $0x48] sm:$0xff]
      %v3655 = vld [vmem:[#allocation3 + $0x50] sm:$0xff]
      %v3656 = vld [vmem:[#allocation3 + $0x58] sm:$0xff]
      %v3657 = vld [vmem:[#allocation3 + $0x60] sm:$0xff]
      %v3658 = vld [vmem:[#allocation3 + $0x68] sm:$0xff]
      %v3659 = vld [vmem:[#allocation3 + $0x70] sm:$0xff]
      %v3660 = vld [vmem:[#allocation3 + $0x78] sm:$0xff]
      %v3661 = vld [vmem:[#allocation3 + $0x80] sm:$0xff]
      %v3662 = vld [vmem:[#allocation3 + $0x88] sm:$0xff]
      %v3663 = vld [vmem:[#allocation3 + $0x90] sm:$0xff]
      %v3664 = vld [vmem:[#allocation3 + $0x98] sm:$0xff]
      %v3665 = vld [vmem:[#allocation3 + $0xa0] sm:$0xff]
      %v3666 = vld [vmem:[#allocation3 + $0xa8] sm:$0xff]
      %v3667 = vld [vmem:[#allocation3 + $0xb0] sm:$0xff]
      %v3668 = vld [vmem:[#allocation3 + $0xb8] sm:$0xff]
      %v3669 = vld [vmem:[#allocation3 + $0xc0] sm:$0xff]
      %v3670 = vld [vmem:[#allocation3 + $0xc8] sm:$0xff]
      %v3671 = vld [vmem:[#allocation3 + $0xd0] sm:$0xff]
      %v3672 = vld [vmem:[#allocation3 + $0xd8] sm:$0xff]
      %v3673 = vld [vmem:[#allocation3 + $0xe0] sm:$0xff]
      %v3674 = vld [vmem:[#allocation3 + $0xe8] sm:$0xff]
      %v3675 = vld [vmem:[#allocation3 + $0xf0] sm:$0xff]
      %v3676 = vld [vmem:[#allocation3 + $0xf8] sm:$0xff]
      %v3677 = vld [vmem:[#allocation3 + $0x100] sm:$0xff]
      %v3678 = vld [vmem:[#allocation3 + $0x108] sm:$0xff]
      %v3679 = vld [vmem:[#allocation3 + $0x110] sm:$0xff]
      %v3680 = vld [vmem:[#allocation3 + $0x118] sm:$0xff]
      %v3681 = vld [vmem:[#allocation3 + $0x120] sm:$0xff]
      %v3682 = vld [vmem:[#allocation3 + $0x128] sm:$0xff]
      %v3683 = vld [vmem:[#allocation3 + $0x130] sm:$0xff]
      %v3684 = vld [vmem:[#allocation3 + $0x138] sm:$0xff]
      %v3685 = vld [vmem:[#allocation3 + $0x140] sm:$0xff]
      %v3686 = vld [vmem:[#allocation3 + $0x148] sm:$0xff]
      %v3687 = vld [vmem:[#allocation3 + $0x150] sm:$0xff]
      %v3688 = vld [vmem:[#allocation3 + $0x158] sm:$0xff]
      %v3689 = vld [vmem:[#allocation3 + $0x160] sm:$0xff]
      %v3690 = vld [vmem:[#allocation3 + $0x168] sm:$0xff]
      %v3691 = vld [vmem:[#allocation3 + $0x170] sm:$0xff]
      %v3692 = vld [vmem:[#allocation3 + $0x178] sm:$0xff]
      %v3693 = vld [vmem:[#allocation3 + $0x180] sm:$0xff]
      %v3694 = vld [vmem:[#allocation3 + $0x188] sm:$0xff]
      %v3695 = vld [vmem:[#allocation3 + $0x190] sm:$0xff]
      %v3696 = vld [vmem:[#allocation3 + $0x198] sm:$0xff]
      %v3697 = vld [vmem:[#allocation3 + $0x1a0] sm:$0xff]
      %v3698 = vld [vmem:[#allocation3 + $0x1a8] sm:$0xff]
      %v3699 = vld [vmem:[#allocation3 + $0x1b0] sm:$0xff]
      %v3700 = vld [vmem:[#allocation3 + $0x1b8] sm:$0xff]
      %v3701 = vld [vmem:[#allocation3 + $0x1c0] sm:$0xff]
      %v3702 = vld [vmem:[#allocation3 + $0x1c8] sm:$0xff]
      %v3703 = vld [vmem:[#allocation3 + $0x1d0] sm:$0xff]
      %v3704 = vld [vmem:[#allocation3 + $0x1d8] sm:$0xff]
      %v3705 = vld [vmem:[#allocation3 + $0x1e0] sm:$0xff]
      %v3706 = vld [vmem:[#allocation3 + $0x1e8] sm:$0xff]
      %v3707 = vld [vmem:[#allocation3 + $0x1f0] sm:$0xff]
      %v3708 = vld [vmem:[#allocation3 + $0x1f8] sm:$0xff]
      %v3709 = vld [vmem:[#allocation3 + $0x200] sm:$0xff]
      %v3710 = vld [vmem:[#allocation3 + $0x208] sm:$0xff]
      %v3711 = vld [vmem:[#allocation3 + $0x210] sm:$0xff]
      %v3712 = vld [vmem:[#allocation3 + $0x218] sm:$0xff]
      %v3713 = vld [vmem:[#allocation3 + $0x220] sm:$0xff]
      %v3714 = vld [vmem:[#allocation3 + $0x228] sm:$0xff]
      %v3715 = vld [vmem:[#allocation3 + $0x230] sm:$0xff]
      %v3716 = vld [vmem:[#allocation3 + $0x238] sm:$0xff]
      %v3717 = vld [vmem:[#allocation3 + $0x240] sm:$0xff]
      %v3718 = vld [vmem:[#allocation3 + $0x248] sm:$0xff]
      %v3719 = vld [vmem:[#allocation3 + $0x250] sm:$0xff]
      %v3720 = vld [vmem:[#allocation3 + $0x258] sm:$0xff]
      %v3721 = vld [vmem:[#allocation3 + $0x260] sm:$0xff]
      %v3722 = vld [vmem:[#allocation3 + $0x268] sm:$0xff]
      %v3723 = vld [vmem:[#allocation3 + $0x270] sm:$0xff]
      %v3724 = vld [vmem:[#allocation3 + $0x278] sm:$0xff]
      %v3725 = vld [vmem:[#allocation3 + $0x280] sm:$0xff]
      %v3726 = vld [vmem:[#allocation3 + $0x288] sm:$0xff]
      %v3727 = vld [vmem:[#allocation3 + $0x290] sm:$0xff]
      %v3728 = vld [vmem:[#allocation3 + $0x298] sm:$0xff]
      %v3729 = vld [vmem:[#allocation3 + $0x2a0] sm:$0xff]
      %v3730 = vld [vmem:[#allocation3 + $0x2a8] sm:$0xff]
      %v3731 = vld [vmem:[#allocation3 + $0x2b0] sm:$0xff]
      %v3732 = vld [vmem:[#allocation3 + $0x2b8] sm:$0xff]
      %v3733 = vld [vmem:[#allocation3 + $0x2c0] sm:$0xff]
      %v3734 = vld [vmem:[#allocation3 + $0x2c8] sm:$0xff]
      %v3735 = vld [vmem:[#allocation3 + $0x2d0] sm:$0xff]
      %v3736 = vld [vmem:[#allocation3 + $0x2d8] sm:$0xff]
      %v3737 = vld [vmem:[#allocation3 + $0x2e0] sm:$0xff]
      %v3738 = vld [vmem:[#allocation3 + $0x2e8] sm:$0xff]
      %v3739 = vld [vmem:[#allocation3 + $0x2f0] sm:$0xff]
      %v3740 = vld [vmem:[#allocation3 + $0x2f8] sm:$0xff]
      %v3741 = vld [vmem:[#allocation3 + $0x300] sm:$0xff]
      %v3742 = vld [vmem:[#allocation3 + $0x308] sm:$0xff]
      %v3743 = vld [vmem:[#allocation3 + $0x310] sm:$0xff]
      %v3744 = vld [vmem:[#allocation3 + $0x318] sm:$0xff]
      %v3745 = vld [vmem:[#allocation3 + $0x320] sm:$0xff]
      %v3746 = vld [vmem:[#allocation3 + $0x328] sm:$0xff]
      %v3747 = vld [vmem:[#allocation3 + $0x330] sm:$0xff]
      %v3748 = vld [vmem:[#allocation3 + $0x338] sm:$0xff]
      %v3749 = vld [vmem:[#allocation3 + $0x340] sm:$0xff]
      %v3750 = vld [vmem:[#allocation3 + $0x348] sm:$0xff]
      %v3751 = vld [vmem:[#allocation3 + $0x350] sm:$0xff]
      %v3752 = vld [vmem:[#allocation3 + $0x358] sm:$0xff]
      %v3753 = vld [vmem:[#allocation3 + $0x360] sm:$0xff]
      %v3754 = vld [vmem:[#allocation3 + $0x368] sm:$0xff]
      %v3755 = vld [vmem:[#allocation3 + $0x370] sm:$0xff]
      %v3756 = vld [vmem:[#allocation3 + $0x378] sm:$0xff]
      %v3757 = vld [vmem:[#allocation3 + $0x380] sm:$0xff]
      %v3758 = vld [vmem:[#allocation3 + $0x388] sm:$0xff]
      %v3759 = vld [vmem:[#allocation3 + $0x390] sm:$0xff]
      %v3760 = vld [vmem:[#allocation3 + $0x398] sm:$0xff]
      %v3761 = vld [vmem:[#allocation3 + $0x3a0] sm:$0xff]
      %v3762 = vld [vmem:[#allocation3 + $0x3a8] sm:$0xff]
      %v3763 = vld [vmem:[#allocation3 + $0x3b0] sm:$0xff]
      %v3764 = vld [vmem:[#allocation3 + $0x3b8] sm:$0xff]
      %v3765 = vld [vmem:[#allocation3 + $0x3c0] sm:$0xff]
      %v3766 = vld [vmem:[#allocation3 + $0x3c8] sm:$0xff]
      %v3767 = vld [vmem:[#allocation3 + $0x3d0] sm:$0xff]
      %v3768 = vld [vmem:[#allocation3 + $0x3d8] sm:$0xff]
      %v3769 = vld [vmem:[#allocation3 + $0x3e0] sm:$0xff]
      %v3770 = vld [vmem:[#allocation3 + $0x3e8] sm:$0xff]
      %v3771 = vld [vmem:[#allocation3 + $0x3f0] sm:$0xff]
      %v3772 = vld [vmem:[#allocation3 + $0x3f8] sm:$0xff]
      %v3773 = vld [vmem:[#allocation3 + $0x400] sm:$0xff]
      %v3774 = vld [vmem:[#allocation3 + $0x408] sm:$0xff]
      %v3775 = vld [vmem:[#allocation3 + $0x410] sm:$0xff]
      %v3776 = vld [vmem:[#allocation3 + $0x418] sm:$0xff]
      %v3777 = vld [vmem:[#allocation3 + $0x420] sm:$0xff]
      %v3778 = vld [vmem:[#allocation3 + $0x428] sm:$0xff]
      %v3779 = vld [vmem:[#allocation3 + $0x430] sm:$0xff]
      %v3780 = vld [vmem:[#allocation3 + $0x438] sm:$0xff]
      %v3781 = vld [vmem:[#allocation3 + $0x440] sm:$0xff]
      %v3782 = vld [vmem:[#allocation3 + $0x448] sm:$0xff]
      %v3783 = vld [vmem:[#allocation3 + $0x450] sm:$0xff]
      %v3784 = vld [vmem:[#allocation3 + $0x458] sm:$0xff]
      %v3785 = vld [vmem:[#allocation3 + $0x460] sm:$0xff]
      %v3786 = vld [vmem:[#allocation3 + $0x468] sm:$0xff]
      %v3787 = vld [vmem:[#allocation3 + $0x470] sm:$0xff]
      %v3788 = vld [vmem:[#allocation3 + $0x478] sm:$0xff]
      %v3789 = vld [vmem:[%s1] sm:$0xf]
      %v3790 = vld [vmem:[%s1 + $0x4] sm:$0xf]
      %v3791 = vld [vmem:[%s1 + $0x8] sm:$0xf]
      %v3792 = vld [vmem:[%s1 + $0xc] sm:$0xf]
      %v3793 = vld [vmem:[%s1 + $0x10] sm:$0xf]
      %v3794 = vld [vmem:[%s1 + $0x14] sm:$0xf]
      %v3795 = vld [vmem:[%s1 + $0x18] sm:$0xf]
      %v3796 = vld [vmem:[%s1 + $0x1c] sm:$0xf]
      %v3797 = vld [vmem:[%s1 + $0x20] sm:$0xf]
      %v3798 = vld [vmem:[%s1 + $0x24] sm:$0xf]
      %v3799 = vld [vmem:[%s1 + $0x28] sm:$0xf]
      %v3800 = vld [vmem:[%s1 + $0x2c] sm:$0xf]
      %v3801 = vld [vmem:[%s1 + $0x30] sm:$0xf]
      %v3802 = vld [vmem:[%s1 + $0x34] sm:$0xf]
      %v3803 = vld [vmem:[%s1 + $0x38] sm:$0xf]
      %v3804 = vld [vmem:[%s1 + $0x3c] sm:$0xf]
      %v3805 = vld [vmem:[%s1 + $0x40] sm:$0xf]
      %v3806 = vld [vmem:[%s1 + $0x44] sm:$0xf]
      %v3807 = vld [vmem:[%s1 + $0x48] sm:$0xf]
      %v3808 = vld [vmem:[%s1 + $0x4c] sm:$0xf]
      %v3809 = vld [vmem:[%s1 + $0x50] sm:$0xf]
      %v3810 = vld [vmem:[%s1 + $0x54] sm:$0xf]
      %v3811 = vld [vmem:[%s1 + $0x58] sm:$0xf]
      %v3812 = vld [vmem:[%s1 + $0x5c] sm:$0xf]
      %v3813 = vld [vmem:[%s1 + $0x60] sm:$0xf]
      %v3814 = vld [vmem:[%s1 + $0x64] sm:$0xf]
      %v3815 = vld [vmem:[%s1 + $0x68] sm:$0xf]
      %v3816 = vld [vmem:[%s1 + $0x6c] sm:$0xf]
      %v3817 = vld [vmem:[%s1 + $0x70] sm:$0xf]
      %v3818 = vld [vmem:[%s1 + $0x74] sm:$0xf]
      %v3819 = vld [vmem:[%s1 + $0x78] sm:$0xf]
      %v3820 = vld [vmem:[%s1 + $0x7c] sm:$0xf]
      %v3821 = vld [vmem:[%s1 + $0x80] sm:$0xf]
      %v3822 = vld [vmem:[%s1 + $0x84] sm:$0xf]
      %v3823 = vld [vmem:[%s1 + $0x88] sm:$0xf]
      %v3824 = vld [vmem:[%s1 + $0x8c] sm:$0xf]
      %v3825 = vld [vmem:[%s1 + $0x90] sm:$0xf]
      %v3826 = vld [vmem:[%s1 + $0x94] sm:$0xf]
      %v3827 = vld [vmem:[%s1 + $0x98] sm:$0xf]
      %v3828 = vld [vmem:[%s1 + $0x9c] sm:$0xf]
      %v3829 = vld [vmem:[%s1 + $0xa0] sm:$0xf]
      %v3830 = vld [vmem:[%s1 + $0xa4] sm:$0xf]
      %v3831 = vld [vmem:[%s1 + $0xa8] sm:$0xf]
      %v3832 = vld [vmem:[%s1 + $0xac] sm:$0xf]
      %v3833 = vld [vmem:[%s1 + $0xb0] sm:$0xf]
      %v3834 = vld [vmem:[%s1 + $0xb4] sm:$0xf]
      %v3835 = vld [vmem:[%s1 + $0xb8] sm:$0xf]
      %v3836 = vld [vmem:[%s1 + $0xbc] sm:$0xf]
      %v3837 = vld [vmem:[%s1 + $0xc0] sm:$0xf]
      %v3838 = vld [vmem:[%s1 + $0xc4] sm:$0xf]
      %v3839 = vld [vmem:[%s1 + $0xc8] sm:$0xf]
      %v3840 = vld [vmem:[%s1 + $0xcc] sm:$0xf]
      %v3841 = vld [vmem:[%s1 + $0xd0] sm:$0xf]
      %v3842 = vld [vmem:[%s1 + $0xd4] sm:$0xf]
      %v3843 = vld [vmem:[%s1 + $0xd8] sm:$0xf]
      %v3844 = vld [vmem:[%s1 + $0xdc] sm:$0xf]
      %v3845 = vld [vmem:[%s1 + $0xe0] sm:$0xf]
      %v3846 = vld [vmem:[%s1 + $0xe4] sm:$0xf]
      %v3847 = vld [vmem:[%s1 + $0xe8] sm:$0xf]
      %v3848 = vld [vmem:[%s1 + $0xec] sm:$0xf]
      %v3849 = vld [vmem:[%s1 + $0xf0] sm:$0xf]
      %v3850 = vld [vmem:[%s1 + $0xf4] sm:$0xf]
      %v3851 = vld [vmem:[%s1 + $0xf8] sm:$0xf]
      %v3852 = vld [vmem:[%s1 + $0xfc] sm:$0xf]
      %v3853 = vld [vmem:[%s1 + $0x100] sm:$0xf]
      %v3854 = vld [vmem:[%s1 + $0x104] sm:$0xf]
      %v3855 = vld [vmem:[%s1 + $0x108] sm:$0xf]
      %v3856 = vld [vmem:[%s1 + $0x10c] sm:$0xf]
      %v3857 = vld [vmem:[%s1 + $0x110] sm:$0xf]
      %v3858 = vld [vmem:[%s1 + $0x114] sm:$0xf]
      %v3859 = vld [vmem:[%s1 + $0x118] sm:$0xf]
      %v3860 = vld [vmem:[%s1 + $0x11c] sm:$0xf]
      %v3861 = vld [vmem:[%s1 + $0x120] sm:$0xf]
      %v3862 = vld [vmem:[%s1 + $0x124] sm:$0xf]
      %v3863 = vld [vmem:[%s1 + $0x128] sm:$0xf]
      %v3864 = vld [vmem:[%s1 + $0x12c] sm:$0xf]
      %v3865 = vld [vmem:[%s1 + $0x130] sm:$0xf]
      %v3866 = vld [vmem:[%s1 + $0x134] sm:$0xf]
      %v3867 = vld [vmem:[%s1 + $0x138] sm:$0xf]
      %v3868 = vld [vmem:[%s1 + $0x13c] sm:$0xf]
      %v3869 = vld [vmem:[%s1 + $0x140] sm:$0xf]
      %v3870 = vld [vmem:[%s1 + $0x144] sm:$0xf]
      %v3871 = vld [vmem:[%s1 + $0x148] sm:$0xf]
      %v3872 = vld [vmem:[%s1 + $0x14c] sm:$0xf]
      %v3873 = vld [vmem:[%s1 + $0x150] sm:$0xf]
      %v3874 = vld [vmem:[%s1 + $0x154] sm:$0xf]
      %v3875 = vld [vmem:[%s1 + $0x158] sm:$0xf]
      %v3876 = vld [vmem:[%s1 + $0x15c] sm:$0xf]
      %v3877 = vld [vmem:[%s1 + $0x160] sm:$0xf]
      %v3878 = vld [vmem:[%s1 + $0x164] sm:$0xf]
      %v3879 = vld [vmem:[%s1 + $0x168] sm:$0xf]
      %v3880 = vld [vmem:[%s1 + $0x16c] sm:$0xf]
      %v3881 = vld [vmem:[%s1 + $0x170] sm:$0xf]
      %v3882 = vld [vmem:[%s1 + $0x174] sm:$0xf]
      %v3883 = vld [vmem:[%s1 + $0x178] sm:$0xf]
      %v3884 = vld [vmem:[%s1 + $0x17c] sm:$0xf]
      %v3885 = vld [vmem:[%s1 + $0x180] sm:$0xf]
      %v3886 = vld [vmem:[%s1 + $0x184] sm:$0xf]
      %v3887 = vld [vmem:[%s1 + $0x188] sm:$0xf]
      %v3888 = vld [vmem:[%s1 + $0x18c] sm:$0xf]
      %v3889 = vld [vmem:[%s1 + $0x190] sm:$0xf]
      %v3890 = vld [vmem:[%s1 + $0x194] sm:$0xf]
      %v3891 = vld [vmem:[%s1 + $0x198] sm:$0xf]
      %v3892 = vld [vmem:[%s1 + $0x19c] sm:$0xf]
      %v3893 = vld [vmem:[%s1 + $0x1a0] sm:$0xf]
      %v3894 = vld [vmem:[%s1 + $0x1a4] sm:$0xf]
      %v3895 = vld [vmem:[%s1 + $0x1a8] sm:$0xf]
      %v3896 = vld [vmem:[%s1 + $0x1ac] sm:$0xf]
      %v3897 = vld [vmem:[%s1 + $0x1b0] sm:$0xf]
      %v3898 = vld [vmem:[%s1 + $0x1b4] sm:$0xf]
      %v3899 = vld [vmem:[%s1 + $0x1b8] sm:$0xf]
      %v3900 = vld [vmem:[%s1 + $0x1bc] sm:$0xf]
      %v3901 = vld [vmem:[%s1 + $0x1c0] sm:$0xf]
      %v3902 = vld [vmem:[%s1 + $0x1c4] sm:$0xf]
      %v3903 = vld [vmem:[%s1 + $0x1c8] sm:$0xf]
      %v3904 = vld [vmem:[%s1 + $0x1cc] sm:$0xf]
      %v3905 = vld [vmem:[%s1 + $0x1d0] sm:$0xf]
      %v3906 = vld [vmem:[%s1 + $0x1d4] sm:$0xf]
      %v3907 = vld [vmem:[%s1 + $0x1d8] sm:$0xf]
      %v3908 = vld [vmem:[%s1 + $0x1dc] sm:$0xf]
      %v3909 = vld [vmem:[%s1 + $0x1e0] sm:$0xf]
      %v3910 = vld [vmem:[%s1 + $0x1e4] sm:$0xf]
      %v3911 = vld [vmem:[%s1 + $0x1e8] sm:$0xf]
      %v3912 = vld [vmem:[%s1 + $0x1ec] sm:$0xf]
      %v3913 = vld [vmem:[%s1 + $0x1f0] sm:$0xf]
      %v3914 = vld [vmem:[%s1 + $0x1f4] sm:$0xf]
      %v3915 = vld [vmem:[%s1 + $0x1f8] sm:$0xf]
      %v3916 = vld [vmem:[%s1 + $0x1fc] sm:$0xf]
      %v3917 = vld [vmem:[%s1 + $0x200] sm:$0xf]
      %v3918 = vld [vmem:[%s1 + $0x204] sm:$0xf]
      %v3919 = vld [vmem:[%s1 + $0x208] sm:$0xf]
      %v3920 = vld [vmem:[%s1 + $0x20c] sm:$0xf]
      %v3921 = vld [vmem:[%s1 + $0x210] sm:$0xf]
      %v3922 = vld [vmem:[%s1 + $0x214] sm:$0xf]
      %v3923 = vld [vmem:[%s1 + $0x218] sm:$0xf]
      %v3924 = vld [vmem:[%s1 + $0x21c] sm:$0xf]
      %v3925 = vld [vmem:[%s1 + $0x220] sm:$0xf]
      %v3926 = vld [vmem:[%s1 + $0x224] sm:$0xf]
      %v3927 = vld [vmem:[%s1 + $0x228] sm:$0xf]
      %v3928 = vld [vmem:[%s1 + $0x22c] sm:$0xf]
      %v3929 = vld [vmem:[%s1 + $0x230] sm:$0xf]
      %v3930 = vld [vmem:[%s1 + $0x234] sm:$0xf]
      %v3931 = vld [vmem:[%s1 + $0x238] sm:$0xf]
      %v3932 = vld [vmem:[%s1 + $0x23c] sm:$0xf]
      %v4077 = vunpack.c.l.b16 %v3789
      %v4078 = vunpack.c.l.b16 %v3790
      %v4079 = vunpack.c.l.b16 %v3791
      %v4080 = vunpack.c.l.b16 %v3792
      %v4081 = vunpack.c.l.b16 %v3793
      %v4082 = vunpack.c.l.b16 %v3794
      %v4083 = vunpack.c.l.b16 %v3795
      %v4084 = vunpack.c.l.b16 %v3796
      %v4085 = vunpack.c.l.b16 %v3797
      %v4086 = vunpack.c.l.b16 %v3798
      %v4087 = vunpack.c.l.b16 %v3799
      %v4088 = vunpack.c.l.b16 %v3800
      %v4089 = vunpack.c.l.b16 %v3801
      %v4090 = vunpack.c.l.b16 %v3802
      %v4091 = vunpack.c.l.b16 %v3803
      %v4092 = vunpack.c.l.b16 %v3804
      %v4093 = vunpack.c.l.b16 %v3805
      %v4094 = vunpack.c.l.b16 %v3806
      %v4095 = vunpack.c.l.b16 %v3807
      %v4096 = vunpack.c.l.b16 %v3808
      %v4097 = vunpack.c.l.b16 %v3809
      %v4098 = vunpack.c.l.b16 %v3810
      %v4099 = vunpack.c.l.b16 %v3811
      %v4100 = vunpack.c.l.b16 %v3812
      %v4101 = vunpack.c.l.b16 %v3813
      %v4102 = vunpack.c.l.b16 %v3814
      %v4103 = vunpack.c.l.b16 %v3815
      %v4104 = vunpack.c.l.b16 %v3816
      %v4105 = vunpack.c.l.b16 %v3817
      %v4106 = vunpack.c.l.b16 %v3818
      %v4107 = vunpack.c.l.b16 %v3819
      %v4108 = vunpack.c.l.b16 %v3820
      %v4109 = vunpack.c.l.b16 %v3821
      %v4110 = vunpack.c.l.b16 %v3822
      %v4111 = vunpack.c.l.b16 %v3823
      %v4112 = vunpack.c.l.b16 %v3824
      %v4113 = vunpack.c.l.b16 %v3825
      %v4114 = vunpack.c.l.b16 %v3826
      %v4115 = vunpack.c.l.b16 %v3827
      %v4116 = vunpack.c.l.b16 %v3828
      %v4117 = vunpack.c.l.b16 %v3829
      %v4118 = vunpack.c.l.b16 %v3830
      %v4119 = vunpack.c.l.b16 %v3831
      %v4120 = vunpack.c.l.b16 %v3832
      %v4121 = vunpack.c.l.b16 %v3833
      %v4122 = vunpack.c.l.b16 %v3834
      %v4123 = vunpack.c.l.b16 %v3835
      %v4124 = vunpack.c.l.b16 %v3836
      %v4125 = vunpack.c.l.b16 %v3837
      %v4126 = vunpack.c.l.b16 %v3838
      %v4127 = vunpack.c.l.b16 %v3839
      %v4128 = vunpack.c.l.b16 %v3840
      %v4129 = vunpack.c.l.b16 %v3841
      %v4130 = vunpack.c.l.b16 %v3842
      %v4131 = vunpack.c.l.b16 %v3843
      %v4132 = vunpack.c.l.b16 %v3844
      %v4133 = vunpack.c.l.b16 %v3845
      %v4134 = vunpack.c.l.b16 %v3846
      %v4135 = vunpack.c.l.b16 %v3847
      %v4136 = vunpack.c.l.b16 %v3848
      %v4137 = vunpack.c.l.b16 %v3849
      %v4138 = vunpack.c.l.b16 %v3850
      %v4139 = vunpack.c.l.b16 %v3851
      %v4140 = vunpack.c.l.b16 %v3852
      %v4141 = vunpack.c.l.b16 %v3853
      %v4142 = vunpack.c.l.b16 %v3854
      %v4143 = vunpack.c.l.b16 %v3855
      %v4144 = vunpack.c.l.b16 %v3856
      %v4145 = vunpack.c.l.b16 %v3857
      %v4146 = vunpack.c.l.b16 %v3858
      %v4147 = vunpack.c.l.b16 %v3859
      %v4148 = vunpack.c.l.b16 %v3860
      %v4149 = vunpack.c.l.b16 %v3861
      %v4150 = vunpack.c.l.b16 %v3862
      %v4151 = vunpack.c.l.b16 %v3863
      %v4152 = vunpack.c.l.b16 %v3864
      %v4153 = vunpack.c.l.b16 %v3865
      %v4154 = vunpack.c.l.b16 %v3866
      %v4155 = vunpack.c.l.b16 %v3867
      %v4156 = vunpack.c.l.b16 %v3868
      %v4157 = vunpack.c.l.b16 %v3869
      %v4158 = vunpack.c.l.b16 %v3870
      %v4159 = vunpack.c.l.b16 %v3871
      %v4160 = vunpack.c.l.b16 %v3872
      %v4161 = vunpack.c.l.b16 %v3873
      %v4162 = vunpack.c.l.b16 %v3874
      %v4163 = vunpack.c.l.b16 %v3875
      %v4164 = vunpack.c.l.b16 %v3876
      %v4165 = vunpack.c.l.b16 %v3877
      %v4166 = vunpack.c.l.b16 %v3878
      %v4167 = vunpack.c.l.b16 %v3879
      %v4168 = vunpack.c.l.b16 %v3880
      %v4169 = vunpack.c.l.b16 %v3881
      %v4170 = vunpack.c.l.b16 %v3882
      %v4171 = vunpack.c.l.b16 %v3883
      %v4172 = vunpack.c.l.b16 %v3884
      %v4173 = vunpack.c.l.b16 %v3885
      %v4174 = vunpack.c.l.b16 %v3886
      %v4175 = vunpack.c.l.b16 %v3887
      %v4176 = vunpack.c.l.b16 %v3888
      %v4177 = vunpack.c.l.b16 %v3889
      %v4178 = vunpack.c.l.b16 %v3890
      %v4179 = vunpack.c.l.b16 %v3891
      %v4180 = vunpack.c.l.b16 %v3892
      %v4181 = vunpack.c.l.b16 %v3893
      %v4182 = vunpack.c.l.b16 %v3894
      %v4183 = vunpack.c.l.b16 %v3895
      %v4184 = vunpack.c.l.b16 %v3896
      %v4185 = vunpack.c.l.b16 %v3897
      %v4186 = vunpack.c.l.b16 %v3898
      %v4187 = vunpack.c.l.b16 %v3899
      %v4188 = vunpack.c.l.b16 %v3900
      %v4189 = vunpack.c.l.b16 %v3901
      %v4190 = vunpack.c.l.b16 %v3902
      %v4191 = vunpack.c.l.b16 %v3903
      %v4192 = vunpack.c.l.b16 %v3904
      %v4193 = vunpack.c.l.b16 %v3905
      %v4194 = vunpack.c.l.b16 %v3906
      %v4195 = vunpack.c.l.b16 %v3907
      %v4196 = vunpack.c.l.b16 %v3908
      %v4197 = vunpack.c.l.b16 %v3909
      %v4198 = vunpack.c.l.b16 %v3910
      %v4199 = vunpack.c.l.b16 %v3911
      %v4200 = vunpack.c.l.b16 %v3912
      %v4201 = vunpack.c.l.b16 %v3913
      %v4202 = vunpack.c.l.b16 %v3914
      %v4203 = vunpack.c.l.b16 %v3915
      %v4204 = vunpack.c.l.b16 %v3916
      %v4205 = vunpack.c.l.b16 %v3917
      %v4206 = vunpack.c.l.b16 %v3918
      %v4207 = vunpack.c.l.b16 %v3919
      %v4208 = vunpack.c.l.b16 %v3920
      %v4209 = vunpack.c.l.b16 %v3921
      %v4210 = vunpack.c.l.b16 %v3922
      %v4211 = vunpack.c.l.b16 %v3923
      %v4212 = vunpack.c.l.b16 %v3924
      %v4213 = vunpack.c.l.b16 %v3925
      %v4214 = vunpack.c.l.b16 %v3926
      %v4215 = vunpack.c.l.b16 %v3927
      %v4216 = vunpack.c.l.b16 %v3928
      %v4217 = vunpack.c.l.b16 %v3929
      %v4218 = vunpack.c.l.b16 %v3930
      %v4219 = vunpack.c.l.b16 %v3931
      %v4220 = vunpack.c.l.b16 %v3932
      %v4221 = vpack.c.b16 %v4078, %v4077
      %v4222 = vpack.c.b16 %v4080, %v4079
      %v4223 = vpack.c.b16 %v4082, %v4081
      %v4224 = vpack.c.b16 %v4084, %v4083
      %v4225 = vpack.c.b16 %v4086, %v4085
      %v4226 = vpack.c.b16 %v4088, %v4087
      %v4227 = vpack.c.b16 %v4090, %v4089
      %v4228 = vpack.c.b16 %v4092, %v4091
      %v4229 = vpack.c.b16 %v4094, %v4093
      %v4230 = vpack.c.b16 %v4096, %v4095
      %v4231 = vpack.c.b16 %v4098, %v4097
      %v4232 = vpack.c.b16 %v4100, %v4099
      %v4233 = vpack.c.b16 %v4102, %v4101
      %v4234 = vpack.c.b16 %v4104, %v4103
      %v4235 = vpack.c.b16 %v4106, %v4105
      %v4236 = vpack.c.b16 %v4108, %v4107
      %v4237 = vpack.c.b16 %v4110, %v4109
      %v4238 = vpack.c.b16 %v4112, %v4111
      %v4239 = vpack.c.b16 %v4114, %v4113
      %v4240 = vpack.c.b16 %v4116, %v4115
      %v4241 = vpack.c.b16 %v4118, %v4117
      %v4242 = vpack.c.b16 %v4120, %v4119
      %v4243 = vpack.c.b16 %v4122, %v4121
      %v4244 = vpack.c.b16 %v4124, %v4123
      %v4245 = vpack.c.b16 %v4126, %v4125
      %v4246 = vpack.c.b16 %v4128, %v4127
      %v4247 = vpack.c.b16 %v4130, %v4129
      %v4248 = vpack.c.b16 %v4132, %v4131
      %v4249 = vpack.c.b16 %v4134, %v4133
      %v4250 = vpack.c.b16 %v4136, %v4135
      %v4251 = vpack.c.b16 %v4138, %v4137
      %v4252 = vpack.c.b16 %v4140, %v4139
      %v4253 = vpack.c.b16 %v4142, %v4141
      %v4254 = vpack.c.b16 %v4144, %v4143
      %v4255 = vpack.c.b16 %v4146, %v4145
      %v4256 = vpack.c.b16 %v4148, %v4147
      %v4257 = vpack.c.b16 %v4150, %v4149
      %v4258 = vpack.c.b16 %v4152, %v4151
      %v4259 = vpack.c.b16 %v4154, %v4153
      %v4260 = vpack.c.b16 %v4156, %v4155
      %v4261 = vpack.c.b16 %v4158, %v4157
      %v4262 = vpack.c.b16 %v4160, %v4159
      %v4263 = vpack.c.b16 %v4162, %v4161
      %v4264 = vpack.c.b16 %v4164, %v4163
      %v4265 = vpack.c.b16 %v4166, %v4165
      %v4266 = vpack.c.b16 %v4168, %v4167
      %v4267 = vpack.c.b16 %v4170, %v4169
      %v4268 = vpack.c.b16 %v4172, %v4171
      %v4269 = vpack.c.b16 %v4174, %v4173
      %v4270 = vpack.c.b16 %v4176, %v4175
      %v4271 = vpack.c.b16 %v4178, %v4177
      %v4272 = vpack.c.b16 %v4180, %v4179
      %v4273 = vpack.c.b16 %v4182, %v4181
      %v4274 = vpack.c.b16 %v4184, %v4183
      %v4275 = vpack.c.b16 %v4186, %v4185
      %v4276 = vpack.c.b16 %v4188, %v4187
      %v4277 = vpack.c.b16 %v4190, %v4189
      %v4278 = vpack.c.b16 %v4192, %v4191
      %v4279 = vpack.c.b16 %v4194, %v4193
      %v4280 = vpack.c.b16 %v4196, %v4195
      %v4281 = vpack.c.b16 %v4198, %v4197
      %v4282 = vpack.c.b16 %v4200, %v4199
      %v4283 = vpack.c.b16 %v4202, %v4201
      %v4284 = vpack.c.b16 %v4204, %v4203
      %v4285 = vpack.c.b16 %v4206, %v4205
      %v4286 = vpack.c.b16 %v4208, %v4207
      %v4287 = vpack.c.b16 %v4210, %v4209
      %v4288 = vpack.c.b16 %v4212, %v4211
      %v4289 = vpack.c.b16 %v4214, %v4213
      %v4290 = vpack.c.b16 %v4216, %v4215
      %v4291 = vpack.c.b16 %v4218, %v4217
      %v4292 = vpack.c.b16 %v4220, %v4219
      %4365 = vmatprep.subr.bf16.mxu0 0
      %4366 = vmatpush1.bf16.msra.mxu0 %v4221
      %4367 = vmatprep.subr.bf16.mxu0 0
      %4368 = vmatpush1.bf16.msra.mxu0 %v4222
      %4369 = vmatprep.subr.bf16.mxu0 0
      %4370 = vmatpush1.bf16.msra.mxu0 %v4223
      %4371 = vmatprep.subr.bf16.mxu0 0
      %4372 = vmatpush1.bf16.msra.mxu0 %v4224
      %4373 = vmatprep.subr.bf16.mxu0 0
      %4374 = vmatpush1.bf16.msra.mxu0 %v4225
      %4375 = vmatprep.subr.bf16.mxu0 0
      %4376 = vmatpush1.bf16.msra.mxu0 %v4226
      %4377 = vmatprep.subr.bf16.mxu0 0
      %4378 = vmatpush1.bf16.msra.mxu0 %v4227
      %4379 = vmatprep.subr.bf16.mxu0 0
      %4380 = vmatpush1.bf16.msra.mxu0 %v4228
      %4381 = vmatprep.subr.bf16.mxu0 0
      %4382 = vmatpush1.bf16.msra.mxu0 %v4229
      %4383 = vmatprep.subr.bf16.mxu0 0
      %4384 = vmatpush1.bf16.msra.mxu0 %v4230
      %4385 = vmatprep.subr.bf16.mxu0 0
      %4386 = vmatpush1.bf16.msra.mxu0 %v4231
      %4387 = vmatprep.subr.bf16.mxu0 0
      %4388 = vmatpush1.bf16.msra.mxu0 %v4232
      %4389 = vmatprep.subr.bf16.mxu0 0
      %4390 = vmatpush1.bf16.msra.mxu0 %v4233
      %4391 = vmatprep.subr.bf16.mxu0 0
      %4392 = vmatpush1.bf16.msra.mxu0 %v4234
      %4393 = vmatprep.subr.bf16.mxu0 0
      %4394 = vmatpush1.bf16.msra.mxu0 %v4235
      %4395 = vmatprep.subr.bf16.mxu0 0
      %4396 = vmatpush1.bf16.msra.mxu0 %v4236
      %4397 = vmatprep.mubr.bf16.mxu0 %v3646
      %4398 = vmatmul.mubr.bf16.gmra.mrb[0].mxu0 %v3645
      %v4399 = vpop.f32.mrb[0].mxu0
      %v4400 = vadd.f32 0.0, %v4399
      %v4401 = vpop.f32.mrb[0].mxu0
      %v4402 = vpop.f32.mrb[0].mxu0
      %v4403 = vadd.f32 0.0, %v4402
      %v4404 = vpop.f32.mrb[0].mxu0
      %4405 = vmatprep.mubr.bf16.mxu0 %v3655
      %4406 = vmatmul.mubr.bf16.gmra.mrb[0].mxu0 %v3654
      %v4407 = vpop.f32.mrb[0].mxu0
      %v4408 = vadd.f32 0.0, %v4407
      %v4409 = vpop.f32.mrb[0].mxu0
      %v4410 = vpop.f32.mrb[0].mxu0
      %v4411 = vadd.f32 0.0, %v4410
      %v4412 = vpop.f32.mrb[0].mxu0
      %4413 = vmatprep.mubr.bf16.mxu0 %v3664
      %4414 = vmatmul.mubr.bf16.gmra.mrb[0].mxu0 %v3663
      %v4415 = vpop.f32.mrb[0].mxu0
      %v4416 = vadd.f32 0.0, %v4415
      %v4417 = vpop.f32.mrb[0].mxu0
      %v4418 = vpop.f32.mrb[0].mxu0
      %v4419 = vadd.f32 0.0, %v4418
      %v4420 = vpop.f32.mrb[0].mxu0
      %4421 = vmatprep.mubr.bf16.mxu0 %v3673
      %4422 = vmatmul.mubr.bf16.gmra.mrb[0].mxu0 %v3672
      %v4423 = vpop.f32.mrb[0].mxu0
      %v4424 = vadd.f32 0.0, %v4423
      %v4425 = vpop.f32.mrb[0].mxu0
      %v4426 = vpop.f32.mrb[0].mxu0
      %v4427 = vadd.f32 0.0, %v4426
      %v4428 = vpop.f32.mrb[0].mxu0
      %4429 = vmatprep.mubr.bf16.mxu0 %v3682
      %4430 = vmatmul.mubr.bf16.gmra.mrb[0].mxu0 %v3681
      %v4431 = vpop.f32.mrb[0].mxu0
      %v4432 = vadd.f32 0.0, %v4431
      %v4433 = vpop.f32.mrb[0].mxu0
      %v4434 = vpop.f32.mrb[0].mxu0
      %v4435 = vadd.f32 0.0, %v4434
      %v4436 = vpop.f32.mrb[0].mxu0
      %4437 = vmatprep.mubr.bf16.mxu0 %v3691
      %4438 = vmatmul.mubr.bf16.gmra.mrb[0].mxu0 %v3690
      %v4439 = vpop.f32.mrb[0].mxu0
      %v4440 = vadd.f32 0.0, %v4439
      %v4441 = vpop.f32.mrb[0].mxu0
      %v4442 = vpop.f32.mrb[0].mxu0
      %v4443 = vadd.f32 0.0, %v4442
      %v4444 = vpop.f32.mrb[0].mxu0
      %4445 = vmatprep.mubr.bf16.mxu0 %v3700
      %4446 = vmatmul.mubr.bf16.gmra.mrb[0].mxu0 %v3699
      %v4447 = vpop.f32.mrb[0].mxu0
      %v4448 = vadd.f32 0.0, %v4447
      %v4449 = vpop.f32.mrb[0].mxu0
      %v4450 = vpop.f32.mrb[0].mxu0
      %v4451 = vadd.f32 0.0, %v4450
      %v4452 = vpop.f32.mrb[0].mxu0
      %4453 = vmatprep.mubr.bf16.mxu0 %v3709
      %4454 = vmatmul.mubr.bf16.gmra.mrb[0].mxu0 %v3708
      %v4455 = vpop.f32.mrb[0].mxu0
      %v4456 = vadd.f32 0.0, %v4455
      %v4457 = vpop.f32.mrb[0].mxu0
      %v4458 = vpop.f32.mrb[0].mxu0
      %v4459 = vadd.f32 0.0, %v4458
      %v4460 = vpop.f32.mrb[0].mxu0
      %4461 = vmatprep.mubr.bf16.mxu0 %v3718
      %4462 = vmatmul.mubr.bf16.gmra.mrb[0].mxu0 %v3717
      %v4463 = vpop.f32.mrb[0].mxu0
      %v4464 = vadd.f32 0.0, %v4463
      %v4465 = vpop.f32.mrb[0].mxu0
      %v4466 = vpop.f32.mrb[0].mxu0
      %v4467 = vadd.f32 0.0, %v4466
      %v4468 = vpop.f32.mrb[0].mxu0
      %4469 = vmatprep.mubr.bf16.mxu0 %v3727
      %4470 = vmatmul.mubr.bf16.gmra.mrb[0].mxu0 %v3726
      %v4471 = vpop.f32.mrb[0].mxu0
      %v4472 = vadd.f32 0.0, %v4471
      %v4473 = vpop.f32.mrb[0].mxu0
      %v4474 = vpop.f32.mrb[0].mxu0
      %v4475 = vadd.f32 0.0, %v4474
      %v4476 = vpop.f32.mrb[0].mxu0
      %4477 = vmatprep.mubr.bf16.mxu0 %v3736
      %4478 = vmatmul.mubr.bf16.gmra.mrb[0].mxu0 %v3735
      %v4479 = vpop.f32.mrb[0].mxu0
      %v4480 = vadd.f32 0.0, %v4479
      %v4481 = vpop.f32.mrb[0].mxu0
      %v4482 = vpop.f32.mrb[0].mxu0
      %v4483 = vadd.f32 0.0, %v4482
      %v4484 = vpop.f32.mrb[0].mxu0
      %4485 = vmatprep.mubr.bf16.mxu0 %v3745
      %4486 = vmatmul.mubr.bf16.gmra.mrb[0].mxu0 %v3744
      %v4487 = vpop.f32.mrb[0].mxu0
      %v4488 = vadd.f32 0.0, %v4487
      %v4489 = vpop.f32.mrb[0].mxu0
      %v4490 = vpop.f32.mrb[0].mxu0
      %v4491 = vadd.f32 0.0, %v4490
      %v4492 = vpop.f32.mrb[0].mxu0
      %4493 = vmatprep.mubr.bf16.mxu0 %v3754
      %4494 = vmatmul.mubr.bf16.gmra.mrb[0].mxu0 %v3753
      %v4495 = vpop.f32.mrb[0].mxu0
      %v4496 = vadd.f32 0.0, %v4495
      %v4497 = vpop.f32.mrb[0].mxu0
      %v4498 = vpop.f32.mrb[0].mxu0
      %v4499 = vadd.f32 0.0, %v4498
      %v4500 = vpop.f32.mrb[0].mxu0
      %4501 = vmatprep.mubr.bf16.mxu0 %v3763
      %4502 = vmatmul.mubr.bf16.gmra.mrb[0].mxu0 %v3762
      %v4503 = vpop.f32.mrb[0].mxu0
      %v4504 = vadd.f32 0.0, %v4503
      %v4505 = vpop.f32.mrb[0].mxu0
      %v4506 = vpop.f32.mrb[0].mxu0
      %v4507 = vadd.f32 0.0, %v4506
      %v4508 = vpop.f32.mrb[0].mxu0
      %4509 = vmatprep.mubr.bf16.mxu0 %v3772
      %4510 = vmatmul.mubr.bf16.gmra.mrb[0].mxu0 %v3771
      %v4511 = vpop.f32.mrb[0].mxu0
      %v4512 = vadd.f32 0.0, %v4511
      %v4513 = vpop.f32.mrb[0].mxu0
      %v4514 = vpop.f32.mrb[0].mxu0
      %v4515 = vadd.f32 0.0, %v4514
      %v4516 = vpop.f32.mrb[0].mxu0
      %4517 = vmatprep.mubr.bf16.mxu0 %v3781
      %4518 = vmatmul.mubr.bf16.gmra.mrb[0].mxu0 %v3780
      %v4519 = vpop.f32.mrb[0].mxu0
      %v4520 = vadd.f32 0.0, %v4519
      %v4521 = vpop.f32.mrb[0].mxu0
      %v4522 = vpop.f32.mrb[0].mxu0
      %v4523 = vadd.f32 0.0, %v4522
      %v4524 = vpop.f32.mrb[0].mxu0
      %4525 = vdwg.mxu0
      %4526 = vmatprep.subr.bf16.mxu0 0
      %4527 = vmatpush1.bf16.msra.mxu0 %v4237
      %4528 = vmatprep.subr.bf16.mxu0 0
      %4529 = vmatpush1.bf16.msra.mxu0 %v4238
      %4530 = vmatprep.subr.bf16.mxu0 0
      %4531 = vmatpush1.bf16.msra.mxu0 %v4239
      %4532 = vmatprep.subr.bf16.mxu0 0
      %4533 = vmatpush1.bf16.msra.mxu0 %v4240
      %4534 = vmatprep.subr.bf16.mxu0 0
      %4535 = vmatpush1.bf16.msra.mxu0 %v4241
      %4536 = vmatprep.subr.bf16.mxu0 0
      %4537 = vmatpush1.bf16.msra.mxu0 %v4242
      %4538 = vmatprep.subr.bf16.mxu0 0
      %4539 = vmatpush1.bf16.msra.mxu0 %v4243
      %4540 = vmatprep.subr.bf16.mxu0 0
      %4541 = vmatpush1.bf16.msra.mxu0 %v4244
      %4542 = vmatprep.subr.bf16.mxu0 0
      %4543 = vmatpush1.bf16.msra.mxu0 %v4245
      %4544 = vmatprep.subr.bf16.mxu0 0
      %4545 = vmatpush1.bf16.msra.mxu0 %v4246
      %4546 = vmatprep.subr.bf16.mxu0 0
      %4547 = vmatpush1.bf16.msra.mxu0 %v4247
      %4548 = vmatprep.subr.bf16.mxu0 0
      %4549 = vmatpush1.bf16.msra.mxu0 %v4248
      %4550 = vmatprep.subr.bf16.mxu0 0
      %4551 = vmatpush1.bf16.msra.mxu0 %v4249
      %4552 = vmatprep.subr.bf16.mxu0 0
      %4553 = vmatpush1.bf16.msra.mxu0 %v4250
      %4554 = vmatprep.subr.bf16.mxu0 0
      %4555 = vmatpush1.bf16.msra.mxu0 %v4251
      %4556 = vmatprep.subr.bf16.mxu0 0
      %4557 = vmatpush1.bf16.msra.mxu0 %v4252
      %4558 = vmatprep.mubr.bf16.mxu0 %v3648
      %4559 = vmatmul.mubr.bf16.gmra.mrb[0].mxu0 %v3647
      %v4560 = vpop.f32.mrb[0].mxu0
      %v4561 = vadd.f32 %v4400, %v4560
      %v4562 = vpop.f32.mrb[0].mxu0
      %v4563 = vpop.f32.mrb[0].mxu0
      %v4564 = vadd.f32 %v4403, %v4563
      %v4565 = vpop.f32.mrb[0].mxu0
      %4566 = vmatprep.mubr.bf16.mxu0 %v3657
      %4567 = vmatmul.mubr.bf16.gmra.mrb[0].mxu0 %v3656
      %v4568 = vpop.f32.mrb[0].mxu0
      %v4569 = vadd.f32 %v4408, %v4568
      %v4570 = vpop.f32.mrb[0].mxu0
      %v4571 = vpop.f32.mrb[0].mxu0
      %v4572 = vadd.f32 %v4411, %v4571
      %v4573 = vpop.f32.mrb[0].mxu0
      %4574 = vmatprep.mubr.bf16.mxu0 %v3666
      %4575 = vmatmul.mubr.bf16.gmra.mrb[0].mxu0 %v3665
      %v4576 = vpop.f32.mrb[0].mxu0
      %v4577 = vadd.f32 %v4416, %v4576
      %v4578 = vpop.f32.mrb[0].mxu0
      %v4579 = vpop.f32.mrb[0].mxu0
      %v4580 = vadd.f32 %v4419, %v4579
      %v4581 = vpop.f32.mrb[0].mxu0
      %4582 = vmatprep.mubr.bf16.mxu0 %v3675
      %4583 = vmatmul.mubr.bf16.gmra.mrb[0].mxu0 %v3674
      %v4584 = vpop.f32.mrb[0].mxu0
      %v4585 = vadd.f32 %v4424, %v4584
      %v4586 = vpop.f32.mrb[0].mxu0
      %v4587 = vpop.f32.mrb[0].mxu0
      %v4588 = vadd.f32 %v4427, %v4587
      %v4589 = vpop.f32.mrb[0].mxu0
      %4590 = vmatprep.mubr.bf16.mxu0 %v3684
      %4591 = vmatmul.mubr.bf16.gmra.mrb[0].mxu0 %v3683
      %v4592 = vpop.f32.mrb[0].mxu0
      %v4593 = vadd.f32 %v4432, %v4592
      %v4594 = vpop.f32.mrb[0].mxu0
      %v4595 = vpop.f32.mrb[0].mxu0
      %v4596 = vadd.f32 %v4435, %v4595
      %v4597 = vpop.f32.mrb[0].mxu0
      %4598 = vmatprep.mubr.bf16.mxu0 %v3693
      %4599 = vmatmul.mubr.bf16.gmra.mrb[0].mxu0 %v3692
      %v4600 = vpop.f32.mrb[0].mxu0
      %v4601 = vadd.f32 %v4440, %v4600
      %v4602 = vpop.f32.mrb[0].mxu0
      %v4603 = vpop.f32.mrb[0].mxu0
      %v4604 = vadd.f32 %v4443, %v4603
      %v4605 = vpop.f32.mrb[0].mxu0
      %4606 = vmatprep.mubr.bf16.mxu0 %v3702
      %4607 = vmatmul.mubr.bf16.gmra.mrb[0].mxu0 %v3701
      %v4608 = vpop.f32.mrb[0].mxu0
      %v4609 = vadd.f32 %v4448, %v4608
      %v4610 = vpop.f32.mrb[0].mxu0
      %v4611 = vpop.f32.mrb[0].mxu0
      %v4612 = vadd.f32 %v4451, %v4611
      %v4613 = vpop.f32.mrb[0].mxu0
      %4614 = vmatprep.mubr.bf16.mxu0 %v3711
      %4615 = vmatmul.mubr.bf16.gmra.mrb[0].mxu0 %v3710
      %v4616 = vpop.f32.mrb[0].mxu0
      %v4617 = vadd.f32 %v4456, %v4616
      %v4618 = vpop.f32.mrb[0].mxu0
      %v4619 = vpop.f32.mrb[0].mxu0
      %v4620 = vadd.f32 %v4459, %v4619
      %v4621 = vpop.f32.mrb[0].mxu0
      %4622 = vmatprep.mubr.bf16.mxu0 %v3720
      %4623 = vmatmul.mubr.bf16.gmra.mrb[0].mxu0 %v3719
      %v4624 = vpop.f32.mrb[0].mxu0
      %v4625 = vadd.f32 %v4464, %v4624
      %v4626 = vpop.f32.mrb[0].mxu0
      %v4627 = vpop.f32.mrb[0].mxu0
      %v4628 = vadd.f32 %v4467, %v4627
      %v4629 = vpop.f32.mrb[0].mxu0
      %4630 = vmatprep.mubr.bf16.mxu0 %v3729
      %4631 = vmatmul.mubr.bf16.gmra.mrb[0].mxu0 %v3728
      %v4632 = vpop.f32.mrb[0].mxu0
      %v4633 = vadd.f32 %v4472, %v4632
      %v4634 = vpop.f32.mrb[0].mxu0
      %v4635 = vpop.f32.mrb[0].mxu0
      %v4636 = vadd.f32 %v4475, %v4635
      %v4637 = vpop.f32.mrb[0].mxu0
      %4638 = vmatprep.mubr.bf16.mxu0 %v3738
      %4639 = vmatmul.mubr.bf16.gmra.mrb[0].mxu0 %v3737
      %v4640 = vpop.f32.mrb[0].mxu0
      %v4641 = vadd.f32 %v4480, %v4640
      %v4642 = vpop.f32.mrb[0].mxu0
      %v4643 = vpop.f32.mrb[0].mxu0
      %v4644 = vadd.f32 %v4483, %v4643
      %v4645 = vpop.f32.mrb[0].mxu0
      %4646 = vmatprep.mubr.bf16.mxu0 %v3747
      %4647 = vmatmul.mubr.bf16.gmra.mrb[0].mxu0 %v3746
      %v4648 = vpop.f32.mrb[0].mxu0
      %v4649 = vadd.f32 %v4488, %v4648
      %v4650 = vpop.f32.mrb[0].mxu0
      %v4651 = vpop.f32.mrb[0].mxu0
      %v4652 = vadd.f32 %v4491, %v4651
      %v4653 = vpop.f32.mrb[0].mxu0
      %4654 = vmatprep.mubr.bf16.mxu0 %v3756
      %4655 = vmatmul.mubr.bf16.gmra.mrb[0].mxu0 %v3755
      %v4656 = vpop.f32.mrb[0].mxu0
      %v4657 = vadd.f32 %v4496, %v4656
      %v4658 = vpop.f32.mrb[0].mxu0
      %v4659 = vpop.f32.mrb[0].mxu0
      %v4660 = vadd.f32 %v4499, %v4659
      %v4661 = vpop.f32.mrb[0].mxu0
      %4662 = vmatprep.mubr.bf16.mxu0 %v3765
      %4663 = vmatmul.mubr.bf16.gmra.mrb[0].mxu0 %v3764
      %v4664 = vpop.f32.mrb[0].mxu0
      %v4665 = vadd.f32 %v4504, %v4664
      %v4666 = vpop.f32.mrb[0].mxu0
      %v4667 = vpop.f32.mrb[0].mxu0
      %v4668 = vadd.f32 %v4507, %v4667
      %v4669 = vpop.f32.mrb[0].mxu0
      %4670 = vmatprep.mubr.bf16.mxu0 %v3774
      %4671 = vmatmul.mubr.bf16.gmra.mrb[0].mxu0 %v3773
      %v4672 = vpop.f32.mrb[0].mxu0
      %v4673 = vadd.f32 %v4512, %v4672
      %v4674 = vpop.f32.mrb[0].mxu0
      %v4675 = vpop.f32.mrb[0].mxu0
      %v4676 = vadd.f32 %v4515, %v4675
      %v4677 = vpop.f32.mrb[0].mxu0
      %4678 = vmatprep.mubr.bf16.mxu0 %v3783
      %4679 = vmatmul.mubr.bf16.gmra.mrb[0].mxu0 %v3782
      %v4680 = vpop.f32.mrb[0].mxu0
      %v4681 = vadd.f32 %v4520, %v4680
      %v4682 = vpop.f32.mrb[0].mxu0
      %v4683 = vpop.f32.mrb[0].mxu0
      %v4684 = vadd.f32 %v4523, %v4683
      %v4685 = vpop.f32.mrb[0].mxu0
      %4686 = vdwg.mxu0
      %4687 = vmatprep.subr.bf16.mxu0 0
      %4688 = vmatpush1.bf16.msra.mxu0 %v4253
      %4689 = vmatprep.subr.bf16.mxu0 0
      %4690 = vmatpush1.bf16.msra.mxu0 %v4254
      %4691 = vmatprep.subr.bf16.mxu0 0
      %4692 = vmatpush1.bf16.msra.mxu0 %v4255
      %4693 = vmatprep.subr.bf16.mxu0 0
      %4694 = vmatpush1.bf16.msra.mxu0 %v4256
      %4695 = vmatprep.subr.bf16.mxu0 0
      %4696 = vmatpush1.bf16.msra.mxu0 %v4257
      %4697 = vmatprep.subr.bf16.mxu0 0
      %4698 = vmatpush1.bf16.msra.mxu0 %v4258
      %4699 = vmatprep.subr.bf16.mxu0 0
      %4700 = vmatpush1.bf16.msra.mxu0 %v4259
      %4701 = vmatprep.subr.bf16.mxu0 0
      %4702 = vmatpush1.bf16.msra.mxu0 %v4260
      %4703 = vmatprep.subr.bf16.mxu0 0
      %4704 = vmatpush1.bf16.msra.mxu0 %v4261
      %4705 = vmatprep.subr.bf16.mxu0 0
      %4706 = vmatpush1.bf16.msra.mxu0 %v4262
      %4707 = vmatprep.subr.bf16.mxu0 0
      %4708 = vmatpush1.bf16.msra.mxu0 %v4263
      %4709 = vmatprep.subr.bf16.mxu0 0
      %4710 = vmatpush1.bf16.msra.mxu0 %v4264
      %4711 = vmatprep.subr.bf16.mxu0 0
      %4712 = vmatpush1.bf16.msra.mxu0 %v4265
      %4713 = vmatprep.subr.bf16.mxu0 0
      %4714 = vmatpush1.bf16.msra.mxu0 %v4266
      %4715 = vmatprep.subr.bf16.mxu0 0
      %4716 = vmatpush1.bf16.msra.mxu0 %v4267
      %4717 = vmatprep.subr.bf16.mxu0 0
      %4718 = vmatpush1.bf16.msra.mxu0 %v4268
      %4719 = vmatprep.mubr.bf16.mxu0 %v3650
      %4720 = vmatmul.mubr.bf16.gmra.mrb[0].mxu0 %v3649
      %v4721 = vpop.f32.mrb[0].mxu0
      %v4722 = vadd.f32 %v4561, %v4721
      %v4723 = vpop.f32.mrb[0].mxu0
      %v4724 = vpop.f32.mrb[0].mxu0
      %v4725 = vadd.f32 %v4564, %v4724
      %v4726 = vpop.f32.mrb[0].mxu0
      %4727 = vmatprep.mubr.bf16.mxu0 %v3659
      %4728 = vmatmul.mubr.bf16.gmra.mrb[0].mxu0 %v3658
      %v4729 = vpop.f32.mrb[0].mxu0
      %v4730 = vadd.f32 %v4569, %v4729
      %v4731 = vpop.f32.mrb[0].mxu0
      %v4732 = vpop.f32.mrb[0].mxu0
      %v4733 = vadd.f32 %v4572, %v4732
      %v4734 = vpop.f32.mrb[0].mxu0
      %4735 = vmatprep.mubr.bf16.mxu0 %v3668
      %4736 = vmatmul.mubr.bf16.gmra.mrb[0].mxu0 %v3667
      %v4737 = vpop.f32.mrb[0].mxu0
      %v4738 = vadd.f32 %v4577, %v4737
      %v4739 = vpop.f32.mrb[0].mxu0
      %v4740 = vpop.f32.mrb[0].mxu0
      %v4741 = vadd.f32 %v4580, %v4740
      %v4742 = vpop.f32.mrb[0].mxu0
      %4743 = vmatprep.mubr.bf16.mxu0 %v3677
      %4744 = vmatmul.mubr.bf16.gmra.mrb[0].mxu0 %v3676
      %v4745 = vpop.f32.mrb[0].mxu0
      %v4746 = vadd.f32 %v4585, %v4745
      %v4747 = vpop.f32.mrb[0].mxu0
      %v4748 = vpop.f32.mrb[0].mxu0
      %v4749 = vadd.f32 %v4588, %v4748
      %v4750 = vpop.f32.mrb[0].mxu0
      %4751 = vmatprep.mubr.bf16.mxu0 %v3686
      %4752 = vmatmul.mubr.bf16.gmra.mrb[0].mxu0 %v3685
      %v4753 = vpop.f32.mrb[0].mxu0
      %v4754 = vadd.f32 %v4593, %v4753
      %v4755 = vpop.f32.mrb[0].mxu0
      %v4756 = vpop.f32.mrb[0].mxu0
      %v4757 = vadd.f32 %v4596, %v4756
      %v4758 = vpop.f32.mrb[0].mxu0
      %4759 = vmatprep.mubr.bf16.mxu0 %v3695
      %4760 = vmatmul.mubr.bf16.gmra.mrb[0].mxu0 %v3694
      %v4761 = vpop.f32.mrb[0].mxu0
      %v4762 = vadd.f32 %v4601, %v4761
      %v4763 = vpop.f32.mrb[0].mxu0
      %v4764 = vpop.f32.mrb[0].mxu0
      %v4765 = vadd.f32 %v4604, %v4764
      %v4766 = vpop.f32.mrb[0].mxu0
      %4767 = vmatprep.mubr.bf16.mxu0 %v3704
      %4768 = vmatmul.mubr.bf16.gmra.mrb[0].mxu0 %v3703
      %v4769 = vpop.f32.mrb[0].mxu0
      %v4770 = vadd.f32 %v4609, %v4769
      %v4771 = vpop.f32.mrb[0].mxu0
      %v4772 = vpop.f32.mrb[0].mxu0
      %v4773 = vadd.f32 %v4612, %v4772
      %v4774 = vpop.f32.mrb[0].mxu0
      %4775 = vmatprep.mubr.bf16.mxu0 %v3713
      %4776 = vmatmul.mubr.bf16.gmra.mrb[0].mxu0 %v3712
      %v4777 = vpop.f32.mrb[0].mxu0
      %v4778 = vadd.f32 %v4617, %v4777
      %v4779 = vpop.f32.mrb[0].mxu0
      %v4780 = vpop.f32.mrb[0].mxu0
      %v4781 = vadd.f32 %v4620, %v4780
      %v4782 = vpop.f32.mrb[0].mxu0
      %4783 = vmatprep.mubr.bf16.mxu0 %v3722
      %4784 = vmatmul.mubr.bf16.gmra.mrb[0].mxu0 %v3721
      %v4785 = vpop.f32.mrb[0].mxu0
      %v4786 = vadd.f32 %v4625, %v4785
      %v4787 = vpop.f32.mrb[0].mxu0
      %v4788 = vpop.f32.mrb[0].mxu0
      %v4789 = vadd.f32 %v4628, %v4788
      %v4790 = vpop.f32.mrb[0].mxu0
      %4791 = vmatprep.mubr.bf16.mxu0 %v3731
      %4792 = vmatmul.mubr.bf16.gmra.mrb[0].mxu0 %v3730
      %v4793 = vpop.f32.mrb[0].mxu0
      %v4794 = vadd.f32 %v4633, %v4793
      %v4795 = vpop.f32.mrb[0].mxu0
      %v4796 = vpop.f32.mrb[0].mxu0
      %v4797 = vadd.f32 %v4636, %v4796
      %v4798 = vpop.f32.mrb[0].mxu0
      %4799 = vmatprep.mubr.bf16.mxu0 %v3740
      %4800 = vmatmul.mubr.bf16.gmra.mrb[0].mxu0 %v3739
      %v4801 = vpop.f32.mrb[0].mxu0
      %v4802 = vadd.f32 %v4641, %v4801
      %v4803 = vpop.f32.mrb[0].mxu0
      %v4804 = vpop.f32.mrb[0].mxu0
      %v4805 = vadd.f32 %v4644, %v4804
      %v4806 = vpop.f32.mrb[0].mxu0
      %4807 = vmatprep.mubr.bf16.mxu0 %v3749
      %4808 = vmatmul.mubr.bf16.gmra.mrb[0].mxu0 %v3748
      %v4809 = vpop.f32.mrb[0].mxu0
      %v4810 = vadd.f32 %v4649, %v4809
      %v4811 = vpop.f32.mrb[0].mxu0
      %v4812 = vpop.f32.mrb[0].mxu0
      %v4813 = vadd.f32 %v4652, %v4812
      %v4814 = vpop.f32.mrb[0].mxu0
      %4815 = vmatprep.mubr.bf16.mxu0 %v3758
      %4816 = vmatmul.mubr.bf16.gmra.mrb[0].mxu0 %v3757
      %v4817 = vpop.f32.mrb[0].mxu0
      %v4818 = vadd.f32 %v4657, %v4817
      %v4819 = vpop.f32.mrb[0].mxu0
      %v4820 = vpop.f32.mrb[0].mxu0
      %v4821 = vadd.f32 %v4660, %v4820
      %v4822 = vpop.f32.mrb[0].mxu0
      %4823 = vmatprep.mubr.bf16.mxu0 %v3767
      %4824 = vmatmul.mubr.bf16.gmra.mrb[0].mxu0 %v3766
      %v4825 = vpop.f32.mrb[0].mxu0
      %v4826 = vadd.f32 %v4665, %v4825
      %v4827 = vpop.f32.mrb[0].mxu0
      %v4828 = vpop.f32.mrb[0].mxu0
      %v4829 = vadd.f32 %v4668, %v4828
      %v4830 = vpop.f32.mrb[0].mxu0
      %4831 = vmatprep.mubr.bf16.mxu0 %v3776
      %4832 = vmatmul.mubr.bf16.gmra.mrb[0].mxu0 %v3775
      %v4833 = vpop.f32.mrb[0].mxu0
      %v4834 = vadd.f32 %v4673, %v4833
      %v4835 = vpop.f32.mrb[0].mxu0
      %v4836 = vpop.f32.mrb[0].mxu0
      %v4837 = vadd.f32 %v4676, %v4836
      %v4838 = vpop.f32.mrb[0].mxu0
      %4839 = vmatprep.mubr.bf16.mxu0 %v3785
      %4840 = vmatmul.mubr.bf16.gmra.mrb[0].mxu0 %v3784
      %v4841 = vpop.f32.mrb[0].mxu0
      %v4842 = vadd.f32 %v4681, %v4841
      %v4843 = vpop.f32.mrb[0].mxu0
      %v4844 = vpop.f32.mrb[0].mxu0
      %v4845 = vadd.f32 %v4684, %v4844
      %v4846 = vpop.f32.mrb[0].mxu0
      %4847 = vdwg.mxu0
      %4848 = vmatprep.subr.bf16.mxu0 0
      %4849 = vmatpush1.bf16.msra.mxu0 %v4269
      %4850 = vmatprep.subr.bf16.mxu0 0
      %4851 = vmatpush1.bf16.msra.mxu0 %v4270
      %4852 = vmatprep.subr.bf16.mxu0 0
      %4853 = vmatpush1.bf16.msra.mxu0 %v4271
      %4854 = vmatprep.subr.bf16.mxu0 0
      %4855 = vmatpush1.bf16.msra.mxu0 %v4272
      %4856 = vmatprep.subr.bf16.mxu0 0
      %4857 = vmatpush1.bf16.msra.mxu0 %v4273
      %4858 = vmatprep.subr.bf16.mxu0 0
      %4859 = vmatpush1.bf16.msra.mxu0 %v4274
      %4860 = vmatprep.subr.bf16.mxu0 0
      %4861 = vmatpush1.bf16.msra.mxu0 %v4275
      %4862 = vmatprep.subr.bf16.mxu0 0
      %4863 = vmatpush1.bf16.msra.mxu0 %v4276
      %4864 = vmatprep.subr.bf16.mxu0 0
      %4865 = vmatpush1.bf16.msra.mxu0 %v4277
      %4866 = vmatprep.subr.bf16.mxu0 0
      %4867 = vmatpush1.bf16.msra.mxu0 %v4278
      %4868 = vmatprep.subr.bf16.mxu0 0
      %4869 = vmatpush1.bf16.msra.mxu0 %v4279
      %4870 = vmatprep.subr.bf16.mxu0 0
      %4871 = vmatpush1.bf16.msra.mxu0 %v4280
      %4872 = vmatprep.subr.bf16.mxu0 0
      %4873 = vmatpush1.bf16.msra.mxu0 %v4281
      %4874 = vmatprep.subr.bf16.mxu0 0
      %4875 = vmatpush1.bf16.msra.mxu0 %v4282
      %4876 = vmatprep.subr.bf16.mxu0 0
      %4877 = vmatpush1.bf16.msra.mxu0 %v4283
      %4878 = vmatprep.subr.bf16.mxu0 0
      %4879 = vmatpush1.bf16.msra.mxu0 %v4284
      %4880 = vmatprep.mubr.bf16.mxu0 %v3652
      %4881 = vmatmul.mubr.bf16.gmra.mrb[0].mxu0 %v3651
      %v4882 = vpop.f32.mrb[0].mxu0
      %v4883 = vadd.f32 %v4722, %v4882
      %v4884 = vpop.f32.mrb[0].mxu0
      %v4885 = vpop.f32.mrb[0].mxu0
      %v4886 = vadd.f32 %v4725, %v4885
      %v4887 = vpop.f32.mrb[0].mxu0
      %4888 = vmatprep.mubr.bf16.mxu0 %v3661
      %4889 = vmatmul.mubr.bf16.gmra.mrb[0].mxu0 %v3660
      %v4890 = vpop.f32.mrb[0].mxu0
      %v4891 = vadd.f32 %v4730, %v4890
      %v4892 = vpop.f32.mrb[0].mxu0
      %v4893 = vpop.f32.mrb[0].mxu0
      %v4894 = vadd.f32 %v4733, %v4893
      %v4895 = vpop.f32.mrb[0].mxu0
      %4896 = vmatprep.mubr.bf16.mxu0 %v3670
      %4897 = vmatmul.mubr.bf16.gmra.mrb[0].mxu0 %v3669
      %v4898 = vpop.f32.mrb[0].mxu0
      %v4899 = vadd.f32 %v4738, %v4898
      %v4900 = vpop.f32.mrb[0].mxu0
      %v4901 = vpop.f32.mrb[0].mxu0
      %v4902 = vadd.f32 %v4741, %v4901
      %v4903 = vpop.f32.mrb[0].mxu0
      %4904 = vmatprep.mubr.bf16.mxu0 %v3679
      %4905 = vmatmul.mubr.bf16.gmra.mrb[0].mxu0 %v3678
      %v4906 = vpop.f32.mrb[0].mxu0
      %v4907 = vadd.f32 %v4746, %v4906
      %v4908 = vpop.f32.mrb[0].mxu0
      %v4909 = vpop.f32.mrb[0].mxu0
      %v4910 = vadd.f32 %v4749, %v4909
      %v4911 = vpop.f32.mrb[0].mxu0
      %4912 = vmatprep.mubr.bf16.mxu0 %v3688
      %4913 = vmatmul.mubr.bf16.gmra.mrb[0].mxu0 %v3687
      %v4914 = vpop.f32.mrb[0].mxu0
      %v4915 = vadd.f32 %v4754, %v4914
      %v4916 = vpop.f32.mrb[0].mxu0
      %v4917 = vpop.f32.mrb[0].mxu0
      %v4918 = vadd.f32 %v4757, %v4917
      %v4919 = vpop.f32.mrb[0].mxu0
      %4920 = vmatprep.mubr.bf16.mxu0 %v3697
      %4921 = vmatmul.mubr.bf16.gmra.mrb[0].mxu0 %v3696
      %v4922 = vpop.f32.mrb[0].mxu0
      %v4923 = vadd.f32 %v4762, %v4922
      %v4924 = vpop.f32.mrb[0].mxu0
      %v4925 = vpop.f32.mrb[0].mxu0
      %v4926 = vadd.f32 %v4765, %v4925
      %v4927 = vpop.f32.mrb[0].mxu0
      %4928 = vmatprep.mubr.bf16.mxu0 %v3706
      %4929 = vmatmul.mubr.bf16.gmra.mrb[0].mxu0 %v3705
      %v4930 = vpop.f32.mrb[0].mxu0
      %v4931 = vadd.f32 %v4770, %v4930
      %v4932 = vpop.f32.mrb[0].mxu0
      %v4933 = vpop.f32.mrb[0].mxu0
      %v4934 = vadd.f32 %v4773, %v4933
      %v4935 = vpop.f32.mrb[0].mxu0
      %4936 = vmatprep.mubr.bf16.mxu0 %v3715
      %4937 = vmatmul.mubr.bf16.gmra.mrb[0].mxu0 %v3714
      %v4938 = vpop.f32.mrb[0].mxu0
      %v4939 = vadd.f32 %v4778, %v4938
      %v4940 = vpop.f32.mrb[0].mxu0
      %v4941 = vpop.f32.mrb[0].mxu0
      %v4942 = vadd.f32 %v4781, %v4941
      %v4943 = vpop.f32.mrb[0].mxu0
      %4944 = vmatprep.mubr.bf16.mxu0 %v3724
      %4945 = vmatmul.mubr.bf16.gmra.mrb[0].mxu0 %v3723
      %v4946 = vpop.f32.mrb[0].mxu0
      %v4947 = vadd.f32 %v4786, %v4946
      %v4948 = vpop.f32.mrb[0].mxu0
      %v4949 = vpop.f32.mrb[0].mxu0
      %v4950 = vadd.f32 %v4789, %v4949
      %v4951 = vpop.f32.mrb[0].mxu0
      %4952 = vmatprep.mubr.bf16.mxu0 %v3733
      %4953 = vmatmul.mubr.bf16.gmra.mrb[0].mxu0 %v3732
      %v4954 = vpop.f32.mrb[0].mxu0
      %v4955 = vadd.f32 %v4794, %v4954
      %v4956 = vpop.f32.mrb[0].mxu0
      %v4957 = vpop.f32.mrb[0].mxu0
      %v4958 = vadd.f32 %v4797, %v4957
      %v4959 = vpop.f32.mrb[0].mxu0
      %4960 = vmatprep.mubr.bf16.mxu0 %v3742
      %4961 = vmatmul.mubr.bf16.gmra.mrb[0].mxu0 %v3741
      %v4962 = vpop.f32.mrb[0].mxu0
      %v4963 = vadd.f32 %v4802, %v4962
      %v4964 = vpop.f32.mrb[0].mxu0
      %v4965 = vpop.f32.mrb[0].mxu0
      %v4966 = vadd.f32 %v4805, %v4965
      %v4967 = vpop.f32.mrb[0].mxu0
      %4968 = vmatprep.mubr.bf16.mxu0 %v3751
      %4969 = vmatmul.mubr.bf16.gmra.mrb[0].mxu0 %v3750
      %v4970 = vpop.f32.mrb[0].mxu0
      %v4971 = vadd.f32 %v4810, %v4970
      %v4972 = vpop.f32.mrb[0].mxu0
      %v4973 = vpop.f32.mrb[0].mxu0
      %v4974 = vadd.f32 %v4813, %v4973
      %v4975 = vpop.f32.mrb[0].mxu0
      %4976 = vmatprep.mubr.bf16.mxu0 %v3760
      %4977 = vmatmul.mubr.bf16.gmra.mrb[0].mxu0 %v3759
      %v4978 = vpop.f32.mrb[0].mxu0
      %v4979 = vadd.f32 %v4818, %v4978
      %v4980 = vpop.f32.mrb[0].mxu0
      %v4981 = vpop.f32.mrb[0].mxu0
      %v4982 = vadd.f32 %v4821, %v4981
      %v4983 = vpop.f32.mrb[0].mxu0
      %4984 = vmatprep.mubr.bf16.mxu0 %v3769
      %4985 = vmatmul.mubr.bf16.gmra.mrb[0].mxu0 %v3768
      %v4986 = vpop.f32.mrb[0].mxu0
      %v4987 = vadd.f32 %v4826, %v4986
      %v4988 = vpop.f32.mrb[0].mxu0
      %v4989 = vpop.f32.mrb[0].mxu0
      %v4990 = vadd.f32 %v4829, %v4989
      %v4991 = vpop.f32.mrb[0].mxu0
      %4992 = vmatprep.mubr.bf16.mxu0 %v3778
      %4993 = vmatmul.mubr.bf16.gmra.mrb[0].mxu0 %v3777
      %v4994 = vpop.f32.mrb[0].mxu0
      %v4995 = vadd.f32 %v4834, %v4994
      %v4996 = vpop.f32.mrb[0].mxu0
      %v4997 = vpop.f32.mrb[0].mxu0
      %v4998 = vadd.f32 %v4837, %v4997
      %v4999 = vpop.f32.mrb[0].mxu0
      %5000 = vmatprep.mubr.bf16.mxu0 %v3787
      %5001 = vmatmul.mubr.bf16.gmra.mrb[0].mxu0 %v3786
      %v5002 = vpop.f32.mrb[0].mxu0
      %v5003 = vadd.f32 %v4842, %v5002
      %v5004 = vpop.f32.mrb[0].mxu0
      %v5005 = vpop.f32.mrb[0].mxu0
      %v5006 = vadd.f32 %v4845, %v5005
      %v5007 = vpop.f32.mrb[0].mxu0
      %5008 = vdwg.mxu0
      %5009 = vmatprep.subr.bf16.mxu0 0
      %5010 = vmatpush1.bf16.msra.mxu0 %v4285
      %5011 = vmatprep.subr.bf16.mxu0 0
      %5012 = vmatpush1.bf16.msra.mxu0 %v4286
      %5013 = vmatprep.subr.bf16.mxu0 0
      %5014 = vmatpush1.bf16.msra.mxu0 %v4287
      %5015 = vmatprep.subr.bf16.mxu0 0
      %5016 = vmatpush1.bf16.msra.mxu0 %v4288
      %5017 = vmatprep.subr.bf16.mxu0 0
      %5018 = vmatpush1.bf16.msra.mxu0 %v4289
      %5019 = vmatprep.subr.bf16.mxu0 0
      %5020 = vmatpush1.bf16.msra.mxu0 %v4290
      %5021 = vmatprep.subr.bf16.mxu0 0
      %5022 = vmatpush1.bf16.msra.mxu0 %v4291
      %5023 = vmatprep.subr.bf16.mxu0 0
      %5024 = vmatpush1.bf16.msra.mxu0 %v4292
      %5025 = vmatprep.subr.bf16.mxu0 0
      %5026 = vmatpush1.bf16.msra.mxu0 0
      %5027 = vmatprep.subr.bf16.mxu0 0
      %5028 = vmatpush1.bf16.msra.mxu0 0
      %5029 = vmatprep.subr.bf16.mxu0 0
      %5030 = vmatpush1.bf16.msra.mxu0 0
      %5031 = vmatprep.subr.bf16.mxu0 0
      %5032 = vmatpush1.bf16.msra.mxu0 0
      %5033 = vmatprep.subr.bf16.mxu0 0
      %5034 = vmatpush1.bf16.msra.mxu0 0
      %5035 = vmatprep.subr.bf16.mxu0 0
      %5036 = vmatpush1.bf16.msra.mxu0 0
      %5037 = vmatprep.subr.bf16.mxu0 0
      %5038 = vmatpush1.bf16.msra.mxu0 0
      %5039 = vmatprep.subr.bf16.mxu0 0
      %5040 = vmatpush1.bf16.msra.mxu0 0
      %5041 = vmatprep.mubr.bf16.mxu0 0
      %5042 = vmatmul.mubr.bf16.gmra.mrb[0].mxu0 %v3653
      %v5043 = vpop.f32.mrb[0].mxu0
      %v5044 = vadd.f32 %v4883, %v5043
      %v5045 = vpop.f32.mrb[0].mxu0
      %v5046 = vpop.f32.mrb[0].mxu0
      %v5047 = vadd.f32 %v4886, %v5046
      %v5048 = vpop.f32.mrb[0].mxu0
      %5049 = vmatprep.mubr.bf16.mxu0 0
      %5050 = vmatmul.mubr.bf16.gmra.mrb[0].mxu0 %v3662
      %v5051 = vpop.f32.mrb[0].mxu0
      %v5052 = vadd.f32 %v4891, %v5051
      %v5053 = vpop.f32.mrb[0].mxu0
      %v5054 = vpop.f32.mrb[0].mxu0
      %v5055 = vadd.f32 %v4894, %v5054
      %v5056 = vpop.f32.mrb[0].mxu0
      %5057 = vmatprep.mubr.bf16.mxu0 0
      %5058 = vmatmul.mubr.bf16.gmra.mrb[0].mxu0 %v3671
      %v5059 = vpop.f32.mrb[0].mxu0
      %v5060 = vadd.f32 %v4899, %v5059
      %v5061 = vpop.f32.mrb[0].mxu0
      %v5062 = vpop.f32.mrb[0].mxu0
      %v5063 = vadd.f32 %v4902, %v5062
      %v5064 = vpop.f32.mrb[0].mxu0
      %5065 = vmatprep.mubr.bf16.mxu0 0
      %5066 = vmatmul.mubr.bf16.gmra.mrb[0].mxu0 %v3680
      %v5067 = vpop.f32.mrb[0].mxu0
      %v5068 = vadd.f32 %v4907, %v5067
      %v5069 = vpop.f32.mrb[0].mxu0
      %v5070 = vpop.f32.mrb[0].mxu0
      %v5071 = vadd.f32 %v4910, %v5070
      %v5072 = vpop.f32.mrb[0].mxu0
      %5073 = vmatprep.mubr.bf16.mxu0 0
      %5074 = vmatmul.mubr.bf16.gmra.mrb[0].mxu0 %v3689
      %v5075 = vpop.f32.mrb[0].mxu0
      %v5076 = vadd.f32 %v4915, %v5075
      %v5077 = vpop.f32.mrb[0].mxu0
      %v5078 = vpop.f32.mrb[0].mxu0
      %v5079 = vadd.f32 %v4918, %v5078
      %v5080 = vpop.f32.mrb[0].mxu0
      %5081 = vmatprep.mubr.bf16.mxu0 0
      %5082 = vmatmul.mubr.bf16.gmra.mrb[0].mxu0 %v3698
      %v5083 = vpop.f32.mrb[0].mxu0
      %v5084 = vadd.f32 %v4923, %v5083
      %v5085 = vpop.f32.mrb[0].mxu0
      %v5086 = vpop.f32.mrb[0].mxu0
      %v5087 = vadd.f32 %v4926, %v5086
      %v5088 = vpop.f32.mrb[0].mxu0
      %5089 = vmatprep.mubr.bf16.mxu0 0
      %5090 = vmatmul.mubr.bf16.gmra.mrb[0].mxu0 %v3707
      %v5091 = vpop.f32.mrb[0].mxu0
      %v5092 = vadd.f32 %v4931, %v5091
      %v5093 = vpop.f32.mrb[0].mxu0
      %v5094 = vpop.f32.mrb[0].mxu0
      %v5095 = vadd.f32 %v4934, %v5094
      %v5096 = vpop.f32.mrb[0].mxu0
      %5097 = vmatprep.mubr.bf16.mxu0 0
      %5098 = vmatmul.mubr.bf16.gmra.mrb[0].mxu0 %v3716
      %v5099 = vpop.f32.mrb[0].mxu0
      %v5100 = vadd.f32 %v4939, %v5099
      %v5101 = vpop.f32.mrb[0].mxu0
      %v5102 = vpop.f32.mrb[0].mxu0
      %v5103 = vadd.f32 %v4942, %v5102
      %v5104 = vpop.f32.mrb[0].mxu0
      %5105 = vmatprep.mubr.bf16.mxu0 0
      %5106 = vmatmul.mubr.bf16.gmra.mrb[0].mxu0 %v3725
      %v5107 = vpop.f32.mrb[0].mxu0
      %v5108 = vadd.f32 %v4947, %v5107
      %v5109 = vpop.f32.mrb[0].mxu0
      %v5110 = vpop.f32.mrb[0].mxu0
      %v5111 = vadd.f32 %v4950, %v5110
      %v5112 = vpop.f32.mrb[0].mxu0
      %5113 = vmatprep.mubr.bf16.mxu0 0
      %5114 = vmatmul.mubr.bf16.gmra.mrb[0].mxu0 %v3734
      %v5115 = vpop.f32.mrb[0].mxu0
      %v5116 = vadd.f32 %v4955, %v5115
      %v5117 = vpop.f32.mrb[0].mxu0
      %v5118 = vpop.f32.mrb[0].mxu0
      %v5119 = vadd.f32 %v4958, %v5118
      %v5120 = vpop.f32.mrb[0].mxu0
      %5121 = vmatprep.mubr.bf16.mxu0 0
      %5122 = vmatmul.mubr.bf16.gmra.mrb[0].mxu0 %v3743
      %v5123 = vpop.f32.mrb[0].mxu0
      %v5124 = vadd.f32 %v4963, %v5123
      %v5125 = vpop.f32.mrb[0].mxu0
      %v5126 = vpop.f32.mrb[0].mxu0
      %v5127 = vadd.f32 %v4966, %v5126
      %v5128 = vpop.f32.mrb[0].mxu0
      %5129 = vmatprep.mubr.bf16.mxu0 0
      %5130 = vmatmul.mubr.bf16.gmra.mrb[0].mxu0 %v3752
      %v5131 = vpop.f32.mrb[0].mxu0
      %v5132 = vadd.f32 %v4971, %v5131
      %v5133 = vpop.f32.mrb[0].mxu0
      %v5134 = vpop.f32.mrb[0].mxu0
      %v5135 = vadd.f32 %v4974, %v5134
      %v5136 = vpop.f32.mrb[0].mxu0
      %5137 = vmatprep.mubr.bf16.mxu0 0
      %5138 = vmatmul.mubr.bf16.gmra.mrb[0].mxu0 %v3761
      %v5139 = vpop.f32.mrb[0].mxu0
      %v5140 = vadd.f32 %v4979, %v5139
      %v5141 = vpop.f32.mrb[0].mxu0
      %v5142 = vpop.f32.mrb[0].mxu0
      %v5143 = vadd.f32 %v4982, %v5142
      %v5144 = vpop.f32.mrb[0].mxu0
      %5145 = vmatprep.mubr.bf16.mxu0 0
      %5146 = vmatmul.mubr.bf16.gmra.mrb[0].mxu0 %v3770
      %v5147 = vpop.f32.mrb[0].mxu0
      %v5148 = vadd.f32 %v4987, %v5147
      %v5149 = vpop.f32.mrb[0].mxu0
      %v5150 = vpop.f32.mrb[0].mxu0
      %v5151 = vadd.f32 %v4990, %v5150
      %v5152 = vpop.f32.mrb[0].mxu0
      %5153 = vmatprep.mubr.bf16.mxu0 0
      %5154 = vmatmul.mubr.bf16.gmra.mrb[0].mxu0 %v3779
      %v5155 = vpop.f32.mrb[0].mxu0
      %v5156 = vadd.f32 %v4995, %v5155
      %v5157 = vpop.f32.mrb[0].mxu0
      %v5158 = vpop.f32.mrb[0].mxu0
      %v5159 = vadd.f32 %v4998, %v5158
      %v5160 = vpop.f32.mrb[0].mxu0
      %5161 = vmatprep.mubr.bf16.mxu0 0
      %5162 = vmatmul.mubr.bf16.gmra.mrb[0].mxu0 %v3788
      %v5163 = vpop.f32.mrb[0].mxu0
      %v5164 = vadd.f32 %v5003, %v5163
      %v5165 = vpop.f32.mrb[0].mxu0
      %v5166 = vpop.f32.mrb[0].mxu0
      %v5167 = vadd.f32 %v5006, %v5166
      %v5168 = vpop.f32.mrb[0].mxu0
      %5169 = vdwg.mxu0
      %5170 = vst [vmem:[%s177] sm:$0xff] %v5044
      %5171 = vst [vmem:[%s177 + $0x8] sm:$0xff] %v5047
      %5172 = vst [vmem:[%s177 + $0x10] sm:$0xff] %v5052
      %5173 = vst [vmem:[%s177 + $0x18] sm:$0xff] %v5055
      %5174 = vst [vmem:[%s177 + $0x20] sm:$0xff] %v5060
      %5175 = vst [vmem:[%s177 + $0x28] sm:$0xff] %v5063
      %5176 = vst [vmem:[%s177 + $0x30] sm:$0xff] %v5068
      %5177 = vst [vmem:[%s177 + $0x38] sm:$0xff] %v5071
      %5178 = vst [vmem:[%s177 + $0x40] sm:$0xff] %v5076
      %5179 = vst [vmem:[%s177 + $0x48] sm:$0xff] %v5079
      %5180 = vst [vmem:[%s177 + $0x50] sm:$0xff] %v5084
      %5181 = vst [vmem:[%s177 + $0x58] sm:$0xff] %v5087
      %5182 = vst [vmem:[%s177 + $0x60] sm:$0xff] %v5092
      %5183 = vst [vmem:[%s177 + $0x68] sm:$0xff] %v5095
      %5184 = vst [vmem:[%s177 + $0x70] sm:$0xff] %v5100
      %5185 = vst [vmem:[%s177 + $0x78] sm:$0xff] %v5103
      %5186 = vst [vmem:[%s177 + $0x80] sm:$0xff] %v5108
      %5187 = vst [vmem:[%s177 + $0x88] sm:$0xff] %v5111
      %5188 = vst [vmem:[%s177 + $0x90] sm:$0xff] %v5116
      %5189 = vst [vmem:[%s177 + $0x98] sm:$0xff] %v5119
      %5190 = vst [vmem:[%s177 + $0xa0] sm:$0xff] %v5124
      %5191 = vst [vmem:[%s177 + $0xa8] sm:$0xff] %v5127
      %5192 = vst [vmem:[%s177 + $0xb0] sm:$0xff] %v5132
      %5193 = vst [vmem:[%s177 + $0xb8] sm:$0xff] %v5135
      %5194 = vst [vmem:[%s177 + $0xc0] sm:$0xff] %v5140
      %5195 = vst [vmem:[%s177 + $0xc8] sm:$0xff] %v5143
      %5196 = vst [vmem:[%s177 + $0xd0] sm:$0xff] %v5148
      %5197 = vst [vmem:[%s177 + $0xd8] sm:$0xff] %v5151
      %5198 = vst [vmem:[%s177 + $0xe0] sm:$0xff] %v5156
      %5199 = vst [vmem:[%s177 + $0xe8] sm:$0xff] %v5159
      %5200 = vst [vmem:[%s177 + $0xf0] sm:$0xff] %v5164
      %5201 = vst [vmem:[%s177 + $0xf8] sm:$0xff] %v5167
      %v5202 = vadd.f32 %v5044, %v5047
      %v5203 = vadd.f32 %v5202, %v5052
      %v5204 = vadd.f32 %v5203, %v5055
      %v5205 = vadd.f32 %v5204, %v5060
      %v5206 = vadd.f32 %v5205, %v5063
      %v5207 = vadd.f32 %v5206, %v5068
      %v5208 = vadd.f32 %v5207, %v5071
      %v5209 = vadd.f32 %v5208, %v5076
      %v5210 = vadd.f32 %v5209, %v5079
      %v5211 = vadd.f32 %v5210, %v5084
      %v5212 = vadd.f32 %v5211, %v5087
      %v5213 = vadd.f32 %v5212, %v5092
      %v5214 = vadd.f32 %v5213, %v5095
      %v5215 = vadd.f32 %v5214, %v5100
      %v5216 = vadd.f32 %v5215, %v5103
      %v5217 = vadd.f32 %v5216, %v5108
      %v5218 = vadd.f32 %v5217, %v5111
      %v5219 = vadd.f32 %v5218, %v5116
      %v5220 = vadd.f32 %v5219, %v5119
      %v5221 = vadd.f32 %v5220, %v5124
      %v5222 = vadd.f32 %v5221, %v5127
      %v5223 = vadd.f32 %v5222, %v5132
      %v5224 = vadd.f32 %v5223, %v5135
      %v5225 = vadd.f32 %v5224, %v5140
      %v5226 = vadd.f32 %v5225, %v5143
      %v5227 = vadd.f32 %v5226, %v5148
      %v5228 = vadd.f32 %v5227, %v5151
      %v5229 = vadd.f32 %v5228, %v5156
      %v5230 = vadd.f32 %v5229, %v5159
      %v5231 = vadd.f32 %v5230, %v5164
      %v5232 = vadd.f32 %v5231, %v5167
      %v5233 = vrot.slane %v5232, 4
      %v5234 = vadd.f32 %v5232, %v5233
      %v5235 = vrot.slane %v5234, 2
      %v5236 = vadd.f32 %v5234, %v5235
      %v5237 = vrot.slane %v5236, 1
      %v5238 = vadd.f32 %v5236, %v5237
      %v5239 = vmul.f32 %v5044, %v5044
      %v5240 = vmul.f32 %v5047, %v5047
      %v5241 = vmul.f32 %v5052, %v5052
      %v5242 = vmul.f32 %v5055, %v5055
      %v5243 = vmul.f32 %v5060, %v5060
      %v5244 = vmul.f32 %v5063, %v5063
      %v5245 = vmul.f32 %v5068, %v5068
      %v5246 = vmul.f32 %v5071, %v5071
      %v5247 = vmul.f32 %v5076, %v5076
      %v5248 = vmul.f32 %v5079, %v5079
      %v5249 = vmul.f32 %v5084, %v5084
      %v5250 = vmul.f32 %v5087, %v5087
      %v5251 = vmul.f32 %v5092, %v5092
      %v5252 = vmul.f32 %v5095, %v5095
      %v5253 = vmul.f32 %v5100, %v5100
      %v5254 = vmul.f32 %v5103, %v5103
      %v5255 = vmul.f32 %v5108, %v5108
      %v5256 = vmul.f32 %v5111, %v5111
      %v5257 = vmul.f32 %v5116, %v5116
      %v5258 = vmul.f32 %v5119, %v5119
      %v5259 = vmul.f32 %v5124, %v5124
      %v5260 = vmul.f32 %v5127, %v5127
      %v5261 = vmul.f32 %v5132, %v5132
      %v5262 = vmul.f32 %v5135, %v5135
      %v5263 = vmul.f32 %v5140, %v5140
      %v5264 = vmul.f32 %v5143, %v5143
      %v5265 = vmul.f32 %v5148, %v5148
      %v5266 = vmul.f32 %v5151, %v5151
      %v5267 = vmul.f32 %v5156, %v5156
      %v5268 = vmul.f32 %v5159, %v5159
      %v5269 = vmul.f32 %v5164, %v5164
      %v5270 = vmul.f32 %v5167, %v5167
      %v5271 = vadd.f32 %v5239, %v5240
      %v5272 = vadd.f32 %v5271, %v5241
      %v5273 = vadd.f32 %v5272, %v5242
      %v5274 = vadd.f32 %v5273, %v5243
      %v5275 = vadd.f32 %v5274, %v5244
      %v5276 = vadd.f32 %v5275, %v5245
      %v5277 = vadd.f32 %v5276, %v5246
      %v5278 = vadd.f32 %v5277, %v5247
      %v5279 = vadd.f32 %v5278, %v5248
      %v5280 = vadd.f32 %v5279, %v5249
      %v5281 = vadd.f32 %v5280, %v5250
      %v5282 = vadd.f32 %v5281, %v5251
      %v5283 = vadd.f32 %v5282, %v5252
      %v5284 = vadd.f32 %v5283, %v5253
      %v5285 = vadd.f32 %v5284, %v5254
      %v5286 = vadd.f32 %v5285, %v5255
      %v5287 = vadd.f32 %v5286, %v5256
      %v5288 = vadd.f32 %v5287, %v5257
      %v5289 = vadd.f32 %v5288, %v5258
      %v5290 = vadd.f32 %v5289, %v5259
      %v5291 = vadd.f32 %v5290, %v5260
      %v5292 = vadd.f32 %v5291, %v5261
      %v5293 = vadd.f32 %v5292, %v5262
      %v5294 = vadd.f32 %v5293, %v5263
      %v5295 = vadd.f32 %v5294, %v5264
      %v5296 = vadd.f32 %v5295, %v5265
      %v5297 = vadd.f32 %v5296, %v5266
      %v5298 = vadd.f32 %v5297, %v5267
      %v5299 = vadd.f32 %v5298, %v5268
      %v5300 = vadd.f32 %v5299, %v5269
      %v5301 = vadd.f32 %v5300, %v5270
      %v5302 = vrot.slane %v5301, 4
      %v5303 = vadd.f32 %v5301, %v5302
      %v5304 = vrot.slane %v5303, 2
      %v5305 = vadd.f32 %v5303, %v5304
      %v5306 = vrot.slane %v5305, 1
      %v5307 = vadd.f32 %v5305, %v5306
      %vm5308 = vcmask 1040384
      %v5309 = vsel %vm5308, %v5238, %v5307
      %5310 = vst [vmem:[%s181] sm:$0x3] %v5309
      %p5311 = scmp.lt.s32.totalorder %s15, 1
      %s5312 = scalar_select %p5311, %s15, 1
      %s5313 = smul.addr %s5312, 32
      %s5314 = smul.addr %s5313, 8
      %s5315 = scalar_lea.vmem %s2, %s5314
      %p5316 = scmp.lt.s32.totalorder %s15, 1
      %s5317 = scalar_select %p5316, %s15, 1
      %s5318 = smul.addr %s5317, 2
      %s5319 = scalar_lea.vmem %s3, %s5318
      // Predicated region
      $region29: #{basic_block_forward.3} parent=27 // pred_check
        %p5320 = pneg %p80
      $region30: #{basic_block_forward.3} parent=27 // pred_check_branch
        %5322 = sbr.rel (%p5320) target = $region32
      $region31: #{basic_block_forward.3} parent=27 // pred_region
        _
      $region32: #{basic_block_forward.3} parent=27 // pred_fallthru
        _
      // Predicated region
      $region33: #{basic_block_forward.3} parent=27 // pred_check
        %p5323 = pneg %p106
      $region34: #{basic_block_forward.3} parent=27 // pred_check_branch
        %5325 = sbr.rel (%p5323) target = $region36
      $region35: #{basic_block_forward.3} parent=27 // pred_region
        _
      $region36: #{basic_block_forward.3} parent=27 // pred_fallthru
        _
    $region28: #{basic_block_forward.3} parent=5 // pred_fallthru
      _
    %p5326 = scmp.le.s32.totalorder 2, %s10
    // Predicated region
    $region37: #{basic_block_forward.3} parent=5 // pred_check
      %p5327 = pneg %p5326
    $region38: #{basic_block_forward.3} parent=5 // pred_check_branch
      %5329 = sbr.rel (%p5327) target = $region40
    $region39: #{basic_block_forward.3} parent=5 // pred_region
      %s5330 = ssub.s32 %s10, 2
      // Predicated region
      $region41: #{basic_block_forward.3} parent=39 // pred_check
        %p5331 = pneg %p86
      $region42: #{basic_block_forward.3} parent=39 // pred_check_branch
        %5333 = sbr.rel (%p5331) target = $region44
      $region43: #{basic_block_forward.3} parent=39 // pred_region
        %p5334 = scmp.lt.s32.totalorder %s16, 1
        %s5335 = scalar_select %p5334, %s16, 1
        %s5336 = smul.addr %s5335, 32
        %s5337 = smul.addr %s5336, 8
        %s5338 = scalar_lea.vmem %s2, %s5337
      $region44: #{basic_block_forward.3} parent=39 // pred_fallthru
        _
      // Predicated region
      $region45: #{basic_block_forward.3} parent=39 // pred_check
        %p5339 = pneg %p112
      $region46: #{basic_block_forward.3} parent=39 // pred_check_branch
        %5341 = sbr.rel (%p5339) target = $region48
      $region47: #{basic_block_forward.3} parent=39 // pred_region
        %p5342 = scmp.lt.s32.totalorder %s16, 1
        %s5343 = scalar_select %p5342, %s16, 1
        %s5344 = smul.addr %s5343, 2
        %s5345 = scalar_lea.vmem %s3, %s5344
      $region48: #{basic_block_forward.3} parent=39 // pred_fallthru
        _
    $region40: #{basic_block_forward.3} parent=5 // pred_fallthru
      _
  $region6: #{basic_block_forward.3} parent=0 // loop_footer
    %s14 = sadd.s32 1, %s10
  $region7: #{basic_block_forward.3} parent=0 // loop_footer_branch
    %9 = sbr.rel target = $region3
  $region8: #{basic_block_forward.3} parent=0 // loop_exit
    _

// kernel: basic_block_forward.4
$region0: #{basic_block_forward.4}
  #allocation0 [shape = 'u32[]', space=smem, size = 0x4, offset = 0x4, fixed_abs, tag = 'smem constant byte address 0x4 - core index']
  #allocation1 [shape = 'u32[144,128]{1,0:T(1,128)}', space=vmem, size = 0x12000, scoped, tag = 'internal scratch']
  #allocation2 [shape = 'bf16[18,18,128]{2,1,0:T(8,128)(2,1)}', space=vmem, size = 0x1b000, scoped, tag = 'scratch operand']
  #allocation3 [shape = 'bf16[256,1152]{1,0:T(16,128)(2,1)}', space=vmem, size = 0x90000, scoped, tag = 'scratch operand']
  %s0 = inlined_call_operand.vmem [shape: f32[2,256,128], index: 0, kind: input, shape index: {}]
  %s1 = inlined_call_operand.vmem [shape: f32[1,128], index: 1, kind: input, shape index: {}]
  %s2 = inlined_call_operand.vmem [shape: f32[1,128], index: 2, kind: input, shape index: {}]
  %s3 = inlined_call_operand.vmem [shape: bf16[1152,128], index: 3, kind: input, shape index: {}]
  %s4 = inlined_call_operand.vmem [shape: f32[2,256,128], index: 4, kind: output, shape index: {0}]
  %s5 = inlined_call_operand.vmem [shape: f32[2,2,128], index: 5, kind: output, shape index: {1}]
  %6 = xla_tuple %s4, %s5
  %s7 = sld [smem:[#allocation0]]
  $region57: #{basic_block_forward.4} parent=0
    _
  %s9 = ssub.s32 1, %s7
  %s10 = scalar_select 0, %s9, %s7
  loop: start=0, step=1, limit=4
  $region2: #{basic_block_forward.4} parent=0 // loop_pre_header
    _
  $region3: #{basic_block_forward.4} parent=0 // loop_header
    %s12 = sphi 0, %s16
    %p13 = scmp.ge.s32.totalorder %s12, 4
    %s22 = sphi 0, %s24
    %s25 = sphi 0, %s22
    %s26 = sphi 0, %s25
    %s42 = sphi 0, %s26
    %s46 = sphi 0, %s46
    %s48 = sphi 0, %s46
    %s49 = sphi 0, %s48
    %s63 = sphi 0, %s49
    %s67 = sphi 0, %s67
    %s69 = sphi 0, %s67
    %s70 = sphi 0, %s69
    %s84 = sphi 0, %s70
    %s88 = sphi 0, %s88
    %s90 = sphi 0, %s88
    %s91 = sphi 0, %s90
    %s105 = sphi 0, %s91
    %s111 = sphi 0, %s113
    %s114 = sphi 0, %s111
    %s115 = sphi 0, %s114
    %s131 = sphi 0, %s115
    %s137 = sphi 0, %s139
    %s140 = sphi 0, %s137
    %s141 = sphi 0, %s140
    %s157 = sphi 0, %s141
  $region4: #{basic_block_forward.4} parent=0 // loop_header_branch
    %15 = sbr.rel (%p13) target = $region8
  $region5: #{basic_block_forward.4} parent=0 // loop_body
    %s17 = ssub.s32 %s12, 1
    %s18 = ssub.s32 %s12, 2
    %s19 = sadd.s32 %s12, 1
    %s20 = ssub.s32 %s12, %s19
    %p21 = scmp.eq.s32.totalorder %s20, 0
    %s23 = sadd.s32 %s22, 1
    %s24 = scalar_select %p21, %s22, %s23
    %p27 = pneg %p21
    %p28 = scmp.eq.s32.totalorder %s12, 1
    %p29 = por %p27, %p28
    %p30 = scmp.ne.s32.totalorder %s22, %s25
    %p31 = scmp.eq.s32.totalorder %s12, 0
    %p32 = por %p30, %p31
    %p33 = scmp.ne.s32.totalorder %s22, %s25
    %p34 = scmp.eq.s32.totalorder %s17, 1
    %p35 = por %p33, %p34
    %p36 = scmp.ne.s32.totalorder %s25, %s26
    %p37 = scmp.eq.s32.totalorder %s17, 0
    %p38 = por %p36, %p37
    %p39 = scmp.ne.s32.totalorder %s25, %s26
    %p40 = scmp.eq.s32.totalorder %s18, 1
    %p41 = por %p39, %p40
    %p43 = scmp.ne.s32.totalorder %s26, %s42
    %p44 = scmp.eq.s32.totalorder %s18, 0
    %p45 = por %p43, %p44
    %s47 = sadd.s32 %s46, 1
    %p50 = scmp.eq.s32.totalorder %s12, 1
    %p51 = scmp.ne.s32.totalorder %s46, %s48
    %p52 = scmp.eq.s32.totalorder %s12, 0
    %p53 = por %p51, %p52
    %p54 = scmp.ne.s32.totalorder %s46, %s48
    %p55 = scmp.eq.s32.totalorder %s17, 1
    %p56 = por %p54, %p55
    %p57 = scmp.ne.s32.totalorder %s48, %s49
    %p58 = scmp.eq.s32.totalorder %s17, 0
    %p59 = por %p57, %p58
    %p60 = scmp.ne.s32.totalorder %s48, %s49
    %p61 = scmp.eq.s32.totalorder %s18, 1
    %p62 = por %p60, %p61
    %p64 = scmp.ne.s32.totalorder %s49, %s63
    %p65 = scmp.eq.s32.totalorder %s18, 0
    %p66 = por %p64, %p65
    %s68 = sadd.s32 %s67, 1
    %p71 = scmp.eq.s32.totalorder %s12, 1
    %p72 = scmp.ne.s32.totalorder %s67, %s69
    %p73 = scmp.eq.s32.totalorder %s12, 0
    %p74 = por %p72, %p73
    %p75 = scmp.ne.s32.totalorder %s67, %s69
    %p76 = scmp.eq.s32.totalorder %s17, 1
    %p77 = por %p75, %p76
    %p78 = scmp.ne.s32.totalorder %s69, %s70
    %p79 = scmp.eq.s32.totalorder %s17, 0
    %p80 = por %p78, %p79
    %p81 = scmp.ne.s32.totalorder %s69, %s70
    %p82 = scmp.eq.s32.totalorder %s18, 1
    %p83 = por %p81, %p82
    %p85 = scmp.ne.s32.totalorder %s70, %s84
    %p86 = scmp.eq.s32.totalorder %s18, 0
    %p87 = por %p85, %p86
    %s89 = sadd.s32 %s88, 1
    %p92 = scmp.eq.s32.totalorder %s12, 1
    %p93 = scmp.ne.s32.totalorder %s88, %s90
    %p94 = scmp.eq.s32.totalorder %s12, 0
    %p95 = por %p93, %p94
    %p96 = scmp.ne.s32.totalorder %s88, %s90
    %p97 = scmp.eq.s32.totalorder %s17, 1
    %p98 = por %p96, %p97
    %p99 = scmp.ne.s32.totalorder %s90, %s91
    %p100 = scmp.eq.s32.totalorder %s17, 0
    %p101 = por %p99, %p100
    %p102 = scmp.ne.s32.totalorder %s90, %s91
    %p103 = scmp.eq.s32.totalorder %s18, 1
    %p104 = por %p102, %p103
    %p106 = scmp.ne.s32.totalorder %s91, %s105
    %p107 = scmp.eq.s32.totalorder %s18, 0
    %p108 = por %p106, %p107
    %s109 = ssub.s32 %s12, %s19
    %p110 = scmp.eq.s32.totalorder %s109, 0
    %s112 = sadd.s32 %s111, 1
    %s113 = scalar_select %p110, %s111, %s112
    %p116 = pneg %p110
    %p117 = scmp.eq.s32.totalorder %s12, 1
    %p118 = por %p116, %p117
    %p119 = scmp.ne.s32.totalorder %s111, %s114
    %p120 = scmp.eq.s32.totalorder %s12, 0
    %p121 = por %p119, %p120
    %p122 = scmp.ne.s32.totalorder %s111, %s114
    %p123 = scmp.eq.s32.totalorder %s17, 1
    %p124 = por %p122, %p123
    %p125 = scmp.ne.s32.totalorder %s114, %s115
    %p126 = scmp.eq.s32.totalorder %s17, 0
    %p127 = por %p125, %p126
    %p128 = scmp.ne.s32.totalorder %s114, %s115
    %p129 = scmp.eq.s32.totalorder %s18, 1
    %p130 = por %p128, %p129
    %p132 = scmp.ne.s32.totalorder %s115, %s131
    %p133 = scmp.eq.s32.totalorder %s18, 0
    %p134 = por %p132, %p133
    %s135 = ssub.s32 %s12, %s19
    %p136 = scmp.eq.s32.totalorder %s135, 0
    %s138 = sadd.s32 %s137, 1
    %s139 = scalar_select %p136, %s137, %s138
    %p142 = pneg %p136
    %p143 = scmp.eq.s32.totalorder %s12, 1
    %p144 = por %p142, %p143
    %p145 = scmp.ne.s32.totalorder %s137, %s140
    %p146 = scmp.eq.s32.totalorder %s12, 0
    %p147 = por %p145, %p146
    %p148 = scmp.ne.s32.totalorder %s137, %s140
    %p149 = scmp.eq.s32.totalorder %s17, 1
    %p150 = por %p148, %p149
    %p151 = scmp.ne.s32.totalorder %s140, %s141
    %p152 = scmp.eq.s32.totalorder %s17, 0
    %p153 = por %p151, %p152
    %p154 = scmp.ne.s32.totalorder %s140, %s141
    %p155 = scmp.eq.s32.totalorder %s18, 1
    %p156 = por %p154, %p155
    %p158 = scmp.ne.s32.totalorder %s141, %s157
    %p159 = scmp.eq.s32.totalorder %s18, 0
    %p160 = por %p158, %p159
    %p161 = scmp.le.s32.totalorder 1, %s12
    %p162 = scmp.lt.s32.totalorder %s12, 3
    %p163 = pnand %p161, %p162
    %p164 = pneg %p163
    // Predicated region
    $region9: #{basic_block_forward.4} parent=5 // pred_check
      _
    $region10: #{basic_block_forward.4} parent=5 // pred_check_branch
      %166 = sbr.rel (%p163) target = $region12
    $region11: #{basic_block_forward.4} parent=5 // pred_region
      %s167 = ssub.s32 %s12, 1
      // Predicated region
      $region13: #{basic_block_forward.4} parent=11 // pred_check
        %p168 = pneg %p59
      $region14: #{basic_block_forward.4} parent=11 // pred_check_branch
        %170 = sbr.rel (%p168) target = $region16
      $region15: #{basic_block_forward.4} parent=11 // pred_region
        _
      $region16: #{basic_block_forward.4} parent=11 // pred_fallthru
        _
      // Predicated region
      $region17: #{basic_block_forward.4} parent=11 // pred_check
        %p171 = pneg %p80
      $region18: #{basic_block_forward.4} parent=11 // pred_check_branch
        %173 = sbr.rel (%p171) target = $region20
      $region19: #{basic_block_forward.4} parent=11 // pred_region
        _
      $region20: #{basic_block_forward.4} parent=11 // pred_fallthru
        _
      // Predicated region
      $region21: #{basic_block_forward.4} parent=11 // pred_check
        %p174 = pneg %p101
      $region22: #{basic_block_forward.4} parent=11 // pred_check_branch
        %176 = sbr.rel (%p174) target = $region24
      $region23: #{basic_block_forward.4} parent=11 // pred_region
        _
      $region24: #{basic_block_forward.4} parent=11 // pred_fallthru
        _
    $region12: #{basic_block_forward.4} parent=5 // pred_fallthru
      _
    %p177 = scmp.lt.s32.totalorder %s12, 2
    // Predicated region
    $region25: #{basic_block_forward.4} parent=5 // pred_check
      %p178 = pneg %p177
    $region26: #{basic_block_forward.4} parent=5 // pred_check_branch
      %180 = sbr.rel (%p178) target = $region28
    $region27: #{basic_block_forward.4} parent=5 // pred_region
      // Predicated region
      $region29: #{basic_block_forward.4} parent=27 // pred_check
        %p181 = pneg %p32
      $region30: #{basic_block_forward.4} parent=27 // pred_check_branch
        %183 = sbr.rel (%p181) target = $region32
      $region31: #{basic_block_forward.4} parent=27 // pred_region
        %p184 = scmp.lt.s32.totalorder %s12, 1
        %s185 = scalar_select %p184, %s12, 1
        %s186 = smul.addr %s185, 32
        %s187 = smul.addr %s186, 8
        %s188 = scalar_lea.vmem %s0, %s187
      $region32: #{basic_block_forward.4} parent=27 // pred_fallthru
        _
    $region28: #{basic_block_forward.4} parent=5 // pred_fallthru
      _
    %p189 = scmp.le.s32.totalorder 1, %s12
    %p190 = scmp.lt.s32.totalorder %s12, 3
    %p191 = pnand %p189, %p190
    %p192 = pneg %p191
    // Predicated region
    $region33: #{basic_block_forward.4} parent=5 // pred_check
      _
    $region34: #{basic_block_forward.4} parent=5 // pred_check_branch
      %194 = sbr.rel (%p191) target = $region36
    $region35: #{basic_block_forward.4} parent=5 // pred_region
      %s195 = ssub.s32 %s12, 1
      %p196 = scmp.lt.s32.totalorder %s17, 1
      %s197 = scalar_select %p196, %s17, 1
      %s198 = smul.addr %s197, 32
      %s199 = smul.addr %s198, 8
      %s200 = scalar_lea.vmem %s0, %s199
      %p201 = pneg %p38
      %p202 = pneg %p35
      %p203 = pneg %p59
      %p204 = pneg %p56
      %p205 = pneg %p80
      %p206 = pneg %p77
      %p207 = pneg %p101
      %p208 = pneg %p98
      %p209 = pneg %p127
      %p210 = pneg %p124
      %p211 = scmp.lt.s32.totalorder %s17, 1
      %s212 = scalar_select %p211, %s17, 1
      %s213 = smul.addr %s212, 32
      %s214 = smul.addr %s213, 8
      %s215 = scalar_lea.vmem %s4, %s214
      %p216 = pneg %p153
      %p217 = pneg %p150
      %p218 = scmp.lt.s32.totalorder %s17, 1
      %s219 = scalar_select %p218, %s17, 1
      %s220 = smul.addr %s219, 2
      %s221 = scalar_lea.vmem %s5, %s220
      %p222 = scmp.lt.s32.totalorder %s17, 1
      %s223 = scalar_select %p222, %s17, 1
      %s224 = smul.addr %s223, 32
      %s225 = smul.addr %s224, 8
      %s226 = scalar_lea.vmem %s0, %s225
      %p227 = scmp.lt.s32.totalorder %s17, 1
      %s228 = scalar_select %p227, %s17, 1
      %s229 = smul.addr %s228, 32
      %s230 = smul.addr %s229, 8
      %s231 = scalar_lea.vmem %s4, %s230
      %p232 = scmp.lt.s32.totalorder %s17, 1
      %s233 = scalar_select %p232, %s17, 1
      %s234 = smul.addr %s233, 2
      %s235 = scalar_lea.vmem %s5, %s234
      %v237 = vld [vmem:[%s1] sm:$0x1]
      %v238 = vld [vmem:[%s2] sm:$0x1]
      %v239 = vld [vmem:[%s226] sm:$0xff]
      %v240 = vld [vmem:[%s226 + $0x8] sm:$0xff]
      %v241 = vld [vmem:[%s226 + $0x10] sm:$0xff]
      %v242 = vld [vmem:[%s226 + $0x18] sm:$0xff]
      %v243 = vld [vmem:[%s226 + $0x20] sm:$0xff]
      %v244 = vld [vmem:[%s226 + $0x28] sm:$0xff]
      %v245 = vld [vmem:[%s226 + $0x30] sm:$0xff]
      %v246 = vld [vmem:[%s226 + $0x38] sm:$0xff]
      %v247 = vld [vmem:[%s226 + $0x40] sm:$0xff]
      %v248 = vld [vmem:[%s226 + $0x48] sm:$0xff]
      %v249 = vld [vmem:[%s226 + $0x50] sm:$0xff]
      %v250 = vld [vmem:[%s226 + $0x58] sm:$0xff]
      %v251 = vld [vmem:[%s226 + $0x60] sm:$0xff]
      %v252 = vld [vmem:[%s226 + $0x68] sm:$0xff]
      %v253 = vld [vmem:[%s226 + $0x70] sm:$0xff]
      %v254 = vld [vmem:[%s226 + $0x78] sm:$0xff]
      %v255 = vld [vmem:[%s226 + $0x80] sm:$0xff]
      %v256 = vld [vmem:[%s226 + $0x88] sm:$0xff]
      %v257 = vld [vmem:[%s226 + $0x90] sm:$0xff]
      %v258 = vld [vmem:[%s226 + $0x98] sm:$0xff]
      %v259 = vld [vmem:[%s226 + $0xa0] sm:$0xff]
      %v260 = vld [vmem:[%s226 + $0xa8] sm:$0xff]
      %v261 = vld [vmem:[%s226 + $0xb0] sm:$0xff]
      %v262 = vld [vmem:[%s226 + $0xb8] sm:$0xff]
      %v263 = vld [vmem:[%s226 + $0xc0] sm:$0xff]
      %v264 = vld [vmem:[%s226 + $0xc8] sm:$0xff]
      %v265 = vld [vmem:[%s226 + $0xd0] sm:$0xff]
      %v266 = vld [vmem:[%s226 + $0xd8] sm:$0xff]
      %v267 = vld [vmem:[%s226 + $0xe0] sm:$0xff]
      %v268 = vld [vmem:[%s226 + $0xe8] sm:$0xff]
      %v269 = vld [vmem:[%s226 + $0xf0] sm:$0xff]
      %v270 = vld [vmem:[%s226 + $0xf8] sm:$0xff]
      %v272 = vlaneseq
      %v273 = vshrl.u32 %v272, 7
      %v274 = vsub.s32 0, %v273
      %v275 = vrot.slane %v237, %v274
      %v277 = vmul.f32 %v239, %v275
      %v278 = vmul.f32 %v240, %v275
      %v279 = vmul.f32 %v241, %v275
      %v280 = vmul.f32 %v242, %v275
      %v281 = vmul.f32 %v243, %v275
      %v282 = vmul.f32 %v244, %v275
      %v283 = vmul.f32 %v245, %v275
      %v284 = vmul.f32 %v246, %v275
      %v285 = vmul.f32 %v247, %v275
      %v286 = vmul.f32 %v248, %v275
      %v287 = vmul.f32 %v249, %v275
      %v288 = vmul.f32 %v250, %v275
      %v289 = vmul.f32 %v251, %v275
      %v290 = vmul.f32 %v252, %v275
      %v291 = vmul.f32 %v253, %v275
      %v292 = vmul.f32 %v254, %v275
      %v293 = vmul.f32 %v255, %v275
      %v294 = vmul.f32 %v256, %v275
      %v295 = vmul.f32 %v257, %v275
      %v296 = vmul.f32 %v258, %v275
      %v297 = vmul.f32 %v259, %v275
      %v298 = vmul.f32 %v260, %v275
      %v299 = vmul.f32 %v261, %v275
      %v300 = vmul.f32 %v262, %v275
      %v301 = vmul.f32 %v263, %v275
      %v302 = vmul.f32 %v264, %v275
      %v303 = vmul.f32 %v265, %v275
      %v304 = vmul.f32 %v266, %v275
      %v305 = vmul.f32 %v267, %v275
      %v306 = vmul.f32 %v268, %v275
      %v307 = vmul.f32 %v269, %v275
      %v308 = vmul.f32 %v270, %v275
      %v310 = vlaneseq
      %v311 = vshrl.u32 %v310, 7
      %v312 = vsub.s32 0, %v311
      %v313 = vrot.slane %v238, %v312
      %v315 = vadd.f32 %v277, %v313
      %v316 = vadd.f32 %v278, %v313
      %v317 = vadd.f32 %v279, %v313
      %v318 = vadd.f32 %v280, %v313
      %v319 = vadd.f32 %v281, %v313
      %v320 = vadd.f32 %v282, %v313
      %v321 = vadd.f32 %v283, %v313
      %v322 = vadd.f32 %v284, %v313
      %v323 = vadd.f32 %v285, %v313
      %v324 = vadd.f32 %v286, %v313
      %v325 = vadd.f32 %v287, %v313
      %v326 = vadd.f32 %v288, %v313
      %v327 = vadd.f32 %v289, %v313
      %v328 = vadd.f32 %v290, %v313
      %v329 = vadd.f32 %v291, %v313
      %v330 = vadd.f32 %v292, %v313
      %v331 = vadd.f32 %v293, %v313
      %v332 = vadd.f32 %v294, %v313
      %v333 = vadd.f32 %v295, %v313
      %v334 = vadd.f32 %v296, %v313
      %v335 = vadd.f32 %v297, %v313
      %v336 = vadd.f32 %v298, %v313
      %v337 = vadd.f32 %v299, %v313
      %v338 = vadd.f32 %v300, %v313
      %v339 = vadd.f32 %v301, %v313
      %v340 = vadd.f32 %v302, %v313
      %v341 = vadd.f32 %v303, %v313
      %v342 = vadd.f32 %v304, %v313
      %v343 = vadd.f32 %v305, %v313
      %v344 = vadd.f32 %v306, %v313
      %v345 = vadd.f32 %v307, %v313
      %v346 = vadd.f32 %v308, %v313
      %v347 = vmax.f32 %v315, 0.0
      %v348 = vmax.f32 %v316, 0.0
      %v349 = vmax.f32 %v317, 0.0
      %v350 = vmax.f32 %v318, 0.0
      %v351 = vmax.f32 %v319, 0.0
      %v352 = vmax.f32 %v320, 0.0
      %v353 = vmax.f32 %v321, 0.0
      %v354 = vmax.f32 %v322, 0.0
      %v355 = vmax.f32 %v323, 0.0
      %v356 = vmax.f32 %v324, 0.0
      %v357 = vmax.f32 %v325, 0.0
      %v358 = vmax.f32 %v326, 0.0
      %v359 = vmax.f32 %v327, 0.0
      %v360 = vmax.f32 %v328, 0.0
      %v361 = vmax.f32 %v329, 0.0
      %v362 = vmax.f32 %v330, 0.0
      %v363 = vmax.f32 %v331, 0.0
      %v364 = vmax.f32 %v332, 0.0
      %v365 = vmax.f32 %v333, 0.0
      %v366 = vmax.f32 %v334, 0.0
      %v367 = vmax.f32 %v335, 0.0
      %v368 = vmax.f32 %v336, 0.0
      %v369 = vmax.f32 %v337, 0.0
      %v370 = vmax.f32 %v338, 0.0
      %v371 = vmax.f32 %v339, 0.0
      %v372 = vmax.f32 %v340, 0.0
      %v373 = vmax.f32 %v341, 0.0
      %v374 = vmax.f32 %v342, 0.0
      %v375 = vmax.f32 %v343, 0.0
      %v376 = vmax.f32 %v344, 0.0
      %v377 = vmax.f32 %v345, 0.0
      %v378 = vmax.f32 %v346, 0.0
      %379 = vst [vmem:[#allocation2] sm:$0xf] 0
      %380 = vst [vmem:[#allocation2 + $0x4] sm:$0xf] 0
      %381 = vst [vmem:[#allocation2 + $0x8] sm:$0x1] 0
      %382 = vst [vmem:[#allocation2 + $0xc] sm:$0xf] 0
      %383 = vst [vmem:[#allocation2 + $0x10] sm:$0xf] 0
      %384 = vst [vmem:[#allocation2 + $0x14] sm:$0x1] 0
      %385 = vst [vmem:[#allocation2 + $0x18] sm:$0xf] 0
      %386 = vst [vmem:[#allocation2 + $0x1c] sm:$0xf] 0
      %387 = vst [vmem:[#allocation2 + $0x20] sm:$0x1] 0
      %388 = vst [vmem:[#allocation2 + $0x24] sm:$0xf] 0
      %389 = vst [vmem:[#allocation2 + $0x28] sm:$0xf] 0
      %390 = vst [vmem:[#allocation2 + $0x2c] sm:$0x1] 0
      %391 = vst [vmem:[#allocation2 + $0x30] sm:$0xf] 0
      %392 = vst [vmem:[#allocation2 + $0x34] sm:$0xf] 0
      %393 = vst [vmem:[#allocation2 + $0x38] sm:$0x1] 0
      %394 = vst [vmem:[#allocation2 + $0x3c] sm:$0xf] 0
      %395 = vst [vmem:[#allocation2 + $0x40] sm:$0xf] 0
      %396 = vst [vmem:[#allocation2 + $0x44] sm:$0x1] 0
      %397 = vst [vmem:[#allocation2 + $0x48] sm:$0xf] 0
      %398 = vst [vmem:[#allocation2 + $0x4c] sm:$0xf] 0
      %399 = vst [vmem:[#allocation2 + $0x50] sm:$0x1] 0
      %400 = vst [vmem:[#allocation2 + $0x54] sm:$0xf] 0
      %401 = vst [vmem:[#allocation2 + $0x58] sm:$0xf] 0
      %402 = vst [vmem:[#allocation2 + $0x5c] sm:$0x1] 0
      %403 = vst [vmem:[#allocation2 + $0x60] sm:$0xf] 0
      %404 = vst [vmem:[#allocation2 + $0x64] sm:$0xf] 0
      %405 = vst [vmem:[#allocation2 + $0x68] sm:$0x1] 0
      %406 = vst [vmem:[#allocation2 + $0x6c] sm:$0xf] 0
      %407 = vst [vmem:[#allocation2 + $0x70] sm:$0xf] 0
      %408 = vst [vmem:[#allocation2 + $0x74] sm:$0x1] 0
      %409 = vst [vmem:[#allocation2 + $0x78] sm:$0xf] 0
      %410 = vst [vmem:[#allocation2 + $0x7c] sm:$0xf] 0
      %411 = vst [vmem:[#allocation2 + $0x80] sm:$0x1] 0
      %412 = vst [vmem:[#allocation2 + $0x84] sm:$0xf] 0
      %413 = vst [vmem:[#allocation2 + $0x88] sm:$0xf] 0
      %414 = vst [vmem:[#allocation2 + $0x8c] sm:$0x1] 0
      %415 = vst [vmem:[#allocation2 + $0x90] sm:$0xf] 0
      %416 = vst [vmem:[#allocation2 + $0x94] sm:$0xf] 0
      %417 = vst [vmem:[#allocation2 + $0x98] sm:$0x1] 0
      %418 = vst [vmem:[#allocation2 + $0x9c] sm:$0xf] 0
      %419 = vst [vmem:[#allocation2 + $0xa0] sm:$0xf] 0
      %420 = vst [vmem:[#allocation2 + $0xa4] sm:$0x1] 0
      %421 = vst [vmem:[#allocation2 + $0xa8] sm:$0xf] 0
      %422 = vst [vmem:[#allocation2 + $0xac] sm:$0xf] 0
      %423 = vst [vmem:[#allocation2 + $0xb0] sm:$0x1] 0
      %424 = vst [vmem:[#allocation2 + $0xb4] sm:$0xf] 0
      %425 = vst [vmem:[#allocation2 + $0xb8] sm:$0xf] 0
      %426 = vst [vmem:[#allocation2 + $0xbc] sm:$0x1] 0
      %427 = vst [vmem:[#allocation2 + $0xc0] sm:$0xf] 0
      %428 = vst [vmem:[#allocation2 + $0xc4] sm:$0xf] 0
      %429 = vst [vmem:[#allocation2 + $0xc8] sm:$0x1] 0
      %430 = vst [vmem:[#allocation2 + $0xcc] sm:$0xf] 0
      %431 = vst [vmem:[#allocation2 + $0xd0] sm:$0xf] 0
      %432 = vst [vmem:[#allocation2 + $0xd4] sm:$0x1] 0
      %v433 = vpack.c.bf16 %v348, %v347
      %v434 = vpack.c.bf16 %v350, %v349
      %v435 = vpack.c.bf16 %v352, %v351
      %v436 = vpack.c.bf16 %v354, %v353
      %v437 = vpack.c.bf16 %v356, %v355
      %v438 = vpack.c.bf16 %v358, %v357
      %v439 = vpack.c.bf16 %v360, %v359
      %v440 = vpack.c.bf16 %v362, %v361
      %v441 = vpack.c.bf16 %v364, %v363
      %v442 = vpack.c.bf16 %v366, %v365
      %v443 = vpack.c.bf16 %v368, %v367
      %v444 = vpack.c.bf16 %v370, %v369
      %v445 = vpack.c.bf16 %v372, %v371
      %v446 = vpack.c.bf16 %v374, %v373
      %v447 = vpack.c.bf16 %v376, %v375
      %v448 = vpack.c.bf16 %v378, %v377
      %v465 = vunpack.c.l.b16 %v433
      %v466 = vunpack.c.h.b16 %v433
      %v467 = vunpack.c.l.b16 %v434
      %v468 = vunpack.c.h.b16 %v434
      %v469 = vunpack.c.l.b16 %v435
      %v470 = vunpack.c.h.b16 %v435
      %v471 = vunpack.c.l.b16 %v436
      %v472 = vunpack.c.h.b16 %v436
      %v473 = vunpack.c.l.b16 %v437
      %v474 = vunpack.c.h.b16 %v437
      %v475 = vunpack.c.l.b16 %v438
      %v476 = vunpack.c.h.b16 %v438
      %v477 = vunpack.c.l.b16 %v439
      %v478 = vunpack.c.h.b16 %v439
      %v479 = vunpack.c.l.b16 %v440
      %v480 = vunpack.c.h.b16 %v440
      %v481 = vunpack.c.l.b16 %v441
      %v482 = vunpack.c.h.b16 %v441
      %v483 = vunpack.c.l.b16 %v442
      %v484 = vunpack.c.h.b16 %v442
      %v485 = vunpack.c.l.b16 %v443
      %v486 = vunpack.c.h.b16 %v443
      %v487 = vunpack.c.l.b16 %v444
      %v488 = vunpack.c.h.b16 %v444
      %v489 = vunpack.c.l.b16 %v445
      %v490 = vunpack.c.h.b16 %v445
      %v491 = vunpack.c.l.b16 %v446
      %v492 = vunpack.c.h.b16 %v446
      %v493 = vunpack.c.l.b16 %v447
      %v494 = vunpack.c.h.b16 %v447
      %v495 = vunpack.c.l.b16 %v448
      %v496 = vunpack.c.h.b16 %v448
      %v497 = vpack.c.b16 %v465, %v465
      %v498 = vpack.c.b16 %v466, %v466
      %v499 = vpack.c.b16 %v467, %v467
      %v500 = vpack.c.b16 %v468, %v468
      %v501 = vpack.c.b16 %v469, %v469
      %v502 = vpack.c.b16 %v470, %v470
      %v503 = vpack.c.b16 %v471, %v471
      %v504 = vpack.c.b16 %v472, %v472
      %v505 = vpack.c.b16 %v473, %v473
      %v506 = vpack.c.b16 %v474, %v474
      %v507 = vpack.c.b16 %v475, %v475
      %v508 = vpack.c.b16 %v476, %v476
      %v509 = vpack.c.b16 %v477, %v477
      %v510 = vpack.c.b16 %v478, %v478
      %v511 = vpack.c.b16 %v479, %v479
      %v512 = vpack.c.b16 %v480, %v480
      %v513 = vpack.c.b16 %v481, %v481
      %v514 = vpack.c.b16 %v482, %v482
      %v515 = vpack.c.b16 %v483, %v483
      %v516 = vpack.c.b16 %v484, %v484
      %v517 = vpack.c.b16 %v485, %v485
      %v518 = vpack.c.b16 %v486, %v486
      %v519 = vpack.c.b16 %v487, %v487
      %v520 = vpack.c.b16 %v488, %v488
      %v521 = vpack.c.b16 %v489, %v489
      %v522 = vpack.c.b16 %v490, %v490
      %v523 = vpack.c.b16 %v491, %v491
      %v524 = vpack.c.b16 %v492, %v492
      %v525 = vpack.c.b16 %v493, %v493
      %v526 = vpack.c.b16 %v494, %v494
      %v527 = vpack.c.b16 %v495, %v495
      %v528 = vpack.c.b16 %v496, %v496
      %vm529 = vsmask.f32 256
      %vm530 = vsmask.f32 4368
      %vm531 = vmor %vm529, %vm530
      %v533 = vshrl.u32 %v497, 16
      %v535 = vrot.slane %v533, 7
      %v536 = vshll.u32 %v497, 16
      %v538 = vor.u32 %v535, %v536
      %v539 = vrot.slane %v535, 4
      %v541 = vshrl.u32 %v498, 16
      %v543 = vrot.slane %v541, 7
      %v544 = vshll.u32 %v498, 16
      %v546 = vor.u32 %v543, %v544
      %v547 = vsel %vm531, %v539, %v546
      %v548 = vrot.slane %v543, 4
      %v550 = vshrl.u32 %v499, 16
      %v552 = vrot.slane %v550, 7
      %v553 = vshll.u32 %v499, 16
      %v555 = vor.u32 %v552, %v553
      %v556 = vrot.slane %v552, 4
      %v558 = vshrl.u32 %v500, 16
      %v560 = vrot.slane %v558, 7
      %v561 = vshll.u32 %v500, 16
      %v563 = vor.u32 %v560, %v561
      %v564 = vsel %vm531, %v556, %v563
      %v565 = vrot.slane %v560, 4
      %v567 = vshrl.u32 %v501, 16
      %v569 = vrot.slane %v567, 7
      %v570 = vshll.u32 %v501, 16
      %v572 = vor.u32 %v569, %v570
      %v573 = vrot.slane %v569, 4
      %v575 = vshrl.u32 %v502, 16
      %v577 = vrot.slane %v575, 7
      %v578 = vshll.u32 %v502, 16
      %v580 = vor.u32 %v577, %v578
      %v581 = vsel %vm531, %v573, %v580
      %v582 = vrot.slane %v577, 4
      %v584 = vshrl.u32 %v503, 16
      %v586 = vrot.slane %v584, 7
      %v587 = vshll.u32 %v503, 16
      %v589 = vor.u32 %v586, %v587
      %v590 = vrot.slane %v586, 4
      %v592 = vshrl.u32 %v504, 16
      %v594 = vrot.slane %v592, 7
      %v595 = vshll.u32 %v504, 16
      %v597 = vor.u32 %v594, %v595
      %v598 = vsel %vm531, %v590, %v597
      %v599 = vrot.slane %v594, 4
      %v601 = vshrl.u32 %v505, 16
      %v603 = vrot.slane %v601, 7
      %v604 = vshll.u32 %v505, 16
      %v606 = vor.u32 %v603, %v604
      %v607 = vrot.slane %v603, 4
      %v609 = vshrl.u32 %v506, 16
      %v611 = vrot.slane %v609, 7
      %v612 = vshll.u32 %v506, 16
      %v614 = vor.u32 %v611, %v612
      %v615 = vsel %vm531, %v607, %v614
      %v616 = vrot.slane %v611, 4
      %v618 = vshrl.u32 %v507, 16
      %v620 = vrot.slane %v618, 7
      %v621 = vshll.u32 %v507, 16
      %v623 = vor.u32 %v620, %v621
      %v624 = vrot.slane %v620, 4
      %v626 = vshrl.u32 %v508, 16
      %v628 = vrot.slane %v626, 7
      %v629 = vshll.u32 %v508, 16
      %v631 = vor.u32 %v628, %v629
      %v632 = vsel %vm531, %v624, %v631
      %v633 = vrot.slane %v628, 4
      %v635 = vshrl.u32 %v509, 16
      %v637 = vrot.slane %v635, 7
      %v638 = vshll.u32 %v509, 16
      %v640 = vor.u32 %v637, %v638
      %v641 = vrot.slane %v637, 4
      %v643 = vshrl.u32 %v510, 16
      %v645 = vrot.slane %v643, 7
      %v646 = vshll.u32 %v510, 16
      %v648 = vor.u32 %v645, %v646
      %v649 = vsel %vm531, %v641, %v648
      %v650 = vrot.slane %v645, 4
      %v652 = vshrl.u32 %v511, 16
      %v654 = vrot.slane %v652, 7
      %v655 = vshll.u32 %v511, 16
      %v657 = vor.u32 %v654, %v655
      %v658 = vrot.slane %v654, 4
      %v660 = vshrl.u32 %v512, 16
      %v662 = vrot.slane %v660, 7
      %v663 = vshll.u32 %v512, 16
      %v665 = vor.u32 %v662, %v663
      %v666 = vsel %vm531, %v658, %v665
      %v667 = vrot.slane %v662, 4
      %v669 = vshrl.u32 %v513, 16
      %v671 = vrot.slane %v669, 7
      %v672 = vshll.u32 %v513, 16
      %v674 = vor.u32 %v671, %v672
      %v675 = vrot.slane %v671, 4
      %v677 = vshrl.u32 %v514, 16
      %v679 = vrot.slane %v677, 7
      %v680 = vshll.u32 %v514, 16
      %v682 = vor.u32 %v679, %v680
      %v683 = vsel %vm531, %v675, %v682
      %v684 = vrot.slane %v679, 4
      %v686 = vshrl.u32 %v515, 16
      %v688 = vrot.slane %v686, 7
      %v689 = vshll.u32 %v515, 16
      %v691 = vor.u32 %v688, %v689
      %v692 = vrot.slane %v688, 4
      %v694 = vshrl.u32 %v516, 16
      %v696 = vrot.slane %v694, 7
      %v697 = vshll.u32 %v516, 16
      %v699 = vor.u32 %v696, %v697
      %v700 = vsel %vm531, %v692, %v699
      %v701 = vrot.slane %v696, 4
      %v703 = vshrl.u32 %v517, 16
      %v705 = vrot.slane %v703, 7
      %v706 = vshll.u32 %v517, 16
      %v708 = vor.u32 %v705, %v706
      %v709 = vrot.slane %v705, 4
      %v711 = vshrl.u32 %v518, 16
      %v713 = vrot.slane %v711, 7
      %v714 = vshll.u32 %v518, 16
      %v716 = vor.u32 %v713, %v714
      %v717 = vsel %vm531, %v709, %v716
      %v718 = vrot.slane %v713, 4
      %v720 = vshrl.u32 %v519, 16
      %v722 = vrot.slane %v720, 7
      %v723 = vshll.u32 %v519, 16
      %v725 = vor.u32 %v722, %v723
      %v726 = vrot.slane %v722, 4
      %v728 = vshrl.u32 %v520, 16
      %v730 = vrot.slane %v728, 7
      %v731 = vshll.u32 %v520, 16
      %v733 = vor.u32 %v730, %v731
      %v734 = vsel %vm531, %v726, %v733
      %v735 = vrot.slane %v730, 4
      %v737 = vshrl.u32 %v521, 16
      %v739 = vrot.slane %v737, 7
      %v740 = vshll.u32 %v521, 16
      %v742 = vor.u32 %v739, %v740
      %v743 = vrot.slane %v739, 4
      %v745 = vshrl.u32 %v522, 16
      %v747 = vrot.slane %v745, 7
      %v748 = vshll.u32 %v522, 16
      %v750 = vor.u32 %v747, %v748
      %v751 = vsel %vm531, %v743, %v750
      %v752 = vrot.slane %v747, 4
      %v754 = vshrl.u32 %v523, 16
      %v756 = vrot.slane %v754, 7
      %v757 = vshll.u32 %v523, 16
      %v759 = vor.u32 %v756, %v757
      %v760 = vrot.slane %v756, 4
      %v762 = vshrl.u32 %v524, 16
      %v764 = vrot.slane %v762, 7
      %v765 = vshll.u32 %v524, 16
      %v767 = vor.u32 %v764, %v765
      %v768 = vsel %vm531, %v760, %v767
      %v769 = vrot.slane %v764, 4
      %v771 = vshrl.u32 %v525, 16
      %v773 = vrot.slane %v771, 7
      %v774 = vshll.u32 %v525, 16
      %v776 = vor.u32 %v773, %v774
      %v777 = vrot.slane %v773, 4
      %v779 = vshrl.u32 %v526, 16
      %v781 = vrot.slane %v779, 7
      %v782 = vshll.u32 %v526, 16
      %v784 = vor.u32 %v781, %v782
      %v785 = vsel %vm531, %v777, %v784
      %v786 = vrot.slane %v781, 4
      %v788 = vshrl.u32 %v527, 16
      %v790 = vrot.slane %v788, 7
      %v791 = vshll.u32 %v527, 16
      %v793 = vor.u32 %v790, %v791
      %v794 = vrot.slane %v790, 4
      %v796 = vshrl.u32 %v528, 16
      %v798 = vrot.slane %v796, 7
      %v799 = vshll.u32 %v528, 16
      %v801 = vor.u32 %v798, %v799
      %v802 = vsel %vm531, %v794, %v801
      %v803 = vrot.slane %v798, 4
      %s852 = scalar_lea.vmem [#allocation2], 12
      %vm853 = vcmask 1043456
      %vm854 = vsmask.f32 7938
      %vm855 = vmand %vm853, %vm854
      %v856 = vld [vmem:[%s852] sm:$0xf]
      %v857 = vsel %vm855, %v538, %v856
      %858 = vst [vmem:[%s852] sm:$0xf] %v857
      %859 = vst [vmem:[%s852 + $0x4] sm:$0xf] %v547
      %vm860 = vcmask 1040384
      %vm861 = vmand %vm860, %vm529
      %v862 = vld [vmem:[%s852 + $0x8] sm:$0x1]
      %v863 = vsel %vm861, %v548, %v862
      %864 = vst [vmem:[%s852 + $0x8] sm:$0x1] %v863
      %v865 = vld [vmem:[%s852 + $0xc] sm:$0xf]
      %v866 = vsel %vm855, %v555, %v865
      %867 = vst [vmem:[%s852 + $0xc] sm:$0xf] %v866
      %868 = vst [vmem:[%s852 + $0x10] sm:$0xf] %v564
      %v869 = vld [vmem:[%s852 + $0x14] sm:$0x1]
      %v870 = vsel %vm861, %v565, %v869
      %871 = vst [vmem:[%s852 + $0x14] sm:$0x1] %v870
      %v872 = vld [vmem:[%s852 + $0x18] sm:$0xf]
      %v873 = vsel %vm855, %v572, %v872
      %874 = vst [vmem:[%s852 + $0x18] sm:$0xf] %v873
      %875 = vst [vmem:[%s852 + $0x1c] sm:$0xf] %v581
      %v876 = vld [vmem:[%s852 + $0x20] sm:$0x1]
      %v877 = vsel %vm861, %v582, %v876
      %878 = vst [vmem:[%s852 + $0x20] sm:$0x1] %v877
      %v879 = vld [vmem:[%s852 + $0x24] sm:$0xf]
      %v880 = vsel %vm855, %v589, %v879
      %881 = vst [vmem:[%s852 + $0x24] sm:$0xf] %v880
      %882 = vst [vmem:[%s852 + $0x28] sm:$0xf] %v598
      %v883 = vld [vmem:[%s852 + $0x2c] sm:$0x1]
      %v884 = vsel %vm861, %v599, %v883
      %885 = vst [vmem:[%s852 + $0x2c] sm:$0x1] %v884
      %v886 = vld [vmem:[%s852 + $0x30] sm:$0xf]
      %v887 = vsel %vm855, %v606, %v886
      %888 = vst [vmem:[%s852 + $0x30] sm:$0xf] %v887
      %889 = vst [vmem:[%s852 + $0x34] sm:$0xf] %v615
      %v890 = vld [vmem:[%s852 + $0x38] sm:$0x1]
      %v891 = vsel %vm861, %v616, %v890
      %892 = vst [vmem:[%s852 + $0x38] sm:$0x1] %v891
      %v893 = vld [vmem:[%s852 + $0x3c] sm:$0xf]
      %v894 = vsel %vm855, %v623, %v893
      %895 = vst [vmem:[%s852 + $0x3c] sm:$0xf] %v894
      %896 = vst [vmem:[%s852 + $0x40] sm:$0xf] %v632
      %v897 = vld [vmem:[%s852 + $0x44] sm:$0x1]
      %v898 = vsel %vm861, %v633, %v897
      %899 = vst [vmem:[%s852 + $0x44] sm:$0x1] %v898
      %v900 = vld [vmem:[%s852 + $0x48] sm:$0xf]
      %v901 = vsel %vm855, %v640, %v900
      %902 = vst [vmem:[%s852 + $0x48] sm:$0xf] %v901
      %903 = vst [vmem:[%s852 + $0x4c] sm:$0xf] %v649
      %v904 = vld [vmem:[%s852 + $0x50] sm:$0x1]
      %v905 = vsel %vm861, %v650, %v904
      %906 = vst [vmem:[%s852 + $0x50] sm:$0x1] %v905
      %v907 = vld [vmem:[%s852 + $0x54] sm:$0xf]
      %v908 = vsel %vm855, %v657, %v907
      %909 = vst [vmem:[%s852 + $0x54] sm:$0xf] %v908
      %910 = vst [vmem:[%s852 + $0x58] sm:$0xf] %v666
      %v911 = vld [vmem:[%s852 + $0x5c] sm:$0x1]
      %v912 = vsel %vm861, %v667, %v911
      %913 = vst [vmem:[%s852 + $0x5c] sm:$0x1] %v912
      %v914 = vld [vmem:[%s852 + $0x60] sm:$0xf]
      %v915 = vsel %vm855, %v674, %v914
      %916 = vst [vmem:[%s852 + $0x60] sm:$0xf] %v915
      %917 = vst [vmem:[%s852 + $0x64] sm:$0xf] %v683
      %v918 = vld [vmem:[%s852 + $0x68] sm:$0x1]
      %v919 = vsel %vm861, %v684, %v918
      %920 = vst [vmem:[%s852 + $0x68] sm:$0x1] %v919
      %v921 = vld [vmem:[%s852 + $0x6c] sm:$0xf]
      %v922 = vsel %vm855, %v691, %v921
      %923 = vst [vmem:[%s852 + $0x6c] sm:$0xf] %v922
      %924 = vst [vmem:[%s852 + $0x70] sm:$0xf] %v700
      %v925 = vld [vmem:[%s852 + $0x74] sm:$0x1]
      %v926 = vsel %vm861, %v701, %v925
      %927 = vst [vmem:[%s852 + $0x74] sm:$0x1] %v926
      %v928 = vld [vmem:[%s852 + $0x78] sm:$0xf]
      %v929 = vsel %vm855, %v708, %v928
      %930 = vst [vmem:[%s852 + $0x78] sm:$0xf] %v929
      %931 = vst [vmem:[%s852 + $0x7c] sm:$0xf] %v717
      %v932 = vld [vmem:[%s852 + $0x80] sm:$0x1]
      %v933 = vsel %vm861, %v718, %v932
      %934 = vst [vmem:[%s852 + $0x80] sm:$0x1] %v933
      %v935 = vld [vmem:[%s852 + $0x84] sm:$0xf]
      %v936 = vsel %vm855, %v725, %v935
      %937 = vst [vmem:[%s852 + $0x84] sm:$0xf] %v936
      %938 = vst [vmem:[%s852 + $0x88] sm:$0xf] %v734
      %v939 = vld [vmem:[%s852 + $0x8c] sm:$0x1]
      %v940 = vsel %vm861, %v735, %v939
      %941 = vst [vmem:[%s852 + $0x8c] sm:$0x1] %v940
      %v942 = vld [vmem:[%s852 + $0x90] sm:$0xf]
      %v943 = vsel %vm855, %v742, %v942
      %944 = vst [vmem:[%s852 + $0x90] sm:$0xf] %v943
      %945 = vst [vmem:[%s852 + $0x94] sm:$0xf] %v751
      %v946 = vld [vmem:[%s852 + $0x98] sm:$0x1]
      %v947 = vsel %vm861, %v752, %v946
      %948 = vst [vmem:[%s852 + $0x98] sm:$0x1] %v947
      %v949 = vld [vmem:[%s852 + $0x9c] sm:$0xf]
      %v950 = vsel %vm855, %v759, %v949
      %951 = vst [vmem:[%s852 + $0x9c] sm:$0xf] %v950
      %952 = vst [vmem:[%s852 + $0xa0] sm:$0xf] %v768
      %v953 = vld [vmem:[%s852 + $0xa4] sm:$0x1]
      %v954 = vsel %vm861, %v769, %v953
      %955 = vst [vmem:[%s852 + $0xa4] sm:$0x1] %v954
      %v956 = vld [vmem:[%s852 + $0xa8] sm:$0xf]
      %v957 = vsel %vm855, %v776, %v956
      %958 = vst [vmem:[%s852 + $0xa8] sm:$0xf] %v957
      %959 = vst [vmem:[%s852 + $0xac] sm:$0xf] %v785
      %v960 = vld [vmem:[%s852 + $0xb0] sm:$0x1]
      %v961 = vsel %vm861, %v786, %v960
      %962 = vst [vmem:[%s852 + $0xb0] sm:$0x1] %v961
      %v963 = vld [vmem:[%s852 + $0xb4] sm:$0xf]
      %v964 = vsel %vm855, %v793, %v963
      %965 = vst [vmem:[%s852 + $0xb4] sm:$0xf] %v964
      %966 = vst [vmem:[%s852 + $0xb8] sm:$0xf] %v802
      %v967 = vld [vmem:[%s852 + $0xbc] sm:$0x1]
      %v968 = vsel %vm861, %v803, %v967
      %969 = vst [vmem:[%s852 + $0xbc] sm:$0x1] %v968
      %v970 = vld [vmem:[#allocation2] sm:$0xf]
      %v971 = vld [vmem:[#allocation2 + $0x4] sm:$0xf]
      %v972 = vld [vmem:[#allocation2 + $0xc] sm:$0xf]
      %v973 = vld [vmem:[#allocation2 + $0x10] sm:$0xf]
      %v974 = vld [vmem:[#allocation2 + $0x18] sm:$0xf]
      %v975 = vld [vmem:[#allocation2 + $0x1c] sm:$0xf]
      %v976 = vld [vmem:[#allocation2 + $0x24] sm:$0xf]
      %v977 = vld [vmem:[#allocation2 + $0x28] sm:$0xf]
      %v978 = vld [vmem:[#allocation2 + $0x30] sm:$0xf]
      %v979 = vld [vmem:[#allocation2 + $0x34] sm:$0xf]
      %v980 = vld [vmem:[#allocation2 + $0x3c] sm:$0xf]
      %v981 = vld [vmem:[#allocation2 + $0x40] sm:$0xf]
      %v982 = vld [vmem:[#allocation2 + $0x48] sm:$0xf]
      %v983 = vld [vmem:[#allocation2 + $0x4c] sm:$0xf]
      %v984 = vld [vmem:[#allocation2 + $0x54] sm:$0xf]
      %v985 = vld [vmem:[#allocation2 + $0x58] sm:$0xf]
      %v986 = vld [vmem:[#allocation2 + $0x60] sm:$0xf]
      %v987 = vld [vmem:[#allocation2 + $0x64] sm:$0xf]
      %v988 = vld [vmem:[#allocation2 + $0x6c] sm:$0xf]
      %v989 = vld [vmem:[#allocation2 + $0x70] sm:$0xf]
      %v990 = vld [vmem:[#allocation2 + $0x78] sm:$0xf]
      %v991 = vld [vmem:[#allocation2 + $0x7c] sm:$0xf]
      %v992 = vld [vmem:[#allocation2 + $0x84] sm:$0xf]
      %v993 = vld [vmem:[#allocation2 + $0x88] sm:$0xf]
      %v994 = vld [vmem:[#allocation2 + $0x90] sm:$0xf]
      %v995 = vld [vmem:[#allocation2 + $0x94] sm:$0xf]
      %v996 = vld [vmem:[#allocation2 + $0x9c] sm:$0xf]
      %v997 = vld [vmem:[#allocation2 + $0xa0] sm:$0xf]
      %v998 = vld [vmem:[#allocation2 + $0xa8] sm:$0xf]
      %v999 = vld [vmem:[#allocation2 + $0xac] sm:$0xf]
      %v1000 = vld [vmem:[#allocation2 + $0xb4] sm:$0xf]
      %v1001 = vld [vmem:[#allocation2 + $0xb8] sm:$0xf]
      %v1034 = vunpack.c.l.b16 %v970
      %v1035 = vunpack.c.l.b16 %v971
      %v1036 = vunpack.c.l.b16 %v972
      %v1037 = vunpack.c.l.b16 %v973
      %v1038 = vunpack.c.l.b16 %v974
      %v1039 = vunpack.c.l.b16 %v975
      %v1040 = vunpack.c.l.b16 %v976
      %v1041 = vunpack.c.l.b16 %v977
      %v1042 = vunpack.c.l.b16 %v978
      %v1043 = vunpack.c.l.b16 %v979
      %v1044 = vunpack.c.l.b16 %v980
      %v1045 = vunpack.c.l.b16 %v981
      %v1046 = vunpack.c.l.b16 %v982
      %v1047 = vunpack.c.l.b16 %v983
      %v1048 = vunpack.c.l.b16 %v984
      %v1049 = vunpack.c.l.b16 %v985
      %v1050 = vunpack.c.l.b16 %v986
      %v1051 = vunpack.c.l.b16 %v987
      %v1052 = vunpack.c.l.b16 %v988
      %v1053 = vunpack.c.l.b16 %v989
      %v1054 = vunpack.c.l.b16 %v990
      %v1055 = vunpack.c.l.b16 %v991
      %v1056 = vunpack.c.l.b16 %v992
      %v1057 = vunpack.c.l.b16 %v993
      %v1058 = vunpack.c.l.b16 %v994
      %v1059 = vunpack.c.l.b16 %v995
      %v1060 = vunpack.c.l.b16 %v996
      %v1061 = vunpack.c.l.b16 %v997
      %v1062 = vunpack.c.l.b16 %v998
      %v1063 = vunpack.c.l.b16 %v999
      %v1064 = vunpack.c.l.b16 %v1000
      %v1065 = vunpack.c.l.b16 %v1001
      %v1066 = vpack.c.b16 %v1035, %v1034
      %v1067 = vpack.c.b16 %v1037, %v1036
      %v1068 = vpack.c.b16 %v1039, %v1038
      %v1069 = vpack.c.b16 %v1041, %v1040
      %v1070 = vpack.c.b16 %v1043, %v1042
      %v1071 = vpack.c.b16 %v1045, %v1044
      %v1072 = vpack.c.b16 %v1047, %v1046
      %v1073 = vpack.c.b16 %v1049, %v1048
      %v1074 = vpack.c.b16 %v1051, %v1050
      %v1075 = vpack.c.b16 %v1053, %v1052
      %v1076 = vpack.c.b16 %v1055, %v1054
      %v1077 = vpack.c.b16 %v1057, %v1056
      %v1078 = vpack.c.b16 %v1059, %v1058
      %v1079 = vpack.c.b16 %v1061, %v1060
      %v1080 = vpack.c.b16 %v1063, %v1062
      %v1081 = vpack.c.b16 %v1065, %v1064
      %1098 = vst [vmem:[#allocation3] sm:$0xff] %v1066
      %1099 = vst [vmem:[#allocation3 + $0x48] sm:$0xff] %v1067
      %1100 = vst [vmem:[#allocation3 + $0x90] sm:$0xff] %v1068
      %1101 = vst [vmem:[#allocation3 + $0xd8] sm:$0xff] %v1069
      %1102 = vst [vmem:[#allocation3 + $0x120] sm:$0xff] %v1070
      %1103 = vst [vmem:[#allocation3 + $0x168] sm:$0xff] %v1071
      %1104 = vst [vmem:[#allocation3 + $0x1b0] sm:$0xff] %v1072
      %1105 = vst [vmem:[#allocation3 + $0x1f8] sm:$0xff] %v1073
      %1106 = vst [vmem:[#allocation3 + $0x240] sm:$0xff] %v1074
      %1107 = vst [vmem:[#allocation3 + $0x288] sm:$0xff] %v1075
      %1108 = vst [vmem:[#allocation3 + $0x2d0] sm:$0xff] %v1076
      %1109 = vst [vmem:[#allocation3 + $0x318] sm:$0xff] %v1077
      %1110 = vst [vmem:[#allocation3 + $0x360] sm:$0xff] %v1078
      %1111 = vst [vmem:[#allocation3 + $0x3a8] sm:$0xff] %v1079
      %1112 = vst [vmem:[#allocation3 + $0x3f0] sm:$0xff] %v1080
      %1113 = vst [vmem:[#allocation3 + $0x438] sm:$0xff] %v1081
      %v1114 = vld [vmem:[#allocation2] sm:$0xf]
      %v1115 = vld [vmem:[#allocation2 + $0x4] sm:$0xf]
      %v1116 = vld [vmem:[#allocation2 + $0x8] sm:$0x1]
      %v1117 = vld [vmem:[#allocation2 + $0xc] sm:$0xf]
      %v1118 = vld [vmem:[#allocation2 + $0x10] sm:$0xf]
      %v1119 = vld [vmem:[#allocation2 + $0x14] sm:$0x1]
      %v1120 = vld [vmem:[#allocation2 + $0x18] sm:$0xf]
      %v1121 = vld [vmem:[#allocation2 + $0x1c] sm:$0xf]
      %v1122 = vld [vmem:[#allocation2 + $0x20] sm:$0x1]
      %v1123 = vld [vmem:[#allocation2 + $0x24] sm:$0xf]
      %v1124 = vld [vmem:[#allocation2 + $0x28] sm:$0xf]
      %v1125 = vld [vmem:[#allocation2 + $0x2c] sm:$0x1]
      %v1126 = vld [vmem:[#allocation2 + $0x30] sm:$0xf]
      %v1127 = vld [vmem:[#allocation2 + $0x34] sm:$0xf]
      %v1128 = vld [vmem:[#allocation2 + $0x38] sm:$0x1]
      %v1129 = vld [vmem:[#allocation2 + $0x3c] sm:$0xf]
      %v1130 = vld [vmem:[#allocation2 + $0x40] sm:$0xf]
      %v1131 = vld [vmem:[#allocation2 + $0x44] sm:$0x1]
      %v1132 = vld [vmem:[#allocation2 + $0x48] sm:$0xf]
      %v1133 = vld [vmem:[#allocation2 + $0x4c] sm:$0xf]
      %v1134 = vld [vmem:[#allocation2 + $0x50] sm:$0x1]
      %v1135 = vld [vmem:[#allocation2 + $0x54] sm:$0xf]
      %v1136 = vld [vmem:[#allocation2 + $0x58] sm:$0xf]
      %v1137 = vld [vmem:[#allocation2 + $0x5c] sm:$0x1]
      %v1138 = vld [vmem:[#allocation2 + $0x60] sm:$0xf]
      %v1139 = vld [vmem:[#allocation2 + $0x64] sm:$0xf]
      %v1140 = vld [vmem:[#allocation2 + $0x68] sm:$0x1]
      %v1141 = vld [vmem:[#allocation2 + $0x6c] sm:$0xf]
      %v1142 = vld [vmem:[#allocation2 + $0x70] sm:$0xf]
      %v1143 = vld [vmem:[#allocation2 + $0x74] sm:$0x1]
      %v1144 = vld [vmem:[#allocation2 + $0x78] sm:$0xf]
      %v1145 = vld [vmem:[#allocation2 + $0x7c] sm:$0xf]
      %v1146 = vld [vmem:[#allocation2 + $0x80] sm:$0x1]
      %v1147 = vld [vmem:[#allocation2 + $0x84] sm:$0xf]
      %v1148 = vld [vmem:[#allocation2 + $0x88] sm:$0xf]
      %v1149 = vld [vmem:[#allocation2 + $0x8c] sm:$0x1]
      %v1150 = vld [vmem:[#allocation2 + $0x90] sm:$0xf]
      %v1151 = vld [vmem:[#allocation2 + $0x94] sm:$0xf]
      %v1152 = vld [vmem:[#allocation2 + $0x98] sm:$0x1]
      %v1153 = vld [vmem:[#allocation2 + $0x9c] sm:$0xf]
      %v1154 = vld [vmem:[#allocation2 + $0xa0] sm:$0xf]
      %v1155 = vld [vmem:[#allocation2 + $0xa4] sm:$0x1]
      %v1156 = vld [vmem:[#allocation2 + $0xa8] sm:$0xf]
      %v1157 = vld [vmem:[#allocation2 + $0xac] sm:$0xf]
      %v1158 = vld [vmem:[#allocation2 + $0xb0] sm:$0x1]
      %v1159 = vld [vmem:[#allocation2 + $0xb4] sm:$0xf]
      %v1160 = vld [vmem:[#allocation2 + $0xb8] sm:$0xf]
      %v1161 = vld [vmem:[#allocation2 + $0xbc] sm:$0x1]
      %vm1162 = vsmask.f32 3328
      %vm1163 = vsmask.f32 7440
      %vm1164 = vmor %vm1162, %vm1163
      %v1166 = vshrl.u32 %v1114, 16
      %v1168 = vrot.slane %v1166, 4
      %v1169 = vshll.u32 %v1114, 16
      %v1171 = vrot.slane %v1169, 5
      %v1172 = vor.u32 %v1168, %v1171
      %v1173 = vrot.slane %v1172, 4
      %v1175 = vshll.u32 %v1115, 16
      %v1177 = vrot.slane %v1175, 5
      %v1178 = vsel %vm1164, %v1173, %v1177
      %v1179 = vshrl.u32 %v1115, 16
      %v1181 = vrot.slane %v1179, 4
      %v1182 = vor.u32 %v1181, %v1177
      %v1183 = vrot.slane %v1182, 4
      %v1185 = vshll.u32 %v1116, 16
      %v1187 = vrot.slane %v1185, 5
      %v1188 = vsel %vm1164, %v1183, %v1187
      %v1190 = vshrl.u32 %v1117, 16
      %v1192 = vrot.slane %v1190, 4
      %v1193 = vshll.u32 %v1117, 16
      %v1195 = vrot.slane %v1193, 5
      %v1196 = vor.u32 %v1192, %v1195
      %v1197 = vrot.slane %v1196, 4
      %v1199 = vshll.u32 %v1118, 16
      %v1201 = vrot.slane %v1199, 5
      %v1202 = vsel %vm1164, %v1197, %v1201
      %v1203 = vshrl.u32 %v1118, 16
      %v1205 = vrot.slane %v1203, 4
      %v1206 = vor.u32 %v1205, %v1201
      %v1207 = vrot.slane %v1206, 4
      %v1209 = vshll.u32 %v1119, 16
      %v1211 = vrot.slane %v1209, 5
      %v1212 = vsel %vm1164, %v1207, %v1211
      %v1214 = vshrl.u32 %v1120, 16
      %v1216 = vrot.slane %v1214, 4
      %v1217 = vshll.u32 %v1120, 16
      %v1219 = vrot.slane %v1217, 5
      %v1220 = vor.u32 %v1216, %v1219
      %v1221 = vrot.slane %v1220, 4
      %v1223 = vshll.u32 %v1121, 16
      %v1225 = vrot.slane %v1223, 5
      %v1226 = vsel %vm1164, %v1221, %v1225
      %v1227 = vshrl.u32 %v1121, 16
      %v1229 = vrot.slane %v1227, 4
      %v1230 = vor.u32 %v1229, %v1225
      %v1231 = vrot.slane %v1230, 4
      %v1233 = vshll.u32 %v1122, 16
      %v1235 = vrot.slane %v1233, 5
      %v1236 = vsel %vm1164, %v1231, %v1235
      %v1238 = vshrl.u32 %v1123, 16
      %v1240 = vrot.slane %v1238, 4
      %v1241 = vshll.u32 %v1123, 16
      %v1243 = vrot.slane %v1241, 5
      %v1244 = vor.u32 %v1240, %v1243
      %v1245 = vrot.slane %v1244, 4
      %v1247 = vshll.u32 %v1124, 16
      %v1249 = vrot.slane %v1247, 5
      %v1250 = vsel %vm1164, %v1245, %v1249
      %v1251 = vshrl.u32 %v1124, 16
      %v1253 = vrot.slane %v1251, 4
      %v1254 = vor.u32 %v1253, %v1249
      %v1255 = vrot.slane %v1254, 4
      %v1257 = vshll.u32 %v1125, 16
      %v1259 = vrot.slane %v1257, 5
      %v1260 = vsel %vm1164, %v1255, %v1259
      %v1262 = vshrl.u32 %v1126, 16
      %v1264 = vrot.slane %v1262, 4
      %v1265 = vshll.u32 %v1126, 16
      %v1267 = vrot.slane %v1265, 5
      %v1268 = vor.u32 %v1264, %v1267
      %v1269 = vrot.slane %v1268, 4
      %v1271 = vshll.u32 %v1127, 16
      %v1273 = vrot.slane %v1271, 5
      %v1274 = vsel %vm1164, %v1269, %v1273
      %v1275 = vshrl.u32 %v1127, 16
      %v1277 = vrot.slane %v1275, 4
      %v1278 = vor.u32 %v1277, %v1273
      %v1279 = vrot.slane %v1278, 4
      %v1281 = vshll.u32 %v1128, 16
      %v1283 = vrot.slane %v1281, 5
      %v1284 = vsel %vm1164, %v1279, %v1283
      %v1286 = vshrl.u32 %v1129, 16
      %v1288 = vrot.slane %v1286, 4
      %v1289 = vshll.u32 %v1129, 16
      %v1291 = vrot.slane %v1289, 5
      %v1292 = vor.u32 %v1288, %v1291
      %v1293 = vrot.slane %v1292, 4
      %v1295 = vshll.u32 %v1130, 16
      %v1297 = vrot.slane %v1295, 5
      %v1298 = vsel %vm1164, %v1293, %v1297
      %v1299 = vshrl.u32 %v1130, 16
      %v1301 = vrot.slane %v1299, 4
      %v1302 = vor.u32 %v1301, %v1297
      %v1303 = vrot.slane %v1302, 4
      %v1305 = vshll.u32 %v1131, 16
      %v1307 = vrot.slane %v1305, 5
      %v1308 = vsel %vm1164, %v1303, %v1307
      %v1310 = vshrl.u32 %v1132, 16
      %v1312 = vrot.slane %v1310, 4
      %v1313 = vshll.u32 %v1132, 16
      %v1315 = vrot.slane %v1313, 5
      %v1316 = vor.u32 %v1312, %v1315
      %v1317 = vrot.slane %v1316, 4
      %v1319 = vshll.u32 %v1133, 16
      %v1321 = vrot.slane %v1319, 5
      %v1322 = vsel %vm1164, %v1317, %v1321
      %v1323 = vshrl.u32 %v1133, 16
      %v1325 = vrot.slane %v1323, 4
      %v1326 = vor.u32 %v1325, %v1321
      %v1327 = vrot.slane %v1326, 4
      %v1329 = vshll.u32 %v1134, 16
      %v1331 = vrot.slane %v1329, 5
      %v1332 = vsel %vm1164, %v1327, %v1331
      %v1334 = vshrl.u32 %v1135, 16
      %v1336 = vrot.slane %v1334, 4
      %v1337 = vshll.u32 %v1135, 16
      %v1339 = vrot.slane %v1337, 5
      %v1340 = vor.u32 %v1336, %v1339
      %v1341 = vrot.slane %v1340, 4
      %v1343 = vshll.u32 %v1136, 16
      %v1345 = vrot.slane %v1343, 5
      %v1346 = vsel %vm1164, %v1341, %v1345
      %v1347 = vshrl.u32 %v1136, 16
      %v1349 = vrot.slane %v1347, 4
      %v1350 = vor.u32 %v1349, %v1345
      %v1351 = vrot.slane %v1350, 4
      %v1353 = vshll.u32 %v1137, 16
      %v1355 = vrot.slane %v1353, 5
      %v1356 = vsel %vm1164, %v1351, %v1355
      %v1358 = vshrl.u32 %v1138, 16
      %v1360 = vrot.slane %v1358, 4
      %v1361 = vshll.u32 %v1138, 16
      %v1363 = vrot.slane %v1361, 5
      %v1364 = vor.u32 %v1360, %v1363
      %v1365 = vrot.slane %v1364, 4
      %v1367 = vshll.u32 %v1139, 16
      %v1369 = vrot.slane %v1367, 5
      %v1370 = vsel %vm1164, %v1365, %v1369
      %v1371 = vshrl.u32 %v1139, 16
      %v1373 = vrot.slane %v1371, 4
      %v1374 = vor.u32 %v1373, %v1369
      %v1375 = vrot.slane %v1374, 4
      %v1377 = vshll.u32 %v1140, 16
      %v1379 = vrot.slane %v1377, 5
      %v1380 = vsel %vm1164, %v1375, %v1379
      %v1382 = vshrl.u32 %v1141, 16
      %v1384 = vrot.slane %v1382, 4
      %v1385 = vshll.u32 %v1141, 16
      %v1387 = vrot.slane %v1385, 5
      %v1388 = vor.u32 %v1384, %v1387
      %v1389 = vrot.slane %v1388, 4
      %v1391 = vshll.u32 %v1142, 16
      %v1393 = vrot.slane %v1391, 5
      %v1394 = vsel %vm1164, %v1389, %v1393
      %v1395 = vshrl.u32 %v1142, 16
      %v1397 = vrot.slane %v1395, 4
      %v1398 = vor.u32 %v1397, %v1393
      %v1399 = vrot.slane %v1398, 4
      %v1401 = vshll.u32 %v1143, 16
      %v1403 = vrot.slane %v1401, 5
      %v1404 = vsel %vm1164, %v1399, %v1403
      %v1406 = vshrl.u32 %v1144, 16
      %v1408 = vrot.slane %v1406, 4
      %v1409 = vshll.u32 %v1144, 16
      %v1411 = vrot.slane %v1409, 5
      %v1412 = vor.u32 %v1408, %v1411
      %v1413 = vrot.slane %v1412, 4
      %v1415 = vshll.u32 %v1145, 16
      %v1417 = vrot.slane %v1415, 5
      %v1418 = vsel %vm1164, %v1413, %v1417
      %v1419 = vshrl.u32 %v1145, 16
      %v1421 = vrot.slane %v1419, 4
      %v1422 = vor.u32 %v1421, %v1417
      %v1423 = vrot.slane %v1422, 4
      %v1425 = vshll.u32 %v1146, 16
      %v1427 = vrot.slane %v1425, 5
      %v1428 = vsel %vm1164, %v1423, %v1427
      %v1430 = vshrl.u32 %v1147, 16
      %v1432 = vrot.slane %v1430, 4
      %v1433 = vshll.u32 %v1147, 16
      %v1435 = vrot.slane %v1433, 5
      %v1436 = vor.u32 %v1432, %v1435
      %v1437 = vrot.slane %v1436, 4
      %v1439 = vshll.u32 %v1148, 16
      %v1441 = vrot.slane %v1439, 5
      %v1442 = vsel %vm1164, %v1437, %v1441
      %v1443 = vshrl.u32 %v1148, 16
      %v1445 = vrot.slane %v1443, 4
      %v1446 = vor.u32 %v1445, %v1441
      %v1447 = vrot.slane %v1446, 4
      %v1449 = vshll.u32 %v1149, 16
      %v1451 = vrot.slane %v1449, 5
      %v1452 = vsel %vm1164, %v1447, %v1451
      %v1454 = vshrl.u32 %v1150, 16
      %v1456 = vrot.slane %v1454, 4
      %v1457 = vshll.u32 %v1150, 16
      %v1459 = vrot.slane %v1457, 5
      %v1460 = vor.u32 %v1456, %v1459
      %v1461 = vrot.slane %v1460, 4
      %v1463 = vshll.u32 %v1151, 16
      %v1465 = vrot.slane %v1463, 5
      %v1466 = vsel %vm1164, %v1461, %v1465
      %v1467 = vshrl.u32 %v1151, 16
      %v1469 = vrot.slane %v1467, 4
      %v1470 = vor.u32 %v1469, %v1465
      %v1471 = vrot.slane %v1470, 4
      %v1473 = vshll.u32 %v1152, 16
      %v1475 = vrot.slane %v1473, 5
      %v1476 = vsel %vm1164, %v1471, %v1475
      %v1478 = vshrl.u32 %v1153, 16
      %v1480 = vrot.slane %v1478, 4
      %v1481 = vshll.u32 %v1153, 16
      %v1483 = vrot.slane %v1481, 5
      %v1484 = vor.u32 %v1480, %v1483
      %v1485 = vrot.slane %v1484, 4
      %v1487 = vshll.u32 %v1154, 16
      %v1489 = vrot.slane %v1487, 5
      %v1490 = vsel %vm1164, %v1485, %v1489
      %v1491 = vshrl.u32 %v1154, 16
      %v1493 = vrot.slane %v1491, 4
      %v1494 = vor.u32 %v1493, %v1489
      %v1495 = vrot.slane %v1494, 4
      %v1497 = vshll.u32 %v1155, 16
      %v1499 = vrot.slane %v1497, 5
      %v1500 = vsel %vm1164, %v1495, %v1499
      %v1502 = vshrl.u32 %v1156, 16
      %v1504 = vrot.slane %v1502, 4
      %v1505 = vshll.u32 %v1156, 16
      %v1507 = vrot.slane %v1505, 5
      %v1508 = vor.u32 %v1504, %v1507
      %v1509 = vrot.slane %v1508, 4
      %v1511 = vshll.u32 %v1157, 16
      %v1513 = vrot.slane %v1511, 5
      %v1514 = vsel %vm1164, %v1509, %v1513
      %v1515 = vshrl.u32 %v1157, 16
      %v1517 = vrot.slane %v1515, 4
      %v1518 = vor.u32 %v1517, %v1513
      %v1519 = vrot.slane %v1518, 4
      %v1521 = vshll.u32 %v1158, 16
      %v1523 = vrot.slane %v1521, 5
      %v1524 = vsel %vm1164, %v1519, %v1523
      %v1526 = vshrl.u32 %v1159, 16
      %v1528 = vrot.slane %v1526, 4
      %v1529 = vshll.u32 %v1159, 16
      %v1531 = vrot.slane %v1529, 5
      %v1532 = vor.u32 %v1528, %v1531
      %v1533 = vrot.slane %v1532, 4
      %v1535 = vshll.u32 %v1160, 16
      %v1537 = vrot.slane %v1535, 5
      %v1538 = vsel %vm1164, %v1533, %v1537
      %v1539 = vshrl.u32 %v1160, 16
      %v1541 = vrot.slane %v1539, 4
      %v1542 = vor.u32 %v1541, %v1537
      %v1543 = vrot.slane %v1542, 4
      %v1545 = vshll.u32 %v1161, 16
      %v1547 = vrot.slane %v1545, 5
      %v1548 = vsel %vm1164, %v1543, %v1547
      %v1549 = vunpack.c.l.b16 %v1178
      %v1550 = vunpack.c.l.b16 %v1188
      %v1551 = vunpack.c.l.b16 %v1202
      %v1552 = vunpack.c.l.b16 %v1212
      %v1553 = vunpack.c.l.b16 %v1226
      %v1554 = vunpack.c.l.b16 %v1236
      %v1555 = vunpack.c.l.b16 %v1250
      %v1556 = vunpack.c.l.b16 %v1260
      %v1557 = vunpack.c.l.b16 %v1274
      %v1558 = vunpack.c.l.b16 %v1284
      %v1559 = vunpack.c.l.b16 %v1298
      %v1560 = vunpack.c.l.b16 %v1308
      %v1561 = vunpack.c.l.b16 %v1322
      %v1562 = vunpack.c.l.b16 %v1332
      %v1563 = vunpack.c.l.b16 %v1346
      %v1564 = vunpack.c.l.b16 %v1356
      %v1565 = vunpack.c.l.b16 %v1370
      %v1566 = vunpack.c.l.b16 %v1380
      %v1567 = vunpack.c.l.b16 %v1394
      %v1568 = vunpack.c.l.b16 %v1404
      %v1569 = vunpack.c.l.b16 %v1418
      %v1570 = vunpack.c.l.b16 %v1428
      %v1571 = vunpack.c.l.b16 %v1442
      %v1572 = vunpack.c.l.b16 %v1452
      %v1573 = vunpack.c.l.b16 %v1466
      %v1574 = vunpack.c.l.b16 %v1476
      %v1575 = vunpack.c.l.b16 %v1490
      %v1576 = vunpack.c.l.b16 %v1500
      %v1577 = vunpack.c.l.b16 %v1514
      %v1578 = vunpack.c.l.b16 %v1524
      %v1579 = vunpack.c.l.b16 %v1538
      %v1580 = vunpack.c.l.b16 %v1548
      %v1581 = vpack.c.b16 %v1550, %v1549
      %v1582 = vpack.c.b16 %v1552, %v1551
      %v1583 = vpack.c.b16 %v1554, %v1553
      %v1584 = vpack.c.b16 %v1556, %v1555
      %v1585 = vpack.c.b16 %v1558, %v1557
      %v1586 = vpack.c.b16 %v1560, %v1559
      %v1587 = vpack.c.b16 %v1562, %v1561
      %v1588 = vpack.c.b16 %v1564, %v1563
      %v1589 = vpack.c.b16 %v1566, %v1565
      %v1590 = vpack.c.b16 %v1568, %v1567
      %v1591 = vpack.c.b16 %v1570, %v1569
      %v1592 = vpack.c.b16 %v1572, %v1571
      %v1593 = vpack.c.b16 %v1574, %v1573
      %v1594 = vpack.c.b16 %v1576, %v1575
      %v1595 = vpack.c.b16 %v1578, %v1577
      %v1596 = vpack.c.b16 %v1580, %v1579
      %1613 = vst [vmem:[#allocation3 + $0x8] sm:$0xff] %v1581
      %1614 = vst [vmem:[#allocation3 + $0x50] sm:$0xff] %v1582
      %1615 = vst [vmem:[#allocation3 + $0x98] sm:$0xff] %v1583
      %1616 = vst [vmem:[#allocation3 + $0xe0] sm:$0xff] %v1584
      %1617 = vst [vmem:[#allocation3 + $0x128] sm:$0xff] %v1585
      %1618 = vst [vmem:[#allocation3 + $0x170] sm:$0xff] %v1586
      %1619 = vst [vmem:[#allocation3 + $0x1b8] sm:$0xff] %v1587
      %1620 = vst [vmem:[#allocation3 + $0x200] sm:$0xff] %v1588
      %1621 = vst [vmem:[#allocation3 + $0x248] sm:$0xff] %v1589
      %1622 = vst [vmem:[#allocation3 + $0x290] sm:$0xff] %v1590
      %1623 = vst [vmem:[#allocation3 + $0x2d8] sm:$0xff] %v1591
      %1624 = vst [vmem:[#allocation3 + $0x320] sm:$0xff] %v1592
      %1625 = vst [vmem:[#allocation3 + $0x368] sm:$0xff] %v1593
      %1626 = vst [vmem:[#allocation3 + $0x3b0] sm:$0xff] %v1594
      %1627 = vst [vmem:[#allocation3 + $0x3f8] sm:$0xff] %v1595
      %1628 = vst [vmem:[#allocation3 + $0x440] sm:$0xff] %v1596
      %v1629 = vld [vmem:[#allocation2] sm:$0xe]
      %v1630 = vld [vmem:[#allocation2 + $0x4] sm:$0xf]
      %v1631 = vld [vmem:[#allocation2 + $0x8] sm:$0x1]
      %v1632 = vld [vmem:[#allocation2 + $0xc] sm:$0xe]
      %v1633 = vld [vmem:[#allocation2 + $0x10] sm:$0xf]
      %v1634 = vld [vmem:[#allocation2 + $0x14] sm:$0x1]
      %v1635 = vld [vmem:[#allocation2 + $0x18] sm:$0xe]
      %v1636 = vld [vmem:[#allocation2 + $0x1c] sm:$0xf]
      %v1637 = vld [vmem:[#allocation2 + $0x20] sm:$0x1]
      %v1638 = vld [vmem:[#allocation2 + $0x24] sm:$0xe]
      %v1639 = vld [vmem:[#allocation2 + $0x28] sm:$0xf]
      %v1640 = vld [vmem:[#allocation2 + $0x2c] sm:$0x1]
      %v1641 = vld [vmem:[#allocation2 + $0x30] sm:$0xe]
      %v1642 = vld [vmem:[#allocation2 + $0x34] sm:$0xf]
      %v1643 = vld [vmem:[#allocation2 + $0x38] sm:$0x1]
      %v1644 = vld [vmem:[#allocation2 + $0x3c] sm:$0xe]
      %v1645 = vld [vmem:[#allocation2 + $0x40] sm:$0xf]
      %v1646 = vld [vmem:[#allocation2 + $0x44] sm:$0x1]
      %v1647 = vld [vmem:[#allocation2 + $0x48] sm:$0xe]
      %v1648 = vld [vmem:[#allocation2 + $0x4c] sm:$0xf]
      %v1649 = vld [vmem:[#allocation2 + $0x50] sm:$0x1]
      %v1650 = vld [vmem:[#allocation2 + $0x54] sm:$0xe]
      %v1651 = vld [vmem:[#allocation2 + $0x58] sm:$0xf]
      %v1652 = vld [vmem:[#allocation2 + $0x5c] sm:$0x1]
      %v1653 = vld [vmem:[#allocation2 + $0x60] sm:$0xe]
      %v1654 = vld [vmem:[#allocation2 + $0x64] sm:$0xf]
      %v1655 = vld [vmem:[#allocation2 + $0x68] sm:$0x1]
      %v1656 = vld [vmem:[#allocation2 + $0x6c] sm:$0xe]
      %v1657 = vld [vmem:[#allocation2 + $0x70] sm:$0xf]
      %v1658 = vld [vmem:[#allocation2 + $0x74] sm:$0x1]
      %v1659 = vld [vmem:[#allocation2 + $0x78] sm:$0xe]
      %v1660 = vld [vmem:[#allocation2 + $0x7c] sm:$0xf]
      %v1661 = vld [vmem:[#allocation2 + $0x80] sm:$0x1]
      %v1662 = vld [vmem:[#allocation2 + $0x84] sm:$0xe]
      %v1663 = vld [vmem:[#allocation2 + $0x88] sm:$0xf]
      %v1664 = vld [vmem:[#allocation2 + $0x8c] sm:$0x1]
      %v1665 = vld [vmem:[#allocation2 + $0x90] sm:$0xe]
      %v1666 = vld [vmem:[#allocation2 + $0x94] sm:$0xf]
      %v1667 = vld [vmem:[#allocation2 + $0x98] sm:$0x1]
      %v1668 = vld [vmem:[#allocation2 + $0x9c] sm:$0xe]
      %v1669 = vld [vmem:[#allocation2 + $0xa0] sm:$0xf]
      %v1670 = vld [vmem:[#allocation2 + $0xa4] sm:$0x1]
      %v1671 = vld [vmem:[#allocation2 + $0xa8] sm:$0xe]
      %v1672 = vld [vmem:[#allocation2 + $0xac] sm:$0xf]
      %v1673 = vld [vmem:[#allocation2 + $0xb0] sm:$0x1]
      %v1674 = vld [vmem:[#allocation2 + $0xb4] sm:$0xe]
      %v1675 = vld [vmem:[#allocation2 + $0xb8] sm:$0xf]
      %v1676 = vld [vmem:[#allocation2 + $0xbc] sm:$0x1]
      %vm1725 = vcmask 1042432
      %vm1726 = vcmask 1046532
      %vm1727 = vmor %vm1725, %vm1726
      %v1728 = vrot.slane %v1629, 5
      %v1729 = vrot.slane %v1728, 4
      %v1730 = vrot.slane %v1630, 5
      %v1731 = vsel %vm1727, %v1729, %v1730
      %v1732 = vrot.slane %v1730, 4
      %v1733 = vrot.slane %v1631, 5
      %v1734 = vsel %vm1727, %v1732, %v1733
      %v1735 = vrot.slane %v1632, 5
      %v1736 = vrot.slane %v1735, 4
      %v1737 = vrot.slane %v1633, 5
      %v1738 = vsel %vm1727, %v1736, %v1737
      %v1739 = vrot.slane %v1737, 4
      %v1740 = vrot.slane %v1634, 5
      %v1741 = vsel %vm1727, %v1739, %v1740
      %v1742 = vrot.slane %v1635, 5
      %v1743 = vrot.slane %v1742, 4
      %v1744 = vrot.slane %v1636, 5
      %v1745 = vsel %vm1727, %v1743, %v1744
      %v1746 = vrot.slane %v1744, 4
      %v1747 = vrot.slane %v1637, 5
      %v1748 = vsel %vm1727, %v1746, %v1747
      %v1749 = vrot.slane %v1638, 5
      %v1750 = vrot.slane %v1749, 4
      %v1751 = vrot.slane %v1639, 5
      %v1752 = vsel %vm1727, %v1750, %v1751
      %v1753 = vrot.slane %v1751, 4
      %v1754 = vrot.slane %v1640, 5
      %v1755 = vsel %vm1727, %v1753, %v1754
      %v1756 = vrot.slane %v1641, 5
      %v1757 = vrot.slane %v1756, 4
      %v1758 = vrot.slane %v1642, 5
      %v1759 = vsel %vm1727, %v1757, %v1758
      %v1760 = vrot.slane %v1758, 4
      %v1761 = vrot.slane %v1643, 5
      %v1762 = vsel %vm1727, %v1760, %v1761
      %v1763 = vrot.slane %v1644, 5
      %v1764 = vrot.slane %v1763, 4
      %v1765 = vrot.slane %v1645, 5
      %v1766 = vsel %vm1727, %v1764, %v1765
      %v1767 = vrot.slane %v1765, 4
      %v1768 = vrot.slane %v1646, 5
      %v1769 = vsel %vm1727, %v1767, %v1768
      %v1770 = vrot.slane %v1647, 5
      %v1771 = vrot.slane %v1770, 4
      %v1772 = vrot.slane %v1648, 5
      %v1773 = vsel %vm1727, %v1771, %v1772
      %v1774 = vrot.slane %v1772, 4
      %v1775 = vrot.slane %v1649, 5
      %v1776 = vsel %vm1727, %v1774, %v1775
      %v1777 = vrot.slane %v1650, 5
      %v1778 = vrot.slane %v1777, 4
      %v1779 = vrot.slane %v1651, 5
      %v1780 = vsel %vm1727, %v1778, %v1779
      %v1781 = vrot.slane %v1779, 4
      %v1782 = vrot.slane %v1652, 5
      %v1783 = vsel %vm1727, %v1781, %v1782
      %v1784 = vrot.slane %v1653, 5
      %v1785 = vrot.slane %v1784, 4
      %v1786 = vrot.slane %v1654, 5
      %v1787 = vsel %vm1727, %v1785, %v1786
      %v1788 = vrot.slane %v1786, 4
      %v1789 = vrot.slane %v1655, 5
      %v1790 = vsel %vm1727, %v1788, %v1789
      %v1791 = vrot.slane %v1656, 5
      %v1792 = vrot.slane %v1791, 4
      %v1793 = vrot.slane %v1657, 5
      %v1794 = vsel %vm1727, %v1792, %v1793
      %v1795 = vrot.slane %v1793, 4
      %v1796 = vrot.slane %v1658, 5
      %v1797 = vsel %vm1727, %v1795, %v1796
      %v1798 = vrot.slane %v1659, 5
      %v1799 = vrot.slane %v1798, 4
      %v1800 = vrot.slane %v1660, 5
      %v1801 = vsel %vm1727, %v1799, %v1800
      %v1802 = vrot.slane %v1800, 4
      %v1803 = vrot.slane %v1661, 5
      %v1804 = vsel %vm1727, %v1802, %v1803
      %v1805 = vrot.slane %v1662, 5
      %v1806 = vrot.slane %v1805, 4
      %v1807 = vrot.slane %v1663, 5
      %v1808 = vsel %vm1727, %v1806, %v1807
      %v1809 = vrot.slane %v1807, 4
      %v1810 = vrot.slane %v1664, 5
      %v1811 = vsel %vm1727, %v1809, %v1810
      %v1812 = vrot.slane %v1665, 5
      %v1813 = vrot.slane %v1812, 4
      %v1814 = vrot.slane %v1666, 5
      %v1815 = vsel %vm1727, %v1813, %v1814
      %v1816 = vrot.slane %v1814, 4
      %v1817 = vrot.slane %v1667, 5
      %v1818 = vsel %vm1727, %v1816, %v1817
      %v1819 = vrot.slane %v1668, 5
      %v1820 = vrot.slane %v1819, 4
      %v1821 = vrot.slane %v1669, 5
      %v1822 = vsel %vm1727, %v1820, %v1821
      %v1823 = vrot.slane %v1821, 4
      %v1824 = vrot.slane %v1670, 5
      %v1825 = vsel %vm1727, %v1823, %v1824
      %v1826 = vrot.slane %v1671, 5
      %v1827 = vrot.slane %v1826, 4
      %v1828 = vrot.slane %v1672, 5
      %v1829 = vsel %vm1727, %v1827, %v1828
      %v1830 = vrot.slane %v1828, 4
      %v1831 = vrot.slane %v1673, 5
      %v1832 = vsel %vm1727, %v1830, %v1831
      %v1833 = vrot.slane %v1674, 5
      %v1834 = vrot.slane %v1833, 4
      %v1835 = vrot.slane %v1675, 5
      %v1836 = vsel %vm1727, %v1834, %v1835
      %v1837 = vrot.slane %v1835, 4
      %v1838 = vrot.slane %v1676, 5
      %v1839 = vsel %vm1727, %v1837, %v1838
      %v1840 = vunpack.c.l.b16 %v1731
      %v1841 = vunpack.c.l.b16 %v1734
      %v1842 = vunpack.c.l.b16 %v1738
      %v1843 = vunpack.c.l.b16 %v1741
      %v1844 = vunpack.c.l.b16 %v1745
      %v1845 = vunpack.c.l.b16 %v1748
      %v1846 = vunpack.c.l.b16 %v1752
      %v1847 = vunpack.c.l.b16 %v1755
      %v1848 = vunpack.c.l.b16 %v1759
      %v1849 = vunpack.c.l.b16 %v1762
      %v1850 = vunpack.c.l.b16 %v1766
      %v1851 = vunpack.c.l.b16 %v1769
      %v1852 = vunpack.c.l.b16 %v1773
      %v1853 = vunpack.c.l.b16 %v1776
      %v1854 = vunpack.c.l.b16 %v1780
      %v1855 = vunpack.c.l.b16 %v1783
      %v1856 = vunpack.c.l.b16 %v1787
      %v1857 = vunpack.c.l.b16 %v1790
      %v1858 = vunpack.c.l.b16 %v1794
      %v1859 = vunpack.c.l.b16 %v1797
      %v1860 = vunpack.c.l.b16 %v1801
      %v1861 = vunpack.c.l.b16 %v1804
      %v1862 = vunpack.c.l.b16 %v1808
      %v1863 = vunpack.c.l.b16 %v1811
      %v1864 = vunpack.c.l.b16 %v1815
      %v1865 = vunpack.c.l.b16 %v1818
      %v1866 = vunpack.c.l.b16 %v1822
      %v1867 = vunpack.c.l.b16 %v1825
      %v1868 = vunpack.c.l.b16 %v1829
      %v1869 = vunpack.c.l.b16 %v1832
      %v1870 = vunpack.c.l.b16 %v1836
      %v1871 = vunpack.c.l.b16 %v1839
      %v1872 = vpack.c.b16 %v1841, %v1840
      %v1873 = vpack.c.b16 %v1843, %v1842
      %v1874 = vpack.c.b16 %v1845, %v1844
      %v1875 = vpack.c.b16 %v1847, %v1846
      %v1876 = vpack.c.b16 %v1849, %v1848
      %v1877 = vpack.c.b16 %v1851, %v1850
      %v1878 = vpack.c.b16 %v1853, %v1852
      %v1879 = vpack.c.b16 %v1855, %v1854
      %v1880 = vpack.c.b16 %v1857, %v1856
      %v1881 = vpack.c.b16 %v1859, %v1858
      %v1882 = vpack.c.b16 %v1861, %v1860
      %v1883 = vpack.c.b16 %v1863, %v1862
      %v1884 = vpack.c.b16 %v1865, %v1864
      %v1885 = vpack.c.b16 %v1867, %v1866
      %v1886 = vpack.c.b16 %v1869, %v1868
      %v1887 = vpack.c.b16 %v1871, %v1870
      %1904 = vst [vmem:[#allocation3 + $0x10] sm:$0xff] %v1872
      %1905 = vst [vmem:[#allocation3 + $0x58] sm:$0xff] %v1873
      %1906 = vst [vmem:[#allocation3 + $0xa0] sm:$0xff] %v1874
      %1907 = vst [vmem:[#allocation3 + $0xe8] sm:$0xff] %v1875
      %1908 = vst [vmem:[#allocation3 + $0x130] sm:$0xff] %v1876
      %1909 = vst [vmem:[#allocation3 + $0x178] sm:$0xff] %v1877
      %1910 = vst [vmem:[#allocation3 + $0x1c0] sm:$0xff] %v1878
      %1911 = vst [vmem:[#allocation3 + $0x208] sm:$0xff] %v1879
      %1912 = vst [vmem:[#allocation3 + $0x250] sm:$0xff] %v1880
      %1913 = vst [vmem:[#allocation3 + $0x298] sm:$0xff] %v1881
      %1914 = vst [vmem:[#allocation3 + $0x2e0] sm:$0xff] %v1882
      %1915 = vst [vmem:[#allocation3 + $0x328] sm:$0xff] %v1883
      %1916 = vst [vmem:[#allocation3 + $0x370] sm:$0xff] %v1884
      %1917 = vst [vmem:[#allocation3 + $0x3b8] sm:$0xff] %v1885
      %1918 = vst [vmem:[#allocation3 + $0x400] sm:$0xff] %v1886
      %1919 = vst [vmem:[#allocation3 + $0x448] sm:$0xff] %v1887
      %v1920 = vld [vmem:[%s852] sm:$0xf]
      %v1921 = vld [vmem:[%s852 + $0x4] sm:$0xf]
      %v1922 = vld [vmem:[%s852 + $0xc] sm:$0xf]
      %v1923 = vld [vmem:[%s852 + $0x10] sm:$0xf]
      %v1924 = vld [vmem:[%s852 + $0x18] sm:$0xf]
      %v1925 = vld [vmem:[%s852 + $0x1c] sm:$0xf]
      %v1926 = vld [vmem:[%s852 + $0x24] sm:$0xf]
      %v1927 = vld [vmem:[%s852 + $0x28] sm:$0xf]
      %v1928 = vld [vmem:[%s852 + $0x30] sm:$0xf]
      %v1929 = vld [vmem:[%s852 + $0x34] sm:$0xf]
      %v1930 = vld [vmem:[%s852 + $0x3c] sm:$0xf]
      %v1931 = vld [vmem:[%s852 + $0x40] sm:$0xf]
      %v1932 = vld [vmem:[%s852 + $0x48] sm:$0xf]
      %v1933 = vld [vmem:[%s852 + $0x4c] sm:$0xf]
      %v1934 = vld [vmem:[%s852 + $0x54] sm:$0xf]
      %v1935 = vld [vmem:[%s852 + $0x58] sm:$0xf]
      %v1936 = vld [vmem:[%s852 + $0x60] sm:$0xf]
      %v1937 = vld [vmem:[%s852 + $0x64] sm:$0xf]
      %v1938 = vld [vmem:[%s852 + $0x6c] sm:$0xf]
      %v1939 = vld [vmem:[%s852 + $0x70] sm:$0xf]
      %v1940 = vld [vmem:[%s852 + $0x78] sm:$0xf]
      %v1941 = vld [vmem:[%s852 + $0x7c] sm:$0xf]
      %v1942 = vld [vmem:[%s852 + $0x84] sm:$0xf]
      %v1943 = vld [vmem:[%s852 + $0x88] sm:$0xf]
      %v1944 = vld [vmem:[%s852 + $0x90] sm:$0xf]
      %v1945 = vld [vmem:[%s852 + $0x94] sm:$0xf]
      %v1946 = vld [vmem:[%s852 + $0x9c] sm:$0xf]
      %v1947 = vld [vmem:[%s852 + $0xa0] sm:$0xf]
      %v1948 = vld [vmem:[%s852 + $0xa8] sm:$0xf]
      %v1949 = vld [vmem:[%s852 + $0xac] sm:$0xf]
      %v1950 = vld [vmem:[%s852 + $0xb4] sm:$0xf]
      %v1951 = vld [vmem:[%s852 + $0xb8] sm:$0xf]
      %v1984 = vunpack.c.l.b16 %v1920
      %v1985 = vunpack.c.l.b16 %v1921
      %v1986 = vunpack.c.l.b16 %v1922
      %v1987 = vunpack.c.l.b16 %v1923
      %v1988 = vunpack.c.l.b16 %v1924
      %v1989 = vunpack.c.l.b16 %v1925
      %v1990 = vunpack.c.l.b16 %v1926
      %v1991 = vunpack.c.l.b16 %v1927
      %v1992 = vunpack.c.l.b16 %v1928
      %v1993 = vunpack.c.l.b16 %v1929
      %v1994 = vunpack.c.l.b16 %v1930
      %v1995 = vunpack.c.l.b16 %v1931
      %v1996 = vunpack.c.l.b16 %v1932
      %v1997 = vunpack.c.l.b16 %v1933
      %v1998 = vunpack.c.l.b16 %v1934
      %v1999 = vunpack.c.l.b16 %v1935
      %v2000 = vunpack.c.l.b16 %v1936
      %v2001 = vunpack.c.l.b16 %v1937
      %v2002 = vunpack.c.l.b16 %v1938
      %v2003 = vunpack.c.l.b16 %v1939
      %v2004 = vunpack.c.l.b16 %v1940
      %v2005 = vunpack.c.l.b16 %v1941
      %v2006 = vunpack.c.l.b16 %v1942
      %v2007 = vunpack.c.l.b16 %v1943
      %v2008 = vunpack.c.l.b16 %v1944
      %v2009 = vunpack.c.l.b16 %v1945
      %v2010 = vunpack.c.l.b16 %v1946
      %v2011 = vunpack.c.l.b16 %v1947
      %v2012 = vunpack.c.l.b16 %v1948
      %v2013 = vunpack.c.l.b16 %v1949
      %v2014 = vunpack.c.l.b16 %v1950
      %v2015 = vunpack.c.l.b16 %v1951
      %v2016 = vpack.c.b16 %v1985, %v1984
      %v2017 = vpack.c.b16 %v1987, %v1986
      %v2018 = vpack.c.b16 %v1989, %v1988
      %v2019 = vpack.c.b16 %v1991, %v1990
      %v2020 = vpack.c.b16 %v1993, %v1992
      %v2021 = vpack.c.b16 %v1995, %v1994
      %v2022 = vpack.c.b16 %v1997, %v1996
      %v2023 = vpack.c.b16 %v1999, %v1998
      %v2024 = vpack.c.b16 %v2001, %v2000
      %v2025 = vpack.c.b16 %v2003, %v2002
      %v2026 = vpack.c.b16 %v2005, %v2004
      %v2027 = vpack.c.b16 %v2007, %v2006
      %v2028 = vpack.c.b16 %v2009, %v2008
      %v2029 = vpack.c.b16 %v2011, %v2010
      %v2030 = vpack.c.b16 %v2013, %v2012
      %v2031 = vpack.c.b16 %v2015, %v2014
      %2048 = vst [vmem:[#allocation3 + $0x18] sm:$0xff] %v2016
      %2049 = vst [vmem:[#allocation3 + $0x60] sm:$0xff] %v2017
      %2050 = vst [vmem:[#allocation3 + $0xa8] sm:$0xff] %v2018
      %2051 = vst [vmem:[#allocation3 + $0xf0] sm:$0xff] %v2019
      %2052 = vst [vmem:[#allocation3 + $0x138] sm:$0xff] %v2020
      %2053 = vst [vmem:[#allocation3 + $0x180] sm:$0xff] %v2021
      %2054 = vst [vmem:[#allocation3 + $0x1c8] sm:$0xff] %v2022
      %2055 = vst [vmem:[#allocation3 + $0x210] sm:$0xff] %v2023
      %2056 = vst [vmem:[#allocation3 + $0x258] sm:$0xff] %v2024
      %2057 = vst [vmem:[#allocation3 + $0x2a0] sm:$0xff] %v2025
      %2058 = vst [vmem:[#allocation3 + $0x2e8] sm:$0xff] %v2026
      %2059 = vst [vmem:[#allocation3 + $0x330] sm:$0xff] %v2027
      %2060 = vst [vmem:[#allocation3 + $0x378] sm:$0xff] %v2028
      %2061 = vst [vmem:[#allocation3 + $0x3c0] sm:$0xff] %v2029
      %2062 = vst [vmem:[#allocation3 + $0x408] sm:$0xff] %v2030
      %2063 = vst [vmem:[#allocation3 + $0x450] sm:$0xff] %v2031
      %v2064 = vld [vmem:[%s852] sm:$0xf]
      %v2065 = vld [vmem:[%s852 + $0x4] sm:$0xf]
      %v2066 = vld [vmem:[%s852 + $0x8] sm:$0x1]
      %v2067 = vld [vmem:[%s852 + $0xc] sm:$0xf]
      %v2068 = vld [vmem:[%s852 + $0x10] sm:$0xf]
      %v2069 = vld [vmem:[%s852 + $0x14] sm:$0x1]
      %v2070 = vld [vmem:[%s852 + $0x18] sm:$0xf]
      %v2071 = vld [vmem:[%s852 + $0x1c] sm:$0xf]
      %v2072 = vld [vmem:[%s852 + $0x20] sm:$0x1]
      %v2073 = vld [vmem:[%s852 + $0x24] sm:$0xf]
      %v2074 = vld [vmem:[%s852 + $0x28] sm:$0xf]
      %v2075 = vld [vmem:[%s852 + $0x2c] sm:$0x1]
      %v2076 = vld [vmem:[%s852 + $0x30] sm:$0xf]
      %v2077 = vld [vmem:[%s852 + $0x34] sm:$0xf]
      %v2078 = vld [vmem:[%s852 + $0x38] sm:$0x1]
      %v2079 = vld [vmem:[%s852 + $0x3c] sm:$0xf]
      %v2080 = vld [vmem:[%s852 + $0x40] sm:$0xf]
      %v2081 = vld [vmem:[%s852 + $0x44] sm:$0x1]
      %v2082 = vld [vmem:[%s852 + $0x48] sm:$0xf]
      %v2083 = vld [vmem:[%s852 + $0x4c] sm:$0xf]
      %v2084 = vld [vmem:[%s852 + $0x50] sm:$0x1]
      %v2085 = vld [vmem:[%s852 + $0x54] sm:$0xf]
      %v2086 = vld [vmem:[%s852 + $0x58] sm:$0xf]
      %v2087 = vld [vmem:[%s852 + $0x5c] sm:$0x1]
      %v2088 = vld [vmem:[%s852 + $0x60] sm:$0xf]
      %v2089 = vld [vmem:[%s852 + $0x64] sm:$0xf]
      %v2090 = vld [vmem:[%s852 + $0x68] sm:$0x1]
      %v2091 = vld [vmem:[%s852 + $0x6c] sm:$0xf]
      %v2092 = vld [vmem:[%s852 + $0x70] sm:$0xf]
      %v2093 = vld [vmem:[%s852 + $0x74] sm:$0x1]
      %v2094 = vld [vmem:[%s852 + $0x78] sm:$0xf]
      %v2095 = vld [vmem:[%s852 + $0x7c] sm:$0xf]
      %v2096 = vld [vmem:[%s852 + $0x80] sm:$0x1]
      %v2097 = vld [vmem:[%s852 + $0x84] sm:$0xf]
      %v2098 = vld [vmem:[%s852 + $0x88] sm:$0xf]
      %v2099 = vld [vmem:[%s852 + $0x8c] sm:$0x1]
      %v2100 = vld [vmem:[%s852 + $0x90] sm:$0xf]
      %v2101 = vld [vmem:[%s852 + $0x94] sm:$0xf]
      %v2102 = vld [vmem:[%s852 + $0x98] sm:$0x1]
      %v2103 = vld [vmem:[%s852 + $0x9c] sm:$0xf]
      %v2104 = vld [vmem:[%s852 + $0xa0] sm:$0xf]
      %v2105 = vld [vmem:[%s852 + $0xa4] sm:$0x1]
      %v2106 = vld [vmem:[%s852 + $0xa8] sm:$0xf]
      %v2107 = vld [vmem:[%s852 + $0xac] sm:$0xf]
      %v2108 = vld [vmem:[%s852 + $0xb0] sm:$0x1]
      %v2109 = vld [vmem:[%s852 + $0xb4] sm:$0xf]
      %v2110 = vld [vmem:[%s852 + $0xb8] sm:$0xf]
      %v2111 = vld [vmem:[%s852 + $0xbc] sm:$0x1]
      %v2113 = vshrl.u32 %v2064, 16
      %v2115 = vrot.slane %v2113, 4
      %v2116 = vshll.u32 %v2064, 16
      %v2118 = vrot.slane %v2116, 5
      %v2119 = vor.u32 %v2115, %v2118
      %v2120 = vrot.slane %v2119, 4
      %v2122 = vshll.u32 %v2065, 16
      %v2124 = vrot.slane %v2122, 5
      %v2125 = vsel %vm1164, %v2120, %v2124
      %v2126 = vshrl.u32 %v2065, 16
      %v2128 = vrot.slane %v2126, 4
      %v2129 = vor.u32 %v2128, %v2124
      %v2130 = vrot.slane %v2129, 4
      %v2132 = vshll.u32 %v2066, 16
      %v2134 = vrot.slane %v2132, 5
      %v2135 = vsel %vm1164, %v2130, %v2134
      %v2137 = vshrl.u32 %v2067, 16
      %v2139 = vrot.slane %v2137, 4
      %v2140 = vshll.u32 %v2067, 16
      %v2142 = vrot.slane %v2140, 5
      %v2143 = vor.u32 %v2139, %v2142
      %v2144 = vrot.slane %v2143, 4
      %v2146 = vshll.u32 %v2068, 16
      %v2148 = vrot.slane %v2146, 5
      %v2149 = vsel %vm1164, %v2144, %v2148
      %v2150 = vshrl.u32 %v2068, 16
      %v2152 = vrot.slane %v2150, 4
      %v2153 = vor.u32 %v2152, %v2148
      %v2154 = vrot.slane %v2153, 4
      %v2156 = vshll.u32 %v2069, 16
      %v2158 = vrot.slane %v2156, 5
      %v2159 = vsel %vm1164, %v2154, %v2158
      %v2161 = vshrl.u32 %v2070, 16
      %v2163 = vrot.slane %v2161, 4
      %v2164 = vshll.u32 %v2070, 16
      %v2166 = vrot.slane %v2164, 5
      %v2167 = vor.u32 %v2163, %v2166
      %v2168 = vrot.slane %v2167, 4
      %v2170 = vshll.u32 %v2071, 16
      %v2172 = vrot.slane %v2170, 5
      %v2173 = vsel %vm1164, %v2168, %v2172
      %v2174 = vshrl.u32 %v2071, 16
      %v2176 = vrot.slane %v2174, 4
      %v2177 = vor.u32 %v2176, %v2172
      %v2178 = vrot.slane %v2177, 4
      %v2180 = vshll.u32 %v2072, 16
      %v2182 = vrot.slane %v2180, 5
      %v2183 = vsel %vm1164, %v2178, %v2182
      %v2185 = vshrl.u32 %v2073, 16
      %v2187 = vrot.slane %v2185, 4
      %v2188 = vshll.u32 %v2073, 16
      %v2190 = vrot.slane %v2188, 5
      %v2191 = vor.u32 %v2187, %v2190
      %v2192 = vrot.slane %v2191, 4
      %v2194 = vshll.u32 %v2074, 16
      %v2196 = vrot.slane %v2194, 5
      %v2197 = vsel %vm1164, %v2192, %v2196
      %v2198 = vshrl.u32 %v2074, 16
      %v2200 = vrot.slane %v2198, 4
      %v2201 = vor.u32 %v2200, %v2196
      %v2202 = vrot.slane %v2201, 4
      %v2204 = vshll.u32 %v2075, 16
      %v2206 = vrot.slane %v2204, 5
      %v2207 = vsel %vm1164, %v2202, %v2206
      %v2209 = vshrl.u32 %v2076, 16
      %v2211 = vrot.slane %v2209, 4
      %v2212 = vshll.u32 %v2076, 16
      %v2214 = vrot.slane %v2212, 5
      %v2215 = vor.u32 %v2211, %v2214
      %v2216 = vrot.slane %v2215, 4
      %v2218 = vshll.u32 %v2077, 16
      %v2220 = vrot.slane %v2218, 5
      %v2221 = vsel %vm1164, %v2216, %v2220
      %v2222 = vshrl.u32 %v2077, 16
      %v2224 = vrot.slane %v2222, 4
      %v2225 = vor.u32 %v2224, %v2220
      %v2226 = vrot.slane %v2225, 4
      %v2228 = vshll.u32 %v2078, 16
      %v2230 = vrot.slane %v2228, 5
      %v2231 = vsel %vm1164, %v2226, %v2230
      %v2233 = vshrl.u32 %v2079, 16
      %v2235 = vrot.slane %v2233, 4
      %v2236 = vshll.u32 %v2079, 16
      %v2238 = vrot.slane %v2236, 5
      %v2239 = vor.u32 %v2235, %v2238
      %v2240 = vrot.slane %v2239, 4
      %v2242 = vshll.u32 %v2080, 16
      %v2244 = vrot.slane %v2242, 5
      %v2245 = vsel %vm1164, %v2240, %v2244
      %v2246 = vshrl.u32 %v2080, 16
      %v2248 = vrot.slane %v2246, 4
      %v2249 = vor.u32 %v2248, %v2244
      %v2250 = vrot.slane %v2249, 4
      %v2252 = vshll.u32 %v2081, 16
      %v2254 = vrot.slane %v2252, 5
      %v2255 = vsel %vm1164, %v2250, %v2254
      %v2257 = vshrl.u32 %v2082, 16
      %v2259 = vrot.slane %v2257, 4
      %v2260 = vshll.u32 %v2082, 16
      %v2262 = vrot.slane %v2260, 5
      %v2263 = vor.u32 %v2259, %v2262
      %v2264 = vrot.slane %v2263, 4
      %v2266 = vshll.u32 %v2083, 16
      %v2268 = vrot.slane %v2266, 5
      %v2269 = vsel %vm1164, %v2264, %v2268
      %v2270 = vshrl.u32 %v2083, 16
      %v2272 = vrot.slane %v2270, 4
      %v2273 = vor.u32 %v2272, %v2268
      %v2274 = vrot.slane %v2273, 4
      %v2276 = vshll.u32 %v2084, 16
      %v2278 = vrot.slane %v2276, 5
      %v2279 = vsel %vm1164, %v2274, %v2278
      %v2281 = vshrl.u32 %v2085, 16
      %v2283 = vrot.slane %v2281, 4
      %v2284 = vshll.u32 %v2085, 16
      %v2286 = vrot.slane %v2284, 5
      %v2287 = vor.u32 %v2283, %v2286
      %v2288 = vrot.slane %v2287, 4
      %v2290 = vshll.u32 %v2086, 16
      %v2292 = vrot.slane %v2290, 5
      %v2293 = vsel %vm1164, %v2288, %v2292
      %v2294 = vshrl.u32 %v2086, 16
      %v2296 = vrot.slane %v2294, 4
      %v2297 = vor.u32 %v2296, %v2292
      %v2298 = vrot.slane %v2297, 4
      %v2300 = vshll.u32 %v2087, 16
      %v2302 = vrot.slane %v2300, 5
      %v2303 = vsel %vm1164, %v2298, %v2302
      %v2305 = vshrl.u32 %v2088, 16
      %v2307 = vrot.slane %v2305, 4
      %v2308 = vshll.u32 %v2088, 16
      %v2310 = vrot.slane %v2308, 5
      %v2311 = vor.u32 %v2307, %v2310
      %v2312 = vrot.slane %v2311, 4
      %v2314 = vshll.u32 %v2089, 16
      %v2316 = vrot.slane %v2314, 5
      %v2317 = vsel %vm1164, %v2312, %v2316
      %v2318 = vshrl.u32 %v2089, 16
      %v2320 = vrot.slane %v2318, 4
      %v2321 = vor.u32 %v2320, %v2316
      %v2322 = vrot.slane %v2321, 4
      %v2324 = vshll.u32 %v2090, 16
      %v2326 = vrot.slane %v2324, 5
      %v2327 = vsel %vm1164, %v2322, %v2326
      %v2329 = vshrl.u32 %v2091, 16
      %v2331 = vrot.slane %v2329, 4
      %v2332 = vshll.u32 %v2091, 16
      %v2334 = vrot.slane %v2332, 5
      %v2335 = vor.u32 %v2331, %v2334
      %v2336 = vrot.slane %v2335, 4
      %v2338 = vshll.u32 %v2092, 16
      %v2340 = vrot.slane %v2338, 5
      %v2341 = vsel %vm1164, %v2336, %v2340
      %v2342 = vshrl.u32 %v2092, 16
      %v2344 = vrot.slane %v2342, 4
      %v2345 = vor.u32 %v2344, %v2340
      %v2346 = vrot.slane %v2345, 4
      %v2348 = vshll.u32 %v2093, 16
      %v2350 = vrot.slane %v2348, 5
      %v2351 = vsel %vm1164, %v2346, %v2350
      %v2353 = vshrl.u32 %v2094, 16
      %v2355 = vrot.slane %v2353, 4
      %v2356 = vshll.u32 %v2094, 16
      %v2358 = vrot.slane %v2356, 5
      %v2359 = vor.u32 %v2355, %v2358
      %v2360 = vrot.slane %v2359, 4
      %v2362 = vshll.u32 %v2095, 16
      %v2364 = vrot.slane %v2362, 5
      %v2365 = vsel %vm1164, %v2360, %v2364
      %v2366 = vshrl.u32 %v2095, 16
      %v2368 = vrot.slane %v2366, 4
      %v2369 = vor.u32 %v2368, %v2364
      %v2370 = vrot.slane %v2369, 4
      %v2372 = vshll.u32 %v2096, 16
      %v2374 = vrot.slane %v2372, 5
      %v2375 = vsel %vm1164, %v2370, %v2374
      %v2377 = vshrl.u32 %v2097, 16
      %v2379 = vrot.slane %v2377, 4
      %v2380 = vshll.u32 %v2097, 16
      %v2382 = vrot.slane %v2380, 5
      %v2383 = vor.u32 %v2379, %v2382
      %v2384 = vrot.slane %v2383, 4
      %v2386 = vshll.u32 %v2098, 16
      %v2388 = vrot.slane %v2386, 5
      %v2389 = vsel %vm1164, %v2384, %v2388
      %v2390 = vshrl.u32 %v2098, 16
      %v2392 = vrot.slane %v2390, 4
      %v2393 = vor.u32 %v2392, %v2388
      %v2394 = vrot.slane %v2393, 4
      %v2396 = vshll.u32 %v2099, 16
      %v2398 = vrot.slane %v2396, 5
      %v2399 = vsel %vm1164, %v2394, %v2398
      %v2401 = vshrl.u32 %v2100, 16
      %v2403 = vrot.slane %v2401, 4
      %v2404 = vshll.u32 %v2100, 16
      %v2406 = vrot.slane %v2404, 5
      %v2407 = vor.u32 %v2403, %v2406
      %v2408 = vrot.slane %v2407, 4
      %v2410 = vshll.u32 %v2101, 16
      %v2412 = vrot.slane %v2410, 5
      %v2413 = vsel %vm1164, %v2408, %v2412
      %v2414 = vshrl.u32 %v2101, 16
      %v2416 = vrot.slane %v2414, 4
      %v2417 = vor.u32 %v2416, %v2412
      %v2418 = vrot.slane %v2417, 4
      %v2420 = vshll.u32 %v2102, 16
      %v2422 = vrot.slane %v2420, 5
      %v2423 = vsel %vm1164, %v2418, %v2422
      %v2425 = vshrl.u32 %v2103, 16
      %v2427 = vrot.slane %v2425, 4
      %v2428 = vshll.u32 %v2103, 16
      %v2430 = vrot.slane %v2428, 5
      %v2431 = vor.u32 %v2427, %v2430
      %v2432 = vrot.slane %v2431, 4
      %v2434 = vshll.u32 %v2104, 16
      %v2436 = vrot.slane %v2434, 5
      %v2437 = vsel %vm1164, %v2432, %v2436
      %v2438 = vshrl.u32 %v2104, 16
      %v2440 = vrot.slane %v2438, 4
      %v2441 = vor.u32 %v2440, %v2436
      %v2442 = vrot.slane %v2441, 4
      %v2444 = vshll.u32 %v2105, 16
      %v2446 = vrot.slane %v2444, 5
      %v2447 = vsel %vm1164, %v2442, %v2446
      %v2449 = vshrl.u32 %v2106, 16
      %v2451 = vrot.slane %v2449, 4
      %v2452 = vshll.u32 %v2106, 16
      %v2454 = vrot.slane %v2452, 5
      %v2455 = vor.u32 %v2451, %v2454
      %v2456 = vrot.slane %v2455, 4
      %v2458 = vshll.u32 %v2107, 16
      %v2460 = vrot.slane %v2458, 5
      %v2461 = vsel %vm1164, %v2456, %v2460
      %v2462 = vshrl.u32 %v2107, 16
      %v2464 = vrot.slane %v2462, 4
      %v2465 = vor.u32 %v2464, %v2460
      %v2466 = vrot.slane %v2465, 4
      %v2468 = vshll.u32 %v2108, 16
      %v2470 = vrot.slane %v2468, 5
      %v2471 = vsel %vm1164, %v2466, %v2470
      %v2473 = vshrl.u32 %v2109, 16
      %v2475 = vrot.slane %v2473, 4
      %v2476 = vshll.u32 %v2109, 16
      %v2478 = vrot.slane %v2476, 5
      %v2479 = vor.u32 %v2475, %v2478
      %v2480 = vrot.slane %v2479, 4
      %v2482 = vshll.u32 %v2110, 16
      %v2484 = vrot.slane %v2482, 5
      %v2485 = vsel %vm1164, %v2480, %v2484
      %v2486 = vshrl.u32 %v2110, 16
      %v2488 = vrot.slane %v2486, 4
      %v2489 = vor.u32 %v2488, %v2484
      %v2490 = vrot.slane %v2489, 4
      %v2492 = vshll.u32 %v2111, 16
      %v2494 = vrot.slane %v2492, 5
      %v2495 = vsel %vm1164, %v2490, %v2494
      %v2496 = vunpack.c.l.b16 %v2125
      %v2497 = vunpack.c.l.b16 %v2135
      %v2498 = vunpack.c.l.b16 %v2149
      %v2499 = vunpack.c.l.b16 %v2159
      %v2500 = vunpack.c.l.b16 %v2173
      %v2501 = vunpack.c.l.b16 %v2183
      %v2502 = vunpack.c.l.b16 %v2197
      %v2503 = vunpack.c.l.b16 %v2207
      %v2504 = vunpack.c.l.b16 %v2221
      %v2505 = vunpack.c.l.b16 %v2231
      %v2506 = vunpack.c.l.b16 %v2245
      %v2507 = vunpack.c.l.b16 %v2255
      %v2508 = vunpack.c.l.b16 %v2269
      %v2509 = vunpack.c.l.b16 %v2279
      %v2510 = vunpack.c.l.b16 %v2293
      %v2511 = vunpack.c.l.b16 %v2303
      %v2512 = vunpack.c.l.b16 %v2317
      %v2513 = vunpack.c.l.b16 %v2327
      %v2514 = vunpack.c.l.b16 %v2341
      %v2515 = vunpack.c.l.b16 %v2351
      %v2516 = vunpack.c.l.b16 %v2365
      %v2517 = vunpack.c.l.b16 %v2375
      %v2518 = vunpack.c.l.b16 %v2389
      %v2519 = vunpack.c.l.b16 %v2399
      %v2520 = vunpack.c.l.b16 %v2413
      %v2521 = vunpack.c.l.b16 %v2423
      %v2522 = vunpack.c.l.b16 %v2437
      %v2523 = vunpack.c.l.b16 %v2447
      %v2524 = vunpack.c.l.b16 %v2461
      %v2525 = vunpack.c.l.b16 %v2471
      %v2526 = vunpack.c.l.b16 %v2485
      %v2527 = vunpack.c.l.b16 %v2495
      %v2528 = vpack.c.b16 %v2497, %v2496
      %v2529 = vpack.c.b16 %v2499, %v2498
      %v2530 = vpack.c.b16 %v2501, %v2500
      %v2531 = vpack.c.b16 %v2503, %v2502
      %v2532 = vpack.c.b16 %v2505, %v2504
      %v2533 = vpack.c.b16 %v2507, %v2506
      %v2534 = vpack.c.b16 %v2509, %v2508
      %v2535 = vpack.c.b16 %v2511, %v2510
      %v2536 = vpack.c.b16 %v2513, %v2512
      %v2537 = vpack.c.b16 %v2515, %v2514
      %v2538 = vpack.c.b16 %v2517, %v2516
      %v2539 = vpack.c.b16 %v2519, %v2518
      %v2540 = vpack.c.b16 %v2521, %v2520
      %v2541 = vpack.c.b16 %v2523, %v2522
      %v2542 = vpack.c.b16 %v2525, %v2524
      %v2543 = vpack.c.b16 %v2527, %v2526
      %2560 = vst [vmem:[#allocation3 + $0x20] sm:$0xff] %v2528
      %2561 = vst [vmem:[#allocation3 + $0x68] sm:$0xff] %v2529
      %2562 = vst [vmem:[#allocation3 + $0xb0] sm:$0xff] %v2530
      %2563 = vst [vmem:[#allocation3 + $0xf8] sm:$0xff] %v2531
      %2564 = vst [vmem:[#allocation3 + $0x140] sm:$0xff] %v2532
      %2565 = vst [vmem:[#allocation3 + $0x188] sm:$0xff] %v2533
      %2566 = vst [vmem:[#allocation3 + $0x1d0] sm:$0xff] %v2534
      %2567 = vst [vmem:[#allocation3 + $0x218] sm:$0xff] %v2535
      %2568 = vst [vmem:[#allocation3 + $0x260] sm:$0xff] %v2536
      %2569 = vst [vmem:[#allocation3 + $0x2a8] sm:$0xff] %v2537
      %2570 = vst [vmem:[#allocation3 + $0x2f0] sm:$0xff] %v2538
      %2571 = vst [vmem:[#allocation3 + $0x338] sm:$0xff] %v2539
      %2572 = vst [vmem:[#allocation3 + $0x380] sm:$0xff] %v2540
      %2573 = vst [vmem:[#allocation3 + $0x3c8] sm:$0xff] %v2541
      %2574 = vst [vmem:[#allocation3 + $0x410] sm:$0xff] %v2542
      %2575 = vst [vmem:[#allocation3 + $0x458] sm:$0xff] %v2543
      %v2576 = vld [vmem:[%s852] sm:$0xe]
      %v2577 = vld [vmem:[%s852 + $0x4] sm:$0xf]
      %v2578 = vld [vmem:[%s852 + $0x8] sm:$0x1]
      %v2579 = vld [vmem:[%s852 + $0xc] sm:$0xe]
      %v2580 = vld [vmem:[%s852 + $0x10] sm:$0xf]
      %v2581 = vld [vmem:[%s852 + $0x14] sm:$0x1]
      %v2582 = vld [vmem:[%s852 + $0x18] sm:$0xe]
      %v2583 = vld [vmem:[%s852 + $0x1c] sm:$0xf]
      %v2584 = vld [vmem:[%s852 + $0x20] sm:$0x1]
      %v2585 = vld [vmem:[%s852 + $0x24] sm:$0xe]
      %v2586 = vld [vmem:[%s852 + $0x28] sm:$0xf]
      %v2587 = vld [vmem:[%s852 + $0x2c] sm:$0x1]
      %v2588 = vld [vmem:[%s852 + $0x30] sm:$0xe]
      %v2589 = vld [vmem:[%s852 + $0x34] sm:$0xf]
      %v2590 = vld [vmem:[%s852 + $0x38] sm:$0x1]
      %v2591 = vld [vmem:[%s852 + $0x3c] sm:$0xe]
      %v2592 = vld [vmem:[%s852 + $0x40] sm:$0xf]
      %v2593 = vld [vmem:[%s852 + $0x44] sm:$0x1]
      %v2594 = vld [vmem:[%s852 + $0x48] sm:$0xe]
      %v2595 = vld [vmem:[%s852 + $0x4c] sm:$0xf]
      %v2596 = vld [vmem:[%s852 + $0x50] sm:$0x1]
      %v2597 = vld [vmem:[%s852 + $0x54] sm:$0xe]
      %v2598 = vld [vmem:[%s852 + $0x58] sm:$0xf]
      %v2599 = vld [vmem:[%s852 + $0x5c] sm:$0x1]
      %v2600 = vld [vmem:[%s852 + $0x60] sm:$0xe]
      %v2601 = vld [vmem:[%s852 + $0x64] sm:$0xf]
      %v2602 = vld [vmem:[%s852 + $0x68] sm:$0x1]
      %v2603 = vld [vmem:[%s852 + $0x6c] sm:$0xe]
      %v2604 = vld [vmem:[%s852 + $0x70] sm:$0xf]
      %v2605 = vld [vmem:[%s852 + $0x74] sm:$0x1]
      %v2606 = vld [vmem:[%s852 + $0x78] sm:$0xe]
      %v2607 = vld [vmem:[%s852 + $0x7c] sm:$0xf]
      %v2608 = vld [vmem:[%s852 + $0x80] sm:$0x1]
      %v2609 = vld [vmem:[%s852 + $0x84] sm:$0xe]
      %v2610 = vld [vmem:[%s852 + $0x88] sm:$0xf]
      %v2611 = vld [vmem:[%s852 + $0x8c] sm:$0x1]
      %v2612 = vld [vmem:[%s852 + $0x90] sm:$0xe]
      %v2613 = vld [vmem:[%s852 + $0x94] sm:$0xf]
      %v2614 = vld [vmem:[%s852 + $0x98] sm:$0x1]
      %v2615 = vld [vmem:[%s852 + $0x9c] sm:$0xe]
      %v2616 = vld [vmem:[%s852 + $0xa0] sm:$0xf]
      %v2617 = vld [vmem:[%s852 + $0xa4] sm:$0x1]
      %v2618 = vld [vmem:[%s852 + $0xa8] sm:$0xe]
      %v2619 = vld [vmem:[%s852 + $0xac] sm:$0xf]
      %v2620 = vld [vmem:[%s852 + $0xb0] sm:$0x1]
      %v2621 = vld [vmem:[%s852 + $0xb4] sm:$0xe]
      %v2622 = vld [vmem:[%s852 + $0xb8] sm:$0xf]
      %v2623 = vld [vmem:[%s852 + $0xbc] sm:$0x1]
      %v2672 = vrot.slane %v2576, 5
      %v2673 = vrot.slane %v2672, 4
      %v2674 = vrot.slane %v2577, 5
      %v2675 = vsel %vm1727, %v2673, %v2674
      %v2676 = vrot.slane %v2674, 4
      %v2677 = vrot.slane %v2578, 5
      %v2678 = vsel %vm1727, %v2676, %v2677
      %v2679 = vrot.slane %v2579, 5
      %v2680 = vrot.slane %v2679, 4
      %v2681 = vrot.slane %v2580, 5
      %v2682 = vsel %vm1727, %v2680, %v2681
      %v2683 = vrot.slane %v2681, 4
      %v2684 = vrot.slane %v2581, 5
      %v2685 = vsel %vm1727, %v2683, %v2684
      %v2686 = vrot.slane %v2582, 5
      %v2687 = vrot.slane %v2686, 4
      %v2688 = vrot.slane %v2583, 5
      %v2689 = vsel %vm1727, %v2687, %v2688
      %v2690 = vrot.slane %v2688, 4
      %v2691 = vrot.slane %v2584, 5
      %v2692 = vsel %vm1727, %v2690, %v2691
      %v2693 = vrot.slane %v2585, 5
      %v2694 = vrot.slane %v2693, 4
      %v2695 = vrot.slane %v2586, 5
      %v2696 = vsel %vm1727, %v2694, %v2695
      %v2697 = vrot.slane %v2695, 4
      %v2698 = vrot.slane %v2587, 5
      %v2699 = vsel %vm1727, %v2697, %v2698
      %v2700 = vrot.slane %v2588, 5
      %v2701 = vrot.slane %v2700, 4
      %v2702 = vrot.slane %v2589, 5
      %v2703 = vsel %vm1727, %v2701, %v2702
      %v2704 = vrot.slane %v2702, 4
      %v2705 = vrot.slane %v2590, 5
      %v2706 = vsel %vm1727, %v2704, %v2705
      %v2707 = vrot.slane %v2591, 5
      %v2708 = vrot.slane %v2707, 4
      %v2709 = vrot.slane %v2592, 5
      %v2710 = vsel %vm1727, %v2708, %v2709
      %v2711 = vrot.slane %v2709, 4
      %v2712 = vrot.slane %v2593, 5
      %v2713 = vsel %vm1727, %v2711, %v2712
      %v2714 = vrot.slane %v2594, 5
      %v2715 = vrot.slane %v2714, 4
      %v2716 = vrot.slane %v2595, 5
      %v2717 = vsel %vm1727, %v2715, %v2716
      %v2718 = vrot.slane %v2716, 4
      %v2719 = vrot.slane %v2596, 5
      %v2720 = vsel %vm1727, %v2718, %v2719
      %v2721 = vrot.slane %v2597, 5
      %v2722 = vrot.slane %v2721, 4
      %v2723 = vrot.slane %v2598, 5
      %v2724 = vsel %vm1727, %v2722, %v2723
      %v2725 = vrot.slane %v2723, 4
      %v2726 = vrot.slane %v2599, 5
      %v2727 = vsel %vm1727, %v2725, %v2726
      %v2728 = vrot.slane %v2600, 5
      %v2729 = vrot.slane %v2728, 4
      %v2730 = vrot.slane %v2601, 5
      %v2731 = vsel %vm1727, %v2729, %v2730
      %v2732 = vrot.slane %v2730, 4
      %v2733 = vrot.slane %v2602, 5
      %v2734 = vsel %vm1727, %v2732, %v2733
      %v2735 = vrot.slane %v2603, 5
      %v2736 = vrot.slane %v2735, 4
      %v2737 = vrot.slane %v2604, 5
      %v2738 = vsel %vm1727, %v2736, %v2737
      %v2739 = vrot.slane %v2737, 4
      %v2740 = vrot.slane %v2605, 5
      %v2741 = vsel %vm1727, %v2739, %v2740
      %v2742 = vrot.slane %v2606, 5
      %v2743 = vrot.slane %v2742, 4
      %v2744 = vrot.slane %v2607, 5
      %v2745 = vsel %vm1727, %v2743, %v2744
      %v2746 = vrot.slane %v2744, 4
      %v2747 = vrot.slane %v2608, 5
      %v2748 = vsel %vm1727, %v2746, %v2747
      %v2749 = vrot.slane %v2609, 5
      %v2750 = vrot.slane %v2749, 4
      %v2751 = vrot.slane %v2610, 5
      %v2752 = vsel %vm1727, %v2750, %v2751
      %v2753 = vrot.slane %v2751, 4
      %v2754 = vrot.slane %v2611, 5
      %v2755 = vsel %vm1727, %v2753, %v2754
      %v2756 = vrot.slane %v2612, 5
      %v2757 = vrot.slane %v2756, 4
      %v2758 = vrot.slane %v2613, 5
      %v2759 = vsel %vm1727, %v2757, %v2758
      %v2760 = vrot.slane %v2758, 4
      %v2761 = vrot.slane %v2614, 5
      %v2762 = vsel %vm1727, %v2760, %v2761
      %v2763 = vrot.slane %v2615, 5
      %v2764 = vrot.slane %v2763, 4
      %v2765 = vrot.slane %v2616, 5
      %v2766 = vsel %vm1727, %v2764, %v2765
      %v2767 = vrot.slane %v2765, 4
      %v2768 = vrot.slane %v2617, 5
      %v2769 = vsel %vm1727, %v2767, %v2768
      %v2770 = vrot.slane %v2618, 5
      %v2771 = vrot.slane %v2770, 4
      %v2772 = vrot.slane %v2619, 5
      %v2773 = vsel %vm1727, %v2771, %v2772
      %v2774 = vrot.slane %v2772, 4
      %v2775 = vrot.slane %v2620, 5
      %v2776 = vsel %vm1727, %v2774, %v2775
      %v2777 = vrot.slane %v2621, 5
      %v2778 = vrot.slane %v2777, 4
      %v2779 = vrot.slane %v2622, 5
      %v2780 = vsel %vm1727, %v2778, %v2779
      %v2781 = vrot.slane %v2779, 4
      %v2782 = vrot.slane %v2623, 5
      %v2783 = vsel %vm1727, %v2781, %v2782
      %v2784 = vunpack.c.l.b16 %v2675
      %v2785 = vunpack.c.l.b16 %v2678
      %v2786 = vunpack.c.l.b16 %v2682
      %v2787 = vunpack.c.l.b16 %v2685
      %v2788 = vunpack.c.l.b16 %v2689
      %v2789 = vunpack.c.l.b16 %v2692
      %v2790 = vunpack.c.l.b16 %v2696
      %v2791 = vunpack.c.l.b16 %v2699
      %v2792 = vunpack.c.l.b16 %v2703
      %v2793 = vunpack.c.l.b16 %v2706
      %v2794 = vunpack.c.l.b16 %v2710
      %v2795 = vunpack.c.l.b16 %v2713
      %v2796 = vunpack.c.l.b16 %v2717
      %v2797 = vunpack.c.l.b16 %v2720
      %v2798 = vunpack.c.l.b16 %v2724
      %v2799 = vunpack.c.l.b16 %v2727
      %v2800 = vunpack.c.l.b16 %v2731
      %v2801 = vunpack.c.l.b16 %v2734
      %v2802 = vunpack.c.l.b16 %v2738
      %v2803 = vunpack.c.l.b16 %v2741
      %v2804 = vunpack.c.l.b16 %v2745
      %v2805 = vunpack.c.l.b16 %v2748
      %v2806 = vunpack.c.l.b16 %v2752
      %v2807 = vunpack.c.l.b16 %v2755
      %v2808 = vunpack.c.l.b16 %v2759
      %v2809 = vunpack.c.l.b16 %v2762
      %v2810 = vunpack.c.l.b16 %v2766
      %v2811 = vunpack.c.l.b16 %v2769
      %v2812 = vunpack.c.l.b16 %v2773
      %v2813 = vunpack.c.l.b16 %v2776
      %v2814 = vunpack.c.l.b16 %v2780
      %v2815 = vunpack.c.l.b16 %v2783
      %v2816 = vpack.c.b16 %v2785, %v2784
      %v2817 = vpack.c.b16 %v2787, %v2786
      %v2818 = vpack.c.b16 %v2789, %v2788
      %v2819 = vpack.c.b16 %v2791, %v2790
      %v2820 = vpack.c.b16 %v2793, %v2792
      %v2821 = vpack.c.b16 %v2795, %v2794
      %v2822 = vpack.c.b16 %v2797, %v2796
      %v2823 = vpack.c.b16 %v2799, %v2798
      %v2824 = vpack.c.b16 %v2801, %v2800
      %v2825 = vpack.c.b16 %v2803, %v2802
      %v2826 = vpack.c.b16 %v2805, %v2804
      %v2827 = vpack.c.b16 %v2807, %v2806
      %v2828 = vpack.c.b16 %v2809, %v2808
      %v2829 = vpack.c.b16 %v2811, %v2810
      %v2830 = vpack.c.b16 %v2813, %v2812
      %v2831 = vpack.c.b16 %v2815, %v2814
      %2848 = vst [vmem:[#allocation3 + $0x28] sm:$0xff] %v2816
      %2849 = vst [vmem:[#allocation3 + $0x70] sm:$0xff] %v2817
      %2850 = vst [vmem:[#allocation3 + $0xb8] sm:$0xff] %v2818
      %2851 = vst [vmem:[#allocation3 + $0x100] sm:$0xff] %v2819
      %2852 = vst [vmem:[#allocation3 + $0x148] sm:$0xff] %v2820
      %2853 = vst [vmem:[#allocation3 + $0x190] sm:$0xff] %v2821
      %2854 = vst [vmem:[#allocation3 + $0x1d8] sm:$0xff] %v2822
      %2855 = vst [vmem:[#allocation3 + $0x220] sm:$0xff] %v2823
      %2856 = vst [vmem:[#allocation3 + $0x268] sm:$0xff] %v2824
      %2857 = vst [vmem:[#allocation3 + $0x2b0] sm:$0xff] %v2825
      %2858 = vst [vmem:[#allocation3 + $0x2f8] sm:$0xff] %v2826
      %2859 = vst [vmem:[#allocation3 + $0x340] sm:$0xff] %v2827
      %2860 = vst [vmem:[#allocation3 + $0x388] sm:$0xff] %v2828
      %2861 = vst [vmem:[#allocation3 + $0x3d0] sm:$0xff] %v2829
      %2862 = vst [vmem:[#allocation3 + $0x418] sm:$0xff] %v2830
      %2863 = vst [vmem:[#allocation3 + $0x460] sm:$0xff] %v2831
      %s2864 = scalar_lea.vmem [#allocation2], 24
      %v2865 = vld [vmem:[%s2864] sm:$0xf]
      %v2866 = vld [vmem:[%s2864 + $0x4] sm:$0xf]
      %v2867 = vld [vmem:[%s2864 + $0xc] sm:$0xf]
      %v2868 = vld [vmem:[%s2864 + $0x10] sm:$0xf]
      %v2869 = vld [vmem:[%s2864 + $0x18] sm:$0xf]
      %v2870 = vld [vmem:[%s2864 + $0x1c] sm:$0xf]
      %v2871 = vld [vmem:[%s2864 + $0x24] sm:$0xf]
      %v2872 = vld [vmem:[%s2864 + $0x28] sm:$0xf]
      %v2873 = vld [vmem:[%s2864 + $0x30] sm:$0xf]
      %v2874 = vld [vmem:[%s2864 + $0x34] sm:$0xf]
      %v2875 = vld [vmem:[%s2864 + $0x3c] sm:$0xf]
      %v2876 = vld [vmem:[%s2864 + $0x40] sm:$0xf]
      %v2877 = vld [vmem:[%s2864 + $0x48] sm:$0xf]
      %v2878 = vld [vmem:[%s2864 + $0x4c] sm:$0xf]
      %v2879 = vld [vmem:[%s2864 + $0x54] sm:$0xf]
      %v2880 = vld [vmem:[%s2864 + $0x58] sm:$0xf]
      %v2881 = vld [vmem:[%s2864 + $0x60] sm:$0xf]
      %v2882 = vld [vmem:[%s2864 + $0x64] sm:$0xf]
      %v2883 = vld [vmem:[%s2864 + $0x6c] sm:$0xf]
      %v2884 = vld [vmem:[%s2864 + $0x70] sm:$0xf]
      %v2885 = vld [vmem:[%s2864 + $0x78] sm:$0xf]
      %v2886 = vld [vmem:[%s2864 + $0x7c] sm:$0xf]
      %v2887 = vld [vmem:[%s2864 + $0x84] sm:$0xf]
      %v2888 = vld [vmem:[%s2864 + $0x88] sm:$0xf]
      %v2889 = vld [vmem:[%s2864 + $0x90] sm:$0xf]
      %v2890 = vld [vmem:[%s2864 + $0x94] sm:$0xf]
      %v2891 = vld [vmem:[%s2864 + $0x9c] sm:$0xf]
      %v2892 = vld [vmem:[%s2864 + $0xa0] sm:$0xf]
      %v2893 = vld [vmem:[%s2864 + $0xa8] sm:$0xf]
      %v2894 = vld [vmem:[%s2864 + $0xac] sm:$0xf]
      %v2895 = vld [vmem:[%s2864 + $0xb4] sm:$0xf]
      %v2896 = vld [vmem:[%s2864 + $0xb8] sm:$0xf]
      %v2929 = vunpack.c.l.b16 %v2865
      %v2930 = vunpack.c.l.b16 %v2866
      %v2931 = vunpack.c.l.b16 %v2867
      %v2932 = vunpack.c.l.b16 %v2868
      %v2933 = vunpack.c.l.b16 %v2869
      %v2934 = vunpack.c.l.b16 %v2870
      %v2935 = vunpack.c.l.b16 %v2871
      %v2936 = vunpack.c.l.b16 %v2872
      %v2937 = vunpack.c.l.b16 %v2873
      %v2938 = vunpack.c.l.b16 %v2874
      %v2939 = vunpack.c.l.b16 %v2875
      %v2940 = vunpack.c.l.b16 %v2876
      %v2941 = vunpack.c.l.b16 %v2877
      %v2942 = vunpack.c.l.b16 %v2878
      %v2943 = vunpack.c.l.b16 %v2879
      %v2944 = vunpack.c.l.b16 %v2880
      %v2945 = vunpack.c.l.b16 %v2881
      %v2946 = vunpack.c.l.b16 %v2882
      %v2947 = vunpack.c.l.b16 %v2883
      %v2948 = vunpack.c.l.b16 %v2884
      %v2949 = vunpack.c.l.b16 %v2885
      %v2950 = vunpack.c.l.b16 %v2886
      %v2951 = vunpack.c.l.b16 %v2887
      %v2952 = vunpack.c.l.b16 %v2888
      %v2953 = vunpack.c.l.b16 %v2889
      %v2954 = vunpack.c.l.b16 %v2890
      %v2955 = vunpack.c.l.b16 %v2891
      %v2956 = vunpack.c.l.b16 %v2892
      %v2957 = vunpack.c.l.b16 %v2893
      %v2958 = vunpack.c.l.b16 %v2894
      %v2959 = vunpack.c.l.b16 %v2895
      %v2960 = vunpack.c.l.b16 %v2896
      %v2961 = vpack.c.b16 %v2930, %v2929
      %v2962 = vpack.c.b16 %v2932, %v2931
      %v2963 = vpack.c.b16 %v2934, %v2933
      %v2964 = vpack.c.b16 %v2936, %v2935
      %v2965 = vpack.c.b16 %v2938, %v2937
      %v2966 = vpack.c.b16 %v2940, %v2939
      %v2967 = vpack.c.b16 %v2942, %v2941
      %v2968 = vpack.c.b16 %v2944, %v2943
      %v2969 = vpack.c.b16 %v2946, %v2945
      %v2970 = vpack.c.b16 %v2948, %v2947
      %v2971 = vpack.c.b16 %v2950, %v2949
      %v2972 = vpack.c.b16 %v2952, %v2951
      %v2973 = vpack.c.b16 %v2954, %v2953
      %v2974 = vpack.c.b16 %v2956, %v2955
      %v2975 = vpack.c.b16 %v2958, %v2957
      %v2976 = vpack.c.b16 %v2960, %v2959
      %2993 = vst [vmem:[#allocation3 + $0x30] sm:$0xff] %v2961
      %2994 = vst [vmem:[#allocation3 + $0x78] sm:$0xff] %v2962
      %2995 = vst [vmem:[#allocation3 + $0xc0] sm:$0xff] %v2963
      %2996 = vst [vmem:[#allocation3 + $0x108] sm:$0xff] %v2964
      %2997 = vst [vmem:[#allocation3 + $0x150] sm:$0xff] %v2965
      %2998 = vst [vmem:[#allocation3 + $0x198] sm:$0xff] %v2966
      %2999 = vst [vmem:[#allocation3 + $0x1e0] sm:$0xff] %v2967
      %3000 = vst [vmem:[#allocation3 + $0x228] sm:$0xff] %v2968
      %3001 = vst [vmem:[#allocation3 + $0x270] sm:$0xff] %v2969
      %3002 = vst [vmem:[#allocation3 + $0x2b8] sm:$0xff] %v2970
      %3003 = vst [vmem:[#allocation3 + $0x300] sm:$0xff] %v2971
      %3004 = vst [vmem:[#allocation3 + $0x348] sm:$0xff] %v2972
      %3005 = vst [vmem:[#allocation3 + $0x390] sm:$0xff] %v2973
      %3006 = vst [vmem:[#allocation3 + $0x3d8] sm:$0xff] %v2974
      %3007 = vst [vmem:[#allocation3 + $0x420] sm:$0xff] %v2975
      %3008 = vst [vmem:[#allocation3 + $0x468] sm:$0xff] %v2976
      %v3009 = vld [vmem:[%s2864] sm:$0xf]
      %v3010 = vld [vmem:[%s2864 + $0x4] sm:$0xf]
      %v3011 = vld [vmem:[%s2864 + $0x8] sm:$0x1]
      %v3012 = vld [vmem:[%s2864 + $0xc] sm:$0xf]
      %v3013 = vld [vmem:[%s2864 + $0x10] sm:$0xf]
      %v3014 = vld [vmem:[%s2864 + $0x14] sm:$0x1]
      %v3015 = vld [vmem:[%s2864 + $0x18] sm:$0xf]
      %v3016 = vld [vmem:[%s2864 + $0x1c] sm:$0xf]
      %v3017 = vld [vmem:[%s2864 + $0x20] sm:$0x1]
      %v3018 = vld [vmem:[%s2864 + $0x24] sm:$0xf]
      %v3019 = vld [vmem:[%s2864 + $0x28] sm:$0xf]
      %v3020 = vld [vmem:[%s2864 + $0x2c] sm:$0x1]
      %v3021 = vld [vmem:[%s2864 + $0x30] sm:$0xf]
      %v3022 = vld [vmem:[%s2864 + $0x34] sm:$0xf]
      %v3023 = vld [vmem:[%s2864 + $0x38] sm:$0x1]
      %v3024 = vld [vmem:[%s2864 + $0x3c] sm:$0xf]
      %v3025 = vld [vmem:[%s2864 + $0x40] sm:$0xf]
      %v3026 = vld [vmem:[%s2864 + $0x44] sm:$0x1]
      %v3027 = vld [vmem:[%s2864 + $0x48] sm:$0xf]
      %v3028 = vld [vmem:[%s2864 + $0x4c] sm:$0xf]
      %v3029 = vld [vmem:[%s2864 + $0x50] sm:$0x1]
      %v3030 = vld [vmem:[%s2864 + $0x54] sm:$0xf]
      %v3031 = vld [vmem:[%s2864 + $0x58] sm:$0xf]
      %v3032 = vld [vmem:[%s2864 + $0x5c] sm:$0x1]
      %v3033 = vld [vmem:[%s2864 + $0x60] sm:$0xf]
      %v3034 = vld [vmem:[%s2864 + $0x64] sm:$0xf]
      %v3035 = vld [vmem:[%s2864 + $0x68] sm:$0x1]
      %v3036 = vld [vmem:[%s2864 + $0x6c] sm:$0xf]
      %v3037 = vld [vmem:[%s2864 + $0x70] sm:$0xf]
      %v3038 = vld [vmem:[%s2864 + $0x74] sm:$0x1]
      %v3039 = vld [vmem:[%s2864 + $0x78] sm:$0xf]
      %v3040 = vld [vmem:[%s2864 + $0x7c] sm:$0xf]
      %v3041 = vld [vmem:[%s2864 + $0x80] sm:$0x1]
      %v3042 = vld [vmem:[%s2864 + $0x84] sm:$0xf]
      %v3043 = vld [vmem:[%s2864 + $0x88] sm:$0xf]
      %v3044 = vld [vmem:[%s2864 + $0x8c] sm:$0x1]
      %v3045 = vld [vmem:[%s2864 + $0x90] sm:$0xf]
      %v3046 = vld [vmem:[%s2864 + $0x94] sm:$0xf]
      %v3047 = vld [vmem:[%s2864 + $0x98] sm:$0x1]
      %v3048 = vld [vmem:[%s2864 + $0x9c] sm:$0xf]
      %v3049 = vld [vmem:[%s2864 + $0xa0] sm:$0xf]
      %v3050 = vld [vmem:[%s2864 + $0xa4] sm:$0x1]
      %v3051 = vld [vmem:[%s2864 + $0xa8] sm:$0xf]
      %v3052 = vld [vmem:[%s2864 + $0xac] sm:$0xf]
      %v3053 = vld [vmem:[%s2864 + $0xb0] sm:$0x1]
      %v3054 = vld [vmem:[%s2864 + $0xb4] sm:$0xf]
      %v3055 = vld [vmem:[%s2864 + $0xb8] sm:$0xf]
      %v3056 = vld [vmem:[%s2864 + $0xbc] sm:$0x1]
      %v3058 = vshrl.u32 %v3009, 16
      %v3060 = vrot.slane %v3058, 4
      %v3061 = vshll.u32 %v3009, 16
      %v3063 = vrot.slane %v3061, 5
      %v3064 = vor.u32 %v3060, %v3063
      %v3065 = vrot.slane %v3064, 4
      %v3067 = vshll.u32 %v3010, 16
      %v3069 = vrot.slane %v3067, 5
      %v3070 = vsel %vm1164, %v3065, %v3069
      %v3071 = vshrl.u32 %v3010, 16
      %v3073 = vrot.slane %v3071, 4
      %v3074 = vor.u32 %v3073, %v3069
      %v3075 = vrot.slane %v3074, 4
      %v3077 = vshll.u32 %v3011, 16
      %v3079 = vrot.slane %v3077, 5
      %v3080 = vsel %vm1164, %v3075, %v3079
      %v3082 = vshrl.u32 %v3012, 16
      %v3084 = vrot.slane %v3082, 4
      %v3085 = vshll.u32 %v3012, 16
      %v3087 = vrot.slane %v3085, 5
      %v3088 = vor.u32 %v3084, %v3087
      %v3089 = vrot.slane %v3088, 4
      %v3091 = vshll.u32 %v3013, 16
      %v3093 = vrot.slane %v3091, 5
      %v3094 = vsel %vm1164, %v3089, %v3093
      %v3095 = vshrl.u32 %v3013, 16
      %v3097 = vrot.slane %v3095, 4
      %v3098 = vor.u32 %v3097, %v3093
      %v3099 = vrot.slane %v3098, 4
      %v3101 = vshll.u32 %v3014, 16
      %v3103 = vrot.slane %v3101, 5
      %v3104 = vsel %vm1164, %v3099, %v3103
      %v3106 = vshrl.u32 %v3015, 16
      %v3108 = vrot.slane %v3106, 4
      %v3109 = vshll.u32 %v3015, 16
      %v3111 = vrot.slane %v3109, 5
      %v3112 = vor.u32 %v3108, %v3111
      %v3113 = vrot.slane %v3112, 4
      %v3115 = vshll.u32 %v3016, 16
      %v3117 = vrot.slane %v3115, 5
      %v3118 = vsel %vm1164, %v3113, %v3117
      %v3119 = vshrl.u32 %v3016, 16
      %v3121 = vrot.slane %v3119, 4
      %v3122 = vor.u32 %v3121, %v3117
      %v3123 = vrot.slane %v3122, 4
      %v3125 = vshll.u32 %v3017, 16
      %v3127 = vrot.slane %v3125, 5
      %v3128 = vsel %vm1164, %v3123, %v3127
      %v3130 = vshrl.u32 %v3018, 16
      %v3132 = vrot.slane %v3130, 4
      %v3133 = vshll.u32 %v3018, 16
      %v3135 = vrot.slane %v3133, 5
      %v3136 = vor.u32 %v3132, %v3135
      %v3137 = vrot.slane %v3136, 4
      %v3139 = vshll.u32 %v3019, 16
      %v3141 = vrot.slane %v3139, 5
      %v3142 = vsel %vm1164, %v3137, %v3141
      %v3143 = vshrl.u32 %v3019, 16
      %v3145 = vrot.slane %v3143, 4
      %v3146 = vor.u32 %v3145, %v3141
      %v3147 = vrot.slane %v3146, 4
      %v3149 = vshll.u32 %v3020, 16
      %v3151 = vrot.slane %v3149, 5
      %v3152 = vsel %vm1164, %v3147, %v3151
      %v3154 = vshrl.u32 %v3021, 16
      %v3156 = vrot.slane %v3154, 4
      %v3157 = vshll.u32 %v3021, 16
      %v3159 = vrot.slane %v3157, 5
      %v3160 = vor.u32 %v3156, %v3159
      %v3161 = vrot.slane %v3160, 4
      %v3163 = vshll.u32 %v3022, 16
      %v3165 = vrot.slane %v3163, 5
      %v3166 = vsel %vm1164, %v3161, %v3165
      %v3167 = vshrl.u32 %v3022, 16
      %v3169 = vrot.slane %v3167, 4
      %v3170 = vor.u32 %v3169, %v3165
      %v3171 = vrot.slane %v3170, 4
      %v3173 = vshll.u32 %v3023, 16
      %v3175 = vrot.slane %v3173, 5
      %v3176 = vsel %vm1164, %v3171, %v3175
      %v3178 = vshrl.u32 %v3024, 16
      %v3180 = vrot.slane %v3178, 4
      %v3181 = vshll.u32 %v3024, 16
      %v3183 = vrot.slane %v3181, 5
      %v3184 = vor.u32 %v3180, %v3183
      %v3185 = vrot.slane %v3184, 4
      %v3187 = vshll.u32 %v3025, 16
      %v3189 = vrot.slane %v3187, 5
      %v3190 = vsel %vm1164, %v3185, %v3189
      %v3191 = vshrl.u32 %v3025, 16
      %v3193 = vrot.slane %v3191, 4
      %v3194 = vor.u32 %v3193, %v3189
      %v3195 = vrot.slane %v3194, 4
      %v3197 = vshll.u32 %v3026, 16
      %v3199 = vrot.slane %v3197, 5
      %v3200 = vsel %vm1164, %v3195, %v3199
      %v3202 = vshrl.u32 %v3027, 16
      %v3204 = vrot.slane %v3202, 4
      %v3205 = vshll.u32 %v3027, 16
      %v3207 = vrot.slane %v3205, 5
      %v3208 = vor.u32 %v3204, %v3207
      %v3209 = vrot.slane %v3208, 4
      %v3211 = vshll.u32 %v3028, 16
      %v3213 = vrot.slane %v3211, 5
      %v3214 = vsel %vm1164, %v3209, %v3213
      %v3215 = vshrl.u32 %v3028, 16
      %v3217 = vrot.slane %v3215, 4
      %v3218 = vor.u32 %v3217, %v3213
      %v3219 = vrot.slane %v3218, 4
      %v3221 = vshll.u32 %v3029, 16
      %v3223 = vrot.slane %v3221, 5
      %v3224 = vsel %vm1164, %v3219, %v3223
      %v3226 = vshrl.u32 %v3030, 16
      %v3228 = vrot.slane %v3226, 4
      %v3229 = vshll.u32 %v3030, 16
      %v3231 = vrot.slane %v3229, 5
      %v3232 = vor.u32 %v3228, %v3231
      %v3233 = vrot.slane %v3232, 4
      %v3235 = vshll.u32 %v3031, 16
      %v3237 = vrot.slane %v3235, 5
      %v3238 = vsel %vm1164, %v3233, %v3237
      %v3239 = vshrl.u32 %v3031, 16
      %v3241 = vrot.slane %v3239, 4
      %v3242 = vor.u32 %v3241, %v3237
      %v3243 = vrot.slane %v3242, 4
      %v3245 = vshll.u32 %v3032, 16
      %v3247 = vrot.slane %v3245, 5
      %v3248 = vsel %vm1164, %v3243, %v3247
      %v3250 = vshrl.u32 %v3033, 16
      %v3252 = vrot.slane %v3250, 4
      %v3253 = vshll.u32 %v3033, 16
      %v3255 = vrot.slane %v3253, 5
      %v3256 = vor.u32 %v3252, %v3255
      %v3257 = vrot.slane %v3256, 4
      %v3259 = vshll.u32 %v3034, 16
      %v3261 = vrot.slane %v3259, 5
      %v3262 = vsel %vm1164, %v3257, %v3261
      %v3263 = vshrl.u32 %v3034, 16
      %v3265 = vrot.slane %v3263, 4
      %v3266 = vor.u32 %v3265, %v3261
      %v3267 = vrot.slane %v3266, 4
      %v3269 = vshll.u32 %v3035, 16
      %v3271 = vrot.slane %v3269, 5
      %v3272 = vsel %vm1164, %v3267, %v3271
      %v3274 = vshrl.u32 %v3036, 16
      %v3276 = vrot.slane %v3274, 4
      %v3277 = vshll.u32 %v3036, 16
      %v3279 = vrot.slane %v3277, 5
      %v3280 = vor.u32 %v3276, %v3279
      %v3281 = vrot.slane %v3280, 4
      %v3283 = vshll.u32 %v3037, 16
      %v3285 = vrot.slane %v3283, 5
      %v3286 = vsel %vm1164, %v3281, %v3285
      %v3287 = vshrl.u32 %v3037, 16
      %v3289 = vrot.slane %v3287, 4
      %v3290 = vor.u32 %v3289, %v3285
      %v3291 = vrot.slane %v3290, 4
      %v3293 = vshll.u32 %v3038, 16
      %v3295 = vrot.slane %v3293, 5
      %v3296 = vsel %vm1164, %v3291, %v3295
      %v3298 = vshrl.u32 %v3039, 16
      %v3300 = vrot.slane %v3298, 4
      %v3301 = vshll.u32 %v3039, 16
      %v3303 = vrot.slane %v3301, 5
      %v3304 = vor.u32 %v3300, %v3303
      %v3305 = vrot.slane %v3304, 4
      %v3307 = vshll.u32 %v3040, 16
      %v3309 = vrot.slane %v3307, 5
      %v3310 = vsel %vm1164, %v3305, %v3309
      %v3311 = vshrl.u32 %v3040, 16
      %v3313 = vrot.slane %v3311, 4
      %v3314 = vor.u32 %v3313, %v3309
      %v3315 = vrot.slane %v3314, 4
      %v3317 = vshll.u32 %v3041, 16
      %v3319 = vrot.slane %v3317, 5
      %v3320 = vsel %vm1164, %v3315, %v3319
      %v3322 = vshrl.u32 %v3042, 16
      %v3324 = vrot.slane %v3322, 4
      %v3325 = vshll.u32 %v3042, 16
      %v3327 = vrot.slane %v3325, 5
      %v3328 = vor.u32 %v3324, %v3327
      %v3329 = vrot.slane %v3328, 4
      %v3331 = vshll.u32 %v3043, 16
      %v3333 = vrot.slane %v3331, 5
      %v3334 = vsel %vm1164, %v3329, %v3333
      %v3335 = vshrl.u32 %v3043, 16
      %v3337 = vrot.slane %v3335, 4
      %v3338 = vor.u32 %v3337, %v3333
      %v3339 = vrot.slane %v3338, 4
      %v3341 = vshll.u32 %v3044, 16
      %v3343 = vrot.slane %v3341, 5
      %v3344 = vsel %vm1164, %v3339, %v3343
      %v3346 = vshrl.u32 %v3045, 16
      %v3348 = vrot.slane %v3346, 4
      %v3349 = vshll.u32 %v3045, 16
      %v3351 = vrot.slane %v3349, 5
      %v3352 = vor.u32 %v3348, %v3351
      %v3353 = vrot.slane %v3352, 4
      %v3355 = vshll.u32 %v3046, 16
      %v3357 = vrot.slane %v3355, 5
      %v3358 = vsel %vm1164, %v3353, %v3357
      %v3359 = vshrl.u32 %v3046, 16
      %v3361 = vrot.slane %v3359, 4
      %v3362 = vor.u32 %v3361, %v3357
      %v3363 = vrot.slane %v3362, 4
      %v3365 = vshll.u32 %v3047, 16
      %v3367 = vrot.slane %v3365, 5
      %v3368 = vsel %vm1164, %v3363, %v3367
      %v3370 = vshrl.u32 %v3048, 16
      %v3372 = vrot.slane %v3370, 4
      %v3373 = vshll.u32 %v3048, 16
      %v3375 = vrot.slane %v3373, 5
      %v3376 = vor.u32 %v3372, %v3375
      %v3377 = vrot.slane %v3376, 4
      %v3379 = vshll.u32 %v3049, 16
      %v3381 = vrot.slane %v3379, 5
      %v3382 = vsel %vm1164, %v3377, %v3381
      %v3383 = vshrl.u32 %v3049, 16
      %v3385 = vrot.slane %v3383, 4
      %v3386 = vor.u32 %v3385, %v3381
      %v3387 = vrot.slane %v3386, 4
      %v3389 = vshll.u32 %v3050, 16
      %v3391 = vrot.slane %v3389, 5
      %v3392 = vsel %vm1164, %v3387, %v3391
      %v3394 = vshrl.u32 %v3051, 16
      %v3396 = vrot.slane %v3394, 4
      %v3397 = vshll.u32 %v3051, 16
      %v3399 = vrot.slane %v3397, 5
      %v3400 = vor.u32 %v3396, %v3399
      %v3401 = vrot.slane %v3400, 4
      %v3403 = vshll.u32 %v3052, 16
      %v3405 = vrot.slane %v3403, 5
      %v3406 = vsel %vm1164, %v3401, %v3405
      %v3407 = vshrl.u32 %v3052, 16
      %v3409 = vrot.slane %v3407, 4
      %v3410 = vor.u32 %v3409, %v3405
      %v3411 = vrot.slane %v3410, 4
      %v3413 = vshll.u32 %v3053, 16
      %v3415 = vrot.slane %v3413, 5
      %v3416 = vsel %vm1164, %v3411, %v3415
      %v3418 = vshrl.u32 %v3054, 16
      %v3420 = vrot.slane %v3418, 4
      %v3421 = vshll.u32 %v3054, 16
      %v3423 = vrot.slane %v3421, 5
      %v3424 = vor.u32 %v3420, %v3423
      %v3425 = vrot.slane %v3424, 4
      %v3427 = vshll.u32 %v3055, 16
      %v3429 = vrot.slane %v3427, 5
      %v3430 = vsel %vm1164, %v3425, %v3429
      %v3431 = vshrl.u32 %v3055, 16
      %v3433 = vrot.slane %v3431, 4
      %v3434 = vor.u32 %v3433, %v3429
      %v3435 = vrot.slane %v3434, 4
      %v3437 = vshll.u32 %v3056, 16
      %v3439 = vrot.slane %v3437, 5
      %v3440 = vsel %vm1164, %v3435, %v3439
      %v3441 = vunpack.c.l.b16 %v3070
      %v3442 = vunpack.c.l.b16 %v3080
      %v3443 = vunpack.c.l.b16 %v3094
      %v3444 = vunpack.c.l.b16 %v3104
      %v3445 = vunpack.c.l.b16 %v3118
      %v3446 = vunpack.c.l.b16 %v3128
      %v3447 = vunpack.c.l.b16 %v3142
      %v3448 = vunpack.c.l.b16 %v3152
      %v3449 = vunpack.c.l.b16 %v3166
      %v3450 = vunpack.c.l.b16 %v3176
      %v3451 = vunpack.c.l.b16 %v3190
      %v3452 = vunpack.c.l.b16 %v3200
      %v3453 = vunpack.c.l.b16 %v3214
      %v3454 = vunpack.c.l.b16 %v3224
      %v3455 = vunpack.c.l.b16 %v3238
      %v3456 = vunpack.c.l.b16 %v3248
      %v3457 = vunpack.c.l.b16 %v3262
      %v3458 = vunpack.c.l.b16 %v3272
      %v3459 = vunpack.c.l.b16 %v3286
      %v3460 = vunpack.c.l.b16 %v3296
      %v3461 = vunpack.c.l.b16 %v3310
      %v3462 = vunpack.c.l.b16 %v3320
      %v3463 = vunpack.c.l.b16 %v3334
      %v3464 = vunpack.c.l.b16 %v3344
      %v3465 = vunpack.c.l.b16 %v3358
      %v3466 = vunpack.c.l.b16 %v3368
      %v3467 = vunpack.c.l.b16 %v3382
      %v3468 = vunpack.c.l.b16 %v3392
      %v3469 = vunpack.c.l.b16 %v3406
      %v3470 = vunpack.c.l.b16 %v3416
      %v3471 = vunpack.c.l.b16 %v3430
      %v3472 = vunpack.c.l.b16 %v3440
      %v3473 = vpack.c.b16 %v3442, %v3441
      %v3474 = vpack.c.b16 %v3444, %v3443
      %v3475 = vpack.c.b16 %v3446, %v3445
      %v3476 = vpack.c.b16 %v3448, %v3447
      %v3477 = vpack.c.b16 %v3450, %v3449
      %v3478 = vpack.c.b16 %v3452, %v3451
      %v3479 = vpack.c.b16 %v3454, %v3453
      %v3480 = vpack.c.b16 %v3456, %v3455
      %v3481 = vpack.c.b16 %v3458, %v3457
      %v3482 = vpack.c.b16 %v3460, %v3459
      %v3483 = vpack.c.b16 %v3462, %v3461
      %v3484 = vpack.c.b16 %v3464, %v3463
      %v3485 = vpack.c.b16 %v3466, %v3465
      %v3486 = vpack.c.b16 %v3468, %v3467
      %v3487 = vpack.c.b16 %v3470, %v3469
      %v3488 = vpack.c.b16 %v3472, %v3471
      %3505 = vst [vmem:[#allocation3 + $0x38] sm:$0xff] %v3473
      %3506 = vst [vmem:[#allocation3 + $0x80] sm:$0xff] %v3474
      %3507 = vst [vmem:[#allocation3 + $0xc8] sm:$0xff] %v3475
      %3508 = vst [vmem:[#allocation3 + $0x110] sm:$0xff] %v3476
      %3509 = vst [vmem:[#allocation3 + $0x158] sm:$0xff] %v3477
      %3510 = vst [vmem:[#allocation3 + $0x1a0] sm:$0xff] %v3478
      %3511 = vst [vmem:[#allocation3 + $0x1e8] sm:$0xff] %v3479
      %3512 = vst [vmem:[#allocation3 + $0x230] sm:$0xff] %v3480
      %3513 = vst [vmem:[#allocation3 + $0x278] sm:$0xff] %v3481
      %3514 = vst [vmem:[#allocation3 + $0x2c0] sm:$0xff] %v3482
      %3515 = vst [vmem:[#allocation3 + $0x308] sm:$0xff] %v3483
      %3516 = vst [vmem:[#allocation3 + $0x350] sm:$0xff] %v3484
      %3517 = vst [vmem:[#allocation3 + $0x398] sm:$0xff] %v3485
      %3518 = vst [vmem:[#allocation3 + $0x3e0] sm:$0xff] %v3486
      %3519 = vst [vmem:[#allocation3 + $0x428] sm:$0xff] %v3487
      %3520 = vst [vmem:[#allocation3 + $0x470] sm:$0xff] %v3488
      %v3521 = vld [vmem:[%s2864] sm:$0xe]
      %v3522 = vld [vmem:[%s2864 + $0x4] sm:$0xf]
      %v3523 = vld [vmem:[%s2864 + $0x8] sm:$0x1]
      %v3524 = vld [vmem:[%s2864 + $0xc] sm:$0xe]
      %v3525 = vld [vmem:[%s2864 + $0x10] sm:$0xf]
      %v3526 = vld [vmem:[%s2864 + $0x14] sm:$0x1]
      %v3527 = vld [vmem:[%s2864 + $0x18] sm:$0xe]
      %v3528 = vld [vmem:[%s2864 + $0x1c] sm:$0xf]
      %v3529 = vld [vmem:[%s2864 + $0x20] sm:$0x1]
      %v3530 = vld [vmem:[%s2864 + $0x24] sm:$0xe]
      %v3531 = vld [vmem:[%s2864 + $0x28] sm:$0xf]
      %v3532 = vld [vmem:[%s2864 + $0x2c] sm:$0x1]
      %v3533 = vld [vmem:[%s2864 + $0x30] sm:$0xe]
      %v3534 = vld [vmem:[%s2864 + $0x34] sm:$0xf]
      %v3535 = vld [vmem:[%s2864 + $0x38] sm:$0x1]
      %v3536 = vld [vmem:[%s2864 + $0x3c] sm:$0xe]
      %v3537 = vld [vmem:[%s2864 + $0x40] sm:$0xf]
      %v3538 = vld [vmem:[%s2864 + $0x44] sm:$0x1]
      %v3539 = vld [vmem:[%s2864 + $0x48] sm:$0xe]
      %v3540 = vld [vmem:[%s2864 + $0x4c] sm:$0xf]
      %v3541 = vld [vmem:[%s2864 + $0x50] sm:$0x1]
      %v3542 = vld [vmem:[%s2864 + $0x54] sm:$0xe]
      %v3543 = vld [vmem:[%s2864 + $0x58] sm:$0xf]
      %v3544 = vld [vmem:[%s2864 + $0x5c] sm:$0x1]
      %v3545 = vld [vmem:[%s2864 + $0x60] sm:$0xe]
      %v3546 = vld [vmem:[%s2864 + $0x64] sm:$0xf]
      %v3547 = vld [vmem:[%s2864 + $0x68] sm:$0x1]
      %v3548 = vld [vmem:[%s2864 + $0x6c] sm:$0xe]
      %v3549 = vld [vmem:[%s2864 + $0x70] sm:$0xf]
      %v3550 = vld [vmem:[%s2864 + $0x74] sm:$0x1]
      %v3551 = vld [vmem:[%s2864 + $0x78] sm:$0xe]
      %v3552 = vld [vmem:[%s2864 + $0x7c] sm:$0xf]
      %v3553 = vld [vmem:[%s2864 + $0x80] sm:$0x1]
      %v3554 = vld [vmem:[%s2864 + $0x84] sm:$0xe]
      %v3555 = vld [vmem:[%s2864 + $0x88] sm:$0xf]
      %v3556 = vld [vmem:[%s2864 + $0x8c] sm:$0x1]
      %v3557 = vld [vmem:[%s2864 + $0x90] sm:$0xe]
      %v3558 = vld [vmem:[%s2864 + $0x94] sm:$0xf]
      %v3559 = vld [vmem:[%s2864 + $0x98] sm:$0x1]
      %v3560 = vld [vmem:[%s2864 + $0x9c] sm:$0xe]
      %v3561 = vld [vmem:[%s2864 + $0xa0] sm:$0xf]
      %v3562 = vld [vmem:[%s2864 + $0xa4] sm:$0x1]
      %v3563 = vld [vmem:[%s2864 + $0xa8] sm:$0xe]
      %v3564 = vld [vmem:[%s2864 + $0xac] sm:$0xf]
      %v3565 = vld [vmem:[%s2864 + $0xb0] sm:$0x1]
      %v3566 = vld [vmem:[%s2864 + $0xb4] sm:$0xe]
      %v3567 = vld [vmem:[%s2864 + $0xb8] sm:$0xf]
      %v3568 = vld [vmem:[%s2864 + $0xbc] sm:$0x1]
      %v3617 = vrot.slane %v3521, 5
      %v3618 = vrot.slane %v3617, 4
      %v3619 = vrot.slane %v3522, 5
      %v3620 = vsel %vm1727, %v3618, %v3619
      %v3621 = vrot.slane %v3619, 4
      %v3622 = vrot.slane %v3523, 5
      %v3623 = vsel %vm1727, %v3621, %v3622
      %v3624 = vrot.slane %v3524, 5
      %v3625 = vrot.slane %v3624, 4
      %v3626 = vrot.slane %v3525, 5
      %v3627 = vsel %vm1727, %v3625, %v3626
      %v3628 = vrot.slane %v3626, 4
      %v3629 = vrot.slane %v3526, 5
      %v3630 = vsel %vm1727, %v3628, %v3629
      %v3631 = vrot.slane %v3527, 5
      %v3632 = vrot.slane %v3631, 4
      %v3633 = vrot.slane %v3528, 5
      %v3634 = vsel %vm1727, %v3632, %v3633
      %v3635 = vrot.slane %v3633, 4
      %v3636 = vrot.slane %v3529, 5
      %v3637 = vsel %vm1727, %v3635, %v3636
      %v3638 = vrot.slane %v3530, 5
      %v3639 = vrot.slane %v3638, 4
      %v3640 = vrot.slane %v3531, 5
      %v3641 = vsel %vm1727, %v3639, %v3640
      %v3642 = vrot.slane %v3640, 4
      %v3643 = vrot.slane %v3532, 5
      %v3644 = vsel %vm1727, %v3642, %v3643
      %v3645 = vrot.slane %v3533, 5
      %v3646 = vrot.slane %v3645, 4
      %v3647 = vrot.slane %v3534, 5
      %v3648 = vsel %vm1727, %v3646, %v3647
      %v3649 = vrot.slane %v3647, 4
      %v3650 = vrot.slane %v3535, 5
      %v3651 = vsel %vm1727, %v3649, %v3650
      %v3652 = vrot.slane %v3536, 5
      %v3653 = vrot.slane %v3652, 4
      %v3654 = vrot.slane %v3537, 5
      %v3655 = vsel %vm1727, %v3653, %v3654
      %v3656 = vrot.slane %v3654, 4
      %v3657 = vrot.slane %v3538, 5
      %v3658 = vsel %vm1727, %v3656, %v3657
      %v3659 = vrot.slane %v3539, 5
      %v3660 = vrot.slane %v3659, 4
      %v3661 = vrot.slane %v3540, 5
      %v3662 = vsel %vm1727, %v3660, %v3661
      %v3663 = vrot.slane %v3661, 4
      %v3664 = vrot.slane %v3541, 5
      %v3665 = vsel %vm1727, %v3663, %v3664
      %v3666 = vrot.slane %v3542, 5
      %v3667 = vrot.slane %v3666, 4
      %v3668 = vrot.slane %v3543, 5
      %v3669 = vsel %vm1727, %v3667, %v3668
      %v3670 = vrot.slane %v3668, 4
      %v3671 = vrot.slane %v3544, 5
      %v3672 = vsel %vm1727, %v3670, %v3671
      %v3673 = vrot.slane %v3545, 5
      %v3674 = vrot.slane %v3673, 4
      %v3675 = vrot.slane %v3546, 5
      %v3676 = vsel %vm1727, %v3674, %v3675
      %v3677 = vrot.slane %v3675, 4
      %v3678 = vrot.slane %v3547, 5
      %v3679 = vsel %vm1727, %v3677, %v3678
      %v3680 = vrot.slane %v3548, 5
      %v3681 = vrot.slane %v3680, 4
      %v3682 = vrot.slane %v3549, 5
      %v3683 = vsel %vm1727, %v3681, %v3682
      %v3684 = vrot.slane %v3682, 4
      %v3685 = vrot.slane %v3550, 5
      %v3686 = vsel %vm1727, %v3684, %v3685
      %v3687 = vrot.slane %v3551, 5
      %v3688 = vrot.slane %v3687, 4
      %v3689 = vrot.slane %v3552, 5
      %v3690 = vsel %vm1727, %v3688, %v3689
      %v3691 = vrot.slane %v3689, 4
      %v3692 = vrot.slane %v3553, 5
      %v3693 = vsel %vm1727, %v3691, %v3692
      %v3694 = vrot.slane %v3554, 5
      %v3695 = vrot.slane %v3694, 4
      %v3696 = vrot.slane %v3555, 5
      %v3697 = vsel %vm1727, %v3695, %v3696
      %v3698 = vrot.slane %v3696, 4
      %v3699 = vrot.slane %v3556, 5
      %v3700 = vsel %vm1727, %v3698, %v3699
      %v3701 = vrot.slane %v3557, 5
      %v3702 = vrot.slane %v3701, 4
      %v3703 = vrot.slane %v3558, 5
      %v3704 = vsel %vm1727, %v3702, %v3703
      %v3705 = vrot.slane %v3703, 4
      %v3706 = vrot.slane %v3559, 5
      %v3707 = vsel %vm1727, %v3705, %v3706
      %v3708 = vrot.slane %v3560, 5
      %v3709 = vrot.slane %v3708, 4
      %v3710 = vrot.slane %v3561, 5
      %v3711 = vsel %vm1727, %v3709, %v3710
      %v3712 = vrot.slane %v3710, 4
      %v3713 = vrot.slane %v3562, 5
      %v3714 = vsel %vm1727, %v3712, %v3713
      %v3715 = vrot.slane %v3563, 5
      %v3716 = vrot.slane %v3715, 4
      %v3717 = vrot.slane %v3564, 5
      %v3718 = vsel %vm1727, %v3716, %v3717
      %v3719 = vrot.slane %v3717, 4
      %v3720 = vrot.slane %v3565, 5
      %v3721 = vsel %vm1727, %v3719, %v3720
      %v3722 = vrot.slane %v3566, 5
      %v3723 = vrot.slane %v3722, 4
      %v3724 = vrot.slane %v3567, 5
      %v3725 = vsel %vm1727, %v3723, %v3724
      %v3726 = vrot.slane %v3724, 4
      %v3727 = vrot.slane %v3568, 5
      %v3728 = vsel %vm1727, %v3726, %v3727
      %v3729 = vunpack.c.l.b16 %v3620
      %v3730 = vunpack.c.l.b16 %v3623
      %v3731 = vunpack.c.l.b16 %v3627
      %v3732 = vunpack.c.l.b16 %v3630
      %v3733 = vunpack.c.l.b16 %v3634
      %v3734 = vunpack.c.l.b16 %v3637
      %v3735 = vunpack.c.l.b16 %v3641
      %v3736 = vunpack.c.l.b16 %v3644
      %v3737 = vunpack.c.l.b16 %v3648
      %v3738 = vunpack.c.l.b16 %v3651
      %v3739 = vunpack.c.l.b16 %v3655
      %v3740 = vunpack.c.l.b16 %v3658
      %v3741 = vunpack.c.l.b16 %v3662
      %v3742 = vunpack.c.l.b16 %v3665
      %v3743 = vunpack.c.l.b16 %v3669
      %v3744 = vunpack.c.l.b16 %v3672
      %v3745 = vunpack.c.l.b16 %v3676
      %v3746 = vunpack.c.l.b16 %v3679
      %v3747 = vunpack.c.l.b16 %v3683
      %v3748 = vunpack.c.l.b16 %v3686
      %v3749 = vunpack.c.l.b16 %v3690
      %v3750 = vunpack.c.l.b16 %v3693
      %v3751 = vunpack.c.l.b16 %v3697
      %v3752 = vunpack.c.l.b16 %v3700
      %v3753 = vunpack.c.l.b16 %v3704
      %v3754 = vunpack.c.l.b16 %v3707
      %v3755 = vunpack.c.l.b16 %v3711
      %v3756 = vunpack.c.l.b16 %v3714
      %v3757 = vunpack.c.l.b16 %v3718
      %v3758 = vunpack.c.l.b16 %v3721
      %v3759 = vunpack.c.l.b16 %v3725
      %v3760 = vunpack.c.l.b16 %v3728
      %v3761 = vpack.c.b16 %v3730, %v3729
      %v3762 = vpack.c.b16 %v3732, %v3731
      %v3763 = vpack.c.b16 %v3734, %v3733
      %v3764 = vpack.c.b16 %v3736, %v3735
      %v3765 = vpack.c.b16 %v3738, %v3737
      %v3766 = vpack.c.b16 %v3740, %v3739
      %v3767 = vpack.c.b16 %v3742, %v3741
      %v3768 = vpack.c.b16 %v3744, %v3743
      %v3769 = vpack.c.b16 %v3746, %v3745
      %v3770 = vpack.c.b16 %v3748, %v3747
      %v3771 = vpack.c.b16 %v3750, %v3749
      %v3772 = vpack.c.b16 %v3752, %v3751
      %v3773 = vpack.c.b16 %v3754, %v3753
      %v3774 = vpack.c.b16 %v3756, %v3755
      %v3775 = vpack.c.b16 %v3758, %v3757
      %v3776 = vpack.c.b16 %v3760, %v3759
      %3793 = vst [vmem:[#allocation3 + $0x40] sm:$0xff] %v3761
      %3794 = vst [vmem:[#allocation3 + $0x88] sm:$0xff] %v3762
      %3795 = vst [vmem:[#allocation3 + $0xd0] sm:$0xff] %v3763
      %3796 = vst [vmem:[#allocation3 + $0x118] sm:$0xff] %v3764
      %3797 = vst [vmem:[#allocation3 + $0x160] sm:$0xff] %v3765
      %3798 = vst [vmem:[#allocation3 + $0x1a8] sm:$0xff] %v3766
      %3799 = vst [vmem:[#allocation3 + $0x1f0] sm:$0xff] %v3767
      %3800 = vst [vmem:[#allocation3 + $0x238] sm:$0xff] %v3768
      %3801 = vst [vmem:[#allocation3 + $0x280] sm:$0xff] %v3769
      %3802 = vst [vmem:[#allocation3 + $0x2c8] sm:$0xff] %v3770
      %3803 = vst [vmem:[#allocation3 + $0x310] sm:$0xff] %v3771
      %3804 = vst [vmem:[#allocation3 + $0x358] sm:$0xff] %v3772
      %3805 = vst [vmem:[#allocation3 + $0x3a0] sm:$0xff] %v3773
      %3806 = vst [vmem:[#allocation3 + $0x3e8] sm:$0xff] %v3774
      %3807 = vst [vmem:[#allocation3 + $0x430] sm:$0xff] %v3775
      %3808 = vst [vmem:[#allocation3 + $0x478] sm:$0xff] %v3776
      %v3809 = vld [vmem:[#allocation3] sm:$0xff]
      %v3810 = vld [vmem:[#allocation3 + $0x8] sm:$0xff]
      %v3811 = vld [vmem:[#allocation3 + $0x10] sm:$0xff]
      %v3812 = vld [vmem:[#allocation3 + $0x18] sm:$0xff]
      %v3813 = vld [vmem:[#allocation3 + $0x20] sm:$0xff]
      %v3814 = vld [vmem:[#allocation3 + $0x28] sm:$0xff]
      %v3815 = vld [vmem:[#allocation3 + $0x30] sm:$0xff]
      %v3816 = vld [vmem:[#allocation3 + $0x38] sm:$0xff]
      %v3817 = vld [vmem:[#allocation3 + $0x40] sm:$0xff]
      %v3818 = vld [vmem:[#allocation3 + $0x48] sm:$0xff]
      %v3819 = vld [vmem:[#allocation3 + $0x50] sm:$0xff]
      %v3820 = vld [vmem:[#allocation3 + $0x58] sm:$0xff]
      %v3821 = vld [vmem:[#allocation3 + $0x60] sm:$0xff]
      %v3822 = vld [vmem:[#allocation3 + $0x68] sm:$0xff]
      %v3823 = vld [vmem:[#allocation3 + $0x70] sm:$0xff]
      %v3824 = vld [vmem:[#allocation3 + $0x78] sm:$0xff]
      %v3825 = vld [vmem:[#allocation3 + $0x80] sm:$0xff]
      %v3826 = vld [vmem:[#allocation3 + $0x88] sm:$0xff]
      %v3827 = vld [vmem:[#allocation3 + $0x90] sm:$0xff]
      %v3828 = vld [vmem:[#allocation3 + $0x98] sm:$0xff]
      %v3829 = vld [vmem:[#allocation3 + $0xa0] sm:$0xff]
      %v3830 = vld [vmem:[#allocation3 + $0xa8] sm:$0xff]
      %v3831 = vld [vmem:[#allocation3 + $0xb0] sm:$0xff]
      %v3832 = vld [vmem:[#allocation3 + $0xb8] sm:$0xff]
      %v3833 = vld [vmem:[#allocation3 + $0xc0] sm:$0xff]
      %v3834 = vld [vmem:[#allocation3 + $0xc8] sm:$0xff]
      %v3835 = vld [vmem:[#allocation3 + $0xd0] sm:$0xff]
      %v3836 = vld [vmem:[#allocation3 + $0xd8] sm:$0xff]
      %v3837 = vld [vmem:[#allocation3 + $0xe0] sm:$0xff]
      %v3838 = vld [vmem:[#allocation3 + $0xe8] sm:$0xff]
      %v3839 = vld [vmem:[#allocation3 + $0xf0] sm:$0xff]
      %v3840 = vld [vmem:[#allocation3 + $0xf8] sm:$0xff]
      %v3841 = vld [vmem:[#allocation3 + $0x100] sm:$0xff]
      %v3842 = vld [vmem:[#allocation3 + $0x108] sm:$0xff]
      %v3843 = vld [vmem:[#allocation3 + $0x110] sm:$0xff]
      %v3844 = vld [vmem:[#allocation3 + $0x118] sm:$0xff]
      %v3845 = vld [vmem:[#allocation3 + $0x120] sm:$0xff]
      %v3846 = vld [vmem:[#allocation3 + $0x128] sm:$0xff]
      %v3847 = vld [vmem:[#allocation3 + $0x130] sm:$0xff]
      %v3848 = vld [vmem:[#allocation3 + $0x138] sm:$0xff]
      %v3849 = vld [vmem:[#allocation3 + $0x140] sm:$0xff]
      %v3850 = vld [vmem:[#allocation3 + $0x148] sm:$0xff]
      %v3851 = vld [vmem:[#allocation3 + $0x150] sm:$0xff]
      %v3852 = vld [vmem:[#allocation3 + $0x158] sm:$0xff]
      %v3853 = vld [vmem:[#allocation3 + $0x160] sm:$0xff]
      %v3854 = vld [vmem:[#allocation3 + $0x168] sm:$0xff]
      %v3855 = vld [vmem:[#allocation3 + $0x170] sm:$0xff]
      %v3856 = vld [vmem:[#allocation3 + $0x178] sm:$0xff]
      %v3857 = vld [vmem:[#allocation3 + $0x180] sm:$0xff]
      %v3858 = vld [vmem:[#allocation3 + $0x188] sm:$0xff]
      %v3859 = vld [vmem:[#allocation3 + $0x190] sm:$0xff]
      %v3860 = vld [vmem:[#allocation3 + $0x198] sm:$0xff]
      %v3861 = vld [vmem:[#allocation3 + $0x1a0] sm:$0xff]
      %v3862 = vld [vmem:[#allocation3 + $0x1a8] sm:$0xff]
      %v3863 = vld [vmem:[#allocation3 + $0x1b0] sm:$0xff]
      %v3864 = vld [vmem:[#allocation3 + $0x1b8] sm:$0xff]
      %v3865 = vld [vmem:[#allocation3 + $0x1c0] sm:$0xff]
      %v3866 = vld [vmem:[#allocation3 + $0x1c8] sm:$0xff]
      %v3867 = vld [vmem:[#allocation3 + $0x1d0] sm:$0xff]
      %v3868 = vld [vmem:[#allocation3 + $0x1d8] sm:$0xff]
      %v3869 = vld [vmem:[#allocation3 + $0x1e0] sm:$0xff]
      %v3870 = vld [vmem:[#allocation3 + $0x1e8] sm:$0xff]
      %v3871 = vld [vmem:[#allocation3 + $0x1f0] sm:$0xff]
      %v3872 = vld [vmem:[#allocation3 + $0x1f8] sm:$0xff]
      %v3873 = vld [vmem:[#allocation3 + $0x200] sm:$0xff]
      %v3874 = vld [vmem:[#allocation3 + $0x208] sm:$0xff]
      %v3875 = vld [vmem:[#allocation3 + $0x210] sm:$0xff]
      %v3876 = vld [vmem:[#allocation3 + $0x218] sm:$0xff]
      %v3877 = vld [vmem:[#allocation3 + $0x220] sm:$0xff]
      %v3878 = vld [vmem:[#allocation3 + $0x228] sm:$0xff]
      %v3879 = vld [vmem:[#allocation3 + $0x230] sm:$0xff]
      %v3880 = vld [vmem:[#allocation3 + $0x238] sm:$0xff]
      %v3881 = vld [vmem:[#allocation3 + $0x240] sm:$0xff]
      %v3882 = vld [vmem:[#allocation3 + $0x248] sm:$0xff]
      %v3883 = vld [vmem:[#allocation3 + $0x250] sm:$0xff]
      %v3884 = vld [vmem:[#allocation3 + $0x258] sm:$0xff]
      %v3885 = vld [vmem:[#allocation3 + $0x260] sm:$0xff]
      %v3886 = vld [vmem:[#allocation3 + $0x268] sm:$0xff]
      %v3887 = vld [vmem:[#allocation3 + $0x270] sm:$0xff]
      %v3888 = vld [vmem:[#allocation3 + $0x278] sm:$0xff]
      %v3889 = vld [vmem:[#allocation3 + $0x280] sm:$0xff]
      %v3890 = vld [vmem:[#allocation3 + $0x288] sm:$0xff]
      %v3891 = vld [vmem:[#allocation3 + $0x290] sm:$0xff]
      %v3892 = vld [vmem:[#allocation3 + $0x298] sm:$0xff]
      %v3893 = vld [vmem:[#allocation3 + $0x2a0] sm:$0xff]
      %v3894 = vld [vmem:[#allocation3 + $0x2a8] sm:$0xff]
      %v3895 = vld [vmem:[#allocation3 + $0x2b0] sm:$0xff]
      %v3896 = vld [vmem:[#allocation3 + $0x2b8] sm:$0xff]
      %v3897 = vld [vmem:[#allocation3 + $0x2c0] sm:$0xff]
      %v3898 = vld [vmem:[#allocation3 + $0x2c8] sm:$0xff]
      %v3899 = vld [vmem:[#allocation3 + $0x2d0] sm:$0xff]
      %v3900 = vld [vmem:[#allocation3 + $0x2d8] sm:$0xff]
      %v3901 = vld [vmem:[#allocation3 + $0x2e0] sm:$0xff]
      %v3902 = vld [vmem:[#allocation3 + $0x2e8] sm:$0xff]
      %v3903 = vld [vmem:[#allocation3 + $0x2f0] sm:$0xff]
      %v3904 = vld [vmem:[#allocation3 + $0x2f8] sm:$0xff]
      %v3905 = vld [vmem:[#allocation3 + $0x300] sm:$0xff]
      %v3906 = vld [vmem:[#allocation3 + $0x308] sm:$0xff]
      %v3907 = vld [vmem:[#allocation3 + $0x310] sm:$0xff]
      %v3908 = vld [vmem:[#allocation3 + $0x318] sm:$0xff]
      %v3909 = vld [vmem:[#allocation3 + $0x320] sm:$0xff]
      %v3910 = vld [vmem:[#allocation3 + $0x328] sm:$0xff]
      %v3911 = vld [vmem:[#allocation3 + $0x330] sm:$0xff]
      %v3912 = vld [vmem:[#allocation3 + $0x338] sm:$0xff]
      %v3913 = vld [vmem:[#allocation3 + $0x340] sm:$0xff]
      %v3914 = vld [vmem:[#allocation3 + $0x348] sm:$0xff]
      %v3915 = vld [vmem:[#allocation3 + $0x350] sm:$0xff]
      %v3916 = vld [vmem:[#allocation3 + $0x358] sm:$0xff]
      %v3917 = vld [vmem:[#allocation3 + $0x360] sm:$0xff]
      %v3918 = vld [vmem:[#allocation3 + $0x368] sm:$0xff]
      %v3919 = vld [vmem:[#allocation3 + $0x370] sm:$0xff]
      %v3920 = vld [vmem:[#allocation3 + $0x378] sm:$0xff]
      %v3921 = vld [vmem:[#allocation3 + $0x380] sm:$0xff]
      %v3922 = vld [vmem:[#allocation3 + $0x388] sm:$0xff]
      %v3923 = vld [vmem:[#allocation3 + $0x390] sm:$0xff]
      %v3924 = vld [vmem:[#allocation3 + $0x398] sm:$0xff]
      %v3925 = vld [vmem:[#allocation3 + $0x3a0] sm:$0xff]
      %v3926 = vld [vmem:[#allocation3 + $0x3a8] sm:$0xff]
      %v3927 = vld [vmem:[#allocation3 + $0x3b0] sm:$0xff]
      %v3928 = vld [vmem:[#allocation3 + $0x3b8] sm:$0xff]
      %v3929 = vld [vmem:[#allocation3 + $0x3c0] sm:$0xff]
      %v3930 = vld [vmem:[#allocation3 + $0x3c8] sm:$0xff]
      %v3931 = vld [vmem:[#allocation3 + $0x3d0] sm:$0xff]
      %v3932 = vld [vmem:[#allocation3 + $0x3d8] sm:$0xff]
      %v3933 = vld [vmem:[#allocation3 + $0x3e0] sm:$0xff]
      %v3934 = vld [vmem:[#allocation3 + $0x3e8] sm:$0xff]
      %v3935 = vld [vmem:[#allocation3 + $0x3f0] sm:$0xff]
      %v3936 = vld [vmem:[#allocation3 + $0x3f8] sm:$0xff]
      %v3937 = vld [vmem:[#allocation3 + $0x400] sm:$0xff]
      %v3938 = vld [vmem:[#allocation3 + $0x408] sm:$0xff]
      %v3939 = vld [vmem:[#allocation3 + $0x410] sm:$0xff]
      %v3940 = vld [vmem:[#allocation3 + $0x418] sm:$0xff]
      %v3941 = vld [vmem:[#allocation3 + $0x420] sm:$0xff]
      %v3942 = vld [vmem:[#allocation3 + $0x428] sm:$0xff]
      %v3943 = vld [vmem:[#allocation3 + $0x430] sm:$0xff]
      %v3944 = vld [vmem:[#allocation3 + $0x438] sm:$0xff]
      %v3945 = vld [vmem:[#allocation3 + $0x440] sm:$0xff]
      %v3946 = vld [vmem:[#allocation3 + $0x448] sm:$0xff]
      %v3947 = vld [vmem:[#allocation3 + $0x450] sm:$0xff]
      %v3948 = vld [vmem:[#allocation3 + $0x458] sm:$0xff]
      %v3949 = vld [vmem:[#allocation3 + $0x460] sm:$0xff]
      %v3950 = vld [vmem:[#allocation3 + $0x468] sm:$0xff]
      %v3951 = vld [vmem:[#allocation3 + $0x470] sm:$0xff]
      %v3952 = vld [vmem:[#allocation3 + $0x478] sm:$0xff]
      %v3953 = vld [vmem:[%s3] sm:$0xf]
      %v3954 = vld [vmem:[%s3 + $0x4] sm:$0xf]
      %v3955 = vld [vmem:[%s3 + $0x8] sm:$0xf]
      %v3956 = vld [vmem:[%s3 + $0xc] sm:$0xf]
      %v3957 = vld [vmem:[%s3 + $0x10] sm:$0xf]
      %v3958 = vld [vmem:[%s3 + $0x14] sm:$0xf]
      %v3959 = vld [vmem:[%s3 + $0x18] sm:$0xf]
      %v3960 = vld [vmem:[%s3 + $0x1c] sm:$0xf]
      %v3961 = vld [vmem:[%s3 + $0x20] sm:$0xf]
      %v3962 = vld [vmem:[%s3 + $0x24] sm:$0xf]
      %v3963 = vld [vmem:[%s3 + $0x28] sm:$0xf]
      %v3964 = vld [vmem:[%s3 + $0x2c] sm:$0xf]
      %v3965 = vld [vmem:[%s3 + $0x30] sm:$0xf]
      %v3966 = vld [vmem:[%s3 + $0x34] sm:$0xf]
      %v3967 = vld [vmem:[%s3 + $0x38] sm:$0xf]
      %v3968 = vld [vmem:[%s3 + $0x3c] sm:$0xf]
      %v3969 = vld [vmem:[%s3 + $0x40] sm:$0xf]
      %v3970 = vld [vmem:[%s3 + $0x44] sm:$0xf]
      %v3971 = vld [vmem:[%s3 + $0x48] sm:$0xf]
      %v3972 = vld [vmem:[%s3 + $0x4c] sm:$0xf]
      %v3973 = vld [vmem:[%s3 + $0x50] sm:$0xf]
      %v3974 = vld [vmem:[%s3 + $0x54] sm:$0xf]
      %v3975 = vld [vmem:[%s3 + $0x58] sm:$0xf]
      %v3976 = vld [vmem:[%s3 + $0x5c] sm:$0xf]
      %v3977 = vld [vmem:[%s3 + $0x60] sm:$0xf]
      %v3978 = vld [vmem:[%s3 + $0x64] sm:$0xf]
      %v3979 = vld [vmem:[%s3 + $0x68] sm:$0xf]
      %v3980 = vld [vmem:[%s3 + $0x6c] sm:$0xf]
      %v3981 = vld [vmem:[%s3 + $0x70] sm:$0xf]
      %v3982 = vld [vmem:[%s3 + $0x74] sm:$0xf]
      %v3983 = vld [vmem:[%s3 + $0x78] sm:$0xf]
      %v3984 = vld [vmem:[%s3 + $0x7c] sm:$0xf]
      %v3985 = vld [vmem:[%s3 + $0x80] sm:$0xf]
      %v3986 = vld [vmem:[%s3 + $0x84] sm:$0xf]
      %v3987 = vld [vmem:[%s3 + $0x88] sm:$0xf]
      %v3988 = vld [vmem:[%s3 + $0x8c] sm:$0xf]
      %v3989 = vld [vmem:[%s3 + $0x90] sm:$0xf]
      %v3990 = vld [vmem:[%s3 + $0x94] sm:$0xf]
      %v3991 = vld [vmem:[%s3 + $0x98] sm:$0xf]
      %v3992 = vld [vmem:[%s3 + $0x9c] sm:$0xf]
      %v3993 = vld [vmem:[%s3 + $0xa0] sm:$0xf]
      %v3994 = vld [vmem:[%s3 + $0xa4] sm:$0xf]
      %v3995 = vld [vmem:[%s3 + $0xa8] sm:$0xf]
      %v3996 = vld [vmem:[%s3 + $0xac] sm:$0xf]
      %v3997 = vld [vmem:[%s3 + $0xb0] sm:$0xf]
      %v3998 = vld [vmem:[%s3 + $0xb4] sm:$0xf]
      %v3999 = vld [vmem:[%s3 + $0xb8] sm:$0xf]
      %v4000 = vld [vmem:[%s3 + $0xbc] sm:$0xf]
      %v4001 = vld [vmem:[%s3 + $0xc0] sm:$0xf]
      %v4002 = vld [vmem:[%s3 + $0xc4] sm:$0xf]
      %v4003 = vld [vmem:[%s3 + $0xc8] sm:$0xf]
      %v4004 = vld [vmem:[%s3 + $0xcc] sm:$0xf]
      %v4005 = vld [vmem:[%s3 + $0xd0] sm:$0xf]
      %v4006 = vld [vmem:[%s3 + $0xd4] sm:$0xf]
      %v4007 = vld [vmem:[%s3 + $0xd8] sm:$0xf]
      %v4008 = vld [vmem:[%s3 + $0xdc] sm:$0xf]
      %v4009 = vld [vmem:[%s3 + $0xe0] sm:$0xf]
      %v4010 = vld [vmem:[%s3 + $0xe4] sm:$0xf]
      %v4011 = vld [vmem:[%s3 + $0xe8] sm:$0xf]
      %v4012 = vld [vmem:[%s3 + $0xec] sm:$0xf]
      %v4013 = vld [vmem:[%s3 + $0xf0] sm:$0xf]
      %v4014 = vld [vmem:[%s3 + $0xf4] sm:$0xf]
      %v4015 = vld [vmem:[%s3 + $0xf8] sm:$0xf]
      %v4016 = vld [vmem:[%s3 + $0xfc] sm:$0xf]
      %v4017 = vld [vmem:[%s3 + $0x100] sm:$0xf]
      %v4018 = vld [vmem:[%s3 + $0x104] sm:$0xf]
      %v4019 = vld [vmem:[%s3 + $0x108] sm:$0xf]
      %v4020 = vld [vmem:[%s3 + $0x10c] sm:$0xf]
      %v4021 = vld [vmem:[%s3 + $0x110] sm:$0xf]
      %v4022 = vld [vmem:[%s3 + $0x114] sm:$0xf]
      %v4023 = vld [vmem:[%s3 + $0x118] sm:$0xf]
      %v4024 = vld [vmem:[%s3 + $0x11c] sm:$0xf]
      %v4025 = vld [vmem:[%s3 + $0x120] sm:$0xf]
      %v4026 = vld [vmem:[%s3 + $0x124] sm:$0xf]
      %v4027 = vld [vmem:[%s3 + $0x128] sm:$0xf]
      %v4028 = vld [vmem:[%s3 + $0x12c] sm:$0xf]
      %v4029 = vld [vmem:[%s3 + $0x130] sm:$0xf]
      %v4030 = vld [vmem:[%s3 + $0x134] sm:$0xf]
      %v4031 = vld [vmem:[%s3 + $0x138] sm:$0xf]
      %v4032 = vld [vmem:[%s3 + $0x13c] sm:$0xf]
      %v4033 = vld [vmem:[%s3 + $0x140] sm:$0xf]
      %v4034 = vld [vmem:[%s3 + $0x144] sm:$0xf]
      %v4035 = vld [vmem:[%s3 + $0x148] sm:$0xf]
      %v4036 = vld [vmem:[%s3 + $0x14c] sm:$0xf]
      %v4037 = vld [vmem:[%s3 + $0x150] sm:$0xf]
      %v4038 = vld [vmem:[%s3 + $0x154] sm:$0xf]
      %v4039 = vld [vmem:[%s3 + $0x158] sm:$0xf]
      %v4040 = vld [vmem:[%s3 + $0x15c] sm:$0xf]
      %v4041 = vld [vmem:[%s3 + $0x160] sm:$0xf]
      %v4042 = vld [vmem:[%s3 + $0x164] sm:$0xf]
      %v4043 = vld [vmem:[%s3 + $0x168] sm:$0xf]
      %v4044 = vld [vmem:[%s3 + $0x16c] sm:$0xf]
      %v4045 = vld [vmem:[%s3 + $0x170] sm:$0xf]
      %v4046 = vld [vmem:[%s3 + $0x174] sm:$0xf]
      %v4047 = vld [vmem:[%s3 + $0x178] sm:$0xf]
      %v4048 = vld [vmem:[%s3 + $0x17c] sm:$0xf]
      %v4049 = vld [vmem:[%s3 + $0x180] sm:$0xf]
      %v4050 = vld [vmem:[%s3 + $0x184] sm:$0xf]
      %v4051 = vld [vmem:[%s3 + $0x188] sm:$0xf]
      %v4052 = vld [vmem:[%s3 + $0x18c] sm:$0xf]
      %v4053 = vld [vmem:[%s3 + $0x190] sm:$0xf]
      %v4054 = vld [vmem:[%s3 + $0x194] sm:$0xf]
      %v4055 = vld [vmem:[%s3 + $0x198] sm:$0xf]
      %v4056 = vld [vmem:[%s3 + $0x19c] sm:$0xf]
      %v4057 = vld [vmem:[%s3 + $0x1a0] sm:$0xf]
      %v4058 = vld [vmem:[%s3 + $0x1a4] sm:$0xf]
      %v4059 = vld [vmem:[%s3 + $0x1a8] sm:$0xf]
      %v4060 = vld [vmem:[%s3 + $0x1ac] sm:$0xf]
      %v4061 = vld [vmem:[%s3 + $0x1b0] sm:$0xf]
      %v4062 = vld [vmem:[%s3 + $0x1b4] sm:$0xf]
      %v4063 = vld [vmem:[%s3 + $0x1b8] sm:$0xf]
      %v4064 = vld [vmem:[%s3 + $0x1bc] sm:$0xf]
      %v4065 = vld [vmem:[%s3 + $0x1c0] sm:$0xf]
      %v4066 = vld [vmem:[%s3 + $0x1c4] sm:$0xf]
      %v4067 = vld [vmem:[%s3 + $0x1c8] sm:$0xf]
      %v4068 = vld [vmem:[%s3 + $0x1cc] sm:$0xf]
      %v4069 = vld [vmem:[%s3 + $0x1d0] sm:$0xf]
      %v4070 = vld [vmem:[%s3 + $0x1d4] sm:$0xf]
      %v4071 = vld [vmem:[%s3 + $0x1d8] sm:$0xf]
      %v4072 = vld [vmem:[%s3 + $0x1dc] sm:$0xf]
      %v4073 = vld [vmem:[%s3 + $0x1e0] sm:$0xf]
      %v4074 = vld [vmem:[%s3 + $0x1e4] sm:$0xf]
      %v4075 = vld [vmem:[%s3 + $0x1e8] sm:$0xf]
      %v4076 = vld [vmem:[%s3 + $0x1ec] sm:$0xf]
      %v4077 = vld [vmem:[%s3 + $0x1f0] sm:$0xf]
      %v4078 = vld [vmem:[%s3 + $0x1f4] sm:$0xf]
      %v4079 = vld [vmem:[%s3 + $0x1f8] sm:$0xf]
      %v4080 = vld [vmem:[%s3 + $0x1fc] sm:$0xf]
      %v4081 = vld [vmem:[%s3 + $0x200] sm:$0xf]
      %v4082 = vld [vmem:[%s3 + $0x204] sm:$0xf]
      %v4083 = vld [vmem:[%s3 + $0x208] sm:$0xf]
      %v4084 = vld [vmem:[%s3 + $0x20c] sm:$0xf]
      %v4085 = vld [vmem:[%s3 + $0x210] sm:$0xf]
      %v4086 = vld [vmem:[%s3 + $0x214] sm:$0xf]
      %v4087 = vld [vmem:[%s3 + $0x218] sm:$0xf]
      %v4088 = vld [vmem:[%s3 + $0x21c] sm:$0xf]
      %v4089 = vld [vmem:[%s3 + $0x220] sm:$0xf]
      %v4090 = vld [vmem:[%s3 + $0x224] sm:$0xf]
      %v4091 = vld [vmem:[%s3 + $0x228] sm:$0xf]
      %v4092 = vld [vmem:[%s3 + $0x22c] sm:$0xf]
      %v4093 = vld [vmem:[%s3 + $0x230] sm:$0xf]
      %v4094 = vld [vmem:[%s3 + $0x234] sm:$0xf]
      %v4095 = vld [vmem:[%s3 + $0x238] sm:$0xf]
      %v4096 = vld [vmem:[%s3 + $0x23c] sm:$0xf]
      %v4241 = vunpack.c.l.b16 %v3953
      %v4242 = vunpack.c.l.b16 %v3954
      %v4243 = vunpack.c.l.b16 %v3955
      %v4244 = vunpack.c.l.b16 %v3956
      %v4245 = vunpack.c.l.b16 %v3957
      %v4246 = vunpack.c.l.b16 %v3958
      %v4247 = vunpack.c.l.b16 %v3959
      %v4248 = vunpack.c.l.b16 %v3960
      %v4249 = vunpack.c.l.b16 %v3961
      %v4250 = vunpack.c.l.b16 %v3962
      %v4251 = vunpack.c.l.b16 %v3963
      %v4252 = vunpack.c.l.b16 %v3964
      %v4253 = vunpack.c.l.b16 %v3965
      %v4254 = vunpack.c.l.b16 %v3966
      %v4255 = vunpack.c.l.b16 %v3967
      %v4256 = vunpack.c.l.b16 %v3968
      %v4257 = vunpack.c.l.b16 %v3969
      %v4258 = vunpack.c.l.b16 %v3970
      %v4259 = vunpack.c.l.b16 %v3971
      %v4260 = vunpack.c.l.b16 %v3972
      %v4261 = vunpack.c.l.b16 %v3973
      %v4262 = vunpack.c.l.b16 %v3974
      %v4263 = vunpack.c.l.b16 %v3975
      %v4264 = vunpack.c.l.b16 %v3976
      %v4265 = vunpack.c.l.b16 %v3977
      %v4266 = vunpack.c.l.b16 %v3978
      %v4267 = vunpack.c.l.b16 %v3979
      %v4268 = vunpack.c.l.b16 %v3980
      %v4269 = vunpack.c.l.b16 %v3981
      %v4270 = vunpack.c.l.b16 %v3982
      %v4271 = vunpack.c.l.b16 %v3983
      %v4272 = vunpack.c.l.b16 %v3984
      %v4273 = vunpack.c.l.b16 %v3985
      %v4274 = vunpack.c.l.b16 %v3986
      %v4275 = vunpack.c.l.b16 %v3987
      %v4276 = vunpack.c.l.b16 %v3988
      %v4277 = vunpack.c.l.b16 %v3989
      %v4278 = vunpack.c.l.b16 %v3990
      %v4279 = vunpack.c.l.b16 %v3991
      %v4280 = vunpack.c.l.b16 %v3992
      %v4281 = vunpack.c.l.b16 %v3993
      %v4282 = vunpack.c.l.b16 %v3994
      %v4283 = vunpack.c.l.b16 %v3995
      %v4284 = vunpack.c.l.b16 %v3996
      %v4285 = vunpack.c.l.b16 %v3997
      %v4286 = vunpack.c.l.b16 %v3998
      %v4287 = vunpack.c.l.b16 %v3999
      %v4288 = vunpack.c.l.b16 %v4000
      %v4289 = vunpack.c.l.b16 %v4001
      %v4290 = vunpack.c.l.b16 %v4002
      %v4291 = vunpack.c.l.b16 %v4003
      %v4292 = vunpack.c.l.b16 %v4004
      %v4293 = vunpack.c.l.b16 %v4005
      %v4294 = vunpack.c.l.b16 %v4006
      %v4295 = vunpack.c.l.b16 %v4007
      %v4296 = vunpack.c.l.b16 %v4008
      %v4297 = vunpack.c.l.b16 %v4009
      %v4298 = vunpack.c.l.b16 %v4010
      %v4299 = vunpack.c.l.b16 %v4011
      %v4300 = vunpack.c.l.b16 %v4012
      %v4301 = vunpack.c.l.b16 %v4013
      %v4302 = vunpack.c.l.b16 %v4014
      %v4303 = vunpack.c.l.b16 %v4015
      %v4304 = vunpack.c.l.b16 %v4016
      %v4305 = vunpack.c.l.b16 %v4017
      %v4306 = vunpack.c.l.b16 %v4018
      %v4307 = vunpack.c.l.b16 %v4019
      %v4308 = vunpack.c.l.b16 %v4020
      %v4309 = vunpack.c.l.b16 %v4021
      %v4310 = vunpack.c.l.b16 %v4022
      %v4311 = vunpack.c.l.b16 %v4023
      %v4312 = vunpack.c.l.b16 %v4024
      %v4313 = vunpack.c.l.b16 %v4025
      %v4314 = vunpack.c.l.b16 %v4026
      %v4315 = vunpack.c.l.b16 %v4027
      %v4316 = vunpack.c.l.b16 %v4028
      %v4317 = vunpack.c.l.b16 %v4029
      %v4318 = vunpack.c.l.b16 %v4030
      %v4319 = vunpack.c.l.b16 %v4031
      %v4320 = vunpack.c.l.b16 %v4032
      %v4321 = vunpack.c.l.b16 %v4033
      %v4322 = vunpack.c.l.b16 %v4034
      %v4323 = vunpack.c.l.b16 %v4035
      %v4324 = vunpack.c.l.b16 %v4036
      %v4325 = vunpack.c.l.b16 %v4037
      %v4326 = vunpack.c.l.b16 %v4038
      %v4327 = vunpack.c.l.b16 %v4039
      %v4328 = vunpack.c.l.b16 %v4040
      %v4329 = vunpack.c.l.b16 %v4041
      %v4330 = vunpack.c.l.b16 %v4042
      %v4331 = vunpack.c.l.b16 %v4043
      %v4332 = vunpack.c.l.b16 %v4044
      %v4333 = vunpack.c.l.b16 %v4045
      %v4334 = vunpack.c.l.b16 %v4046
      %v4335 = vunpack.c.l.b16 %v4047
      %v4336 = vunpack.c.l.b16 %v4048
      %v4337 = vunpack.c.l.b16 %v4049
      %v4338 = vunpack.c.l.b16 %v4050
      %v4339 = vunpack.c.l.b16 %v4051
      %v4340 = vunpack.c.l.b16 %v4052
      %v4341 = vunpack.c.l.b16 %v4053
      %v4342 = vunpack.c.l.b16 %v4054
      %v4343 = vunpack.c.l.b16 %v4055
      %v4344 = vunpack.c.l.b16 %v4056
      %v4345 = vunpack.c.l.b16 %v4057
      %v4346 = vunpack.c.l.b16 %v4058
      %v4347 = vunpack.c.l.b16 %v4059
      %v4348 = vunpack.c.l.b16 %v4060
      %v4349 = vunpack.c.l.b16 %v4061
      %v4350 = vunpack.c.l.b16 %v4062
      %v4351 = vunpack.c.l.b16 %v4063
      %v4352 = vunpack.c.l.b16 %v4064
      %v4353 = vunpack.c.l.b16 %v4065
      %v4354 = vunpack.c.l.b16 %v4066
      %v4355 = vunpack.c.l.b16 %v4067
      %v4356 = vunpack.c.l.b16 %v4068
      %v4357 = vunpack.c.l.b16 %v4069
      %v4358 = vunpack.c.l.b16 %v4070
      %v4359 = vunpack.c.l.b16 %v4071
      %v4360 = vunpack.c.l.b16 %v4072
      %v4361 = vunpack.c.l.b16 %v4073
      %v4362 = vunpack.c.l.b16 %v4074
      %v4363 = vunpack.c.l.b16 %v4075
      %v4364 = vunpack.c.l.b16 %v4076
      %v4365 = vunpack.c.l.b16 %v4077
      %v4366 = vunpack.c.l.b16 %v4078
      %v4367 = vunpack.c.l.b16 %v4079
      %v4368 = vunpack.c.l.b16 %v4080
      %v4369 = vunpack.c.l.b16 %v4081
      %v4370 = vunpack.c.l.b16 %v4082
      %v4371 = vunpack.c.l.b16 %v4083
      %v4372 = vunpack.c.l.b16 %v4084
      %v4373 = vunpack.c.l.b16 %v4085
      %v4374 = vunpack.c.l.b16 %v4086
      %v4375 = vunpack.c.l.b16 %v4087
      %v4376 = vunpack.c.l.b16 %v4088
      %v4377 = vunpack.c.l.b16 %v4089
      %v4378 = vunpack.c.l.b16 %v4090
      %v4379 = vunpack.c.l.b16 %v4091
      %v4380 = vunpack.c.l.b16 %v4092
      %v4381 = vunpack.c.l.b16 %v4093
      %v4382 = vunpack.c.l.b16 %v4094
      %v4383 = vunpack.c.l.b16 %v4095
      %v4384 = vunpack.c.l.b16 %v4096
      %v4385 = vpack.c.b16 %v4242, %v4241
      %v4386 = vpack.c.b16 %v4244, %v4243
      %v4387 = vpack.c.b16 %v4246, %v4245
      %v4388 = vpack.c.b16 %v4248, %v4247
      %v4389 = vpack.c.b16 %v4250, %v4249
      %v4390 = vpack.c.b16 %v4252, %v4251
      %v4391 = vpack.c.b16 %v4254, %v4253
      %v4392 = vpack.c.b16 %v4256, %v4255
      %v4393 = vpack.c.b16 %v4258, %v4257
      %v4394 = vpack.c.b16 %v4260, %v4259
      %v4395 = vpack.c.b16 %v4262, %v4261
      %v4396 = vpack.c.b16 %v4264, %v4263
      %v4397 = vpack.c.b16 %v4266, %v4265
      %v4398 = vpack.c.b16 %v4268, %v4267
      %v4399 = vpack.c.b16 %v4270, %v4269
      %v4400 = vpack.c.b16 %v4272, %v4271
      %v4401 = vpack.c.b16 %v4274, %v4273
      %v4402 = vpack.c.b16 %v4276, %v4275
      %v4403 = vpack.c.b16 %v4278, %v4277
      %v4404 = vpack.c.b16 %v4280, %v4279
      %v4405 = vpack.c.b16 %v4282, %v4281
      %v4406 = vpack.c.b16 %v4284, %v4283
      %v4407 = vpack.c.b16 %v4286, %v4285
      %v4408 = vpack.c.b16 %v4288, %v4287
      %v4409 = vpack.c.b16 %v4290, %v4289
      %v4410 = vpack.c.b16 %v4292, %v4291
      %v4411 = vpack.c.b16 %v4294, %v4293
      %v4412 = vpack.c.b16 %v4296, %v4295
      %v4413 = vpack.c.b16 %v4298, %v4297
      %v4414 = vpack.c.b16 %v4300, %v4299
      %v4415 = vpack.c.b16 %v4302, %v4301
      %v4416 = vpack.c.b16 %v4304, %v4303
      %v4417 = vpack.c.b16 %v4306, %v4305
      %v4418 = vpack.c.b16 %v4308, %v4307
      %v4419 = vpack.c.b16 %v4310, %v4309
      %v4420 = vpack.c.b16 %v4312, %v4311
      %v4421 = vpack.c.b16 %v4314, %v4313
      %v4422 = vpack.c.b16 %v4316, %v4315
      %v4423 = vpack.c.b16 %v4318, %v4317
      %v4424 = vpack.c.b16 %v4320, %v4319
      %v4425 = vpack.c.b16 %v4322, %v4321
      %v4426 = vpack.c.b16 %v4324, %v4323
      %v4427 = vpack.c.b16 %v4326, %v4325
      %v4428 = vpack.c.b16 %v4328, %v4327
      %v4429 = vpack.c.b16 %v4330, %v4329
      %v4430 = vpack.c.b16 %v4332, %v4331
      %v4431 = vpack.c.b16 %v4334, %v4333
      %v4432 = vpack.c.b16 %v4336, %v4335
      %v4433 = vpack.c.b16 %v4338, %v4337
      %v4434 = vpack.c.b16 %v4340, %v4339
      %v4435 = vpack.c.b16 %v4342, %v4341
      %v4436 = vpack.c.b16 %v4344, %v4343
      %v4437 = vpack.c.b16 %v4346, %v4345
      %v4438 = vpack.c.b16 %v4348, %v4347
      %v4439 = vpack.c.b16 %v4350, %v4349
      %v4440 = vpack.c.b16 %v4352, %v4351
      %v4441 = vpack.c.b16 %v4354, %v4353
      %v4442 = vpack.c.b16 %v4356, %v4355
      %v4443 = vpack.c.b16 %v4358, %v4357
      %v4444 = vpack.c.b16 %v4360, %v4359
      %v4445 = vpack.c.b16 %v4362, %v4361
      %v4446 = vpack.c.b16 %v4364, %v4363
      %v4447 = vpack.c.b16 %v4366, %v4365
      %v4448 = vpack.c.b16 %v4368, %v4367
      %v4449 = vpack.c.b16 %v4370, %v4369
      %v4450 = vpack.c.b16 %v4372, %v4371
      %v4451 = vpack.c.b16 %v4374, %v4373
      %v4452 = vpack.c.b16 %v4376, %v4375
      %v4453 = vpack.c.b16 %v4378, %v4377
      %v4454 = vpack.c.b16 %v4380, %v4379
      %v4455 = vpack.c.b16 %v4382, %v4381
      %v4456 = vpack.c.b16 %v4384, %v4383
      %4529 = vmatprep.subr.bf16.mxu0 0
      %4530 = vmatpush1.bf16.msra.mxu0 %v4385
      %4531 = vmatprep.subr.bf16.mxu0 0
      %4532 = vmatpush1.bf16.msra.mxu0 %v4386
      %4533 = vmatprep.subr.bf16.mxu0 0
      %4534 = vmatpush1.bf16.msra.mxu0 %v4387
      %4535 = vmatprep.subr.bf16.mxu0 0
      %4536 = vmatpush1.bf16.msra.mxu0 %v4388
      %4537 = vmatprep.subr.bf16.mxu0 0
      %4538 = vmatpush1.bf16.msra.mxu0 %v4389
      %4539 = vmatprep.subr.bf16.mxu0 0
      %4540 = vmatpush1.bf16.msra.mxu0 %v4390
      %4541 = vmatprep.subr.bf16.mxu0 0
      %4542 = vmatpush1.bf16.msra.mxu0 %v4391
      %4543 = vmatprep.subr.bf16.mxu0 0
      %4544 = vmatpush1.bf16.msra.mxu0 %v4392
      %4545 = vmatprep.subr.bf16.mxu0 0
      %4546 = vmatpush1.bf16.msra.mxu0 %v4393
      %4547 = vmatprep.subr.bf16.mxu0 0
      %4548 = vmatpush1.bf16.msra.mxu0 %v4394
      %4549 = vmatprep.subr.bf16.mxu0 0
      %4550 = vmatpush1.bf16.msra.mxu0 %v4395
      %4551 = vmatprep.subr.bf16.mxu0 0
      %4552 = vmatpush1.bf16.msra.mxu0 %v4396
      %4553 = vmatprep.subr.bf16.mxu0 0
      %4554 = vmatpush1.bf16.msra.mxu0 %v4397
      %4555 = vmatprep.subr.bf16.mxu0 0
      %4556 = vmatpush1.bf16.msra.mxu0 %v4398
      %4557 = vmatprep.subr.bf16.mxu0 0
      %4558 = vmatpush1.bf16.msra.mxu0 %v4399
      %4559 = vmatprep.subr.bf16.mxu0 0
      %4560 = vmatpush1.bf16.msra.mxu0 %v4400
      %4561 = vmatprep.mubr.bf16.mxu0 %v3810
      %4562 = vmatmul.mubr.bf16.gmra.mrb[0].mxu0 %v3809
      %v4563 = vpop.f32.mrb[0].mxu0
      %v4564 = vadd.f32 0.0, %v4563
      %v4565 = vpop.f32.mrb[0].mxu0
      %v4566 = vpop.f32.mrb[0].mxu0
      %v4567 = vadd.f32 0.0, %v4566
      %v4568 = vpop.f32.mrb[0].mxu0
      %4569 = vmatprep.mubr.bf16.mxu0 %v3819
      %4570 = vmatmul.mubr.bf16.gmra.mrb[0].mxu0 %v3818
      %v4571 = vpop.f32.mrb[0].mxu0
      %v4572 = vadd.f32 0.0, %v4571
      %v4573 = vpop.f32.mrb[0].mxu0
      %v4574 = vpop.f32.mrb[0].mxu0
      %v4575 = vadd.f32 0.0, %v4574
      %v4576 = vpop.f32.mrb[0].mxu0
      %4577 = vmatprep.mubr.bf16.mxu0 %v3828
      %4578 = vmatmul.mubr.bf16.gmra.mrb[0].mxu0 %v3827
      %v4579 = vpop.f32.mrb[0].mxu0
      %v4580 = vadd.f32 0.0, %v4579
      %v4581 = vpop.f32.mrb[0].mxu0
      %v4582 = vpop.f32.mrb[0].mxu0
      %v4583 = vadd.f32 0.0, %v4582
      %v4584 = vpop.f32.mrb[0].mxu0
      %4585 = vmatprep.mubr.bf16.mxu0 %v3837
      %4586 = vmatmul.mubr.bf16.gmra.mrb[0].mxu0 %v3836
      %v4587 = vpop.f32.mrb[0].mxu0
      %v4588 = vadd.f32 0.0, %v4587
      %v4589 = vpop.f32.mrb[0].mxu0
      %v4590 = vpop.f32.mrb[0].mxu0
      %v4591 = vadd.f32 0.0, %v4590
      %v4592 = vpop.f32.mrb[0].mxu0
      %4593 = vmatprep.mubr.bf16.mxu0 %v3846
      %4594 = vmatmul.mubr.bf16.gmra.mrb[0].mxu0 %v3845
      %v4595 = vpop.f32.mrb[0].mxu0
      %v4596 = vadd.f32 0.0, %v4595
      %v4597 = vpop.f32.mrb[0].mxu0
      %v4598 = vpop.f32.mrb[0].mxu0
      %v4599 = vadd.f32 0.0, %v4598
      %v4600 = vpop.f32.mrb[0].mxu0
      %4601 = vmatprep.mubr.bf16.mxu0 %v3855
      %4602 = vmatmul.mubr.bf16.gmra.mrb[0].mxu0 %v3854
      %v4603 = vpop.f32.mrb[0].mxu0
      %v4604 = vadd.f32 0.0, %v4603
      %v4605 = vpop.f32.mrb[0].mxu0
      %v4606 = vpop.f32.mrb[0].mxu0
      %v4607 = vadd.f32 0.0, %v4606
      %v4608 = vpop.f32.mrb[0].mxu0
      %4609 = vmatprep.mubr.bf16.mxu0 %v3864
      %4610 = vmatmul.mubr.bf16.gmra.mrb[0].mxu0 %v3863
      %v4611 = vpop.f32.mrb[0].mxu0
      %v4612 = vadd.f32 0.0, %v4611
      %v4613 = vpop.f32.mrb[0].mxu0
      %v4614 = vpop.f32.mrb[0].mxu0
      %v4615 = vadd.f32 0.0, %v4614
      %v4616 = vpop.f32.mrb[0].mxu0
      %4617 = vmatprep.mubr.bf16.mxu0 %v3873
      %4618 = vmatmul.mubr.bf16.gmra.mrb[0].mxu0 %v3872
      %v4619 = vpop.f32.mrb[0].mxu0
      %v4620 = vadd.f32 0.0, %v4619
      %v4621 = vpop.f32.mrb[0].mxu0
      %v4622 = vpop.f32.mrb[0].mxu0
      %v4623 = vadd.f32 0.0, %v4622
      %v4624 = vpop.f32.mrb[0].mxu0
      %4625 = vmatprep.mubr.bf16.mxu0 %v3882
      %4626 = vmatmul.mubr.bf16.gmra.mrb[0].mxu0 %v3881
      %v4627 = vpop.f32.mrb[0].mxu0
      %v4628 = vadd.f32 0.0, %v4627
      %v4629 = vpop.f32.mrb[0].mxu0
      %v4630 = vpop.f32.mrb[0].mxu0
      %v4631 = vadd.f32 0.0, %v4630
      %v4632 = vpop.f32.mrb[0].mxu0
      %4633 = vmatprep.mubr.bf16.mxu0 %v3891
      %4634 = vmatmul.mubr.bf16.gmra.mrb[0].mxu0 %v3890
      %v4635 = vpop.f32.mrb[0].mxu0
      %v4636 = vadd.f32 0.0, %v4635
      %v4637 = vpop.f32.mrb[0].mxu0
      %v4638 = vpop.f32.mrb[0].mxu0
      %v4639 = vadd.f32 0.0, %v4638
      %v4640 = vpop.f32.mrb[0].mxu0
      %4641 = vmatprep.mubr.bf16.mxu0 %v3900
      %4642 = vmatmul.mubr.bf16.gmra.mrb[0].mxu0 %v3899
      %v4643 = vpop.f32.mrb[0].mxu0
      %v4644 = vadd.f32 0.0, %v4643
      %v4645 = vpop.f32.mrb[0].mxu0
      %v4646 = vpop.f32.mrb[0].mxu0
      %v4647 = vadd.f32 0.0, %v4646
      %v4648 = vpop.f32.mrb[0].mxu0
      %4649 = vmatprep.mubr.bf16.mxu0 %v3909
      %4650 = vmatmul.mubr.bf16.gmra.mrb[0].mxu0 %v3908
      %v4651 = vpop.f32.mrb[0].mxu0
      %v4652 = vadd.f32 0.0, %v4651
      %v4653 = vpop.f32.mrb[0].mxu0
      %v4654 = vpop.f32.mrb[0].mxu0
      %v4655 = vadd.f32 0.0, %v4654
      %v4656 = vpop.f32.mrb[0].mxu0
      %4657 = vmatprep.mubr.bf16.mxu0 %v3918
      %4658 = vmatmul.mubr.bf16.gmra.mrb[0].mxu0 %v3917
      %v4659 = vpop.f32.mrb[0].mxu0
      %v4660 = vadd.f32 0.0, %v4659
      %v4661 = vpop.f32.mrb[0].mxu0
      %v4662 = vpop.f32.mrb[0].mxu0
      %v4663 = vadd.f32 0.0, %v4662
      %v4664 = vpop.f32.mrb[0].mxu0
      %4665 = vmatprep.mubr.bf16.mxu0 %v3927
      %4666 = vmatmul.mubr.bf16.gmra.mrb[0].mxu0 %v3926
      %v4667 = vpop.f32.mrb[0].mxu0
      %v4668 = vadd.f32 0.0, %v4667
      %v4669 = vpop.f32.mrb[0].mxu0
      %v4670 = vpop.f32.mrb[0].mxu0
      %v4671 = vadd.f32 0.0, %v4670
      %v4672 = vpop.f32.mrb[0].mxu0
      %4673 = vmatprep.mubr.bf16.mxu0 %v3936
      %4674 = vmatmul.mubr.bf16.gmra.mrb[0].mxu0 %v3935
      %v4675 = vpop.f32.mrb[0].mxu0
      %v4676 = vadd.f32 0.0, %v4675
      %v4677 = vpop.f32.mrb[0].mxu0
      %v4678 = vpop.f32.mrb[0].mxu0
      %v4679 = vadd.f32 0.0, %v4678
      %v4680 = vpop.f32.mrb[0].mxu0
      %4681 = vmatprep.mubr.bf16.mxu0 %v3945
      %4682 = vmatmul.mubr.bf16.gmra.mrb[0].mxu0 %v3944
      %v4683 = vpop.f32.mrb[0].mxu0
      %v4684 = vadd.f32 0.0, %v4683
      %v4685 = vpop.f32.mrb[0].mxu0
      %v4686 = vpop.f32.mrb[0].mxu0
      %v4687 = vadd.f32 0.0, %v4686
      %v4688 = vpop.f32.mrb[0].mxu0
      %4689 = vdwg.mxu0
      %4690 = vmatprep.subr.bf16.mxu0 0
      %4691 = vmatpush1.bf16.msra.mxu0 %v4401
      %4692 = vmatprep.subr.bf16.mxu0 0
      %4693 = vmatpush1.bf16.msra.mxu0 %v4402
      %4694 = vmatprep.subr.bf16.mxu0 0
      %4695 = vmatpush1.bf16.msra.mxu0 %v4403
      %4696 = vmatprep.subr.bf16.mxu0 0
      %4697 = vmatpush1.bf16.msra.mxu0 %v4404
      %4698 = vmatprep.subr.bf16.mxu0 0
      %4699 = vmatpush1.bf16.msra.mxu0 %v4405
      %4700 = vmatprep.subr.bf16.mxu0 0
      %4701 = vmatpush1.bf16.msra.mxu0 %v4406
      %4702 = vmatprep.subr.bf16.mxu0 0
      %4703 = vmatpush1.bf16.msra.mxu0 %v4407
      %4704 = vmatprep.subr.bf16.mxu0 0
      %4705 = vmatpush1.bf16.msra.mxu0 %v4408
      %4706 = vmatprep.subr.bf16.mxu0 0
      %4707 = vmatpush1.bf16.msra.mxu0 %v4409
      %4708 = vmatprep.subr.bf16.mxu0 0
      %4709 = vmatpush1.bf16.msra.mxu0 %v4410
      %4710 = vmatprep.subr.bf16.mxu0 0
      %4711 = vmatpush1.bf16.msra.mxu0 %v4411
      %4712 = vmatprep.subr.bf16.mxu0 0
      %4713 = vmatpush1.bf16.msra.mxu0 %v4412
      %4714 = vmatprep.subr.bf16.mxu0 0
      %4715 = vmatpush1.bf16.msra.mxu0 %v4413
      %4716 = vmatprep.subr.bf16.mxu0 0
      %4717 = vmatpush1.bf16.msra.mxu0 %v4414
      %4718 = vmatprep.subr.bf16.mxu0 0
      %4719 = vmatpush1.bf16.msra.mxu0 %v4415
      %4720 = vmatprep.subr.bf16.mxu0 0
      %4721 = vmatpush1.bf16.msra.mxu0 %v4416
      %4722 = vmatprep.mubr.bf16.mxu0 %v3812
      %4723 = vmatmul.mubr.bf16.gmra.mrb[0].mxu0 %v3811
      %v4724 = vpop.f32.mrb[0].mxu0
      %v4725 = vadd.f32 %v4564, %v4724
      %v4726 = vpop.f32.mrb[0].mxu0
      %v4727 = vpop.f32.mrb[0].mxu0
      %v4728 = vadd.f32 %v4567, %v4727
      %v4729 = vpop.f32.mrb[0].mxu0
      %4730 = vmatprep.mubr.bf16.mxu0 %v3821
      %4731 = vmatmul.mubr.bf16.gmra.mrb[0].mxu0 %v3820
      %v4732 = vpop.f32.mrb[0].mxu0
      %v4733 = vadd.f32 %v4572, %v4732
      %v4734 = vpop.f32.mrb[0].mxu0
      %v4735 = vpop.f32.mrb[0].mxu0
      %v4736 = vadd.f32 %v4575, %v4735
      %v4737 = vpop.f32.mrb[0].mxu0
      %4738 = vmatprep.mubr.bf16.mxu0 %v3830
      %4739 = vmatmul.mubr.bf16.gmra.mrb[0].mxu0 %v3829
      %v4740 = vpop.f32.mrb[0].mxu0
      %v4741 = vadd.f32 %v4580, %v4740
      %v4742 = vpop.f32.mrb[0].mxu0
      %v4743 = vpop.f32.mrb[0].mxu0
      %v4744 = vadd.f32 %v4583, %v4743
      %v4745 = vpop.f32.mrb[0].mxu0
      %4746 = vmatprep.mubr.bf16.mxu0 %v3839
      %4747 = vmatmul.mubr.bf16.gmra.mrb[0].mxu0 %v3838
      %v4748 = vpop.f32.mrb[0].mxu0
      %v4749 = vadd.f32 %v4588, %v4748
      %v4750 = vpop.f32.mrb[0].mxu0
      %v4751 = vpop.f32.mrb[0].mxu0
      %v4752 = vadd.f32 %v4591, %v4751
      %v4753 = vpop.f32.mrb[0].mxu0
      %4754 = vmatprep.mubr.bf16.mxu0 %v3848
      %4755 = vmatmul.mubr.bf16.gmra.mrb[0].mxu0 %v3847
      %v4756 = vpop.f32.mrb[0].mxu0
      %v4757 = vadd.f32 %v4596, %v4756
      %v4758 = vpop.f32.mrb[0].mxu0
      %v4759 = vpop.f32.mrb[0].mxu0
      %v4760 = vadd.f32 %v4599, %v4759
      %v4761 = vpop.f32.mrb[0].mxu0
      %4762 = vmatprep.mubr.bf16.mxu0 %v3857
      %4763 = vmatmul.mubr.bf16.gmra.mrb[0].mxu0 %v3856
      %v4764 = vpop.f32.mrb[0].mxu0
      %v4765 = vadd.f32 %v4604, %v4764
      %v4766 = vpop.f32.mrb[0].mxu0
      %v4767 = vpop.f32.mrb[0].mxu0
      %v4768 = vadd.f32 %v4607, %v4767
      %v4769 = vpop.f32.mrb[0].mxu0
      %4770 = vmatprep.mubr.bf16.mxu0 %v3866
      %4771 = vmatmul.mubr.bf16.gmra.mrb[0].mxu0 %v3865
      %v4772 = vpop.f32.mrb[0].mxu0
      %v4773 = vadd.f32 %v4612, %v4772
      %v4774 = vpop.f32.mrb[0].mxu0
      %v4775 = vpop.f32.mrb[0].mxu0
      %v4776 = vadd.f32 %v4615, %v4775
      %v4777 = vpop.f32.mrb[0].mxu0
      %4778 = vmatprep.mubr.bf16.mxu0 %v3875
      %4779 = vmatmul.mubr.bf16.gmra.mrb[0].mxu0 %v3874
      %v4780 = vpop.f32.mrb[0].mxu0
      %v4781 = vadd.f32 %v4620, %v4780
      %v4782 = vpop.f32.mrb[0].mxu0
      %v4783 = vpop.f32.mrb[0].mxu0
      %v4784 = vadd.f32 %v4623, %v4783
      %v4785 = vpop.f32.mrb[0].mxu0
      %4786 = vmatprep.mubr.bf16.mxu0 %v3884
      %4787 = vmatmul.mubr.bf16.gmra.mrb[0].mxu0 %v3883
      %v4788 = vpop.f32.mrb[0].mxu0
      %v4789 = vadd.f32 %v4628, %v4788
      %v4790 = vpop.f32.mrb[0].mxu0
      %v4791 = vpop.f32.mrb[0].mxu0
      %v4792 = vadd.f32 %v4631, %v4791
      %v4793 = vpop.f32.mrb[0].mxu0
      %4794 = vmatprep.mubr.bf16.mxu0 %v3893
      %4795 = vmatmul.mubr.bf16.gmra.mrb[0].mxu0 %v3892
      %v4796 = vpop.f32.mrb[0].mxu0
      %v4797 = vadd.f32 %v4636, %v4796
      %v4798 = vpop.f32.mrb[0].mxu0
      %v4799 = vpop.f32.mrb[0].mxu0
      %v4800 = vadd.f32 %v4639, %v4799
      %v4801 = vpop.f32.mrb[0].mxu0
      %4802 = vmatprep.mubr.bf16.mxu0 %v3902
      %4803 = vmatmul.mubr.bf16.gmra.mrb[0].mxu0 %v3901
      %v4804 = vpop.f32.mrb[0].mxu0
      %v4805 = vadd.f32 %v4644, %v4804
      %v4806 = vpop.f32.mrb[0].mxu0
      %v4807 = vpop.f32.mrb[0].mxu0
      %v4808 = vadd.f32 %v4647, %v4807
      %v4809 = vpop.f32.mrb[0].mxu0
      %4810 = vmatprep.mubr.bf16.mxu0 %v3911
      %4811 = vmatmul.mubr.bf16.gmra.mrb[0].mxu0 %v3910
      %v4812 = vpop.f32.mrb[0].mxu0
      %v4813 = vadd.f32 %v4652, %v4812
      %v4814 = vpop.f32.mrb[0].mxu0
      %v4815 = vpop.f32.mrb[0].mxu0
      %v4816 = vadd.f32 %v4655, %v4815
      %v4817 = vpop.f32.mrb[0].mxu0
      %4818 = vmatprep.mubr.bf16.mxu0 %v3920
      %4819 = vmatmul.mubr.bf16.gmra.mrb[0].mxu0 %v3919
      %v4820 = vpop.f32.mrb[0].mxu0
      %v4821 = vadd.f32 %v4660, %v4820
      %v4822 = vpop.f32.mrb[0].mxu0
      %v4823 = vpop.f32.mrb[0].mxu0
      %v4824 = vadd.f32 %v4663, %v4823
      %v4825 = vpop.f32.mrb[0].mxu0
      %4826 = vmatprep.mubr.bf16.mxu0 %v3929
      %4827 = vmatmul.mubr.bf16.gmra.mrb[0].mxu0 %v3928
      %v4828 = vpop.f32.mrb[0].mxu0
      %v4829 = vadd.f32 %v4668, %v4828
      %v4830 = vpop.f32.mrb[0].mxu0
      %v4831 = vpop.f32.mrb[0].mxu0
      %v4832 = vadd.f32 %v4671, %v4831
      %v4833 = vpop.f32.mrb[0].mxu0
      %4834 = vmatprep.mubr.bf16.mxu0 %v3938
      %4835 = vmatmul.mubr.bf16.gmra.mrb[0].mxu0 %v3937
      %v4836 = vpop.f32.mrb[0].mxu0
      %v4837 = vadd.f32 %v4676, %v4836
      %v4838 = vpop.f32.mrb[0].mxu0
      %v4839 = vpop.f32.mrb[0].mxu0
      %v4840 = vadd.f32 %v4679, %v4839
      %v4841 = vpop.f32.mrb[0].mxu0
      %4842 = vmatprep.mubr.bf16.mxu0 %v3947
      %4843 = vmatmul.mubr.bf16.gmra.mrb[0].mxu0 %v3946
      %v4844 = vpop.f32.mrb[0].mxu0
      %v4845 = vadd.f32 %v4684, %v4844
      %v4846 = vpop.f32.mrb[0].mxu0
      %v4847 = vpop.f32.mrb[0].mxu0
      %v4848 = vadd.f32 %v4687, %v4847
      %v4849 = vpop.f32.mrb[0].mxu0
      %4850 = vdwg.mxu0
      %4851 = vmatprep.subr.bf16.mxu0 0
      %4852 = vmatpush1.bf16.msra.mxu0 %v4417
      %4853 = vmatprep.subr.bf16.mxu0 0
      %4854 = vmatpush1.bf16.msra.mxu0 %v4418
      %4855 = vmatprep.subr.bf16.mxu0 0
      %4856 = vmatpush1.bf16.msra.mxu0 %v4419
      %4857 = vmatprep.subr.bf16.mxu0 0
      %4858 = vmatpush1.bf16.msra.mxu0 %v4420
      %4859 = vmatprep.subr.bf16.mxu0 0
      %4860 = vmatpush1.bf16.msra.mxu0 %v4421
      %4861 = vmatprep.subr.bf16.mxu0 0
      %4862 = vmatpush1.bf16.msra.mxu0 %v4422
      %4863 = vmatprep.subr.bf16.mxu0 0
      %4864 = vmatpush1.bf16.msra.mxu0 %v4423
      %4865 = vmatprep.subr.bf16.mxu0 0
      %4866 = vmatpush1.bf16.msra.mxu0 %v4424
      %4867 = vmatprep.subr.bf16.mxu0 0
      %4868 = vmatpush1.bf16.msra.mxu0 %v4425
      %4869 = vmatprep.subr.bf16.mxu0 0
      %4870 = vmatpush1.bf16.msra.mxu0 %v4426
      %4871 = vmatprep.subr.bf16.mxu0 0
      %4872 = vmatpush1.bf16.msra.mxu0 %v4427
      %4873 = vmatprep.subr.bf16.mxu0 0
      %4874 = vmatpush1.bf16.msra.mxu0 %v4428
      %4875 = vmatprep.subr.bf16.mxu0 0
      %4876 = vmatpush1.bf16.msra.mxu0 %v4429
      %4877 = vmatprep.subr.bf16.mxu0 0
      %4878 = vmatpush1.bf16.msra.mxu0 %v4430
      %4879 = vmatprep.subr.bf16.mxu0 0
      %4880 = vmatpush1.bf16.msra.mxu0 %v4431
      %4881 = vmatprep.subr.bf16.mxu0 0
      %4882 = vmatpush1.bf16.msra.mxu0 %v4432
      %4883 = vmatprep.mubr.bf16.mxu0 %v3814
      %4884 = vmatmul.mubr.bf16.gmra.mrb[0].mxu0 %v3813
      %v4885 = vpop.f32.mrb[0].mxu0
      %v4886 = vadd.f32 %v4725, %v4885
      %v4887 = vpop.f32.mrb[0].mxu0
      %v4888 = vpop.f32.mrb[0].mxu0
      %v4889 = vadd.f32 %v4728, %v4888
      %v4890 = vpop.f32.mrb[0].mxu0
      %4891 = vmatprep.mubr.bf16.mxu0 %v3823
      %4892 = vmatmul.mubr.bf16.gmra.mrb[0].mxu0 %v3822
      %v4893 = vpop.f32.mrb[0].mxu0
      %v4894 = vadd.f32 %v4733, %v4893
      %v4895 = vpop.f32.mrb[0].mxu0
      %v4896 = vpop.f32.mrb[0].mxu0
      %v4897 = vadd.f32 %v4736, %v4896
      %v4898 = vpop.f32.mrb[0].mxu0
      %4899 = vmatprep.mubr.bf16.mxu0 %v3832
      %4900 = vmatmul.mubr.bf16.gmra.mrb[0].mxu0 %v3831
      %v4901 = vpop.f32.mrb[0].mxu0
      %v4902 = vadd.f32 %v4741, %v4901
      %v4903 = vpop.f32.mrb[0].mxu0
      %v4904 = vpop.f32.mrb[0].mxu0
      %v4905 = vadd.f32 %v4744, %v4904
      %v4906 = vpop.f32.mrb[0].mxu0
      %4907 = vmatprep.mubr.bf16.mxu0 %v3841
      %4908 = vmatmul.mubr.bf16.gmra.mrb[0].mxu0 %v3840
      %v4909 = vpop.f32.mrb[0].mxu0
      %v4910 = vadd.f32 %v4749, %v4909
      %v4911 = vpop.f32.mrb[0].mxu0
      %v4912 = vpop.f32.mrb[0].mxu0
      %v4913 = vadd.f32 %v4752, %v4912
      %v4914 = vpop.f32.mrb[0].mxu0
      %4915 = vmatprep.mubr.bf16.mxu0 %v3850
      %4916 = vmatmul.mubr.bf16.gmra.mrb[0].mxu0 %v3849
      %v4917 = vpop.f32.mrb[0].mxu0
      %v4918 = vadd.f32 %v4757, %v4917
      %v4919 = vpop.f32.mrb[0].mxu0
      %v4920 = vpop.f32.mrb[0].mxu0
      %v4921 = vadd.f32 %v4760, %v4920
      %v4922 = vpop.f32.mrb[0].mxu0
      %4923 = vmatprep.mubr.bf16.mxu0 %v3859
      %4924 = vmatmul.mubr.bf16.gmra.mrb[0].mxu0 %v3858
      %v4925 = vpop.f32.mrb[0].mxu0
      %v4926 = vadd.f32 %v4765, %v4925
      %v4927 = vpop.f32.mrb[0].mxu0
      %v4928 = vpop.f32.mrb[0].mxu0
      %v4929 = vadd.f32 %v4768, %v4928
      %v4930 = vpop.f32.mrb[0].mxu0
      %4931 = vmatprep.mubr.bf16.mxu0 %v3868
      %4932 = vmatmul.mubr.bf16.gmra.mrb[0].mxu0 %v3867
      %v4933 = vpop.f32.mrb[0].mxu0
      %v4934 = vadd.f32 %v4773, %v4933
      %v4935 = vpop.f32.mrb[0].mxu0
      %v4936 = vpop.f32.mrb[0].mxu0
      %v4937 = vadd.f32 %v4776, %v4936
      %v4938 = vpop.f32.mrb[0].mxu0
      %4939 = vmatprep.mubr.bf16.mxu0 %v3877
      %4940 = vmatmul.mubr.bf16.gmra.mrb[0].mxu0 %v3876
      %v4941 = vpop.f32.mrb[0].mxu0
      %v4942 = vadd.f32 %v4781, %v4941
      %v4943 = vpop.f32.mrb[0].mxu0
      %v4944 = vpop.f32.mrb[0].mxu0
      %v4945 = vadd.f32 %v4784, %v4944
      %v4946 = vpop.f32.mrb[0].mxu0
      %4947 = vmatprep.mubr.bf16.mxu0 %v3886
      %4948 = vmatmul.mubr.bf16.gmra.mrb[0].mxu0 %v3885
      %v4949 = vpop.f32.mrb[0].mxu0
      %v4950 = vadd.f32 %v4789, %v4949
      %v4951 = vpop.f32.mrb[0].mxu0
      %v4952 = vpop.f32.mrb[0].mxu0
      %v4953 = vadd.f32 %v4792, %v4952
      %v4954 = vpop.f32.mrb[0].mxu0
      %4955 = vmatprep.mubr.bf16.mxu0 %v3895
      %4956 = vmatmul.mubr.bf16.gmra.mrb[0].mxu0 %v3894
      %v4957 = vpop.f32.mrb[0].mxu0
      %v4958 = vadd.f32 %v4797, %v4957
      %v4959 = vpop.f32.mrb[0].mxu0
      %v4960 = vpop.f32.mrb[0].mxu0
      %v4961 = vadd.f32 %v4800, %v4960
      %v4962 = vpop.f32.mrb[0].mxu0
      %4963 = vmatprep.mubr.bf16.mxu0 %v3904
      %4964 = vmatmul.mubr.bf16.gmra.mrb[0].mxu0 %v3903
      %v4965 = vpop.f32.mrb[0].mxu0
      %v4966 = vadd.f32 %v4805, %v4965
      %v4967 = vpop.f32.mrb[0].mxu0
      %v4968 = vpop.f32.mrb[0].mxu0
      %v4969 = vadd.f32 %v4808, %v4968
      %v4970 = vpop.f32.mrb[0].mxu0
      %4971 = vmatprep.mubr.bf16.mxu0 %v3913
      %4972 = vmatmul.mubr.bf16.gmra.mrb[0].mxu0 %v3912
      %v4973 = vpop.f32.mrb[0].mxu0
      %v4974 = vadd.f32 %v4813, %v4973
      %v4975 = vpop.f32.mrb[0].mxu0
      %v4976 = vpop.f32.mrb[0].mxu0
      %v4977 = vadd.f32 %v4816, %v4976
      %v4978 = vpop.f32.mrb[0].mxu0
      %4979 = vmatprep.mubr.bf16.mxu0 %v3922
      %4980 = vmatmul.mubr.bf16.gmra.mrb[0].mxu0 %v3921
      %v4981 = vpop.f32.mrb[0].mxu0
      %v4982 = vadd.f32 %v4821, %v4981
      %v4983 = vpop.f32.mrb[0].mxu0
      %v4984 = vpop.f32.mrb[0].mxu0
      %v4985 = vadd.f32 %v4824, %v4984
      %v4986 = vpop.f32.mrb[0].mxu0
      %4987 = vmatprep.mubr.bf16.mxu0 %v3931
      %4988 = vmatmul.mubr.bf16.gmra.mrb[0].mxu0 %v3930
      %v4989 = vpop.f32.mrb[0].mxu0
      %v4990 = vadd.f32 %v4829, %v4989
      %v4991 = vpop.f32.mrb[0].mxu0
      %v4992 = vpop.f32.mrb[0].mxu0
      %v4993 = vadd.f32 %v4832, %v4992
      %v4994 = vpop.f32.mrb[0].mxu0
      %4995 = vmatprep.mubr.bf16.mxu0 %v3940
      %4996 = vmatmul.mubr.bf16.gmra.mrb[0].mxu0 %v3939
      %v4997 = vpop.f32.mrb[0].mxu0
      %v4998 = vadd.f32 %v4837, %v4997
      %v4999 = vpop.f32.mrb[0].mxu0
      %v5000 = vpop.f32.mrb[0].mxu0
      %v5001 = vadd.f32 %v4840, %v5000
      %v5002 = vpop.f32.mrb[0].mxu0
      %5003 = vmatprep.mubr.bf16.mxu0 %v3949
      %5004 = vmatmul.mubr.bf16.gmra.mrb[0].mxu0 %v3948
      %v5005 = vpop.f32.mrb[0].mxu0
      %v5006 = vadd.f32 %v4845, %v5005
      %v5007 = vpop.f32.mrb[0].mxu0
      %v5008 = vpop.f32.mrb[0].mxu0
      %v5009 = vadd.f32 %v4848, %v5008
      %v5010 = vpop.f32.mrb[0].mxu0
      %5011 = vdwg.mxu0
      %5012 = vmatprep.subr.bf16.mxu0 0
      %5013 = vmatpush1.bf16.msra.mxu0 %v4433
      %5014 = vmatprep.subr.bf16.mxu0 0
      %5015 = vmatpush1.bf16.msra.mxu0 %v4434
      %5016 = vmatprep.subr.bf16.mxu0 0
      %5017 = vmatpush1.bf16.msra.mxu0 %v4435
      %5018 = vmatprep.subr.bf16.mxu0 0
      %5019 = vmatpush1.bf16.msra.mxu0 %v4436
      %5020 = vmatprep.subr.bf16.mxu0 0
      %5021 = vmatpush1.bf16.msra.mxu0 %v4437
      %5022 = vmatprep.subr.bf16.mxu0 0
      %5023 = vmatpush1.bf16.msra.mxu0 %v4438
      %5024 = vmatprep.subr.bf16.mxu0 0
      %5025 = vmatpush1.bf16.msra.mxu0 %v4439
      %5026 = vmatprep.subr.bf16.mxu0 0
      %5027 = vmatpush1.bf16.msra.mxu0 %v4440
      %5028 = vmatprep.subr.bf16.mxu0 0
      %5029 = vmatpush1.bf16.msra.mxu0 %v4441
      %5030 = vmatprep.subr.bf16.mxu0 0
      %5031 = vmatpush1.bf16.msra.mxu0 %v4442
      %5032 = vmatprep.subr.bf16.mxu0 0
      %5033 = vmatpush1.bf16.msra.mxu0 %v4443
      %5034 = vmatprep.subr.bf16.mxu0 0
      %5035 = vmatpush1.bf16.msra.mxu0 %v4444
      %5036 = vmatprep.subr.bf16.mxu0 0
      %5037 = vmatpush1.bf16.msra.mxu0 %v4445
      %5038 = vmatprep.subr.bf16.mxu0 0
      %5039 = vmatpush1.bf16.msra.mxu0 %v4446
      %5040 = vmatprep.subr.bf16.mxu0 0
      %5041 = vmatpush1.bf16.msra.mxu0 %v4447
      %5042 = vmatprep.subr.bf16.mxu0 0
      %5043 = vmatpush1.bf16.msra.mxu0 %v4448
      %5044 = vmatprep.mubr.bf16.mxu0 %v3816
      %5045 = vmatmul.mubr.bf16.gmra.mrb[0].mxu0 %v3815
      %v5046 = vpop.f32.mrb[0].mxu0
      %v5047 = vadd.f32 %v4886, %v5046
      %v5048 = vpop.f32.mrb[0].mxu0
      %v5049 = vpop.f32.mrb[0].mxu0
      %v5050 = vadd.f32 %v4889, %v5049
      %v5051 = vpop.f32.mrb[0].mxu0
      %5052 = vmatprep.mubr.bf16.mxu0 %v3825
      %5053 = vmatmul.mubr.bf16.gmra.mrb[0].mxu0 %v3824
      %v5054 = vpop.f32.mrb[0].mxu0
      %v5055 = vadd.f32 %v4894, %v5054
      %v5056 = vpop.f32.mrb[0].mxu0
      %v5057 = vpop.f32.mrb[0].mxu0
      %v5058 = vadd.f32 %v4897, %v5057
      %v5059 = vpop.f32.mrb[0].mxu0
      %5060 = vmatprep.mubr.bf16.mxu0 %v3834
      %5061 = vmatmul.mubr.bf16.gmra.mrb[0].mxu0 %v3833
      %v5062 = vpop.f32.mrb[0].mxu0
      %v5063 = vadd.f32 %v4902, %v5062
      %v5064 = vpop.f32.mrb[0].mxu0
      %v5065 = vpop.f32.mrb[0].mxu0
      %v5066 = vadd.f32 %v4905, %v5065
      %v5067 = vpop.f32.mrb[0].mxu0
      %5068 = vmatprep.mubr.bf16.mxu0 %v3843
      %5069 = vmatmul.mubr.bf16.gmra.mrb[0].mxu0 %v3842
      %v5070 = vpop.f32.mrb[0].mxu0
      %v5071 = vadd.f32 %v4910, %v5070
      %v5072 = vpop.f32.mrb[0].mxu0
      %v5073 = vpop.f32.mrb[0].mxu0
      %v5074 = vadd.f32 %v4913, %v5073
      %v5075 = vpop.f32.mrb[0].mxu0
      %5076 = vmatprep.mubr.bf16.mxu0 %v3852
      %5077 = vmatmul.mubr.bf16.gmra.mrb[0].mxu0 %v3851
      %v5078 = vpop.f32.mrb[0].mxu0
      %v5079 = vadd.f32 %v4918, %v5078
      %v5080 = vpop.f32.mrb[0].mxu0
      %v5081 = vpop.f32.mrb[0].mxu0
      %v5082 = vadd.f32 %v4921, %v5081
      %v5083 = vpop.f32.mrb[0].mxu0
      %5084 = vmatprep.mubr.bf16.mxu0 %v3861
      %5085 = vmatmul.mubr.bf16.gmra.mrb[0].mxu0 %v3860
      %v5086 = vpop.f32.mrb[0].mxu0
      %v5087 = vadd.f32 %v4926, %v5086
      %v5088 = vpop.f32.mrb[0].mxu0
      %v5089 = vpop.f32.mrb[0].mxu0
      %v5090 = vadd.f32 %v4929, %v5089
      %v5091 = vpop.f32.mrb[0].mxu0
      %5092 = vmatprep.mubr.bf16.mxu0 %v3870
      %5093 = vmatmul.mubr.bf16.gmra.mrb[0].mxu0 %v3869
      %v5094 = vpop.f32.mrb[0].mxu0
      %v5095 = vadd.f32 %v4934, %v5094
      %v5096 = vpop.f32.mrb[0].mxu0
      %v5097 = vpop.f32.mrb[0].mxu0
      %v5098 = vadd.f32 %v4937, %v5097
      %v5099 = vpop.f32.mrb[0].mxu0
      %5100 = vmatprep.mubr.bf16.mxu0 %v3879
      %5101 = vmatmul.mubr.bf16.gmra.mrb[0].mxu0 %v3878
      %v5102 = vpop.f32.mrb[0].mxu0
      %v5103 = vadd.f32 %v4942, %v5102
      %v5104 = vpop.f32.mrb[0].mxu0
      %v5105 = vpop.f32.mrb[0].mxu0
      %v5106 = vadd.f32 %v4945, %v5105
      %v5107 = vpop.f32.mrb[0].mxu0
      %5108 = vmatprep.mubr.bf16.mxu0 %v3888
      %5109 = vmatmul.mubr.bf16.gmra.mrb[0].mxu0 %v3887
      %v5110 = vpop.f32.mrb[0].mxu0
      %v5111 = vadd.f32 %v4950, %v5110
      %v5112 = vpop.f32.mrb[0].mxu0
      %v5113 = vpop.f32.mrb[0].mxu0
      %v5114 = vadd.f32 %v4953, %v5113
      %v5115 = vpop.f32.mrb[0].mxu0
      %5116 = vmatprep.mubr.bf16.mxu0 %v3897
      %5117 = vmatmul.mubr.bf16.gmra.mrb[0].mxu0 %v3896
      %v5118 = vpop.f32.mrb[0].mxu0
      %v5119 = vadd.f32 %v4958, %v5118
      %v5120 = vpop.f32.mrb[0].mxu0
      %v5121 = vpop.f32.mrb[0].mxu0
      %v5122 = vadd.f32 %v4961, %v5121
      %v5123 = vpop.f32.mrb[0].mxu0
      %5124 = vmatprep.mubr.bf16.mxu0 %v3906
      %5125 = vmatmul.mubr.bf16.gmra.mrb[0].mxu0 %v3905
      %v5126 = vpop.f32.mrb[0].mxu0
      %v5127 = vadd.f32 %v4966, %v5126
      %v5128 = vpop.f32.mrb[0].mxu0
      %v5129 = vpop.f32.mrb[0].mxu0
      %v5130 = vadd.f32 %v4969, %v5129
      %v5131 = vpop.f32.mrb[0].mxu0
      %5132 = vmatprep.mubr.bf16.mxu0 %v3915
      %5133 = vmatmul.mubr.bf16.gmra.mrb[0].mxu0 %v3914
      %v5134 = vpop.f32.mrb[0].mxu0
      %v5135 = vadd.f32 %v4974, %v5134
      %v5136 = vpop.f32.mrb[0].mxu0
      %v5137 = vpop.f32.mrb[0].mxu0
      %v5138 = vadd.f32 %v4977, %v5137
      %v5139 = vpop.f32.mrb[0].mxu0
      %5140 = vmatprep.mubr.bf16.mxu0 %v3924
      %5141 = vmatmul.mubr.bf16.gmra.mrb[0].mxu0 %v3923
      %v5142 = vpop.f32.mrb[0].mxu0
      %v5143 = vadd.f32 %v4982, %v5142
      %v5144 = vpop.f32.mrb[0].mxu0
      %v5145 = vpop.f32.mrb[0].mxu0
      %v5146 = vadd.f32 %v4985, %v5145
      %v5147 = vpop.f32.mrb[0].mxu0
      %5148 = vmatprep.mubr.bf16.mxu0 %v3933
      %5149 = vmatmul.mubr.bf16.gmra.mrb[0].mxu0 %v3932
      %v5150 = vpop.f32.mrb[0].mxu0
      %v5151 = vadd.f32 %v4990, %v5150
      %v5152 = vpop.f32.mrb[0].mxu0
      %v5153 = vpop.f32.mrb[0].mxu0
      %v5154 = vadd.f32 %v4993, %v5153
      %v5155 = vpop.f32.mrb[0].mxu0
      %5156 = vmatprep.mubr.bf16.mxu0 %v3942
      %5157 = vmatmul.mubr.bf16.gmra.mrb[0].mxu0 %v3941
      %v5158 = vpop.f32.mrb[0].mxu0
      %v5159 = vadd.f32 %v4998, %v5158
      %v5160 = vpop.f32.mrb[0].mxu0
      %v5161 = vpop.f32.mrb[0].mxu0
      %v5162 = vadd.f32 %v5001, %v5161
      %v5163 = vpop.f32.mrb[0].mxu0
      %5164 = vmatprep.mubr.bf16.mxu0 %v3951
      %5165 = vmatmul.mubr.bf16.gmra.mrb[0].mxu0 %v3950
      %v5166 = vpop.f32.mrb[0].mxu0
      %v5167 = vadd.f32 %v5006, %v5166
      %v5168 = vpop.f32.mrb[0].mxu0
      %v5169 = vpop.f32.mrb[0].mxu0
      %v5170 = vadd.f32 %v5009, %v5169
      %v5171 = vpop.f32.mrb[0].mxu0
      %5172 = vdwg.mxu0
      %5173 = vmatprep.subr.bf16.mxu0 0
      %5174 = vmatpush1.bf16.msra.mxu0 %v4449
      %5175 = vmatprep.subr.bf16.mxu0 0
      %5176 = vmatpush1.bf16.msra.mxu0 %v4450
      %5177 = vmatprep.subr.bf16.mxu0 0
      %5178 = vmatpush1.bf16.msra.mxu0 %v4451
      %5179 = vmatprep.subr.bf16.mxu0 0
      %5180 = vmatpush1.bf16.msra.mxu0 %v4452
      %5181 = vmatprep.subr.bf16.mxu0 0
      %5182 = vmatpush1.bf16.msra.mxu0 %v4453
      %5183 = vmatprep.subr.bf16.mxu0 0
      %5184 = vmatpush1.bf16.msra.mxu0 %v4454
      %5185 = vmatprep.subr.bf16.mxu0 0
      %5186 = vmatpush1.bf16.msra.mxu0 %v4455
      %5187 = vmatprep.subr.bf16.mxu0 0
      %5188 = vmatpush1.bf16.msra.mxu0 %v4456
      %5189 = vmatprep.subr.bf16.mxu0 0
      %5190 = vmatpush1.bf16.msra.mxu0 0
      %5191 = vmatprep.subr.bf16.mxu0 0
      %5192 = vmatpush1.bf16.msra.mxu0 0
      %5193 = vmatprep.subr.bf16.mxu0 0
      %5194 = vmatpush1.bf16.msra.mxu0 0
      %5195 = vmatprep.subr.bf16.mxu0 0
      %5196 = vmatpush1.bf16.msra.mxu0 0
      %5197 = vmatprep.subr.bf16.mxu0 0
      %5198 = vmatpush1.bf16.msra.mxu0 0
      %5199 = vmatprep.subr.bf16.mxu0 0
      %5200 = vmatpush1.bf16.msra.mxu0 0
      %5201 = vmatprep.subr.bf16.mxu0 0
      %5202 = vmatpush1.bf16.msra.mxu0 0
      %5203 = vmatprep.subr.bf16.mxu0 0
      %5204 = vmatpush1.bf16.msra.mxu0 0
      %5205 = vmatprep.mubr.bf16.mxu0 0
      %5206 = vmatmul.mubr.bf16.gmra.mrb[0].mxu0 %v3817
      %v5207 = vpop.f32.mrb[0].mxu0
      %v5208 = vadd.f32 %v5047, %v5207
      %v5209 = vpop.f32.mrb[0].mxu0
      %v5210 = vpop.f32.mrb[0].mxu0
      %v5211 = vadd.f32 %v5050, %v5210
      %v5212 = vpop.f32.mrb[0].mxu0
      %5213 = vmatprep.mubr.bf16.mxu0 0
      %5214 = vmatmul.mubr.bf16.gmra.mrb[0].mxu0 %v3826
      %v5215 = vpop.f32.mrb[0].mxu0
      %v5216 = vadd.f32 %v5055, %v5215
      %v5217 = vpop.f32.mrb[0].mxu0
      %v5218 = vpop.f32.mrb[0].mxu0
      %v5219 = vadd.f32 %v5058, %v5218
      %v5220 = vpop.f32.mrb[0].mxu0
      %5221 = vmatprep.mubr.bf16.mxu0 0
      %5222 = vmatmul.mubr.bf16.gmra.mrb[0].mxu0 %v3835
      %v5223 = vpop.f32.mrb[0].mxu0
      %v5224 = vadd.f32 %v5063, %v5223
      %v5225 = vpop.f32.mrb[0].mxu0
      %v5226 = vpop.f32.mrb[0].mxu0
      %v5227 = vadd.f32 %v5066, %v5226
      %v5228 = vpop.f32.mrb[0].mxu0
      %5229 = vmatprep.mubr.bf16.mxu0 0
      %5230 = vmatmul.mubr.bf16.gmra.mrb[0].mxu0 %v3844
      %v5231 = vpop.f32.mrb[0].mxu0
      %v5232 = vadd.f32 %v5071, %v5231
      %v5233 = vpop.f32.mrb[0].mxu0
      %v5234 = vpop.f32.mrb[0].mxu0
      %v5235 = vadd.f32 %v5074, %v5234
      %v5236 = vpop.f32.mrb[0].mxu0
      %5237 = vmatprep.mubr.bf16.mxu0 0
      %5238 = vmatmul.mubr.bf16.gmra.mrb[0].mxu0 %v3853
      %v5239 = vpop.f32.mrb[0].mxu0
      %v5240 = vadd.f32 %v5079, %v5239
      %v5241 = vpop.f32.mrb[0].mxu0
      %v5242 = vpop.f32.mrb[0].mxu0
      %v5243 = vadd.f32 %v5082, %v5242
      %v5244 = vpop.f32.mrb[0].mxu0
      %5245 = vmatprep.mubr.bf16.mxu0 0
      %5246 = vmatmul.mubr.bf16.gmra.mrb[0].mxu0 %v3862
      %v5247 = vpop.f32.mrb[0].mxu0
      %v5248 = vadd.f32 %v5087, %v5247
      %v5249 = vpop.f32.mrb[0].mxu0
      %v5250 = vpop.f32.mrb[0].mxu0
      %v5251 = vadd.f32 %v5090, %v5250
      %v5252 = vpop.f32.mrb[0].mxu0
      %5253 = vmatprep.mubr.bf16.mxu0 0
      %5254 = vmatmul.mubr.bf16.gmra.mrb[0].mxu0 %v3871
      %v5255 = vpop.f32.mrb[0].mxu0
      %v5256 = vadd.f32 %v5095, %v5255
      %v5257 = vpop.f32.mrb[0].mxu0
      %v5258 = vpop.f32.mrb[0].mxu0
      %v5259 = vadd.f32 %v5098, %v5258
      %v5260 = vpop.f32.mrb[0].mxu0
      %5261 = vmatprep.mubr.bf16.mxu0 0
      %5262 = vmatmul.mubr.bf16.gmra.mrb[0].mxu0 %v3880
      %v5263 = vpop.f32.mrb[0].mxu0
      %v5264 = vadd.f32 %v5103, %v5263
      %v5265 = vpop.f32.mrb[0].mxu0
      %v5266 = vpop.f32.mrb[0].mxu0
      %v5267 = vadd.f32 %v5106, %v5266
      %v5268 = vpop.f32.mrb[0].mxu0
      %5269 = vmatprep.mubr.bf16.mxu0 0
      %5270 = vmatmul.mubr.bf16.gmra.mrb[0].mxu0 %v3889
      %v5271 = vpop.f32.mrb[0].mxu0
      %v5272 = vadd.f32 %v5111, %v5271
      %v5273 = vpop.f32.mrb[0].mxu0
      %v5274 = vpop.f32.mrb[0].mxu0
      %v5275 = vadd.f32 %v5114, %v5274
      %v5276 = vpop.f32.mrb[0].mxu0
      %5277 = vmatprep.mubr.bf16.mxu0 0
      %5278 = vmatmul.mubr.bf16.gmra.mrb[0].mxu0 %v3898
      %v5279 = vpop.f32.mrb[0].mxu0
      %v5280 = vadd.f32 %v5119, %v5279
      %v5281 = vpop.f32.mrb[0].mxu0
      %v5282 = vpop.f32.mrb[0].mxu0
      %v5283 = vadd.f32 %v5122, %v5282
      %v5284 = vpop.f32.mrb[0].mxu0
      %5285 = vmatprep.mubr.bf16.mxu0 0
      %5286 = vmatmul.mubr.bf16.gmra.mrb[0].mxu0 %v3907
      %v5287 = vpop.f32.mrb[0].mxu0
      %v5288 = vadd.f32 %v5127, %v5287
      %v5289 = vpop.f32.mrb[0].mxu0
      %v5290 = vpop.f32.mrb[0].mxu0
      %v5291 = vadd.f32 %v5130, %v5290
      %v5292 = vpop.f32.mrb[0].mxu0
      %5293 = vmatprep.mubr.bf16.mxu0 0
      %5294 = vmatmul.mubr.bf16.gmra.mrb[0].mxu0 %v3916
      %v5295 = vpop.f32.mrb[0].mxu0
      %v5296 = vadd.f32 %v5135, %v5295
      %v5297 = vpop.f32.mrb[0].mxu0
      %v5298 = vpop.f32.mrb[0].mxu0
      %v5299 = vadd.f32 %v5138, %v5298
      %v5300 = vpop.f32.mrb[0].mxu0
      %5301 = vmatprep.mubr.bf16.mxu0 0
      %5302 = vmatmul.mubr.bf16.gmra.mrb[0].mxu0 %v3925
      %v5303 = vpop.f32.mrb[0].mxu0
      %v5304 = vadd.f32 %v5143, %v5303
      %v5305 = vpop.f32.mrb[0].mxu0
      %v5306 = vpop.f32.mrb[0].mxu0
      %v5307 = vadd.f32 %v5146, %v5306
      %v5308 = vpop.f32.mrb[0].mxu0
      %5309 = vmatprep.mubr.bf16.mxu0 0
      %5310 = vmatmul.mubr.bf16.gmra.mrb[0].mxu0 %v3934
      %v5311 = vpop.f32.mrb[0].mxu0
      %v5312 = vadd.f32 %v5151, %v5311
      %v5313 = vpop.f32.mrb[0].mxu0
      %v5314 = vpop.f32.mrb[0].mxu0
      %v5315 = vadd.f32 %v5154, %v5314
      %v5316 = vpop.f32.mrb[0].mxu0
      %5317 = vmatprep.mubr.bf16.mxu0 0
      %5318 = vmatmul.mubr.bf16.gmra.mrb[0].mxu0 %v3943
      %v5319 = vpop.f32.mrb[0].mxu0
      %v5320 = vadd.f32 %v5159, %v5319
      %v5321 = vpop.f32.mrb[0].mxu0
      %v5322 = vpop.f32.mrb[0].mxu0
      %v5323 = vadd.f32 %v5162, %v5322
      %v5324 = vpop.f32.mrb[0].mxu0
      %5325 = vmatprep.mubr.bf16.mxu0 0
      %5326 = vmatmul.mubr.bf16.gmra.mrb[0].mxu0 %v3952
      %v5327 = vpop.f32.mrb[0].mxu0
      %v5328 = vadd.f32 %v5167, %v5327
      %v5329 = vpop.f32.mrb[0].mxu0
      %v5330 = vpop.f32.mrb[0].mxu0
      %v5331 = vadd.f32 %v5170, %v5330
      %v5332 = vpop.f32.mrb[0].mxu0
      %5333 = vdwg.mxu0
      %5334 = vst [vmem:[%s231] sm:$0xff] %v5208
      %5335 = vst [vmem:[%s231 + $0x8] sm:$0xff] %v5211
      %5336 = vst [vmem:[%s231 + $0x10] sm:$0xff] %v5216
      %5337 = vst [vmem:[%s231 + $0x18] sm:$0xff] %v5219
      %5338 = vst [vmem:[%s231 + $0x20] sm:$0xff] %v5224
      %5339 = vst [vmem:[%s231 + $0x28] sm:$0xff] %v5227
      %5340 = vst [vmem:[%s231 + $0x30] sm:$0xff] %v5232
      %5341 = vst [vmem:[%s231 + $0x38] sm:$0xff] %v5235
      %5342 = vst [vmem:[%s231 + $0x40] sm:$0xff] %v5240
      %5343 = vst [vmem:[%s231 + $0x48] sm:$0xff] %v5243
      %5344 = vst [vmem:[%s231 + $0x50] sm:$0xff] %v5248
      %5345 = vst [vmem:[%s231 + $0x58] sm:$0xff] %v5251
      %5346 = vst [vmem:[%s231 + $0x60] sm:$0xff] %v5256
      %5347 = vst [vmem:[%s231 + $0x68] sm:$0xff] %v5259
      %5348 = vst [vmem:[%s231 + $0x70] sm:$0xff] %v5264
      %5349 = vst [vmem:[%s231 + $0x78] sm:$0xff] %v5267
      %5350 = vst [vmem:[%s231 + $0x80] sm:$0xff] %v5272
      %5351 = vst [vmem:[%s231 + $0x88] sm:$0xff] %v5275
      %5352 = vst [vmem:[%s231 + $0x90] sm:$0xff] %v5280
      %5353 = vst [vmem:[%s231 + $0x98] sm:$0xff] %v5283
      %5354 = vst [vmem:[%s231 + $0xa0] sm:$0xff] %v5288
      %5355 = vst [vmem:[%s231 + $0xa8] sm:$0xff] %v5291
      %5356 = vst [vmem:[%s231 + $0xb0] sm:$0xff] %v5296
      %5357 = vst [vmem:[%s231 + $0xb8] sm:$0xff] %v5299
      %5358 = vst [vmem:[%s231 + $0xc0] sm:$0xff] %v5304
      %5359 = vst [vmem:[%s231 + $0xc8] sm:$0xff] %v5307
      %5360 = vst [vmem:[%s231 + $0xd0] sm:$0xff] %v5312
      %5361 = vst [vmem:[%s231 + $0xd8] sm:$0xff] %v5315
      %5362 = vst [vmem:[%s231 + $0xe0] sm:$0xff] %v5320
      %5363 = vst [vmem:[%s231 + $0xe8] sm:$0xff] %v5323
      %5364 = vst [vmem:[%s231 + $0xf0] sm:$0xff] %v5328
      %5365 = vst [vmem:[%s231 + $0xf8] sm:$0xff] %v5331
      %v5366 = vadd.f32 %v5208, %v5211
      %v5367 = vadd.f32 %v5366, %v5216
      %v5368 = vadd.f32 %v5367, %v5219
      %v5369 = vadd.f32 %v5368, %v5224
      %v5370 = vadd.f32 %v5369, %v5227
      %v5371 = vadd.f32 %v5370, %v5232
      %v5372 = vadd.f32 %v5371, %v5235
      %v5373 = vadd.f32 %v5372, %v5240
      %v5374 = vadd.f32 %v5373, %v5243
      %v5375 = vadd.f32 %v5374, %v5248
      %v5376 = vadd.f32 %v5375, %v5251
      %v5377 = vadd.f32 %v5376, %v5256
      %v5378 = vadd.f32 %v5377, %v5259
      %v5379 = vadd.f32 %v5378, %v5264
      %v5380 = vadd.f32 %v5379, %v5267
      %v5381 = vadd.f32 %v5380, %v5272
      %v5382 = vadd.f32 %v5381, %v5275
      %v5383 = vadd.f32 %v5382, %v5280
      %v5384 = vadd.f32 %v5383, %v5283
      %v5385 = vadd.f32 %v5384, %v5288
      %v5386 = vadd.f32 %v5385, %v5291
      %v5387 = vadd.f32 %v5386, %v5296
      %v5388 = vadd.f32 %v5387, %v5299
      %v5389 = vadd.f32 %v5388, %v5304
      %v5390 = vadd.f32 %v5389, %v5307
      %v5391 = vadd.f32 %v5390, %v5312
      %v5392 = vadd.f32 %v5391, %v5315
      %v5393 = vadd.f32 %v5392, %v5320
      %v5394 = vadd.f32 %v5393, %v5323
      %v5395 = vadd.f32 %v5394, %v5328
      %v5396 = vadd.f32 %v5395, %v5331
      %v5397 = vrot.slane %v5396, 4
      %v5398 = vadd.f32 %v5396, %v5397
      %v5399 = vrot.slane %v5398, 2
      %v5400 = vadd.f32 %v5398, %v5399
      %v5401 = vrot.slane %v5400, 1
      %v5402 = vadd.f32 %v5400, %v5401
      %v5403 = vmul.f32 %v5208, %v5208
      %v5404 = vmul.f32 %v5211, %v5211
      %v5405 = vmul.f32 %v5216, %v5216
      %v5406 = vmul.f32 %v5219, %v5219
      %v5407 = vmul.f32 %v5224, %v5224
      %v5408 = vmul.f32 %v5227, %v5227
      %v5409 = vmul.f32 %v5232, %v5232
      %v5410 = vmul.f32 %v5235, %v5235
      %v5411 = vmul.f32 %v5240, %v5240
      %v5412 = vmul.f32 %v5243, %v5243
      %v5413 = vmul.f32 %v5248, %v5248
      %v5414 = vmul.f32 %v5251, %v5251
      %v5415 = vmul.f32 %v5256, %v5256
      %v5416 = vmul.f32 %v5259, %v5259
      %v5417 = vmul.f32 %v5264, %v5264
      %v5418 = vmul.f32 %v5267, %v5267
      %v5419 = vmul.f32 %v5272, %v5272
      %v5420 = vmul.f32 %v5275, %v5275
      %v5421 = vmul.f32 %v5280, %v5280
      %v5422 = vmul.f32 %v5283, %v5283
      %v5423 = vmul.f32 %v5288, %v5288
      %v5424 = vmul.f32 %v5291, %v5291
      %v5425 = vmul.f32 %v5296, %v5296
      %v5426 = vmul.f32 %v5299, %v5299
      %v5427 = vmul.f32 %v5304, %v5304
      %v5428 = vmul.f32 %v5307, %v5307
      %v5429 = vmul.f32 %v5312, %v5312
      %v5430 = vmul.f32 %v5315, %v5315
      %v5431 = vmul.f32 %v5320, %v5320
      %v5432 = vmul.f32 %v5323, %v5323
      %v5433 = vmul.f32 %v5328, %v5328
      %v5434 = vmul.f32 %v5331, %v5331
      %v5435 = vadd.f32 %v5403, %v5404
      %v5436 = vadd.f32 %v5435, %v5405
      %v5437 = vadd.f32 %v5436, %v5406
      %v5438 = vadd.f32 %v5437, %v5407
      %v5439 = vadd.f32 %v5438, %v5408
      %v5440 = vadd.f32 %v5439, %v5409
      %v5441 = vadd.f32 %v5440, %v5410
      %v5442 = vadd.f32 %v5441, %v5411
      %v5443 = vadd.f32 %v5442, %v5412
      %v5444 = vadd.f32 %v5443, %v5413
      %v5445 = vadd.f32 %v5444, %v5414
      %v5446 = vadd.f32 %v5445, %v5415
      %v5447 = vadd.f32 %v5446, %v5416
      %v5448 = vadd.f32 %v5447, %v5417
      %v5449 = vadd.f32 %v5448, %v5418
      %v5450 = vadd.f32 %v5449, %v5419
      %v5451 = vadd.f32 %v5450, %v5420
      %v5452 = vadd.f32 %v5451, %v5421
      %v5453 = vadd.f32 %v5452, %v5422
      %v5454 = vadd.f32 %v5453, %v5423
      %v5455 = vadd.f32 %v5454, %v5424
      %v5456 = vadd.f32 %v5455, %v5425
      %v5457 = vadd.f32 %v5456, %v5426
      %v5458 = vadd.f32 %v5457, %v5427
      %v5459 = vadd.f32 %v5458, %v5428
      %v5460 = vadd.f32 %v5459, %v5429
      %v5461 = vadd.f32 %v5460, %v5430
      %v5462 = vadd.f32 %v5461, %v5431
      %v5463 = vadd.f32 %v5462, %v5432
      %v5464 = vadd.f32 %v5463, %v5433
      %v5465 = vadd.f32 %v5464, %v5434
      %v5466 = vrot.slane %v5465, 4
      %v5467 = vadd.f32 %v5465, %v5466
      %v5468 = vrot.slane %v5467, 2
      %v5469 = vadd.f32 %v5467, %v5468
      %v5470 = vrot.slane %v5469, 1
      %v5471 = vadd.f32 %v5469, %v5470
      %vm5472 = vcmask 1040384
      %v5473 = vsel %vm5472, %v5402, %v5471
      %5474 = vst [vmem:[%s235] sm:$0x3] %v5473
      %p5475 = scmp.lt.s32.totalorder %s17, 1
      %s5476 = scalar_select %p5475, %s17, 1
      %s5477 = smul.addr %s5476, 32
      %s5478 = smul.addr %s5477, 8
      %s5479 = scalar_lea.vmem %s4, %s5478
      %p5480 = scmp.lt.s32.totalorder %s17, 1
      %s5481 = scalar_select %p5480, %s17, 1
      %s5482 = smul.addr %s5481, 2
      %s5483 = scalar_lea.vmem %s5, %s5482
      // Predicated region
      $region37: #{basic_block_forward.4} parent=35 // pred_check
        %p5484 = pneg %p124
      $region38: #{basic_block_forward.4} parent=35 // pred_check_branch
        %5486 = sbr.rel (%p5484) target = $region40
      $region39: #{basic_block_forward.4} parent=35 // pred_region
        _
      $region40: #{basic_block_forward.4} parent=35 // pred_fallthru
        _
      // Predicated region
      $region41: #{basic_block_forward.4} parent=35 // pred_check
        %p5487 = pneg %p150
      $region42: #{basic_block_forward.4} parent=35 // pred_check_branch
        %5489 = sbr.rel (%p5487) target = $region44
      $region43: #{basic_block_forward.4} parent=35 // pred_region
        _
      $region44: #{basic_block_forward.4} parent=35 // pred_fallthru
        _
    $region36: #{basic_block_forward.4} parent=5 // pred_fallthru
      _
    %p5490 = scmp.le.s32.totalorder 2, %s12
    // Predicated region
    $region45: #{basic_block_forward.4} parent=5 // pred_check
      %p5491 = pneg %p5490
    $region46: #{basic_block_forward.4} parent=5 // pred_check_branch
      %5493 = sbr.rel (%p5491) target = $region48
    $region47: #{basic_block_forward.4} parent=5 // pred_region
      %s5494 = ssub.s32 %s12, 2
      // Predicated region
      $region49: #{basic_block_forward.4} parent=47 // pred_check
        %p5495 = pneg %p130
      $region50: #{basic_block_forward.4} parent=47 // pred_check_branch
        %5497 = sbr.rel (%p5495) target = $region52
      $region51: #{basic_block_forward.4} parent=47 // pred_region
        %p5498 = scmp.lt.s32.totalorder %s18, 1
        %s5499 = scalar_select %p5498, %s18, 1
        %s5500 = smul.addr %s5499, 32
        %s5501 = smul.addr %s5500, 8
        %s5502 = scalar_lea.vmem %s4, %s5501
      $region52: #{basic_block_forward.4} parent=47 // pred_fallthru
        _
      // Predicated region
      $region53: #{basic_block_forward.4} parent=47 // pred_check
        %p5503 = pneg %p156
      $region54: #{basic_block_forward.4} parent=47 // pred_check_branch
        %5505 = sbr.rel (%p5503) target = $region56
      $region55: #{basic_block_forward.4} parent=47 // pred_region
        %p5506 = scmp.lt.s32.totalorder %s18, 1
        %s5507 = scalar_select %p5506, %s18, 1
        %s5508 = smul.addr %s5507, 2
        %s5509 = scalar_lea.vmem %s5, %s5508
      $region56: #{basic_block_forward.4} parent=47 // pred_fallthru
        _
    $region48: #{basic_block_forward.4} parent=5 // pred_fallthru
      _
  $region6: #{basic_block_forward.4} parent=0 // loop_footer
    %s16 = sadd.s32 1, %s12
  $region7: #{basic_block_forward.4} parent=0 // loop_footer_branch
    %11 = sbr.rel target = $region3
  $region8: #{basic_block_forward.4} parent=0 // loop_exit
    _

</llo_original>
